<compile_context>
chip_gen: v7x
topology: tpu7x:2x2x1
jax: 0.10.0
libtpu: 0.0.40
codegen_flags: <defaults>
</compile_context>

<pallas_src>
import functools

import jax
import jax.numpy as jnp
from jax.experimental import pallas as pl
from jax.experimental.pallas import tpu as pltpu

LANE = 128          # lane padding for channel-like dims
BN_EPS = 1e-5


def _round_up(x, m):
    return (x + m - 1) // m * m


# ---------------------------------------------------------------------------
# Pallas kernel: tiled matmul + fused BN shift (+ residual) (+ ReLU) epilogue
# ---------------------------------------------------------------------------
def _epilogue(acc, shift, res, relu, out_dtype):
    out = acc + shift                       # BN scale already folded into weights
    if res is not None:
        out = out + res.astype(jnp.float32)  # residual added BEFORE the final ReLU
    if relu:
        out = jnp.maximum(out, 0.0)
    return out.astype(out_dtype)


def _mm_kernel(x_ref, w_ref, shift_ref, o_ref, acc_ref, *, relu):
    @pl.when(pl.program_id(2) == 0)
    def _():
        acc_ref[...] = jnp.zeros_like(acc_ref)

    acc_ref[...] += jnp.dot(x_ref[...], w_ref[...],
                            preferred_element_type=jnp.float32)

    @pl.when(pl.program_id(2) == pl.num_programs(2) - 1)
    def _():
        o_ref[...] = _epilogue(acc_ref[...], shift_ref[...], None, relu, o_ref.dtype)


def _mm_res_kernel(x_ref, w_ref, shift_ref, res_ref, o_ref, acc_ref, *, relu):
    @pl.when(pl.program_id(2) == 0)
    def _():
        acc_ref[...] = jnp.zeros_like(acc_ref)

    acc_ref[...] += jnp.dot(x_ref[...], w_ref[...],
                            preferred_element_type=jnp.float32)

    @pl.when(pl.program_id(2) == pl.num_programs(2) - 1)
    def _():
        o_ref[...] = _epilogue(acc_ref[...], shift_ref[...], res_ref[...],
                               relu, o_ref.dtype)


def matmul_fused(x2d, w, shift, residual=None, relu=True):
    """x2d: (M, K) bf16, w: (K, Np) bf16 (BN-scale folded), shift: (1, Np) f32,
    residual: optional (M, Np) bf16.  Returns (M, Np) bf16."""
    M, K = x2d.shape
    Kw, Np = w.shape
    assert K == Kw, (K, Kw)
    assert Np % LANE == 0 and K % LANE == 0

    tm = M if M <= 256 else 256                                   # row tile
    tn = 256 if Np % 256 == 0 else 128                            # out-channel tile
    tk = next((t for t in (512, 384, 256, 128) if K % t == 0), K)  # reduction tile
    gm, gn, gk = pl.cdiv(M, tm), Np // tn, K // tk

    in_specs = [
        pl.BlockSpec((tm, tk), lambda i, j, k: (i, k)),
        pl.BlockSpec((tk, tn), lambda i, j, k: (k, j)),
        pl.BlockSpec((1, tn), lambda i, j, k: (0, j)),
    ]
    args = [x2d, w, shift]
    if residual is not None:
        in_specs.append(pl.BlockSpec((tm, tn), lambda i, j, k: (i, j)))
        args.append(residual)
        kernel = functools.partial(_mm_res_kernel, relu=relu)
    else:
        kernel = functools.partial(_mm_kernel, relu=relu)

    return pl.pallas_call(
        kernel,
        out_shape=jax.ShapeDtypeStruct((M, Np), jnp.bfloat16),
        grid=(gm, gn, gk),
        in_specs=in_specs,
        out_specs=pl.BlockSpec((tm, tn), lambda i, j, k: (i, j)),
        scratch_shapes=[pltpu.VMEM((tm, tn), jnp.float32)],
        compiler_params=pltpu.CompilerParams(
            dimension_semantics=("parallel", "parallel", "arbitrary")),
    )(*args)


# ---------------------------------------------------------------------------
# Conv + folded BatchNorm + optional fused residual / ReLU
# ---------------------------------------------------------------------------
def conv_bn(x, cp, kh, kw, stride, pad, relu, residual=None):
    """x: (N, H, W, Cs) bf16 NHWC (channel-padded); cp: {"w": (K, Np) bf16,
    "shift": (1, Np) f32}; residual: optional NHWC bf16 with Np channels."""
    N, H, W, Cs = x.shape
    Ho = (H + 2 * pad - kh) // stride + 1
    Wo = (W + 2 * pad - kw) // stride + 1

    if kh == 1 and kw == 1:
        xs = x if stride == 1 else x[:, ::stride, ::stride, :]
        patches = xs.reshape(N * Ho * Wo, Cs)
    else:
        # TODO(synk): lower the kh*kw taps as an in-kernel reduction axis reading
        # shifted windows of the padded NHWC input (no HBM im2col materialization);
        # this is the remaining big memory-traffic lever flagged by the perf review.
        xp = jnp.pad(x, ((0, 0), (pad, pad), (pad, pad), (0, 0)))
        cols = [xp[:, di:di + stride * (Ho - 1) + 1:stride,
                   dj:dj + stride * (Wo - 1) + 1:stride, :]
                for di in range(kh) for dj in range(kw)]
        patches = jnp.concatenate(cols, axis=-1).reshape(N * Ho * Wo, kh * kw * Cs)

    K = cp["w"].shape[0]
    if patches.shape[1] != K:          # stem only: K=147 -> padded to 256
        patches = jnp.pad(patches, ((0, 0), (0, K - patches.shape[1])))

    res2d = residual.reshape(N * Ho * Wo, -1) if residual is not None else None
    out2d = matmul_fused(patches, cp["w"], cp["shift"], residual=res2d, relu=relu)
    return out2d.reshape(N, Ho, Wo, -1)


def maxpool_3x3_s2_p1(x):
    # MaxPool2d(kernel=3, stride=2, padding=1).  Uses lax.reduce_window (per perf
    # review) so no 9x window copy is ever materialized in HBM.
    return jax.lax.reduce_window(
        x, jnp.array(-jnp.inf, dtype=x.dtype), jax.lax.max,
        window_dimensions=(1, 3, 3, 1), window_strides=(1, 2, 2, 1),
        padding=((0, 0), (1, 1), (1, 1), (0, 0)))


# ---------------------------------------------------------------------------
# Wide-ResNet-50-2 (cut after layer3), scaled-down widths
# ---------------------------------------------------------------------------
def bottleneck(x, p, stride):
    if "cd" in p:
        identity = conv_bn(x, p["cd"], 1, 1, stride, 0, relu=False)
    else:
        identity = x
    out = conv_bn(x, p["c1"], 1, 1, 1, 0, relu=True)
    out = conv_bn(out, p["c2"], 3, 3, stride, 1, relu=True)
    # residual fused into the third conv's epilogue, added before the final ReLU
    out = conv_bn(out, p["c3"], 1, 1, 1, 0, relu=True, residual=identity)
    return out


def forward(params, x_nchw, *, out_channels):
    x = jnp.transpose(x_nchw, (0, 2, 3, 1)).astype(jnp.bfloat16)   # NCHW -> NHWC
    # stem: conv1 (7x7, s2, p3) + bn1 + relu + maxpool(3, s2, p1)
    x = conv_bn(x, params["conv1"], 7, 7, 2, 3, relu=True)
    x = maxpool_3x3_s2_p1(x)
    # layer1 (3 blocks, s1), layer2 (4 blocks, s2), layer3 (6 blocks, s2)
    for name, first_stride in (("layer1", 1), ("layer2", 2), ("layer3", 2)):
        for bi, p in enumerate(params[name]):
            x = bottleneck(x, p, first_stride if bi == 0 else 1)
    x = x[..., :out_channels]                                      # drop lane padding
    return jnp.transpose(x, (0, 3, 1, 2)).astype(jnp.float32)      # NHWC -> NCHW


# ---------------------------------------------------------------------------
# Deterministic synthetic parameters: BN folded, lane-padded, bf16, matmul-ready
# ---------------------------------------------------------------------------
def _conv_init(key, kh, kw, cin, cout):
    std = (2.0 / (kh * kw * cin)) ** 0.5
    return std * jax.random.normal(key, (kh, kw, cin, cout), dtype=jnp.float32)


def _bn_init(key, c):
    k1, k2, k3, k4 = jax.random.split(key, 4)
    gamma = 1.0 + 0.1 * jax.random.normal(k1, (c,), dtype=jnp.float32)
    beta = 0.1 * jax.random.normal(k2, (c,), dtype=jnp.float32)
    mean = 0.1 * jax.random.normal(k3, (c,), dtype=jnp.float32)
    var = jax.random.uniform(k4, (c,), minval=0.5, maxval=1.5, dtype=jnp.float32)
    scale = gamma / jnp.sqrt(var + BN_EPS)
    shift = beta - mean * scale
    return scale, shift


def _prep_conv(w, scale, shift, cs):
    """Fold BN scale into the weight, pad in/out channels to lane multiples,
    reshape to a (K, Np) bf16 matmul weight (K padded to a 128 multiple)."""
    kh, kw, cin, cout = w.shape
    np_out = _round_up(cout, LANE)
    k_raw = kh * kw * cs
    kp = _round_up(k_raw, LANE)
    wf = w * scale[None, None, None, :]                                  # fold scale
    wf = jnp.pad(wf, ((0, 0), (0, 0), (0, cs - cin), (0, np_out - cout)))
    wmat = wf.reshape(k_raw, np_out)
    wmat = jnp.pad(wmat, ((0, kp - k_raw), (0, 0))).astype(jnp.bfloat16)
    sh = jnp.pad(shift, (0, np_out - cout)).astype(jnp.float32).reshape(1, np_out)
    return {"w": wmat, "shift": sh}


def init_params(key, base=8):
    # torchvision wide_resnet50_2: base=64, width = planes * 2, out = planes * 4.
    # Scaled down 8x (base=8) for a small, fast synthetic demo.
    keys = iter(jax.random.split(key, 512))
    nk = lambda: next(keys)

    params = {}
    w = _conv_init(nk(), 7, 7, 3, base)
    s, b = _bn_init(nk(), base)
    params["conv1"] = _prep_conv(w, s, b, cs=3)

    def make_block(cin, width, cout, downsample):
        cs_in, cs_w = _round_up(cin, LANE), _round_up(width, LANE)
        p = {}
        w = _conv_init(nk(), 1, 1, cin, width); s, b = _bn_init(nk(), width)
        p["c1"] = _prep_conv(w, s, b, cs_in)
        w = _conv_init(nk(), 3, 3, width, width); s, b = _bn_init(nk(), width)
        p["c2"] = _prep_conv(w, s, b, cs_w)
        w = _conv_init(nk(), 1, 1, width, cout); s, b = _bn_init(nk(), cout)
        p["c3"] = _prep_conv(w, s, b, cs_w)
        if downsample:
            w = _conv_init(nk(), 1, 1, cin, cout); s, b = _bn_init(nk(), cout)
            p["cd"] = _prep_conv(w, s, b, cs_in)
        return p

    def make_layer(cin, planes, n_blocks):
        width = planes * 2      # "wide" factor 2
        cout = planes * 4       # expansion 4
        blocks = [make_block(cin, width, cout, True)]
        for _ in range(n_blocks - 1):
            blocks.append(make_block(cout, width, cout, False))
        return blocks, cout

    cin = base
    params["layer1"], cin = make_layer(cin, base, 3)
    params["layer2"], cin = make_layer(cin, 2 * base, 4)
    params["layer3"], cin = make_layer(cin, 4 * base, 6)
    return params


# ---------------------------------------------------------------------------
if __name__ == "__main__":
    key = jax.random.PRNGKey(0)
    pkey, xkey = jax.random.split(key)
    BASE = 8
    params = init_params(pkey, base=BASE)

    # small NCHW image batch
    x = jax.random.normal(xkey, (2, 3, 32, 32), dtype=jnp.float32)

    fwd = jax.jit(functools.partial(forward, out_channels=16 * BASE))
    out = jax.block_until_ready(fwd(params, x))

    # layer3 output of the (scaled) wide_resnet50_2 cut: (N, 16*base, H/16, W/16)
    assert out.shape == (2, 16 * BASE, 2, 2), out.shape
    assert bool(jnp.all(jnp.isfinite(out)))
    print("KERNEL_OK")
</pallas_src>

<mosaic_0001>
module attributes {stable_mosaic.version = 11 : i64} {
  func.func @_mm_kernel(%arg0: i32, %arg1: i32, %arg2: i32, %arg3: memref<256x256xbf16, #tpu.memory_space<vmem>>, %arg4: memref<256x128xbf16, #tpu.memory_space<vmem>>, %arg5: memref<1x128xf32, #tpu.memory_space<vmem>>, %arg6: memref<256x128xbf16, #tpu.memory_space<vmem>>, %arg7: memref<256x128xf32, #tpu.memory_space<vmem>>) attributes {dimension_semantics = [#tpu.dimension_semantics<parallel>, #tpu.dimension_semantics<parallel>, #tpu.dimension_semantics<arbitrary>], iteration_bounds = array<i64: 2, 1, 1>, scalar_prefetch = 0 : i64, scratch_operands = 1 : i64, tpu.core_type = #tpu.core_type<tc>, window_params = [{transform_indices = @transform_0, window_bounds = array<i64: 256, 256>}, {transform_indices = @transform_1, window_bounds = array<i64: 256, 128>}, {transform_indices = @transform_2, window_bounds = array<i64: 1, 128>}, {transform_indices = @transform_3, window_bounds = array<i64: 256, 128>}]} {
    %c0_i32 = arith.constant 0 : i32
    %0 = arith.cmpi eq, %arg2, %c0_i32 : i32
    %1 = arith.extui %0 : i1 to i32
    %c0_i32_0 = arith.constant 0 : i32
    %2 = arith.cmpi ne, %1, %c0_i32_0 : i32
    scf.if %2 {
      %cst_10 = arith.constant 0.000000e+00 : f32
      %12 = vector.broadcast %cst_10 : f32 to vector<256x128xf32>
      %c0_11 = arith.constant 0 : index
      %c0_12 = arith.constant 0 : index
      %13 = vector.load %arg7[%c0_11, %c0_12] : memref<256x128xf32, #tpu.memory_space<vmem>>, vector<256x128xf32>
      tpu.vector_store %arg7[%c0_11, %c0_12], %12 {strides = array<i32>} : memref<256x128xf32, #tpu.memory_space<vmem>>, vector<256x128xf32>,
    } else {
    }
    %c0 = arith.constant 0 : index
    %c0_1 = arith.constant 0 : index
    %3 = vector.load %arg7[%c0, %c0_1] : memref<256x128xf32, #tpu.memory_space<vmem>>, vector<256x128xf32>
    %c0_2 = arith.constant 0 : index
    %c0_3 = arith.constant 0 : index
    %4 = vector.load %arg3[%c0_2, %c0_3] : memref<256x256xbf16, #tpu.memory_space<vmem>>, vector<256x256xbf16>
    %c0_4 = arith.constant 0 : index
    %c0_5 = arith.constant 0 : index
    %5 = vector.load %arg4[%c0_4, %c0_5] : memref<256x128xbf16, #tpu.memory_space<vmem>>, vector<256x128xbf16>
    %cst = arith.constant dense<0.000000e+00> : vector<256x128xf32>
    %6 = tpu.matmul %4, %5, %cst {dimension_numbers = #tpu.dot_dimension_numbers<[1], [0], [0], [1], [0, 0, 1, 1], [], []>} : vector<256x256xbf16>, vector<256x128xbf16>, vector<256x128xf32> -> vector<256x128xf32>
    %7 = arith.addf %3, %6 : vector<256x128xf32>
    %c0_6 = arith.constant 0 : index
    %c0_7 = arith.constant 0 : index
    %8 = vector.load %arg7[%c0_6, %c0_7] : memref<256x128xf32, #tpu.memory_space<vmem>>, vector<256x128xf32>
    tpu.vector_store %arg7[%c0_6, %c0_7], %7 {strides = array<i32>} : memref<256x128xf32, #tpu.memory_space<vmem>>, vector<256x128xf32>,
    %c0_i32_8 = arith.constant 0 : i32
    %9 = arith.cmpi eq, %arg2, %c0_i32_8 : i32
    %10 = arith.extui %9 : i1 to i32
    %c0_i32_9 = arith.constant 0 : i32
    %11 = arith.cmpi ne, %10, %c0_i32_9 : i32
    scf.if %11 {
      %c0_10 = arith.constant 0 : index
      %c0_11 = arith.constant 0 : index
      %12 = vector.load %arg7[%c0_10, %c0_11] : memref<256x128xf32, #tpu.memory_space<vmem>>, vector<256x128xf32>
      %c0_12 = arith.constant 0 : index
      %c0_13 = arith.constant 0 : index
      %13 = vector.load %arg5[%c0_12, %c0_13] : memref<1x128xf32, #tpu.memory_space<vmem>>, vector<1x128xf32>
      %14 = vector.broadcast %13 : vector<1x128xf32> to vector<256x128xf32>
      %15 = arith.addf %12, %14 : vector<256x128xf32>
      %cst_14 = arith.constant 0.000000e+00 : f32
      %16 = vector.broadcast %cst_14 : f32 to vector<256x128xf32>
      %17 = arith.maximumf %15, %16 : vector<256x128xf32>
      %18 = arith.truncf %17 : vector<256x128xf32> to vector<256x128xbf16>
      %c0_15 = arith.constant 0 : index
      %c0_16 = arith.constant 0 : index
      %19 = vector.load %arg6[%c0_15, %c0_16] : memref<256x128xbf16, #tpu.memory_space<vmem>>, vector<256x128xbf16>
      tpu.vector_store %arg6[%c0_15, %c0_16], %18 {strides = array<i32>} : memref<256x128xbf16, #tpu.memory_space<vmem>>, vector<256x128xbf16>,
    } else {
    }
    return
  }
  func.func @transform_0(%arg0: i32, %arg1: i32, %arg2: i32) -> (i32, i32) {
    %c0_i32 = arith.constant 0 : i32
    return %arg0, %arg2 : i32, i32
  }
  func.func @transform_1(%arg0: i32, %arg1: i32, %arg2: i32) -> (i32, i32) {
    %c0_i32 = arith.constant 0 : i32
    return %arg2, %arg1 : i32, i32
  }
  func.func @transform_2(%arg0: i32, %arg1: i32, %arg2: i32) -> (i32, i32) {
    %c0_i32 = arith.constant 0 : i32
    %c0_i32_0 = arith.constant 0 : i32
    return %c0_i32, %arg1 : i32, i32
  }
  func.func @transform_3(%arg0: i32, %arg1: i32, %arg2: i32) -> (i32, i32) {
    %c0_i32 = arith.constant 0 : i32
    return %arg0, %arg1 : i32, i32
  }
}

module attributes {stable_mosaic.version = 11 : i64} {
  func.func @_mm_kernel(%arg0: i32, %arg1: i32, %arg2: i32, %arg3: memref<128x128xbf16, #tpu.memory_space<vmem>>, %arg4: memref<128x128xbf16, #tpu.memory_space<vmem>>, %arg5: memref<1x128xf32, #tpu.memory_space<vmem>>, %arg6: memref<128x128xbf16, #tpu.memory_space<vmem>>, %arg7: memref<128x128xf32, #tpu.memory_space<vmem>>) attributes {dimension_semantics = [#tpu.dimension_semantics<parallel>, #tpu.dimension_semantics<parallel>, #tpu.dimension_semantics<arbitrary>], iteration_bounds = array<i64: 1, 1, 1>, scalar_prefetch = 0 : i64, scratch_operands = 1 : i64, tpu.core_type = #tpu.core_type<tc>, window_params = [{transform_indices = @transform_0, window_bounds = array<i64: 128, 128>}, {transform_indices = @transform_1, window_bounds = array<i64: 128, 128>}, {transform_indices = @transform_2, window_bounds = array<i64: 1, 128>}, {transform_indices = @transform_3, window_bounds = array<i64: 128, 128>}]} {
    %c0_i32 = arith.constant 0 : i32
    %0 = arith.cmpi eq, %arg2, %c0_i32 : i32
    %1 = arith.extui %0 : i1 to i32
    %c0_i32_0 = arith.constant 0 : i32
    %2 = arith.cmpi ne, %1, %c0_i32_0 : i32
    scf.if %2 {
      %cst_10 = arith.constant 0.000000e+00 : f32
      %12 = vector.broadcast %cst_10 : f32 to vector<128x128xf32>
      %c0_11 = arith.constant 0 : index
      %c0_12 = arith.constant 0 : index
      %13 = vector.load %arg7[%c0_11, %c0_12] : memref<128x128xf32, #tpu.memory_space<vmem>>, vector<128x128xf32>
      tpu.vector_store %arg7[%c0_11, %c0_12], %12 {strides = array<i32>} : memref<128x128xf32, #tpu.memory_space<vmem>>, vector<128x128xf32>,
    } else {
    }
    %c0 = arith.constant 0 : index
    %c0_1 = arith.constant 0 : index
    %3 = vector.load %arg7[%c0, %c0_1] : memref<128x128xf32, #tpu.memory_space<vmem>>, vector<128x128xf32>
    %c0_2 = arith.constant 0 : index
    %c0_3 = arith.constant 0 : index
    %4 = vector.load %arg3[%c0_2, %c0_3] : memref<128x128xbf16, #tpu.memory_space<vmem>>, vector<128x128xbf16>
    %c0_4 = arith.constant 0 : index
    %c0_5 = arith.constant 0 : index
    %5 = vector.load %arg4[%c0_4, %c0_5] : memref<128x128xbf16, #tpu.memory_space<vmem>>, vector<128x128xbf16>
    %cst = arith.constant dense<0.000000e+00> : vector<128x128xf32>
    %6 = tpu.matmul %4, %5, %cst {dimension_numbers = #tpu.dot_dimension_numbers<[1], [0], [0], [1], [0, 0, 1, 1], [], []>} : vector<128x128xbf16>, vector<128x128xbf16>, vector<128x128xf32> -> vector<128x128xf32>
    %7 = arith.addf %3, %6 : vector<128x128xf32>
    %c0_6 = arith.constant 0 : index
    %c0_7 = arith.constant 0 : index
    %8 = vector.load %arg7[%c0_6, %c0_7] : memref<128x128xf32, #tpu.memory_space<vmem>>, vector<128x128xf32>
    tpu.vector_store %arg7[%c0_6, %c0_7], %7 {strides = array<i32>} : memref<128x128xf32, #tpu.memory_space<vmem>>, vector<128x128xf32>,
    %c0_i32_8 = arith.constant 0 : i32
    %9 = arith.cmpi eq, %arg2, %c0_i32_8 : i32
    %10 = arith.extui %9 : i1 to i32
    %c0_i32_9 = arith.constant 0 : i32
    %11 = arith.cmpi ne, %10, %c0_i32_9 : i32
    scf.if %11 {
      %c0_10 = arith.constant 0 : index
      %c0_11 = arith.constant 0 : index
      %12 = vector.load %arg7[%c0_10, %c0_11] : memref<128x128xf32, #tpu.memory_space<vmem>>, vector<128x128xf32>
      %c0_12 = arith.constant 0 : index
      %c0_13 = arith.constant 0 : index
      %13 = vector.load %arg5[%c0_12, %c0_13] : memref<1x128xf32, #tpu.memory_space<vmem>>, vector<1x128xf32>
      %14 = vector.broadcast %13 : vector<1x128xf32> to vector<128x128xf32>
      %15 = arith.addf %12, %14 : vector<128x128xf32>
      %16 = arith.truncf %15 : vector<128x128xf32> to vector<128x128xbf16>
      %c0_14 = arith.constant 0 : index
      %c0_15 = arith.constant 0 : index
      %17 = vector.load %arg6[%c0_14, %c0_15] : memref<128x128xbf16, #tpu.memory_space<vmem>>, vector<128x128xbf16>
      tpu.vector_store %arg6[%c0_14, %c0_15], %16 {strides = array<i32>} : memref<128x128xbf16, #tpu.memory_space<vmem>>, vector<128x128xbf16>,
    } else {
    }
    return
  }
  func.func @transform_0(%arg0: i32, %arg1: i32, %arg2: i32) -> (i32, i32) {
    %c0_i32 = arith.constant 0 : i32
    return %arg0, %arg2 : i32, i32
  }
  func.func @transform_1(%arg0: i32, %arg1: i32, %arg2: i32) -> (i32, i32) {
    %c0_i32 = arith.constant 0 : i32
    return %arg2, %arg1 : i32, i32
  }
  func.func @transform_2(%arg0: i32, %arg1: i32, %arg2: i32) -> (i32, i32) {
    %c0_i32 = arith.constant 0 : i32
    %c0_i32_0 = arith.constant 0 : i32
    return %c0_i32, %arg1 : i32, i32
  }
  func.func @transform_3(%arg0: i32, %arg1: i32, %arg2: i32) -> (i32, i32) {
    %c0_i32 = arith.constant 0 : i32
    return %arg0, %arg1 : i32, i32
  }
}

module attributes {stable_mosaic.version = 11 : i64} {
  func.func @_mm_kernel(%arg0: i32, %arg1: i32, %arg2: i32, %arg3: memref<128x128xbf16, #tpu.memory_space<vmem>>, %arg4: memref<128x128xbf16, #tpu.memory_space<vmem>>, %arg5: memref<1x128xf32, #tpu.memory_space<vmem>>, %arg6: memref<128x128xbf16, #tpu.memory_space<vmem>>, %arg7: memref<128x128xf32, #tpu.memory_space<vmem>>) attributes {dimension_semantics = [#tpu.dimension_semantics<parallel>, #tpu.dimension_semantics<parallel>, #tpu.dimension_semantics<arbitrary>], iteration_bounds = array<i64: 1, 1, 1>, scalar_prefetch = 0 : i64, scratch_operands = 1 : i64, tpu.core_type = #tpu.core_type<tc>, window_params = [{transform_indices = @transform_0, window_bounds = array<i64: 128, 128>}, {transform_indices = @transform_1, window_bounds = array<i64: 128, 128>}, {transform_indices = @transform_2, window_bounds = array<i64: 1, 128>}, {transform_indices = @transform_3, window_bounds = array<i64: 128, 128>}]} {
    %c0_i32 = arith.constant 0 : i32
    %0 = arith.cmpi eq, %arg2, %c0_i32 : i32
    %1 = arith.extui %0 : i1 to i32
    %c0_i32_0 = arith.constant 0 : i32
    %2 = arith.cmpi ne, %1, %c0_i32_0 : i32
    scf.if %2 {
      %cst_10 = arith.constant 0.000000e+00 : f32
      %12 = vector.broadcast %cst_10 : f32 to vector<128x128xf32>
      %c0_11 = arith.constant 0 : index
      %c0_12 = arith.constant 0 : index
      %13 = vector.load %arg7[%c0_11, %c0_12] : memref<128x128xf32, #tpu.memory_space<vmem>>, vector<128x128xf32>
      tpu.vector_store %arg7[%c0_11, %c0_12], %12 {strides = array<i32>} : memref<128x128xf32, #tpu.memory_space<vmem>>, vector<128x128xf32>,
    } else {
    }
    %c0 = arith.constant 0 : index
    %c0_1 = arith.constant 0 : index
    %3 = vector.load %arg7[%c0, %c0_1] : memref<128x128xf32, #tpu.memory_space<vmem>>, vector<128x128xf32>
    %c0_2 = arith.constant 0 : index
    %c0_3 = arith.constant 0 : index
    %4 = vector.load %arg3[%c0_2, %c0_3] : memref<128x128xbf16, #tpu.memory_space<vmem>>, vector<128x128xbf16>
    %c0_4 = arith.constant 0 : index
    %c0_5 = arith.constant 0 : index
    %5 = vector.load %arg4[%c0_4, %c0_5] : memref<128x128xbf16, #tpu.memory_space<vmem>>, vector<128x128xbf16>
    %cst = arith.constant dense<0.000000e+00> : vector<128x128xf32>
    %6 = tpu.matmul %4, %5, %cst {dimension_numbers = #tpu.dot_dimension_numbers<[1], [0], [0], [1], [0, 0, 1, 1], [], []>} : vector<128x128xbf16>, vector<128x128xbf16>, vector<128x128xf32> -> vector<128x128xf32>
    %7 = arith.addf %3, %6 : vector<128x128xf32>
    %c0_6 = arith.constant 0 : index
    %c0_7 = arith.constant 0 : index
    %8 = vector.load %arg7[%c0_6, %c0_7] : memref<128x128xf32, #tpu.memory_space<vmem>>, vector<128x128xf32>
    tpu.vector_store %arg7[%c0_6, %c0_7], %7 {strides = array<i32>} : memref<128x128xf32, #tpu.memory_space<vmem>>, vector<128x128xf32>,
    %c0_i32_8 = arith.constant 0 : i32
    %9 = arith.cmpi eq, %arg2, %c0_i32_8 : i32
    %10 = arith.extui %9 : i1 to i32
    %c0_i32_9 = arith.constant 0 : i32
    %11 = arith.cmpi ne, %10, %c0_i32_9 : i32
    scf.if %11 {
      %c0_10 = arith.constant 0 : index
      %c0_11 = arith.constant 0 : index
      %12 = vector.load %arg7[%c0_10, %c0_11] : memref<128x128xf32, #tpu.memory_space<vmem>>, vector<128x128xf32>
      %c0_12 = arith.constant 0 : index
      %c0_13 = arith.constant 0 : index
      %13 = vector.load %arg5[%c0_12, %c0_13] : memref<1x128xf32, #tpu.memory_space<vmem>>, vector<1x128xf32>
      %14 = vector.broadcast %13 : vector<1x128xf32> to vector<128x128xf32>
      %15 = arith.addf %12, %14 : vector<128x128xf32>
      %cst_14 = arith.constant 0.000000e+00 : f32
      %16 = vector.broadcast %cst_14 : f32 to vector<128x128xf32>
      %17 = arith.maximumf %15, %16 : vector<128x128xf32>
      %18 = arith.truncf %17 : vector<128x128xf32> to vector<128x128xbf16>
      %c0_15 = arith.constant 0 : index
      %c0_16 = arith.constant 0 : index
      %19 = vector.load %arg6[%c0_15, %c0_16] : memref<128x128xbf16, #tpu.memory_space<vmem>>, vector<128x128xbf16>
      tpu.vector_store %arg6[%c0_15, %c0_16], %18 {strides = array<i32>} : memref<128x128xbf16, #tpu.memory_space<vmem>>, vector<128x128xbf16>,
    } else {
    }
    return
  }
  func.func @transform_0(%arg0: i32, %arg1: i32, %arg2: i32) -> (i32, i32) {
    %c0_i32 = arith.constant 0 : i32
    return %arg0, %arg2 : i32, i32
  }
  func.func @transform_1(%arg0: i32, %arg1: i32, %arg2: i32) -> (i32, i32) {
    %c0_i32 = arith.constant 0 : i32
    return %arg2, %arg1 : i32, i32
  }
  func.func @transform_2(%arg0: i32, %arg1: i32, %arg2: i32) -> (i32, i32) {
    %c0_i32 = arith.constant 0 : i32
    %c0_i32_0 = arith.constant 0 : i32
    return %c0_i32, %arg1 : i32, i32
  }
  func.func @transform_3(%arg0: i32, %arg1: i32, %arg2: i32) -> (i32, i32) {
    %c0_i32 = arith.constant 0 : i32
    return %arg0, %arg1 : i32, i32
  }
}

module attributes {stable_mosaic.version = 11 : i64} {
  func.func @_mm_kernel(%arg0: i32, %arg1: i32, %arg2: i32, %arg3: memref<128x384xbf16, #tpu.memory_space<vmem>>, %arg4: memref<384x128xbf16, #tpu.memory_space<vmem>>, %arg5: memref<1x128xf32, #tpu.memory_space<vmem>>, %arg6: memref<128x128xbf16, #tpu.memory_space<vmem>>, %arg7: memref<128x128xf32, #tpu.memory_space<vmem>>) attributes {dimension_semantics = [#tpu.dimension_semantics<parallel>, #tpu.dimension_semantics<parallel>, #tpu.dimension_semantics<arbitrary>], iteration_bounds = array<i64: 1, 1, 3>, scalar_prefetch = 0 : i64, scratch_operands = 1 : i64, tpu.core_type = #tpu.core_type<tc>, window_params = [{transform_indices = @transform_0, window_bounds = array<i64: 128, 384>}, {transform_indices = @transform_1, window_bounds = array<i64: 384, 128>}, {transform_indices = @transform_2, window_bounds = array<i64: 1, 128>}, {transform_indices = @transform_3, window_bounds = array<i64: 128, 128>}]} {
    %c0_i32 = arith.constant 0 : i32
    %0 = arith.cmpi eq, %arg2, %c0_i32 : i32
    %1 = arith.extui %0 : i1 to i32
    %c0_i32_0 = arith.constant 0 : i32
    %2 = arith.cmpi ne, %1, %c0_i32_0 : i32
    scf.if %2 {
      %cst_9 = arith.constant 0.000000e+00 : f32
      %12 = vector.broadcast %cst_9 : f32 to vector<128x128xf32>
      %c0_10 = arith.constant 0 : index
      %c0_11 = arith.constant 0 : index
      %13 = vector.load %arg7[%c0_10, %c0_11] : memref<128x128xf32, #tpu.memory_space<vmem>>, vector<128x128xf32>
      tpu.vector_store %arg7[%c0_10, %c0_11], %12 {strides = array<i32>} : memref<128x128xf32, #tpu.memory_space<vmem>>, vector<128x128xf32>,
    } else {
    }
    %c0 = arith.constant 0 : index
    %c0_1 = arith.constant 0 : index
    %3 = vector.load %arg7[%c0, %c0_1] : memref<128x128xf32, #tpu.memory_space<vmem>>, vector<128x128xf32>
    %c0_2 = arith.constant 0 : index
    %c0_3 = arith.constant 0 : index
    %4 = vector.load %arg3[%c0_2, %c0_3] : memref<128x384xbf16, #tpu.memory_space<vmem>>, vector<128x384xbf16>
    %c0_4 = arith.constant 0 : index
    %c0_5 = arith.constant 0 : index
    %5 = vector.load %arg4[%c0_4, %c0_5] : memref<384x128xbf16, #tpu.memory_space<vmem>>, vector<384x128xbf16>
    %cst = arith.constant dense<0.000000e+00> : vector<128x128xf32>
    %6 = tpu.matmul %4, %5, %cst {dimension_numbers = #tpu.dot_dimension_numbers<[1], [0], [0], [1], [0, 0, 1, 1], [], []>} : vector<128x384xbf16>, vector<384x128xbf16>, vector<128x128xf32> -> vector<128x128xf32>
    %7 = arith.addf %3, %6 : vector<128x128xf32>
    %c0_6 = arith.constant 0 : index
    %c0_7 = arith.constant 0 : index
    %8 = vector.load %arg7[%c0_6, %c0_7] : memref<128x128xf32, #tpu.memory_space<vmem>>, vector<128x128xf32>
    tpu.vector_store %arg7[%c0_6, %c0_7], %7 {strides = array<i32>} : memref<128x128xf32, #tpu.memory_space<vmem>>, vector<128x128xf32>,
    %c2_i32 = arith.constant 2 : i32
    %9 = arith.cmpi eq, %arg2, %c2_i32 : i32
    %10 = arith.extui %9 : i1 to i32
    %c0_i32_8 = arith.constant 0 : i32
    %11 = arith.cmpi ne, %10, %c0_i32_8 : i32
    scf.if %11 {
      %c0_9 = arith.constant 0 : index
      %c0_10 = arith.constant 0 : index
      %12 = vector.load %arg7[%c0_9, %c0_10] : memref<128x128xf32, #tpu.memory_space<vmem>>, vector<128x128xf32>
      %c0_11 = arith.constant 0 : index
      %c0_12 = arith.constant 0 : index
      %13 = vector.load %arg5[%c0_11, %c0_12] : memref<1x128xf32, #tpu.memory_space<vmem>>, vector<1x128xf32>
      %14 = vector.broadcast %13 : vector<1x128xf32> to vector<128x128xf32>
      %15 = arith.addf %12, %14 : vector<128x128xf32>
      %cst_13 = arith.constant 0.000000e+00 : f32
      %16 = vector.broadcast %cst_13 : f32 to vector<128x128xf32>
      %17 = arith.maximumf %15, %16 : vector<128x128xf32>
      %18 = arith.truncf %17 : vector<128x128xf32> to vector<128x128xbf16>
      %c0_14 = arith.constant 0 : index
      %c0_15 = arith.constant 0 : index
      %19 = vector.load %arg6[%c0_14, %c0_15] : memref<128x128xbf16, #tpu.memory_space<vmem>>, vector<128x128xbf16>
      tpu.vector_store %arg6[%c0_14, %c0_15], %18 {strides = array<i32>} : memref<128x128xbf16, #tpu.memory_space<vmem>>, vector<128x128xbf16>,
    } else {
    }
    return
  }
  func.func @transform_0(%arg0: i32, %arg1: i32, %arg2: i32) -> (i32, i32) {
    %c0_i32 = arith.constant 0 : i32
    return %arg0, %arg2 : i32, i32
  }
  func.func @transform_1(%arg0: i32, %arg1: i32, %arg2: i32) -> (i32, i32) {
    %c0_i32 = arith.constant 0 : i32
    return %arg2, %arg1 : i32, i32
  }
  func.func @transform_2(%arg0: i32, %arg1: i32, %arg2: i32) -> (i32, i32) {
    %c0_i32 = arith.constant 0 : i32
    %c0_i32_0 = arith.constant 0 : i32
    return %c0_i32, %arg1 : i32, i32
  }
  func.func @transform_3(%arg0: i32, %arg1: i32, %arg2: i32) -> (i32, i32) {
    %c0_i32 = arith.constant 0 : i32
    return %arg0, %arg1 : i32, i32
  }
}

module attributes {stable_mosaic.version = 11 : i64} {
  func.func @_mm_res_kernel(%arg0: i32, %arg1: i32, %arg2: i32, %arg3: memref<128x128xbf16, #tpu.memory_space<vmem>>, %arg4: memref<128x128xbf16, #tpu.memory_space<vmem>>, %arg5: memref<1x128xf32, #tpu.memory_space<vmem>>, %arg6: memref<128x128xbf16, #tpu.memory_space<vmem>>, %arg7: memref<128x128xbf16, #tpu.memory_space<vmem>>, %arg8: memref<128x128xf32, #tpu.memory_space<vmem>>) attributes {dimension_semantics = [#tpu.dimension_semantics<parallel>, #tpu.dimension_semantics<parallel>, #tpu.dimension_semantics<arbitrary>], iteration_bounds = array<i64: 1, 1, 1>, scalar_prefetch = 0 : i64, scratch_operands = 1 : i64, tpu.core_type = #tpu.core_type<tc>, window_params = [{transform_indices = @transform_0, window_bounds = array<i64: 128, 128>}, {transform_indices = @transform_1, window_bounds = array<i64: 128, 128>}, {transform_indices = @transform_2, window_bounds = array<i64: 1, 128>}, {transform_indices = @transform_3, window_bounds = array<i64: 128, 128>}, {transform_indices = @transform_4, window_bounds = array<i64: 128, 128>}]} {
    %c0_i32 = arith.constant 0 : i32
    %0 = arith.cmpi eq, %arg2, %c0_i32 : i32
    %1 = arith.extui %0 : i1 to i32
    %c0_i32_0 = arith.constant 0 : i32
    %2 = arith.cmpi ne, %1, %c0_i32_0 : i32
    scf.if %2 {
      %cst_10 = arith.constant 0.000000e+00 : f32
      %12 = vector.broadcast %cst_10 : f32 to vector<128x128xf32>
      %c0_11 = arith.constant 0 : index
      %c0_12 = arith.constant 0 : index
      %13 = vector.load %arg8[%c0_11, %c0_12] : memref<128x128xf32, #tpu.memory_space<vmem>>, vector<128x128xf32>
      tpu.vector_store %arg8[%c0_11, %c0_12], %12 {strides = array<i32>} : memref<128x128xf32, #tpu.memory_space<vmem>>, vector<128x128xf32>,
    } else {
    }
    %c0 = arith.constant 0 : index
    %c0_1 = arith.constant 0 : index
    %3 = vector.load %arg8[%c0, %c0_1] : memref<128x128xf32, #tpu.memory_space<vmem>>, vector<128x128xf32>
    %c0_2 = arith.constant 0 : index
    %c0_3 = arith.constant 0 : index
    %4 = vector.load %arg3[%c0_2, %c0_3] : memref<128x128xbf16, #tpu.memory_space<vmem>>, vector<128x128xbf16>
    %c0_4 = arith.constant 0 : index
    %c0_5 = arith.constant 0 : index
    %5 = vector.load %arg4[%c0_4, %c0_5] : memref<128x128xbf16, #tpu.memory_space<vmem>>, vector<128x128xbf16>
    %cst = arith.constant dense<0.000000e+00> : vector<128x128xf32>
    %6 = tpu.matmul %4, %5, %cst {dimension_numbers = #tpu.dot_dimension_numbers<[1], [0], [0], [1], [0, 0, 1, 1], [], []>} : vector<128x128xbf16>, vector<128x128xbf16>, vector<128x128xf32> -> vector<128x128xf32>
    %7 = arith.addf %3, %6 : vector<128x128xf32>
    %c0_6 = arith.constant 0 : index
    %c0_7 = arith.constant 0 : index
    %8 = vector.load %arg8[%c0_6, %c0_7] : memref<128x128xf32, #tpu.memory_space<vmem>>, vector<128x128xf32>
    tpu.vector_store %arg8[%c0_6, %c0_7], %7 {strides = array<i32>} : memref<128x128xf32, #tpu.memory_space<vmem>>, vector<128x128xf32>,
    %c0_i32_8 = arith.constant 0 : i32
    %9 = arith.cmpi eq, %arg2, %c0_i32_8 : i32
    %10 = arith.extui %9 : i1 to i32
    %c0_i32_9 = arith.constant 0 : i32
    %11 = arith.cmpi ne, %10, %c0_i32_9 : i32
    scf.if %11 {
      %c0_10 = arith.constant 0 : index
      %c0_11 = arith.constant 0 : index
      %12 = vector.load %arg8[%c0_10, %c0_11] : memref<128x128xf32, #tpu.memory_space<vmem>>, vector<128x128xf32>
      %c0_12 = arith.constant 0 : index
      %c0_13 = arith.constant 0 : index
      %13 = vector.load %arg5[%c0_12, %c0_13] : memref<1x128xf32, #tpu.memory_space<vmem>>, vector<1x128xf32>
      %c0_14 = arith.constant 0 : index
      %c0_15 = arith.constant 0 : index
      %14 = vector.load %arg6[%c0_14, %c0_15] : memref<128x128xbf16, #tpu.memory_space<vmem>>, vector<128x128xbf16>
      %15 = vector.broadcast %13 : vector<1x128xf32> to vector<128x128xf32>
      %16 = arith.addf %12, %15 : vector<128x128xf32>
      %17 = arith.extf %14 : vector<128x128xbf16> to vector<128x128xf32>
      %18 = arith.addf %16, %17 : vector<128x128xf32>
      %cst_16 = arith.constant 0.000000e+00 : f32
      %19 = vector.broadcast %cst_16 : f32 to vector<128x128xf32>
      %20 = arith.maximumf %18, %19 : vector<128x128xf32>
      %21 = arith.truncf %20 : vector<128x128xf32> to vector<128x128xbf16>
      %c0_17 = arith.constant 0 : index
      %c0_18 = arith.constant 0 : index
      %22 = vector.load %arg7[%c0_17, %c0_18] : memref<128x128xbf16, #tpu.memory_space<vmem>>, vector<128x128xbf16>
      tpu.vector_store %arg7[%c0_17, %c0_18], %21 {strides = array<i32>} : memref<128x128xbf16, #tpu.memory_space<vmem>>, vector<128x128xbf16>,
    } else {
    }
    return
  }
  func.func @transform_0(%arg0: i32, %arg1: i32, %arg2: i32) -> (i32, i32) {
    %c0_i32 = arith.constant 0 : i32
    return %arg0, %arg2 : i32, i32
  }
  func.func @transform_1(%arg0: i32, %arg1: i32, %arg2: i32) -> (i32, i32) {
    %c0_i32 = arith.constant 0 : i32
    return %arg2, %arg1 : i32, i32
  }
  func.func @transform_2(%arg0: i32, %arg1: i32, %arg2: i32) -> (i32, i32) {
    %c0_i32 = arith.constant 0 : i32
    %c0_i32_0 = arith.constant 0 : i32
    return %c0_i32, %arg1 : i32, i32
  }
  func.func @transform_3(%arg0: i32, %arg1: i32, %arg2: i32) -> (i32, i32) {
    %c0_i32 = arith.constant 0 : i32
    return %arg0, %arg1 : i32, i32
  }
  func.func @transform_4(%arg0: i32, %arg1: i32, %arg2: i32) -> (i32, i32) {
    %c0_i32 = arith.constant 0 : i32
    return %arg0, %arg1 : i32, i32
  }
}

module attributes {stable_mosaic.version = 11 : i64} {
  func.func @_mm_kernel(%arg0: i32, %arg1: i32, %arg2: i32, %arg3: memref<32x128xbf16, #tpu.memory_space<vmem>>, %arg4: memref<128x128xbf16, #tpu.memory_space<vmem>>, %arg5: memref<1x128xf32, #tpu.memory_space<vmem>>, %arg6: memref<32x128xbf16, #tpu.memory_space<vmem>>, %arg7: memref<32x128xf32, #tpu.memory_space<vmem>>) attributes {dimension_semantics = [#tpu.dimension_semantics<parallel>, #tpu.dimension_semantics<parallel>, #tpu.dimension_semantics<arbitrary>], iteration_bounds = array<i64: 1, 1, 1>, scalar_prefetch = 0 : i64, scratch_operands = 1 : i64, tpu.core_type = #tpu.core_type<tc>, window_params = [{transform_indices = @transform_0, window_bounds = array<i64: 32, 128>}, {transform_indices = @transform_1, window_bounds = array<i64: 128, 128>}, {transform_indices = @transform_2, window_bounds = array<i64: 1, 128>}, {transform_indices = @transform_3, window_bounds = array<i64: 32, 128>}]} {
    %c0_i32 = arith.constant 0 : i32
    %0 = arith.cmpi eq, %arg2, %c0_i32 : i32
    %1 = arith.extui %0 : i1 to i32
    %c0_i32_0 = arith.constant 0 : i32
    %2 = arith.cmpi ne, %1, %c0_i32_0 : i32
    scf.if %2 {
      %cst_10 = arith.constant 0.000000e+00 : f32
      %12 = vector.broadcast %cst_10 : f32 to vector<32x128xf32>
      %c0_11 = arith.constant 0 : index
      %c0_12 = arith.constant 0 : index
      %13 = vector.load %arg7[%c0_11, %c0_12] : memref<32x128xf32, #tpu.memory_space<vmem>>, vector<32x128xf32>
      tpu.vector_store %arg7[%c0_11, %c0_12], %12 {strides = array<i32>} : memref<32x128xf32, #tpu.memory_space<vmem>>, vector<32x128xf32>,
    } else {
    }
    %c0 = arith.constant 0 : index
    %c0_1 = arith.constant 0 : index
    %3 = vector.load %arg7[%c0, %c0_1] : memref<32x128xf32, #tpu.memory_space<vmem>>, vector<32x128xf32>
    %c0_2 = arith.constant 0 : index
    %c0_3 = arith.constant 0 : index
    %4 = vector.load %arg3[%c0_2, %c0_3] : memref<32x128xbf16, #tpu.memory_space<vmem>>, vector<32x128xbf16>
    %c0_4 = arith.constant 0 : index
    %c0_5 = arith.constant 0 : index
    %5 = vector.load %arg4[%c0_4, %c0_5] : memref<128x128xbf16, #tpu.memory_space<vmem>>, vector<128x128xbf16>
    %cst = arith.constant dense<0.000000e+00> : vector<32x128xf32>
    %6 = tpu.matmul %4, %5, %cst {dimension_numbers = #tpu.dot_dimension_numbers<[1], [0], [0], [1], [0, 0, 1, 1], [], []>} : vector<32x128xbf16>, vector<128x128xbf16>, vector<32x128xf32> -> vector<32x128xf32>
    %7 = arith.addf %3, %6 : vector<32x128xf32>
    %c0_6 = arith.constant 0 : index
    %c0_7 = arith.constant 0 : index
    %8 = vector.load %arg7[%c0_6, %c0_7] : memref<32x128xf32, #tpu.memory_space<vmem>>, vector<32x128xf32>
    tpu.vector_store %arg7[%c0_6, %c0_7], %7 {strides = array<i32>} : memref<32x128xf32, #tpu.memory_space<vmem>>, vector<32x128xf32>,
    %c0_i32_8 = arith.constant 0 : i32
    %9 = arith.cmpi eq, %arg2, %c0_i32_8 : i32
    %10 = arith.extui %9 : i1 to i32
    %c0_i32_9 = arith.constant 0 : i32
    %11 = arith.cmpi ne, %10, %c0_i32_9 : i32
    scf.if %11 {
      %c0_10 = arith.constant 0 : index
      %c0_11 = arith.constant 0 : index
      %12 = vector.load %arg7[%c0_10, %c0_11] : memref<32x128xf32, #tpu.memory_space<vmem>>, vector<32x128xf32>
      %c0_12 = arith.constant 0 : index
      %c0_13 = arith.constant 0 : index
      %13 = vector.load %arg5[%c0_12, %c0_13] : memref<1x128xf32, #tpu.memory_space<vmem>>, vector<1x128xf32>
      %14 = vector.broadcast %13 : vector<1x128xf32> to vector<32x128xf32>
      %15 = arith.addf %12, %14 : vector<32x128xf32>
      %16 = arith.truncf %15 : vector<32x128xf32> to vector<32x128xbf16>
      %c0_14 = arith.constant 0 : index
      %c0_15 = arith.constant 0 : index
      %17 = vector.load %arg6[%c0_14, %c0_15] : memref<32x128xbf16, #tpu.memory_space<vmem>>, vector<32x128xbf16>
      tpu.vector_store %arg6[%c0_14, %c0_15], %16 {strides = array<i32>} : memref<32x128xbf16, #tpu.memory_space<vmem>>, vector<32x128xbf16>,
    } else {
    }
    return
  }
  func.func @transform_0(%arg0: i32, %arg1: i32, %arg2: i32) -> (i32, i32) {
    %c0_i32 = arith.constant 0 : i32
    return %arg0, %arg2 : i32, i32
  }
  func.func @transform_1(%arg0: i32, %arg1: i32, %arg2: i32) -> (i32, i32) {
    %c0_i32 = arith.constant 0 : i32
    return %arg2, %arg1 : i32, i32
  }
  func.func @transform_2(%arg0: i32, %arg1: i32, %arg2: i32) -> (i32, i32) {
    %c0_i32 = arith.constant 0 : i32
    %c0_i32_0 = arith.constant 0 : i32
    return %c0_i32, %arg1 : i32, i32
  }
  func.func @transform_3(%arg0: i32, %arg1: i32, %arg2: i32) -> (i32, i32) {
    %c0_i32 = arith.constant 0 : i32
    return %arg0, %arg1 : i32, i32
  }
}

module attributes {stable_mosaic.version = 11 : i64} {
  func.func @_mm_res_kernel(%arg0: i32, %arg1: i32, %arg2: i32, %arg3: memref<32x128xbf16, #tpu.memory_space<vmem>>, %arg4: memref<128x128xbf16, #tpu.memory_space<vmem>>, %arg5: memref<1x128xf32, #tpu.memory_space<vmem>>, %arg6: memref<32x128xbf16, #tpu.memory_space<vmem>>, %arg7: memref<32x128xbf16, #tpu.memory_space<vmem>>, %arg8: memref<32x128xf32, #tpu.memory_space<vmem>>) attributes {dimension_semantics = [#tpu.dimension_semantics<parallel>, #tpu.dimension_semantics<parallel>, #tpu.dimension_semantics<arbitrary>], iteration_bounds = array<i64: 1, 1, 1>, scalar_prefetch = 0 : i64, scratch_operands = 1 : i64, tpu.core_type = #tpu.core_type<tc>, window_params = [{transform_indices = @transform_0, window_bounds = array<i64: 32, 128>}, {transform_indices = @transform_1, window_bounds = array<i64: 128, 128>}, {transform_indices = @transform_2, window_bounds = array<i64: 1, 128>}, {transform_indices = @transform_3, window_bounds = array<i64: 32, 128>}, {transform_indices = @transform_4, window_bounds = array<i64: 32, 128>}]} {
    %c0_i32 = arith.constant 0 : i32
    %0 = arith.cmpi eq, %arg2, %c0_i32 : i32
    %1 = arith.extui %0 : i1 to i32
    %c0_i32_0 = arith.constant 0 : i32
    %2 = arith.cmpi ne, %1, %c0_i32_0 : i32
    scf.if %2 {
      %cst_10 = arith.constant 0.000000e+00 : f32
      %12 = vector.broadcast %cst_10 : f32 to vector<32x128xf32>
      %c0_11 = arith.constant 0 : index
      %c0_12 = arith.constant 0 : index
      %13 = vector.load %arg8[%c0_11, %c0_12] : memref<32x128xf32, #tpu.memory_space<vmem>>, vector<32x128xf32>
      tpu.vector_store %arg8[%c0_11, %c0_12], %12 {strides = array<i32>} : memref<32x128xf32, #tpu.memory_space<vmem>>, vector<32x128xf32>,
    } else {
    }
    %c0 = arith.constant 0 : index
    %c0_1 = arith.constant 0 : index
    %3 = vector.load %arg8[%c0, %c0_1] : memref<32x128xf32, #tpu.memory_space<vmem>>, vector<32x128xf32>
    %c0_2 = arith.constant 0 : index
    %c0_3 = arith.constant 0 : index
    %4 = vector.load %arg3[%c0_2, %c0_3] : memref<32x128xbf16, #tpu.memory_space<vmem>>, vector<32x128xbf16>
    %c0_4 = arith.constant 0 : index
    %c0_5 = arith.constant 0 : index
    %5 = vector.load %arg4[%c0_4, %c0_5] : memref<128x128xbf16, #tpu.memory_space<vmem>>, vector<128x128xbf16>
    %cst = arith.constant dense<0.000000e+00> : vector<32x128xf32>
    %6 = tpu.matmul %4, %5, %cst {dimension_numbers = #tpu.dot_dimension_numbers<[1], [0], [0], [1], [0, 0, 1, 1], [], []>} : vector<32x128xbf16>, vector<128x128xbf16>, vector<32x128xf32> -> vector<32x128xf32>
    %7 = arith.addf %3, %6 : vector<32x128xf32>
    %c0_6 = arith.constant 0 : index
    %c0_7 = arith.constant 0 : index
    %8 = vector.load %arg8[%c0_6, %c0_7] : memref<32x128xf32, #tpu.memory_space<vmem>>, vector<32x128xf32>
    tpu.vector_store %arg8[%c0_6, %c0_7], %7 {strides = array<i32>} : memref<32x128xf32, #tpu.memory_space<vmem>>, vector<32x128xf32>,
    %c0_i32_8 = arith.constant 0 : i32
    %9 = arith.cmpi eq, %arg2, %c0_i32_8 : i32
    %10 = arith.extui %9 : i1 to i32
    %c0_i32_9 = arith.constant 0 : i32
    %11 = arith.cmpi ne, %10, %c0_i32_9 : i32
    scf.if %11 {
      %c0_10 = arith.constant 0 : index
      %c0_11 = arith.constant 0 : index
      %12 = vector.load %arg8[%c0_10, %c0_11] : memref<32x128xf32, #tpu.memory_space<vmem>>, vector<32x128xf32>
      %c0_12 = arith.constant 0 : index
      %c0_13 = arith.constant 0 : index
      %13 = vector.load %arg5[%c0_12, %c0_13] : memref<1x128xf32, #tpu.memory_space<vmem>>, vector<1x128xf32>
      %c0_14 = arith.constant 0 : index
      %c0_15 = arith.constant 0 : index
      %14 = vector.load %arg6[%c0_14, %c0_15] : memref<32x128xbf16, #tpu.memory_space<vmem>>, vector<32x128xbf16>
      %15 = vector.broadcast %13 : vector<1x128xf32> to vector<32x128xf32>
      %16 = arith.addf %12, %15 : vector<32x128xf32>
      %17 = arith.extf %14 : vector<32x128xbf16> to vector<32x128xf32>
      %18 = arith.addf %16, %17 : vector<32x128xf32>
      %cst_16 = arith.constant 0.000000e+00 : f32
      %19 = vector.broadcast %cst_16 : f32 to vector<32x128xf32>
      %20 = arith.maximumf %18, %19 : vector<32x128xf32>
      %21 = arith.truncf %20 : vector<32x128xf32> to vector<32x128xbf16>
      %c0_17 = arith.constant 0 : index
      %c0_18 = arith.constant 0 : index
      %22 = vector.load %arg7[%c0_17, %c0_18] : memref<32x128xbf16, #tpu.memory_space<vmem>>, vector<32x128xbf16>
      tpu.vector_store %arg7[%c0_17, %c0_18], %21 {strides = array<i32>} : memref<32x128xbf16, #tpu.memory_space<vmem>>, vector<32x128xbf16>,
    } else {
    }
    return
  }
  func.func @transform_0(%arg0: i32, %arg1: i32, %arg2: i32) -> (i32, i32) {
    %c0_i32 = arith.constant 0 : i32
    return %arg0, %arg2 : i32, i32
  }
  func.func @transform_1(%arg0: i32, %arg1: i32, %arg2: i32) -> (i32, i32) {
    %c0_i32 = arith.constant 0 : i32
    return %arg2, %arg1 : i32, i32
  }
  func.func @transform_2(%arg0: i32, %arg1: i32, %arg2: i32) -> (i32, i32) {
    %c0_i32 = arith.constant 0 : i32
    %c0_i32_0 = arith.constant 0 : i32
    return %c0_i32, %arg1 : i32, i32
  }
  func.func @transform_3(%arg0: i32, %arg1: i32, %arg2: i32) -> (i32, i32) {
    %c0_i32 = arith.constant 0 : i32
    return %arg0, %arg1 : i32, i32
  }
  func.func @transform_4(%arg0: i32, %arg1: i32, %arg2: i32) -> (i32, i32) {
    %c0_i32 = arith.constant 0 : i32
    return %arg0, %arg1 : i32, i32
  }
}

module attributes {stable_mosaic.version = 11 : i64} {
  func.func @_mm_kernel(%arg0: i32, %arg1: i32, %arg2: i32, %arg3: memref<32x128xbf16, #tpu.memory_space<vmem>>, %arg4: memref<128x128xbf16, #tpu.memory_space<vmem>>, %arg5: memref<1x128xf32, #tpu.memory_space<vmem>>, %arg6: memref<32x128xbf16, #tpu.memory_space<vmem>>, %arg7: memref<32x128xf32, #tpu.memory_space<vmem>>) attributes {dimension_semantics = [#tpu.dimension_semantics<parallel>, #tpu.dimension_semantics<parallel>, #tpu.dimension_semantics<arbitrary>], iteration_bounds = array<i64: 1, 1, 1>, scalar_prefetch = 0 : i64, scratch_operands = 1 : i64, tpu.core_type = #tpu.core_type<tc>, window_params = [{transform_indices = @transform_0, window_bounds = array<i64: 32, 128>}, {transform_indices = @transform_1, window_bounds = array<i64: 128, 128>}, {transform_indices = @transform_2, window_bounds = array<i64: 1, 128>}, {transform_indices = @transform_3, window_bounds = array<i64: 32, 128>}]} {
    %c0_i32 = arith.constant 0 : i32
    %0 = arith.cmpi eq, %arg2, %c0_i32 : i32
    %1 = arith.extui %0 : i1 to i32
    %c0_i32_0 = arith.constant 0 : i32
    %2 = arith.cmpi ne, %1, %c0_i32_0 : i32
    scf.if %2 {
      %cst_10 = arith.constant 0.000000e+00 : f32
      %12 = vector.broadcast %cst_10 : f32 to vector<32x128xf32>
      %c0_11 = arith.constant 0 : index
      %c0_12 = arith.constant 0 : index
      %13 = vector.load %arg7[%c0_11, %c0_12] : memref<32x128xf32, #tpu.memory_space<vmem>>, vector<32x128xf32>
      tpu.vector_store %arg7[%c0_11, %c0_12], %12 {strides = array<i32>} : memref<32x128xf32, #tpu.memory_space<vmem>>, vector<32x128xf32>,
    } else {
    }
    %c0 = arith.constant 0 : index
    %c0_1 = arith.constant 0 : index
    %3 = vector.load %arg7[%c0, %c0_1] : memref<32x128xf32, #tpu.memory_space<vmem>>, vector<32x128xf32>
    %c0_2 = arith.constant 0 : index
    %c0_3 = arith.constant 0 : index
    %4 = vector.load %arg3[%c0_2, %c0_3] : memref<32x128xbf16, #tpu.memory_space<vmem>>, vector<32x128xbf16>
    %c0_4 = arith.constant 0 : index
    %c0_5 = arith.constant 0 : index
    %5 = vector.load %arg4[%c0_4, %c0_5] : memref<128x128xbf16, #tpu.memory_space<vmem>>, vector<128x128xbf16>
    %cst = arith.constant dense<0.000000e+00> : vector<32x128xf32>
    %6 = tpu.matmul %4, %5, %cst {dimension_numbers = #tpu.dot_dimension_numbers<[1], [0], [0], [1], [0, 0, 1, 1], [], []>} : vector<32x128xbf16>, vector<128x128xbf16>, vector<32x128xf32> -> vector<32x128xf32>
    %7 = arith.addf %3, %6 : vector<32x128xf32>
    %c0_6 = arith.constant 0 : index
    %c0_7 = arith.constant 0 : index
    %8 = vector.load %arg7[%c0_6, %c0_7] : memref<32x128xf32, #tpu.memory_space<vmem>>, vector<32x128xf32>
    tpu.vector_store %arg7[%c0_6, %c0_7], %7 {strides = array<i32>} : memref<32x128xf32, #tpu.memory_space<vmem>>, vector<32x128xf32>,
    %c0_i32_8 = arith.constant 0 : i32
    %9 = arith.cmpi eq, %arg2, %c0_i32_8 : i32
    %10 = arith.extui %9 : i1 to i32
    %c0_i32_9 = arith.constant 0 : i32
    %11 = arith.cmpi ne, %10, %c0_i32_9 : i32
    scf.if %11 {
      %c0_10 = arith.constant 0 : index
      %c0_11 = arith.constant 0 : index
      %12 = vector.load %arg7[%c0_10, %c0_11] : memref<32x128xf32, #tpu.memory_space<vmem>>, vector<32x128xf32>
      %c0_12 = arith.constant 0 : index
      %c0_13 = arith.constant 0 : index
      %13 = vector.load %arg5[%c0_12, %c0_13] : memref<1x128xf32, #tpu.memory_space<vmem>>, vector<1x128xf32>
      %14 = vector.broadcast %13 : vector<1x128xf32> to vector<32x128xf32>
      %15 = arith.addf %12, %14 : vector<32x128xf32>
      %cst_14 = arith.constant 0.000000e+00 : f32
      %16 = vector.broadcast %cst_14 : f32 to vector<32x128xf32>
      %17 = arith.maximumf %15, %16 : vector<32x128xf32>
      %18 = arith.truncf %17 : vector<32x128xf32> to vector<32x128xbf16>
      %c0_15 = arith.constant 0 : index
      %c0_16 = arith.constant 0 : index
      %19 = vector.load %arg6[%c0_15, %c0_16] : memref<32x128xbf16, #tpu.memory_space<vmem>>, vector<32x128xbf16>
      tpu.vector_store %arg6[%c0_15, %c0_16], %18 {strides = array<i32>} : memref<32x128xbf16, #tpu.memory_space<vmem>>, vector<32x128xbf16>,
    } else {
    }
    return
  }
  func.func @transform_0(%arg0: i32, %arg1: i32, %arg2: i32) -> (i32, i32) {
    %c0_i32 = arith.constant 0 : i32
    return %arg0, %arg2 : i32, i32
  }
  func.func @transform_1(%arg0: i32, %arg1: i32, %arg2: i32) -> (i32, i32) {
    %c0_i32 = arith.constant 0 : i32
    return %arg2, %arg1 : i32, i32
  }
  func.func @transform_2(%arg0: i32, %arg1: i32, %arg2: i32) -> (i32, i32) {
    %c0_i32 = arith.constant 0 : i32
    %c0_i32_0 = arith.constant 0 : i32
    return %c0_i32, %arg1 : i32, i32
  }
  func.func @transform_3(%arg0: i32, %arg1: i32, %arg2: i32) -> (i32, i32) {
    %c0_i32 = arith.constant 0 : i32
    return %arg0, %arg1 : i32, i32
  }
}

module attributes {stable_mosaic.version = 11 : i64} {
  func.func @_mm_kernel(%arg0: i32, %arg1: i32, %arg2: i32, %arg3: memref<32x384xbf16, #tpu.memory_space<vmem>>, %arg4: memref<384x128xbf16, #tpu.memory_space<vmem>>, %arg5: memref<1x128xf32, #tpu.memory_space<vmem>>, %arg6: memref<32x128xbf16, #tpu.memory_space<vmem>>, %arg7: memref<32x128xf32, #tpu.memory_space<vmem>>) attributes {dimension_semantics = [#tpu.dimension_semantics<parallel>, #tpu.dimension_semantics<parallel>, #tpu.dimension_semantics<arbitrary>], iteration_bounds = array<i64: 1, 1, 3>, scalar_prefetch = 0 : i64, scratch_operands = 1 : i64, tpu.core_type = #tpu.core_type<tc>, window_params = [{transform_indices = @transform_0, window_bounds = array<i64: 32, 384>}, {transform_indices = @transform_1, window_bounds = array<i64: 384, 128>}, {transform_indices = @transform_2, window_bounds = array<i64: 1, 128>}, {transform_indices = @transform_3, window_bounds = array<i64: 32, 128>}]} {
    %c0_i32 = arith.constant 0 : i32
    %0 = arith.cmpi eq, %arg2, %c0_i32 : i32
    %1 = arith.extui %0 : i1 to i32
    %c0_i32_0 = arith.constant 0 : i32
    %2 = arith.cmpi ne, %1, %c0_i32_0 : i32
    scf.if %2 {
      %cst_9 = arith.constant 0.000000e+00 : f32
      %12 = vector.broadcast %cst_9 : f32 to vector<32x128xf32>
      %c0_10 = arith.constant 0 : index
      %c0_11 = arith.constant 0 : index
      %13 = vector.load %arg7[%c0_10, %c0_11] : memref<32x128xf32, #tpu.memory_space<vmem>>, vector<32x128xf32>
      tpu.vector_store %arg7[%c0_10, %c0_11], %12 {strides = array<i32>} : memref<32x128xf32, #tpu.memory_space<vmem>>, vector<32x128xf32>,
    } else {
    }
    %c0 = arith.constant 0 : index
    %c0_1 = arith.constant 0 : index
    %3 = vector.load %arg7[%c0, %c0_1] : memref<32x128xf32, #tpu.memory_space<vmem>>, vector<32x128xf32>
    %c0_2 = arith.constant 0 : index
    %c0_3 = arith.constant 0 : index
    %4 = vector.load %arg3[%c0_2, %c0_3] : memref<32x384xbf16, #tpu.memory_space<vmem>>, vector<32x384xbf16>
    %c0_4 = arith.constant 0 : index
    %c0_5 = arith.constant 0 : index
    %5 = vector.load %arg4[%c0_4, %c0_5] : memref<384x128xbf16, #tpu.memory_space<vmem>>, vector<384x128xbf16>
    %cst = arith.constant dense<0.000000e+00> : vector<32x128xf32>
    %6 = tpu.matmul %4, %5, %cst {dimension_numbers = #tpu.dot_dimension_numbers<[1], [0], [0], [1], [0, 0, 1, 1], [], []>} : vector<32x384xbf16>, vector<384x128xbf16>, vector<32x128xf32> -> vector<32x128xf32>
    %7 = arith.addf %3, %6 : vector<32x128xf32>
    %c0_6 = arith.constant 0 : index
    %c0_7 = arith.constant 0 : index
    %8 = vector.load %arg7[%c0_6, %c0_7] : memref<32x128xf32, #tpu.memory_space<vmem>>, vector<32x128xf32>
    tpu.vector_store %arg7[%c0_6, %c0_7], %7 {strides = array<i32>} : memref<32x128xf32, #tpu.memory_space<vmem>>, vector<32x128xf32>,
    %c2_i32 = arith.constant 2 : i32
    %9 = arith.cmpi eq, %arg2, %c2_i32 : i32
    %10 = arith.extui %9 : i1 to i32
    %c0_i32_8 = arith.constant 0 : i32
    %11 = arith.cmpi ne, %10, %c0_i32_8 : i32
    scf.if %11 {
      %c0_9 = arith.constant 0 : index
      %c0_10 = arith.constant 0 : index
      %12 = vector.load %arg7[%c0_9, %c0_10] : memref<32x128xf32, #tpu.memory_space<vmem>>, vector<32x128xf32>
      %c0_11 = arith.constant 0 : index
      %c0_12 = arith.constant 0 : index
      %13 = vector.load %arg5[%c0_11, %c0_12] : memref<1x128xf32, #tpu.memory_space<vmem>>, vector<1x128xf32>
      %14 = vector.broadcast %13 : vector<1x128xf32> to vector<32x128xf32>
      %15 = arith.addf %12, %14 : vector<32x128xf32>
      %cst_13 = arith.constant 0.000000e+00 : f32
      %16 = vector.broadcast %cst_13 : f32 to vector<32x128xf32>
      %17 = arith.maximumf %15, %16 : vector<32x128xf32>
      %18 = arith.truncf %17 : vector<32x128xf32> to vector<32x128xbf16>
      %c0_14 = arith.constant 0 : index
      %c0_15 = arith.constant 0 : index
      %19 = vector.load %arg6[%c0_14, %c0_15] : memref<32x128xbf16, #tpu.memory_space<vmem>>, vector<32x128xbf16>
      tpu.vector_store %arg6[%c0_14, %c0_15], %18 {strides = array<i32>} : memref<32x128xbf16, #tpu.memory_space<vmem>>, vector<32x128xbf16>,
    } else {
    }
    return
  }
  func.func @transform_0(%arg0: i32, %arg1: i32, %arg2: i32) -> (i32, i32) {
    %c0_i32 = arith.constant 0 : i32
    return %arg0, %arg2 : i32, i32
  }
  func.func @transform_1(%arg0: i32, %arg1: i32, %arg2: i32) -> (i32, i32) {
    %c0_i32 = arith.constant 0 : i32
    return %arg2, %arg1 : i32, i32
  }
  func.func @transform_2(%arg0: i32, %arg1: i32, %arg2: i32) -> (i32, i32) {
    %c0_i32 = arith.constant 0 : i32
    %c0_i32_0 = arith.constant 0 : i32
    return %c0_i32, %arg1 : i32, i32
  }
  func.func @transform_3(%arg0: i32, %arg1: i32, %arg2: i32) -> (i32, i32) {
    %c0_i32 = arith.constant 0 : i32
    return %arg0, %arg1 : i32, i32
  }
}

module attributes {stable_mosaic.version = 11 : i64} {
  func.func @_mm_kernel(%arg0: i32, %arg1: i32, %arg2: i32, %arg3: memref<8x128xbf16, #tpu.memory_space<vmem>>, %arg4: memref<128x128xbf16, #tpu.memory_space<vmem>>, %arg5: memref<1x128xf32, #tpu.memory_space<vmem>>, %arg6: memref<8x128xbf16, #tpu.memory_space<vmem>>, %arg7: memref<8x128xf32, #tpu.memory_space<vmem>>) attributes {dimension_semantics = [#tpu.dimension_semantics<parallel>, #tpu.dimension_semantics<parallel>, #tpu.dimension_semantics<arbitrary>], iteration_bounds = array<i64: 1, 1, 1>, scalar_prefetch = 0 : i64, scratch_operands = 1 : i64, tpu.core_type = #tpu.core_type<tc>, window_params = [{transform_indices = @transform_0, window_bounds = array<i64: 8, 128>}, {transform_indices = @transform_1, window_bounds = array<i64: 128, 128>}, {transform_indices = @transform_2, window_bounds = array<i64: 1, 128>}, {transform_indices = @transform_3, window_bounds = array<i64: 8, 128>}]} {
    %c0_i32 = arith.constant 0 : i32
    %0 = arith.cmpi eq, %arg2, %c0_i32 : i32
    %1 = arith.extui %0 : i1 to i32
    %c0_i32_0 = arith.constant 0 : i32
    %2 = arith.cmpi ne, %1, %c0_i32_0 : i32
    scf.if %2 {
      %cst_10 = arith.constant 0.000000e+00 : f32
      %12 = vector.broadcast %cst_10 : f32 to vector<8x128xf32>
      %c0_11 = arith.constant 0 : index
      %c0_12 = arith.constant 0 : index
      %13 = vector.load %arg7[%c0_11, %c0_12] : memref<8x128xf32, #tpu.memory_space<vmem>>, vector<8x128xf32>
      tpu.vector_store %arg7[%c0_11, %c0_12], %12 {strides = array<i32>} : memref<8x128xf32, #tpu.memory_space<vmem>>, vector<8x128xf32>,
    } else {
    }
    %c0 = arith.constant 0 : index
    %c0_1 = arith.constant 0 : index
    %3 = vector.load %arg7[%c0, %c0_1] : memref<8x128xf32, #tpu.memory_space<vmem>>, vector<8x128xf32>
    %c0_2 = arith.constant 0 : index
    %c0_3 = arith.constant 0 : index
    %4 = vector.load %arg3[%c0_2, %c0_3] : memref<8x128xbf16, #tpu.memory_space<vmem>>, vector<8x128xbf16>
    %c0_4 = arith.constant 0 : index
    %c0_5 = arith.constant 0 : index
    %5 = vector.load %arg4[%c0_4, %c0_5] : memref<128x128xbf16, #tpu.memory_space<vmem>>, vector<128x128xbf16>
    %cst = arith.constant dense<0.000000e+00> : vector<8x128xf32>
    %6 = tpu.matmul %4, %5, %cst {dimension_numbers = #tpu.dot_dimension_numbers<[1], [0], [0], [1], [0, 0, 1, 1], [], []>} : vector<8x128xbf16>, vector<128x128xbf16>, vector<8x128xf32> -> vector<8x128xf32>
    %7 = arith.addf %3, %6 : vector<8x128xf32>
    %c0_6 = arith.constant 0 : index
    %c0_7 = arith.constant 0 : index
    %8 = vector.load %arg7[%c0_6, %c0_7] : memref<8x128xf32, #tpu.memory_space<vmem>>, vector<8x128xf32>
    tpu.vector_store %arg7[%c0_6, %c0_7], %7 {strides = array<i32>} : memref<8x128xf32, #tpu.memory_space<vmem>>, vector<8x128xf32>,
    %c0_i32_8 = arith.constant 0 : i32
    %9 = arith.cmpi eq, %arg2, %c0_i32_8 : i32
    %10 = arith.extui %9 : i1 to i32
    %c0_i32_9 = arith.constant 0 : i32
    %11 = arith.cmpi ne, %10, %c0_i32_9 : i32
    scf.if %11 {
      %c0_10 = arith.constant 0 : index
      %c0_11 = arith.constant 0 : index
      %12 = vector.load %arg7[%c0_10, %c0_11] : memref<8x128xf32, #tpu.memory_space<vmem>>, vector<8x128xf32>
      %c0_12 = arith.constant 0 : index
      %c0_13 = arith.constant 0 : index
      %13 = vector.load %arg5[%c0_12, %c0_13] : memref<1x128xf32, #tpu.memory_space<vmem>>, vector<1x128xf32>
      %14 = vector.broadcast %13 : vector<1x128xf32> to vector<8x128xf32>
      %15 = arith.addf %12, %14 : vector<8x128xf32>
      %16 = arith.truncf %15 : vector<8x128xf32> to vector<8x128xbf16>
      %c0_14 = arith.constant 0 : index
      %c0_15 = arith.constant 0 : index
      %17 = vector.load %arg6[%c0_14, %c0_15] : memref<8x128xbf16, #tpu.memory_space<vmem>>, vector<8x128xbf16>
      tpu.vector_store %arg6[%c0_14, %c0_15], %16 {strides = array<i32>} : memref<8x128xbf16, #tpu.memory_space<vmem>>, vector<8x128xbf16>,
    } else {
    }
    return
  }
  func.func @transform_0(%arg0: i32, %arg1: i32, %arg2: i32) -> (i32, i32) {
    %c0_i32 = arith.constant 0 : i32
    return %arg0, %arg2 : i32, i32
  }
  func.func @transform_1(%arg0: i32, %arg1: i32, %arg2: i32) -> (i32, i32) {
    %c0_i32 = arith.constant 0 : i32
    return %arg2, %arg1 : i32, i32
  }
  func.func @transform_2(%arg0: i32, %arg1: i32, %arg2: i32) -> (i32, i32) {
    %c0_i32 = arith.constant 0 : i32
    %c0_i32_0 = arith.constant 0 : i32
    return %c0_i32, %arg1 : i32, i32
  }
  func.func @transform_3(%arg0: i32, %arg1: i32, %arg2: i32) -> (i32, i32) {
    %c0_i32 = arith.constant 0 : i32
    return %arg0, %arg1 : i32, i32
  }
}

module attributes {stable_mosaic.version = 11 : i64} {
  func.func @_mm_res_kernel(%arg0: i32, %arg1: i32, %arg2: i32, %arg3: memref<8x128xbf16, #tpu.memory_space<vmem>>, %arg4: memref<128x128xbf16, #tpu.memory_space<vmem>>, %arg5: memref<1x128xf32, #tpu.memory_space<vmem>>, %arg6: memref<8x128xbf16, #tpu.memory_space<vmem>>, %arg7: memref<8x128xbf16, #tpu.memory_space<vmem>>, %arg8: memref<8x128xf32, #tpu.memory_space<vmem>>) attributes {dimension_semantics = [#tpu.dimension_semantics<parallel>, #tpu.dimension_semantics<parallel>, #tpu.dimension_semantics<arbitrary>], iteration_bounds = array<i64: 1, 1, 1>, scalar_prefetch = 0 : i64, scratch_operands = 1 : i64, tpu.core_type = #tpu.core_type<tc>, window_params = [{transform_indices = @transform_0, window_bounds = array<i64: 8, 128>}, {transform_indices = @transform_1, window_bounds = array<i64: 128, 128>}, {transform_indices = @transform_2, window_bounds = array<i64: 1, 128>}, {transform_indices = @transform_3, window_bounds = array<i64: 8, 128>}, {transform_indices = @transform_4, window_bounds = array<i64: 8, 128>}]} {
    %c0_i32 = arith.constant 0 : i32
    %0 = arith.cmpi eq, %arg2, %c0_i32 : i32
    %1 = arith.extui %0 : i1 to i32
    %c0_i32_0 = arith.constant 0 : i32
    %2 = arith.cmpi ne, %1, %c0_i32_0 : i32
    scf.if %2 {
      %cst_10 = arith.constant 0.000000e+00 : f32
      %12 = vector.broadcast %cst_10 : f32 to vector<8x128xf32>
      %c0_11 = arith.constant 0 : index
      %c0_12 = arith.constant 0 : index
      %13 = vector.load %arg8[%c0_11, %c0_12] : memref<8x128xf32, #tpu.memory_space<vmem>>, vector<8x128xf32>
      tpu.vector_store %arg8[%c0_11, %c0_12], %12 {strides = array<i32>} : memref<8x128xf32, #tpu.memory_space<vmem>>, vector<8x128xf32>,
    } else {
    }
    %c0 = arith.constant 0 : index
    %c0_1 = arith.constant 0 : index
    %3 = vector.load %arg8[%c0, %c0_1] : memref<8x128xf32, #tpu.memory_space<vmem>>, vector<8x128xf32>
    %c0_2 = arith.constant 0 : index
    %c0_3 = arith.constant 0 : index
    %4 = vector.load %arg3[%c0_2, %c0_3] : memref<8x128xbf16, #tpu.memory_space<vmem>>, vector<8x128xbf16>
    %c0_4 = arith.constant 0 : index
    %c0_5 = arith.constant 0 : index
    %5 = vector.load %arg4[%c0_4, %c0_5] : memref<128x128xbf16, #tpu.memory_space<vmem>>, vector<128x128xbf16>
    %cst = arith.constant dense<0.000000e+00> : vector<8x128xf32>
    %6 = tpu.matmul %4, %5, %cst {dimension_numbers = #tpu.dot_dimension_numbers<[1], [0], [0], [1], [0, 0, 1, 1], [], []>} : vector<8x128xbf16>, vector<128x128xbf16>, vector<8x128xf32> -> vector<8x128xf32>
    %7 = arith.addf %3, %6 : vector<8x128xf32>
    %c0_6 = arith.constant 0 : index
    %c0_7 = arith.constant 0 : index
    %8 = vector.load %arg8[%c0_6, %c0_7] : memref<8x128xf32, #tpu.memory_space<vmem>>, vector<8x128xf32>
    tpu.vector_store %arg8[%c0_6, %c0_7], %7 {strides = array<i32>} : memref<8x128xf32, #tpu.memory_space<vmem>>, vector<8x128xf32>,
    %c0_i32_8 = arith.constant 0 : i32
    %9 = arith.cmpi eq, %arg2, %c0_i32_8 : i32
    %10 = arith.extui %9 : i1 to i32
    %c0_i32_9 = arith.constant 0 : i32
    %11 = arith.cmpi ne, %10, %c0_i32_9 : i32
    scf.if %11 {
      %c0_10 = arith.constant 0 : index
      %c0_11 = arith.constant 0 : index
      %12 = vector.load %arg8[%c0_10, %c0_11] : memref<8x128xf32, #tpu.memory_space<vmem>>, vector<8x128xf32>
      %c0_12 = arith.constant 0 : index
      %c0_13 = arith.constant 0 : index
      %13 = vector.load %arg5[%c0_12, %c0_13] : memref<1x128xf32, #tpu.memory_space<vmem>>, vector<1x128xf32>
      %c0_14 = arith.constant 0 : index
      %c0_15 = arith.constant 0 : index
      %14 = vector.load %arg6[%c0_14, %c0_15] : memref<8x128xbf16, #tpu.memory_space<vmem>>, vector<8x128xbf16>
      %15 = vector.broadcast %13 : vector<1x128xf32> to vector<8x128xf32>
      %16 = arith.addf %12, %15 : vector<8x128xf32>
      %17 = arith.extf %14 : vector<8x128xbf16> to vector<8x128xf32>
      %18 = arith.addf %16, %17 : vector<8x128xf32>
      %cst_16 = arith.constant 0.000000e+00 : f32
      %19 = vector.broadcast %cst_16 : f32 to vector<8x128xf32>
      %20 = arith.maximumf %18, %19 : vector<8x128xf32>
      %21 = arith.truncf %20 : vector<8x128xf32> to vector<8x128xbf16>
      %c0_17 = arith.constant 0 : index
      %c0_18 = arith.constant 0 : index
      %22 = vector.load %arg7[%c0_17, %c0_18] : memref<8x128xbf16, #tpu.memory_space<vmem>>, vector<8x128xbf16>
      tpu.vector_store %arg7[%c0_17, %c0_18], %21 {strides = array<i32>} : memref<8x128xbf16, #tpu.memory_space<vmem>>, vector<8x128xbf16>,
    } else {
    }
    return
  }
  func.func @transform_0(%arg0: i32, %arg1: i32, %arg2: i32) -> (i32, i32) {
    %c0_i32 = arith.constant 0 : i32
    return %arg0, %arg2 : i32, i32
  }
  func.func @transform_1(%arg0: i32, %arg1: i32, %arg2: i32) -> (i32, i32) {
    %c0_i32 = arith.constant 0 : i32
    return %arg2, %arg1 : i32, i32
  }
  func.func @transform_2(%arg0: i32, %arg1: i32, %arg2: i32) -> (i32, i32) {
    %c0_i32 = arith.constant 0 : i32
    %c0_i32_0 = arith.constant 0 : i32
    return %c0_i32, %arg1 : i32, i32
  }
  func.func @transform_3(%arg0: i32, %arg1: i32, %arg2: i32) -> (i32, i32) {
    %c0_i32 = arith.constant 0 : i32
    return %arg0, %arg1 : i32, i32
  }
  func.func @transform_4(%arg0: i32, %arg1: i32, %arg2: i32) -> (i32, i32) {
    %c0_i32 = arith.constant 0 : i32
    return %arg0, %arg1 : i32, i32
  }
}

module attributes {stable_mosaic.version = 11 : i64} {
  func.func @_mm_kernel(%arg0: i32, %arg1: i32, %arg2: i32, %arg3: memref<8x384xbf16, #tpu.memory_space<vmem>>, %arg4: memref<384x128xbf16, #tpu.memory_space<vmem>>, %arg5: memref<1x128xf32, #tpu.memory_space<vmem>>, %arg6: memref<8x128xbf16, #tpu.memory_space<vmem>>, %arg7: memref<8x128xf32, #tpu.memory_space<vmem>>) attributes {dimension_semantics = [#tpu.dimension_semantics<parallel>, #tpu.dimension_semantics<parallel>, #tpu.dimension_semantics<arbitrary>], iteration_bounds = array<i64: 1, 1, 3>, scalar_prefetch = 0 : i64, scratch_operands = 1 : i64, tpu.core_type = #tpu.core_type<tc>, window_params = [{transform_indices = @transform_0, window_bounds = array<i64: 8, 384>}, {transform_indices = @transform_1, window_bounds = array<i64: 384, 128>}, {transform_indices = @transform_2, window_bounds = array<i64: 1, 128>}, {transform_indices = @transform_3, window_bounds = array<i64: 8, 128>}]} {
    %c0_i32 = arith.constant 0 : i32
    %0 = arith.cmpi eq, %arg2, %c0_i32 : i32
    %1 = arith.extui %0 : i1 to i32
    %c0_i32_0 = arith.constant 0 : i32
    %2 = arith.cmpi ne, %1, %c0_i32_0 : i32
    scf.if %2 {
      %cst_9 = arith.constant 0.000000e+00 : f32
      %12 = vector.broadcast %cst_9 : f32 to vector<8x128xf32>
      %c0_10 = arith.constant 0 : index
      %c0_11 = arith.constant 0 : index
      %13 = vector.load %arg7[%c0_10, %c0_11] : memref<8x128xf32, #tpu.memory_space<vmem>>, vector<8x128xf32>
      tpu.vector_store %arg7[%c0_10, %c0_11], %12 {strides = array<i32>} : memref<8x128xf32, #tpu.memory_space<vmem>>, vector<8x128xf32>,
    } else {
    }
    %c0 = arith.constant 0 : index
    %c0_1 = arith.constant 0 : index
    %3 = vector.load %arg7[%c0, %c0_1] : memref<8x128xf32, #tpu.memory_space<vmem>>, vector<8x128xf32>
    %c0_2 = arith.constant 0 : index
    %c0_3 = arith.constant 0 : index
    %4 = vector.load %arg3[%c0_2, %c0_3] : memref<8x384xbf16, #tpu.memory_space<vmem>>, vector<8x384xbf16>
    %c0_4 = arith.constant 0 : index
    %c0_5 = arith.constant 0 : index
    %5 = vector.load %arg4[%c0_4, %c0_5] : memref<384x128xbf16, #tpu.memory_space<vmem>>, vector<384x128xbf16>
    %cst = arith.constant dense<0.000000e+00> : vector<8x128xf32>
    %6 = tpu.matmul %4, %5, %cst {dimension_numbers = #tpu.dot_dimension_numbers<[1], [0], [0], [1], [0, 0, 1, 1], [], []>} : vector<8x384xbf16>, vector<384x128xbf16>, vector<8x128xf32> -> vector<8x128xf32>
    %7 = arith.addf %3, %6 : vector<8x128xf32>
    %c0_6 = arith.constant 0 : index
    %c0_7 = arith.constant 0 : index
    %8 = vector.load %arg7[%c0_6, %c0_7] : memref<8x128xf32, #tpu.memory_space<vmem>>, vector<8x128xf32>
    tpu.vector_store %arg7[%c0_6, %c0_7], %7 {strides = array<i32>} : memref<8x128xf32, #tpu.memory_space<vmem>>, vector<8x128xf32>,
    %c2_i32 = arith.constant 2 : i32
    %9 = arith.cmpi eq, %arg2, %c2_i32 : i32
    %10 = arith.extui %9 : i1 to i32
    %c0_i32_8 = arith.constant 0 : i32
    %11 = arith.cmpi ne, %10, %c0_i32_8 : i32
    scf.if %11 {
      %c0_9 = arith.constant 0 : index
      %c0_10 = arith.constant 0 : index
      %12 = vector.load %arg7[%c0_9, %c0_10] : memref<8x128xf32, #tpu.memory_space<vmem>>, vector<8x128xf32>
      %c0_11 = arith.constant 0 : index
      %c0_12 = arith.constant 0 : index
      %13 = vector.load %arg5[%c0_11, %c0_12] : memref<1x128xf32, #tpu.memory_space<vmem>>, vector<1x128xf32>
      %14 = vector.broadcast %13 : vector<1x128xf32> to vector<8x128xf32>
      %15 = arith.addf %12, %14 : vector<8x128xf32>
      %cst_13 = arith.constant 0.000000e+00 : f32
      %16 = vector.broadcast %cst_13 : f32 to vector<8x128xf32>
      %17 = arith.maximumf %15, %16 : vector<8x128xf32>
      %18 = arith.truncf %17 : vector<8x128xf32> to vector<8x128xbf16>
      %c0_14 = arith.constant 0 : index
      %c0_15 = arith.constant 0 : index
      %19 = vector.load %arg6[%c0_14, %c0_15] : memref<8x128xbf16, #tpu.memory_space<vmem>>, vector<8x128xbf16>
      tpu.vector_store %arg6[%c0_14, %c0_15], %18 {strides = array<i32>} : memref<8x128xbf16, #tpu.memory_space<vmem>>, vector<8x128xbf16>,
    } else {
    }
    return
  }
  func.func @transform_0(%arg0: i32, %arg1: i32, %arg2: i32) -> (i32, i32) {
    %c0_i32 = arith.constant 0 : i32
    return %arg0, %arg2 : i32, i32
  }
  func.func @transform_1(%arg0: i32, %arg1: i32, %arg2: i32) -> (i32, i32) {
    %c0_i32 = arith.constant 0 : i32
    return %arg2, %arg1 : i32, i32
  }
  func.func @transform_2(%arg0: i32, %arg1: i32, %arg2: i32) -> (i32, i32) {
    %c0_i32 = arith.constant 0 : i32
    %c0_i32_0 = arith.constant 0 : i32
    return %c0_i32, %arg1 : i32, i32
  }
  func.func @transform_3(%arg0: i32, %arg1: i32, %arg2: i32) -> (i32, i32) {
    %c0_i32 = arith.constant 0 : i32
    return %arg0, %arg1 : i32, i32
  }
}

module attributes {stable_mosaic.version = 11 : i64} {
  func.func @_mm_kernel(%arg0: i32, %arg1: i32, %arg2: i32, %arg3: memref<8x128xbf16, #tpu.memory_space<vmem>>, %arg4: memref<128x128xbf16, #tpu.memory_space<vmem>>, %arg5: memref<1x128xf32, #tpu.memory_space<vmem>>, %arg6: memref<8x128xbf16, #tpu.memory_space<vmem>>, %arg7: memref<8x128xf32, #tpu.memory_space<vmem>>) attributes {dimension_semantics = [#tpu.dimension_semantics<parallel>, #tpu.dimension_semantics<parallel>, #tpu.dimension_semantics<arbitrary>], iteration_bounds = array<i64: 1, 1, 1>, scalar_prefetch = 0 : i64, scratch_operands = 1 : i64, tpu.core_type = #tpu.core_type<tc>, window_params = [{transform_indices = @transform_0, window_bounds = array<i64: 8, 128>}, {transform_indices = @transform_1, window_bounds = array<i64: 128, 128>}, {transform_indices = @transform_2, window_bounds = array<i64: 1, 128>}, {transform_indices = @transform_3, window_bounds = array<i64: 8, 128>}]} {
    %c0_i32 = arith.constant 0 : i32
    %0 = arith.cmpi eq, %arg2, %c0_i32 : i32
    %1 = arith.extui %0 : i1 to i32
    %c0_i32_0 = arith.constant 0 : i32
    %2 = arith.cmpi ne, %1, %c0_i32_0 : i32
    scf.if %2 {
      %cst_10 = arith.constant 0.000000e+00 : f32
      %12 = vector.broadcast %cst_10 : f32 to vector<8x128xf32>
      %c0_11 = arith.constant 0 : index
      %c0_12 = arith.constant 0 : index
      %13 = vector.load %arg7[%c0_11, %c0_12] : memref<8x128xf32, #tpu.memory_space<vmem>>, vector<8x128xf32>
      tpu.vector_store %arg7[%c0_11, %c0_12], %12 {strides = array<i32>} : memref<8x128xf32, #tpu.memory_space<vmem>>, vector<8x128xf32>,
    } else {
    }
    %c0 = arith.constant 0 : index
    %c0_1 = arith.constant 0 : index
    %3 = vector.load %arg7[%c0, %c0_1] : memref<8x128xf32, #tpu.memory_space<vmem>>, vector<8x128xf32>
    %c0_2 = arith.constant 0 : index
    %c0_3 = arith.constant 0 : index
    %4 = vector.load %arg3[%c0_2, %c0_3] : memref<8x128xbf16, #tpu.memory_space<vmem>>, vector<8x128xbf16>
    %c0_4 = arith.constant 0 : index
    %c0_5 = arith.constant 0 : index
    %5 = vector.load %arg4[%c0_4, %c0_5] : memref<128x128xbf16, #tpu.memory_space<vmem>>, vector<128x128xbf16>
    %cst = arith.constant dense<0.000000e+00> : vector<8x128xf32>
    %6 = tpu.matmul %4, %5, %cst {dimension_numbers = #tpu.dot_dimension_numbers<[1], [0], [0], [1], [0, 0, 1, 1], [], []>} : vector<8x128xbf16>, vector<128x128xbf16>, vector<8x128xf32> -> vector<8x128xf32>
    %7 = arith.addf %3, %6 : vector<8x128xf32>
    %c0_6 = arith.constant 0 : index
    %c0_7 = arith.constant 0 : index
    %8 = vector.load %arg7[%c0_6, %c0_7] : memref<8x128xf32, #tpu.memory_space<vmem>>, vector<8x128xf32>
    tpu.vector_store %arg7[%c0_6, %c0_7], %7 {strides = array<i32>} : memref<8x128xf32, #tpu.memory_space<vmem>>, vector<8x128xf32>,
    %c0_i32_8 = arith.constant 0 : i32
    %9 = arith.cmpi eq, %arg2, %c0_i32_8 : i32
    %10 = arith.extui %9 : i1 to i32
    %c0_i32_9 = arith.constant 0 : i32
    %11 = arith.cmpi ne, %10, %c0_i32_9 : i32
    scf.if %11 {
      %c0_10 = arith.constant 0 : index
      %c0_11 = arith.constant 0 : index
      %12 = vector.load %arg7[%c0_10, %c0_11] : memref<8x128xf32, #tpu.memory_space<vmem>>, vector<8x128xf32>
      %c0_12 = arith.constant 0 : index
      %c0_13 = arith.constant 0 : index
      %13 = vector.load %arg5[%c0_12, %c0_13] : memref<1x128xf32, #tpu.memory_space<vmem>>, vector<1x128xf32>
      %14 = vector.broadcast %13 : vector<1x128xf32> to vector<8x128xf32>
      %15 = arith.addf %12, %14 : vector<8x128xf32>
      %cst_14 = arith.constant 0.000000e+00 : f32
      %16 = vector.broadcast %cst_14 : f32 to vector<8x128xf32>
      %17 = arith.maximumf %15, %16 : vector<8x128xf32>
      %18 = arith.truncf %17 : vector<8x128xf32> to vector<8x128xbf16>
      %c0_15 = arith.constant 0 : index
      %c0_16 = arith.constant 0 : index
      %19 = vector.load %arg6[%c0_15, %c0_16] : memref<8x128xbf16, #tpu.memory_space<vmem>>, vector<8x128xbf16>
      tpu.vector_store %arg6[%c0_15, %c0_16], %18 {strides = array<i32>} : memref<8x128xbf16, #tpu.memory_space<vmem>>, vector<8x128xbf16>,
    } else {
    }
    return
  }
  func.func @transform_0(%arg0: i32, %arg1: i32, %arg2: i32) -> (i32, i32) {
    %c0_i32 = arith.constant 0 : i32
    return %arg0, %arg2 : i32, i32
  }
  func.func @transform_1(%arg0: i32, %arg1: i32, %arg2: i32) -> (i32, i32) {
    %c0_i32 = arith.constant 0 : i32
    return %arg2, %arg1 : i32, i32
  }
  func.func @transform_2(%arg0: i32, %arg1: i32, %arg2: i32) -> (i32, i32) {
    %c0_i32 = arith.constant 0 : i32
    %c0_i32_0 = arith.constant 0 : i32
    return %c0_i32, %arg1 : i32, i32
  }
  func.func @transform_3(%arg0: i32, %arg1: i32, %arg2: i32) -> (i32, i32) {
    %c0_i32 = arith.constant 0 : i32
    return %arg0, %arg1 : i32, i32
  }
}

</mosaic_0001>

<llo_original>
// kernel: forward.44
$region0: #{forward.44}
  #allocation0 [shape = 'u32[]', space=smem, size = 0x4, offset = 0x4, fixed_abs, tag = 'smem constant byte address 0x4 - core index']
  #allocation1 [shape = 'u32[144,128]{1,0:T(1,128)}', space=vmem, size = 0x12000, scoped, tag = 'internal scratch']
  #allocation2 [shape = 'f32[128,128]{1,0:T(8,128)}', space=vmem, size = 0x10000, scoped, tag = 'scratch operand']
  %s0 = inlined_call_operand.vmem [shape: bf16[128,128], index: 0, kind: input, shape index: {}]
  %s1 = inlined_call_operand.vmem [shape: bf16[128,128], index: 1, kind: input, shape index: {}]
  %s2 = inlined_call_operand.vmem [shape: f32[1,128], index: 2, kind: input, shape index: {}]
  %s3 = inlined_call_operand.vmem [shape: bf16[128,128], index: 3, kind: output, shape index: {}]
  %s4 = sld [smem:[#allocation0]]
  $region30: #{forward.44} parent=0
    _
  %s6 = ssub.s32 1, %s4
  %s7 = scalar_select 0, %s6, %s4
  // Predicated region
  $region2: #{forward.44} parent=0 // pred_check
    _
  $region3: #{forward.44} parent=0 // pred_check_branch
    %9 = sbr.rel (0) target = $region5
  $region4: #{forward.44} parent=0 // pred_region
    _
  $region5: #{forward.44} parent=0 // pred_fallthru
    _
  // Predicated region
  $region6: #{forward.44} parent=0 // pred_check
    _
  $region7: #{forward.44} parent=0 // pred_check_branch
    %11 = sbr.rel (0) target = $region9
  $region8: #{forward.44} parent=0 // pred_region
    _
  $region9: #{forward.44} parent=0 // pred_fallthru
    _
  // Predicated region
  $region10: #{forward.44} parent=0 // pred_check
    _
  $region11: #{forward.44} parent=0 // pred_check_branch
    %13 = sbr.rel (0) target = $region13
  $region12: #{forward.44} parent=0 // pred_region
    _
  $region13: #{forward.44} parent=0 // pred_fallthru
    _
  %p15 = scmp.eq.s32.totalorder 0, 0
  // Predicated region
  $region14: #{forward.44} parent=0 // pred_check
    %p16 = pneg %p15
  $region15: #{forward.44} parent=0 // pred_check_branch
    %18 = sbr.rel (%p16) target = $region17
  $region16: #{forward.44} parent=0 // pred_region
    %19 = vst [vmem:[#allocation2] sm:$0xff] 0.0
    %20 = vst [vmem:[#allocation2 + $0x8] sm:$0xff] 0.0
    %21 = vst [vmem:[#allocation2 + $0x10] sm:$0xff] 0.0
    %22 = vst [vmem:[#allocation2 + $0x18] sm:$0xff] 0.0
    %23 = vst [vmem:[#allocation2 + $0x20] sm:$0xff] 0.0
    %24 = vst [vmem:[#allocation2 + $0x28] sm:$0xff] 0.0
    %25 = vst [vmem:[#allocation2 + $0x30] sm:$0xff] 0.0
    %26 = vst [vmem:[#allocation2 + $0x38] sm:$0xff] 0.0
    %27 = vst [vmem:[#allocation2 + $0x40] sm:$0xff] 0.0
    %28 = vst [vmem:[#allocation2 + $0x48] sm:$0xff] 0.0
    %29 = vst [vmem:[#allocation2 + $0x50] sm:$0xff] 0.0
    %30 = vst [vmem:[#allocation2 + $0x58] sm:$0xff] 0.0
    %31 = vst [vmem:[#allocation2 + $0x60] sm:$0xff] 0.0
    %32 = vst [vmem:[#allocation2 + $0x68] sm:$0xff] 0.0
    %33 = vst [vmem:[#allocation2 + $0x70] sm:$0xff] 0.0
    %34 = vst [vmem:[#allocation2 + $0x78] sm:$0xff] 0.0
  $region17: #{forward.44} parent=0 // pred_fallthru
    _
  %v35 = vld [vmem:[#allocation2] sm:$0xff]
  %v36 = vld [vmem:[#allocation2 + $0x8] sm:$0xff]
  %v37 = vld [vmem:[#allocation2 + $0x10] sm:$0xff]
  %v38 = vld [vmem:[#allocation2 + $0x18] sm:$0xff]
  %v39 = vld [vmem:[#allocation2 + $0x20] sm:$0xff]
  %v40 = vld [vmem:[#allocation2 + $0x28] sm:$0xff]
  %v41 = vld [vmem:[#allocation2 + $0x30] sm:$0xff]
  %v42 = vld [vmem:[#allocation2 + $0x38] sm:$0xff]
  %v43 = vld [vmem:[#allocation2 + $0x40] sm:$0xff]
  %v44 = vld [vmem:[#allocation2 + $0x48] sm:$0xff]
  %v45 = vld [vmem:[#allocation2 + $0x50] sm:$0xff]
  %v46 = vld [vmem:[#allocation2 + $0x58] sm:$0xff]
  %v47 = vld [vmem:[#allocation2 + $0x60] sm:$0xff]
  %v48 = vld [vmem:[#allocation2 + $0x68] sm:$0xff]
  %v49 = vld [vmem:[#allocation2 + $0x70] sm:$0xff]
  %v50 = vld [vmem:[#allocation2 + $0x78] sm:$0xff]
  %v51 = vld [vmem:[%s0] sm:$0xf]
  %v52 = vld [vmem:[%s0 + $0x4] sm:$0xf]
  %v53 = vld [vmem:[%s0 + $0x8] sm:$0xf]
  %v54 = vld [vmem:[%s0 + $0xc] sm:$0xf]
  %v55 = vld [vmem:[%s0 + $0x10] sm:$0xf]
  %v56 = vld [vmem:[%s0 + $0x14] sm:$0xf]
  %v57 = vld [vmem:[%s0 + $0x18] sm:$0xf]
  %v58 = vld [vmem:[%s0 + $0x1c] sm:$0xf]
  %v59 = vld [vmem:[%s0 + $0x20] sm:$0xf]
  %v60 = vld [vmem:[%s0 + $0x24] sm:$0xf]
  %v61 = vld [vmem:[%s0 + $0x28] sm:$0xf]
  %v62 = vld [vmem:[%s0 + $0x2c] sm:$0xf]
  %v63 = vld [vmem:[%s0 + $0x30] sm:$0xf]
  %v64 = vld [vmem:[%s0 + $0x34] sm:$0xf]
  %v65 = vld [vmem:[%s0 + $0x38] sm:$0xf]
  %v66 = vld [vmem:[%s0 + $0x3c] sm:$0xf]
  %v67 = vld [vmem:[%s1] sm:$0xf]
  %v68 = vld [vmem:[%s1 + $0x4] sm:$0xf]
  %v69 = vld [vmem:[%s1 + $0x8] sm:$0xf]
  %v70 = vld [vmem:[%s1 + $0xc] sm:$0xf]
  %v71 = vld [vmem:[%s1 + $0x10] sm:$0xf]
  %v72 = vld [vmem:[%s1 + $0x14] sm:$0xf]
  %v73 = vld [vmem:[%s1 + $0x18] sm:$0xf]
  %v74 = vld [vmem:[%s1 + $0x1c] sm:$0xf]
  %v75 = vld [vmem:[%s1 + $0x20] sm:$0xf]
  %v76 = vld [vmem:[%s1 + $0x24] sm:$0xf]
  %v77 = vld [vmem:[%s1 + $0x28] sm:$0xf]
  %v78 = vld [vmem:[%s1 + $0x2c] sm:$0xf]
  %v79 = vld [vmem:[%s1 + $0x30] sm:$0xf]
  %v80 = vld [vmem:[%s1 + $0x34] sm:$0xf]
  %v81 = vld [vmem:[%s1 + $0x38] sm:$0xf]
  %v82 = vld [vmem:[%s1 + $0x3c] sm:$0xf]
  %v99 = vunpack.c.l.b16 %v51
  %v100 = vunpack.c.l.b16 %v52
  %v101 = vunpack.c.l.b16 %v53
  %v102 = vunpack.c.l.b16 %v54
  %v103 = vunpack.c.l.b16 %v55
  %v104 = vunpack.c.l.b16 %v56
  %v105 = vunpack.c.l.b16 %v57
  %v106 = vunpack.c.l.b16 %v58
  %v107 = vunpack.c.l.b16 %v59
  %v108 = vunpack.c.l.b16 %v60
  %v109 = vunpack.c.l.b16 %v61
  %v110 = vunpack.c.l.b16 %v62
  %v111 = vunpack.c.l.b16 %v63
  %v112 = vunpack.c.l.b16 %v64
  %v113 = vunpack.c.l.b16 %v65
  %v114 = vunpack.c.l.b16 %v66
  %v115 = vpack.c.b16 %v100, %v99
  %v116 = vpack.c.b16 %v102, %v101
  %v117 = vpack.c.b16 %v104, %v103
  %v118 = vpack.c.b16 %v106, %v105
  %v119 = vpack.c.b16 %v108, %v107
  %v120 = vpack.c.b16 %v110, %v109
  %v121 = vpack.c.b16 %v112, %v111
  %v122 = vpack.c.b16 %v114, %v113
  %v147 = vunpack.c.l.b16 %v67
  %v148 = vunpack.c.l.b16 %v68
  %v149 = vunpack.c.l.b16 %v69
  %v150 = vunpack.c.l.b16 %v70
  %v151 = vunpack.c.l.b16 %v71
  %v152 = vunpack.c.l.b16 %v72
  %v153 = vunpack.c.l.b16 %v73
  %v154 = vunpack.c.l.b16 %v74
  %v155 = vunpack.c.l.b16 %v75
  %v156 = vunpack.c.l.b16 %v76
  %v157 = vunpack.c.l.b16 %v77
  %v158 = vunpack.c.l.b16 %v78
  %v159 = vunpack.c.l.b16 %v79
  %v160 = vunpack.c.l.b16 %v80
  %v161 = vunpack.c.l.b16 %v81
  %v162 = vunpack.c.l.b16 %v82
  %v163 = vpack.c.b16 %v148, %v147
  %v164 = vpack.c.b16 %v150, %v149
  %v165 = vpack.c.b16 %v152, %v151
  %v166 = vpack.c.b16 %v154, %v153
  %v167 = vpack.c.b16 %v156, %v155
  %v168 = vpack.c.b16 %v158, %v157
  %v169 = vpack.c.b16 %v160, %v159
  %v170 = vpack.c.b16 %v162, %v161
  %179 = vmatprep.subr.bf16.mxu0 0
  %180 = vmatpush1.bf16.msra.mxu0 %v163
  %181 = vmatprep.subr.bf16.mxu0 0
  %182 = vmatpush1.bf16.msra.mxu0 %v164
  %183 = vmatprep.subr.bf16.mxu0 0
  %184 = vmatpush1.bf16.msra.mxu0 %v165
  %185 = vmatprep.subr.bf16.mxu0 0
  %186 = vmatpush1.bf16.msra.mxu0 %v166
  %187 = vmatprep.subr.bf16.mxu0 0
  %188 = vmatpush1.bf16.msra.mxu0 %v167
  %189 = vmatprep.subr.bf16.mxu0 0
  %190 = vmatpush1.bf16.msra.mxu0 %v168
  %191 = vmatprep.subr.bf16.mxu0 0
  %192 = vmatpush1.bf16.msra.mxu0 %v169
  %193 = vmatprep.subr.bf16.mxu0 0
  %194 = vmatpush1.bf16.msra.mxu0 %v170
  %195 = vmatprep.subr.bf16.mxu0 0
  %196 = vmatpush1.bf16.msra.mxu0 0
  %197 = vmatprep.subr.bf16.mxu0 0
  %198 = vmatpush1.bf16.msra.mxu0 0
  %199 = vmatprep.subr.bf16.mxu0 0
  %200 = vmatpush1.bf16.msra.mxu0 0
  %201 = vmatprep.subr.bf16.mxu0 0
  %202 = vmatpush1.bf16.msra.mxu0 0
  %203 = vmatprep.subr.bf16.mxu0 0
  %204 = vmatpush1.bf16.msra.mxu0 0
  %205 = vmatprep.subr.bf16.mxu0 0
  %206 = vmatpush1.bf16.msra.mxu0 0
  %207 = vmatprep.subr.bf16.mxu0 0
  %208 = vmatpush1.bf16.msra.mxu0 0
  %209 = vmatprep.subr.bf16.mxu0 0
  %210 = vmatpush1.bf16.msra.mxu0 0
  %211 = vmatprep.mubr.bf16.mxu0 0
  %212 = vmatmul.mubr.bf16.gmra.mrb[0].mxu0 %v115
  %v213 = vpop.f32.mrb[0].mxu0
  %v214 = vadd.f32 0.0, %v213
  %v215 = vpop.f32.mrb[0].mxu0
  %v216 = vpop.f32.mrb[0].mxu0
  %v217 = vadd.f32 0.0, %v216
  %v218 = vpop.f32.mrb[0].mxu0
  %219 = vmatprep.mubr.bf16.mxu0 0
  %220 = vmatmul.mubr.bf16.gmra.mrb[0].mxu0 %v116
  %v221 = vpop.f32.mrb[0].mxu0
  %v222 = vadd.f32 0.0, %v221
  %v223 = vpop.f32.mrb[0].mxu0
  %v224 = vpop.f32.mrb[0].mxu0
  %v225 = vadd.f32 0.0, %v224
  %v226 = vpop.f32.mrb[0].mxu0
  %227 = vmatprep.mubr.bf16.mxu0 0
  %228 = vmatmul.mubr.bf16.gmra.mrb[0].mxu0 %v117
  %v229 = vpop.f32.mrb[0].mxu0
  %v230 = vadd.f32 0.0, %v229
  %v231 = vpop.f32.mrb[0].mxu0
  %v232 = vpop.f32.mrb[0].mxu0
  %v233 = vadd.f32 0.0, %v232
  %v234 = vpop.f32.mrb[0].mxu0
  %235 = vmatprep.mubr.bf16.mxu0 0
  %236 = vmatmul.mubr.bf16.gmra.mrb[0].mxu0 %v118
  %v237 = vpop.f32.mrb[0].mxu0
  %v238 = vadd.f32 0.0, %v237
  %v239 = vpop.f32.mrb[0].mxu0
  %v240 = vpop.f32.mrb[0].mxu0
  %v241 = vadd.f32 0.0, %v240
  %v242 = vpop.f32.mrb[0].mxu0
  %243 = vmatprep.mubr.bf16.mxu0 0
  %244 = vmatmul.mubr.bf16.gmra.mrb[0].mxu0 %v119
  %v245 = vpop.f32.mrb[0].mxu0
  %v246 = vadd.f32 0.0, %v245
  %v247 = vpop.f32.mrb[0].mxu0
  %v248 = vpop.f32.mrb[0].mxu0
  %v249 = vadd.f32 0.0, %v248
  %v250 = vpop.f32.mrb[0].mxu0
  %251 = vmatprep.mubr.bf16.mxu0 0
  %252 = vmatmul.mubr.bf16.gmra.mrb[0].mxu0 %v120
  %v253 = vpop.f32.mrb[0].mxu0
  %v254 = vadd.f32 0.0, %v253
  %v255 = vpop.f32.mrb[0].mxu0
  %v256 = vpop.f32.mrb[0].mxu0
  %v257 = vadd.f32 0.0, %v256
  %v258 = vpop.f32.mrb[0].mxu0
  %259 = vmatprep.mubr.bf16.mxu0 0
  %260 = vmatmul.mubr.bf16.gmra.mrb[0].mxu0 %v121
  %v261 = vpop.f32.mrb[0].mxu0
  %v262 = vadd.f32 0.0, %v261
  %v263 = vpop.f32.mrb[0].mxu0
  %v264 = vpop.f32.mrb[0].mxu0
  %v265 = vadd.f32 0.0, %v264
  %v266 = vpop.f32.mrb[0].mxu0
  %267 = vmatprep.mubr.bf16.mxu0 0
  %268 = vmatmul.mubr.bf16.gmra.mrb[0].mxu0 %v122
  %v269 = vpop.f32.mrb[0].mxu0
  %v270 = vadd.f32 0.0, %v269
  %v271 = vpop.f32.mrb[0].mxu0
  %v272 = vpop.f32.mrb[0].mxu0
  %v273 = vadd.f32 0.0, %v272
  %v274 = vpop.f32.mrb[0].mxu0
  %275 = vdwg.mxu0
  %v276 = vadd.f32 %v35, %v214
  %v277 = vadd.f32 %v36, %v217
  %v278 = vadd.f32 %v37, %v222
  %v279 = vadd.f32 %v38, %v225
  %v280 = vadd.f32 %v39, %v230
  %v281 = vadd.f32 %v40, %v233
  %v282 = vadd.f32 %v41, %v238
  %v283 = vadd.f32 %v42, %v241
  %v284 = vadd.f32 %v43, %v246
  %v285 = vadd.f32 %v44, %v249
  %v286 = vadd.f32 %v45, %v254
  %v287 = vadd.f32 %v46, %v257
  %v288 = vadd.f32 %v47, %v262
  %v289 = vadd.f32 %v48, %v265
  %v290 = vadd.f32 %v49, %v270
  %v291 = vadd.f32 %v50, %v273
  %292 = vst [vmem:[#allocation2] sm:$0xff] %v276
  %293 = vst [vmem:[#allocation2 + $0x8] sm:$0xff] %v277
  %294 = vst [vmem:[#allocation2 + $0x10] sm:$0xff] %v278
  %295 = vst [vmem:[#allocation2 + $0x18] sm:$0xff] %v279
  %296 = vst [vmem:[#allocation2 + $0x20] sm:$0xff] %v280
  %297 = vst [vmem:[#allocation2 + $0x28] sm:$0xff] %v281
  %298 = vst [vmem:[#allocation2 + $0x30] sm:$0xff] %v282
  %299 = vst [vmem:[#allocation2 + $0x38] sm:$0xff] %v283
  %300 = vst [vmem:[#allocation2 + $0x40] sm:$0xff] %v284
  %301 = vst [vmem:[#allocation2 + $0x48] sm:$0xff] %v285
  %302 = vst [vmem:[#allocation2 + $0x50] sm:$0xff] %v286
  %303 = vst [vmem:[#allocation2 + $0x58] sm:$0xff] %v287
  %304 = vst [vmem:[#allocation2 + $0x60] sm:$0xff] %v288
  %305 = vst [vmem:[#allocation2 + $0x68] sm:$0xff] %v289
  %306 = vst [vmem:[#allocation2 + $0x70] sm:$0xff] %v290
  %307 = vst [vmem:[#allocation2 + $0x78] sm:$0xff] %v291
  // Predicated region
  $region18: #{forward.44} parent=0 // pred_check
    %p308 = pneg %p15
  $region19: #{forward.44} parent=0 // pred_check_branch
    %310 = sbr.rel (%p308) target = $region21
  $region20: #{forward.44} parent=0 // pred_region
    %v311 = vld [vmem:[#allocation2] sm:$0xff]
    %v312 = vld [vmem:[#allocation2 + $0x8] sm:$0xff]
    %v313 = vld [vmem:[#allocation2 + $0x10] sm:$0xff]
    %v314 = vld [vmem:[#allocation2 + $0x18] sm:$0xff]
    %v315 = vld [vmem:[#allocation2 + $0x20] sm:$0xff]
    %v316 = vld [vmem:[#allocation2 + $0x28] sm:$0xff]
    %v317 = vld [vmem:[#allocation2 + $0x30] sm:$0xff]
    %v318 = vld [vmem:[#allocation2 + $0x38] sm:$0xff]
    %v319 = vld [vmem:[#allocation2 + $0x40] sm:$0xff]
    %v320 = vld [vmem:[#allocation2 + $0x48] sm:$0xff]
    %v321 = vld [vmem:[#allocation2 + $0x50] sm:$0xff]
    %v322 = vld [vmem:[#allocation2 + $0x58] sm:$0xff]
    %v323 = vld [vmem:[#allocation2 + $0x60] sm:$0xff]
    %v324 = vld [vmem:[#allocation2 + $0x68] sm:$0xff]
    %v325 = vld [vmem:[#allocation2 + $0x70] sm:$0xff]
    %v326 = vld [vmem:[#allocation2 + $0x78] sm:$0xff]
    %v327 = vld [vmem:[%s2] sm:$0x1]
    %v329 = vlaneseq
    %v330 = vshrl.u32 %v329, 7
    %v331 = vsub.s32 0, %v330
    %v332 = vrot.slane %v327, %v331
    %v334 = vadd.f32 %v311, %v332
    %v335 = vadd.f32 %v312, %v332
    %v336 = vadd.f32 %v313, %v332
    %v337 = vadd.f32 %v314, %v332
    %v338 = vadd.f32 %v315, %v332
    %v339 = vadd.f32 %v316, %v332
    %v340 = vadd.f32 %v317, %v332
    %v341 = vadd.f32 %v318, %v332
    %v342 = vadd.f32 %v319, %v332
    %v343 = vadd.f32 %v320, %v332
    %v344 = vadd.f32 %v321, %v332
    %v345 = vadd.f32 %v322, %v332
    %v346 = vadd.f32 %v323, %v332
    %v347 = vadd.f32 %v324, %v332
    %v348 = vadd.f32 %v325, %v332
    %v349 = vadd.f32 %v326, %v332
    %v350 = vpack.c.bf16 %v335, %v334
    %v351 = vpack.c.bf16 %v337, %v336
    %v352 = vpack.c.bf16 %v339, %v338
    %v353 = vpack.c.bf16 %v341, %v340
    %v354 = vpack.c.bf16 %v343, %v342
    %v355 = vpack.c.bf16 %v345, %v344
    %v356 = vpack.c.bf16 %v347, %v346
    %v357 = vpack.c.bf16 %v349, %v348
    %v366 = vunpack.c.l.b16 %v350
    %v367 = vunpack.c.h.b16 %v350
    %v368 = vunpack.c.l.b16 %v351
    %v369 = vunpack.c.h.b16 %v351
    %v370 = vunpack.c.l.b16 %v352
    %v371 = vunpack.c.h.b16 %v352
    %v372 = vunpack.c.l.b16 %v353
    %v373 = vunpack.c.h.b16 %v353
    %v374 = vunpack.c.l.b16 %v354
    %v375 = vunpack.c.h.b16 %v354
    %v376 = vunpack.c.l.b16 %v355
    %v377 = vunpack.c.h.b16 %v355
    %v378 = vunpack.c.l.b16 %v356
    %v379 = vunpack.c.h.b16 %v356
    %v380 = vunpack.c.l.b16 %v357
    %v381 = vunpack.c.h.b16 %v357
    %v382 = vpack.c.b16 %v366, %v366
    %v383 = vpack.c.b16 %v367, %v367
    %v384 = vpack.c.b16 %v368, %v368
    %v385 = vpack.c.b16 %v369, %v369
    %v386 = vpack.c.b16 %v370, %v370
    %v387 = vpack.c.b16 %v371, %v371
    %v388 = vpack.c.b16 %v372, %v372
    %v389 = vpack.c.b16 %v373, %v373
    %v390 = vpack.c.b16 %v374, %v374
    %v391 = vpack.c.b16 %v375, %v375
    %v392 = vpack.c.b16 %v376, %v376
    %v393 = vpack.c.b16 %v377, %v377
    %v394 = vpack.c.b16 %v378, %v378
    %v395 = vpack.c.b16 %v379, %v379
    %v396 = vpack.c.b16 %v380, %v380
    %v397 = vpack.c.b16 %v381, %v381
    %414 = vst [vmem:[%s3] sm:$0xf] %v382
    %415 = vst [vmem:[%s3 + $0x4] sm:$0xf] %v383
    %416 = vst [vmem:[%s3 + $0x8] sm:$0xf] %v384
    %417 = vst [vmem:[%s3 + $0xc] sm:$0xf] %v385
    %418 = vst [vmem:[%s3 + $0x10] sm:$0xf] %v386
    %419 = vst [vmem:[%s3 + $0x14] sm:$0xf] %v387
    %420 = vst [vmem:[%s3 + $0x18] sm:$0xf] %v388
    %421 = vst [vmem:[%s3 + $0x1c] sm:$0xf] %v389
    %422 = vst [vmem:[%s3 + $0x20] sm:$0xf] %v390
    %423 = vst [vmem:[%s3 + $0x24] sm:$0xf] %v391
    %424 = vst [vmem:[%s3 + $0x28] sm:$0xf] %v392
    %425 = vst [vmem:[%s3 + $0x2c] sm:$0xf] %v393
    %426 = vst [vmem:[%s3 + $0x30] sm:$0xf] %v394
    %427 = vst [vmem:[%s3 + $0x34] sm:$0xf] %v395
    %428 = vst [vmem:[%s3 + $0x38] sm:$0xf] %v396
    %429 = vst [vmem:[%s3 + $0x3c] sm:$0xf] %v397
  $region21: #{forward.44} parent=0 // pred_fallthru
    _
  // Predicated region
  $region22: #{forward.44} parent=0 // pred_check
    _
  $region23: #{forward.44} parent=0 // pred_check_branch
    %431 = sbr.rel (0) target = $region25
  $region24: #{forward.44} parent=0 // pred_region
    _
  $region25: #{forward.44} parent=0 // pred_fallthru
    _
  // Predicated region
  $region26: #{forward.44} parent=0 // pred_check
    _
  $region27: #{forward.44} parent=0 // pred_check_branch
    %433 = sbr.rel (0) target = $region29
  $region28: #{forward.44} parent=0 // pred_region
    _
  $region29: #{forward.44} parent=0 // pred_fallthru
    _

// kernel: forward.45
$region0: #{forward.45}
  #allocation0 [shape = 'u32[]', space=smem, size = 0x4, offset = 0x4, fixed_abs, tag = 'smem constant byte address 0x4 - core index']
  #allocation1 [shape = 'u32[144,128]{1,0:T(1,128)}', space=vmem, size = 0x12000, scoped, tag = 'internal scratch']
  #allocation2 [shape = 'f32[128,128]{1,0:T(8,128)}', space=vmem, size = 0x10000, scoped, tag = 'scratch operand']
  %s0 = inlined_call_operand.vmem [shape: bf16[128,128], index: 0, kind: input, shape index: {}]
  %s1 = inlined_call_operand.vmem [shape: bf16[128,128], index: 1, kind: input, shape index: {}]
  %s2 = inlined_call_operand.vmem [shape: f32[1,128], index: 2, kind: input, shape index: {}]
  %s3 = inlined_call_operand.vmem [shape: bf16[128,128], index: 3, kind: output, shape index: {}]
  %s4 = sld [smem:[#allocation0]]
  $region30: #{forward.45} parent=0
    _
  %s6 = ssub.s32 1, %s4
  %s7 = scalar_select 0, %s6, %s4
  // Predicated region
  $region2: #{forward.45} parent=0 // pred_check
    _
  $region3: #{forward.45} parent=0 // pred_check_branch
    %9 = sbr.rel (0) target = $region5
  $region4: #{forward.45} parent=0 // pred_region
    _
  $region5: #{forward.45} parent=0 // pred_fallthru
    _
  // Predicated region
  $region6: #{forward.45} parent=0 // pred_check
    _
  $region7: #{forward.45} parent=0 // pred_check_branch
    %11 = sbr.rel (0) target = $region9
  $region8: #{forward.45} parent=0 // pred_region
    _
  $region9: #{forward.45} parent=0 // pred_fallthru
    _
  // Predicated region
  $region10: #{forward.45} parent=0 // pred_check
    _
  $region11: #{forward.45} parent=0 // pred_check_branch
    %13 = sbr.rel (0) target = $region13
  $region12: #{forward.45} parent=0 // pred_region
    _
  $region13: #{forward.45} parent=0 // pred_fallthru
    _
  %p15 = scmp.eq.s32.totalorder 0, 0
  // Predicated region
  $region14: #{forward.45} parent=0 // pred_check
    %p16 = pneg %p15
  $region15: #{forward.45} parent=0 // pred_check_branch
    %18 = sbr.rel (%p16) target = $region17
  $region16: #{forward.45} parent=0 // pred_region
    %19 = vst [vmem:[#allocation2] sm:$0xff] 0.0
    %20 = vst [vmem:[#allocation2 + $0x8] sm:$0xff] 0.0
    %21 = vst [vmem:[#allocation2 + $0x10] sm:$0xff] 0.0
    %22 = vst [vmem:[#allocation2 + $0x18] sm:$0xff] 0.0
    %23 = vst [vmem:[#allocation2 + $0x20] sm:$0xff] 0.0
    %24 = vst [vmem:[#allocation2 + $0x28] sm:$0xff] 0.0
    %25 = vst [vmem:[#allocation2 + $0x30] sm:$0xff] 0.0
    %26 = vst [vmem:[#allocation2 + $0x38] sm:$0xff] 0.0
    %27 = vst [vmem:[#allocation2 + $0x40] sm:$0xff] 0.0
    %28 = vst [vmem:[#allocation2 + $0x48] sm:$0xff] 0.0
    %29 = vst [vmem:[#allocation2 + $0x50] sm:$0xff] 0.0
    %30 = vst [vmem:[#allocation2 + $0x58] sm:$0xff] 0.0
    %31 = vst [vmem:[#allocation2 + $0x60] sm:$0xff] 0.0
    %32 = vst [vmem:[#allocation2 + $0x68] sm:$0xff] 0.0
    %33 = vst [vmem:[#allocation2 + $0x70] sm:$0xff] 0.0
    %34 = vst [vmem:[#allocation2 + $0x78] sm:$0xff] 0.0
  $region17: #{forward.45} parent=0 // pred_fallthru
    _
  %v35 = vld [vmem:[#allocation2] sm:$0xff]
  %v36 = vld [vmem:[#allocation2 + $0x8] sm:$0xff]
  %v37 = vld [vmem:[#allocation2 + $0x10] sm:$0xff]
  %v38 = vld [vmem:[#allocation2 + $0x18] sm:$0xff]
  %v39 = vld [vmem:[#allocation2 + $0x20] sm:$0xff]
  %v40 = vld [vmem:[#allocation2 + $0x28] sm:$0xff]
  %v41 = vld [vmem:[#allocation2 + $0x30] sm:$0xff]
  %v42 = vld [vmem:[#allocation2 + $0x38] sm:$0xff]
  %v43 = vld [vmem:[#allocation2 + $0x40] sm:$0xff]
  %v44 = vld [vmem:[#allocation2 + $0x48] sm:$0xff]
  %v45 = vld [vmem:[#allocation2 + $0x50] sm:$0xff]
  %v46 = vld [vmem:[#allocation2 + $0x58] sm:$0xff]
  %v47 = vld [vmem:[#allocation2 + $0x60] sm:$0xff]
  %v48 = vld [vmem:[#allocation2 + $0x68] sm:$0xff]
  %v49 = vld [vmem:[#allocation2 + $0x70] sm:$0xff]
  %v50 = vld [vmem:[#allocation2 + $0x78] sm:$0xff]
  %v51 = vld [vmem:[%s0] sm:$0xf]
  %v52 = vld [vmem:[%s0 + $0x4] sm:$0xf]
  %v53 = vld [vmem:[%s0 + $0x8] sm:$0xf]
  %v54 = vld [vmem:[%s0 + $0xc] sm:$0xf]
  %v55 = vld [vmem:[%s0 + $0x10] sm:$0xf]
  %v56 = vld [vmem:[%s0 + $0x14] sm:$0xf]
  %v57 = vld [vmem:[%s0 + $0x18] sm:$0xf]
  %v58 = vld [vmem:[%s0 + $0x1c] sm:$0xf]
  %v59 = vld [vmem:[%s0 + $0x20] sm:$0xf]
  %v60 = vld [vmem:[%s0 + $0x24] sm:$0xf]
  %v61 = vld [vmem:[%s0 + $0x28] sm:$0xf]
  %v62 = vld [vmem:[%s0 + $0x2c] sm:$0xf]
  %v63 = vld [vmem:[%s0 + $0x30] sm:$0xf]
  %v64 = vld [vmem:[%s0 + $0x34] sm:$0xf]
  %v65 = vld [vmem:[%s0 + $0x38] sm:$0xf]
  %v66 = vld [vmem:[%s0 + $0x3c] sm:$0xf]
  %v67 = vld [vmem:[%s1] sm:$0xf]
  %v68 = vld [vmem:[%s1 + $0x4] sm:$0xf]
  %v69 = vld [vmem:[%s1 + $0x8] sm:$0xf]
  %v70 = vld [vmem:[%s1 + $0xc] sm:$0xf]
  %v71 = vld [vmem:[%s1 + $0x10] sm:$0xf]
  %v72 = vld [vmem:[%s1 + $0x14] sm:$0xf]
  %v73 = vld [vmem:[%s1 + $0x18] sm:$0xf]
  %v74 = vld [vmem:[%s1 + $0x1c] sm:$0xf]
  %v75 = vld [vmem:[%s1 + $0x20] sm:$0xf]
  %v76 = vld [vmem:[%s1 + $0x24] sm:$0xf]
  %v77 = vld [vmem:[%s1 + $0x28] sm:$0xf]
  %v78 = vld [vmem:[%s1 + $0x2c] sm:$0xf]
  %v79 = vld [vmem:[%s1 + $0x30] sm:$0xf]
  %v80 = vld [vmem:[%s1 + $0x34] sm:$0xf]
  %v81 = vld [vmem:[%s1 + $0x38] sm:$0xf]
  %v82 = vld [vmem:[%s1 + $0x3c] sm:$0xf]
  %v99 = vunpack.c.l.b16 %v51
  %v100 = vunpack.c.l.b16 %v52
  %v101 = vunpack.c.l.b16 %v53
  %v102 = vunpack.c.l.b16 %v54
  %v103 = vunpack.c.l.b16 %v55
  %v104 = vunpack.c.l.b16 %v56
  %v105 = vunpack.c.l.b16 %v57
  %v106 = vunpack.c.l.b16 %v58
  %v107 = vunpack.c.l.b16 %v59
  %v108 = vunpack.c.l.b16 %v60
  %v109 = vunpack.c.l.b16 %v61
  %v110 = vunpack.c.l.b16 %v62
  %v111 = vunpack.c.l.b16 %v63
  %v112 = vunpack.c.l.b16 %v64
  %v113 = vunpack.c.l.b16 %v65
  %v114 = vunpack.c.l.b16 %v66
  %v115 = vpack.c.b16 %v100, %v99
  %v116 = vpack.c.b16 %v102, %v101
  %v117 = vpack.c.b16 %v104, %v103
  %v118 = vpack.c.b16 %v106, %v105
  %v119 = vpack.c.b16 %v108, %v107
  %v120 = vpack.c.b16 %v110, %v109
  %v121 = vpack.c.b16 %v112, %v111
  %v122 = vpack.c.b16 %v114, %v113
  %v147 = vunpack.c.l.b16 %v67
  %v148 = vunpack.c.l.b16 %v68
  %v149 = vunpack.c.l.b16 %v69
  %v150 = vunpack.c.l.b16 %v70
  %v151 = vunpack.c.l.b16 %v71
  %v152 = vunpack.c.l.b16 %v72
  %v153 = vunpack.c.l.b16 %v73
  %v154 = vunpack.c.l.b16 %v74
  %v155 = vunpack.c.l.b16 %v75
  %v156 = vunpack.c.l.b16 %v76
  %v157 = vunpack.c.l.b16 %v77
  %v158 = vunpack.c.l.b16 %v78
  %v159 = vunpack.c.l.b16 %v79
  %v160 = vunpack.c.l.b16 %v80
  %v161 = vunpack.c.l.b16 %v81
  %v162 = vunpack.c.l.b16 %v82
  %v163 = vpack.c.b16 %v148, %v147
  %v164 = vpack.c.b16 %v150, %v149
  %v165 = vpack.c.b16 %v152, %v151
  %v166 = vpack.c.b16 %v154, %v153
  %v167 = vpack.c.b16 %v156, %v155
  %v168 = vpack.c.b16 %v158, %v157
  %v169 = vpack.c.b16 %v160, %v159
  %v170 = vpack.c.b16 %v162, %v161
  %179 = vmatprep.subr.bf16.mxu0 0
  %180 = vmatpush1.bf16.msra.mxu0 %v163
  %181 = vmatprep.subr.bf16.mxu0 0
  %182 = vmatpush1.bf16.msra.mxu0 %v164
  %183 = vmatprep.subr.bf16.mxu0 0
  %184 = vmatpush1.bf16.msra.mxu0 %v165
  %185 = vmatprep.subr.bf16.mxu0 0
  %186 = vmatpush1.bf16.msra.mxu0 %v166
  %187 = vmatprep.subr.bf16.mxu0 0
  %188 = vmatpush1.bf16.msra.mxu0 %v167
  %189 = vmatprep.subr.bf16.mxu0 0
  %190 = vmatpush1.bf16.msra.mxu0 %v168
  %191 = vmatprep.subr.bf16.mxu0 0
  %192 = vmatpush1.bf16.msra.mxu0 %v169
  %193 = vmatprep.subr.bf16.mxu0 0
  %194 = vmatpush1.bf16.msra.mxu0 %v170
  %195 = vmatprep.subr.bf16.mxu0 0
  %196 = vmatpush1.bf16.msra.mxu0 0
  %197 = vmatprep.subr.bf16.mxu0 0
  %198 = vmatpush1.bf16.msra.mxu0 0
  %199 = vmatprep.subr.bf16.mxu0 0
  %200 = vmatpush1.bf16.msra.mxu0 0
  %201 = vmatprep.subr.bf16.mxu0 0
  %202 = vmatpush1.bf16.msra.mxu0 0
  %203 = vmatprep.subr.bf16.mxu0 0
  %204 = vmatpush1.bf16.msra.mxu0 0
  %205 = vmatprep.subr.bf16.mxu0 0
  %206 = vmatpush1.bf16.msra.mxu0 0
  %207 = vmatprep.subr.bf16.mxu0 0
  %208 = vmatpush1.bf16.msra.mxu0 0
  %209 = vmatprep.subr.bf16.mxu0 0
  %210 = vmatpush1.bf16.msra.mxu0 0
  %211 = vmatprep.mubr.bf16.mxu0 0
  %212 = vmatmul.mubr.bf16.gmra.mrb[0].mxu0 %v115
  %v213 = vpop.f32.mrb[0].mxu0
  %v214 = vadd.f32 0.0, %v213
  %v215 = vpop.f32.mrb[0].mxu0
  %v216 = vpop.f32.mrb[0].mxu0
  %v217 = vadd.f32 0.0, %v216
  %v218 = vpop.f32.mrb[0].mxu0
  %219 = vmatprep.mubr.bf16.mxu0 0
  %220 = vmatmul.mubr.bf16.gmra.mrb[0].mxu0 %v116
  %v221 = vpop.f32.mrb[0].mxu0
  %v222 = vadd.f32 0.0, %v221
  %v223 = vpop.f32.mrb[0].mxu0
  %v224 = vpop.f32.mrb[0].mxu0
  %v225 = vadd.f32 0.0, %v224
  %v226 = vpop.f32.mrb[0].mxu0
  %227 = vmatprep.mubr.bf16.mxu0 0
  %228 = vmatmul.mubr.bf16.gmra.mrb[0].mxu0 %v117
  %v229 = vpop.f32.mrb[0].mxu0
  %v230 = vadd.f32 0.0, %v229
  %v231 = vpop.f32.mrb[0].mxu0
  %v232 = vpop.f32.mrb[0].mxu0
  %v233 = vadd.f32 0.0, %v232
  %v234 = vpop.f32.mrb[0].mxu0
  %235 = vmatprep.mubr.bf16.mxu0 0
  %236 = vmatmul.mubr.bf16.gmra.mrb[0].mxu0 %v118
  %v237 = vpop.f32.mrb[0].mxu0
  %v238 = vadd.f32 0.0, %v237
  %v239 = vpop.f32.mrb[0].mxu0
  %v240 = vpop.f32.mrb[0].mxu0
  %v241 = vadd.f32 0.0, %v240
  %v242 = vpop.f32.mrb[0].mxu0
  %243 = vmatprep.mubr.bf16.mxu0 0
  %244 = vmatmul.mubr.bf16.gmra.mrb[0].mxu0 %v119
  %v245 = vpop.f32.mrb[0].mxu0
  %v246 = vadd.f32 0.0, %v245
  %v247 = vpop.f32.mrb[0].mxu0
  %v248 = vpop.f32.mrb[0].mxu0
  %v249 = vadd.f32 0.0, %v248
  %v250 = vpop.f32.mrb[0].mxu0
  %251 = vmatprep.mubr.bf16.mxu0 0
  %252 = vmatmul.mubr.bf16.gmra.mrb[0].mxu0 %v120
  %v253 = vpop.f32.mrb[0].mxu0
  %v254 = vadd.f32 0.0, %v253
  %v255 = vpop.f32.mrb[0].mxu0
  %v256 = vpop.f32.mrb[0].mxu0
  %v257 = vadd.f32 0.0, %v256
  %v258 = vpop.f32.mrb[0].mxu0
  %259 = vmatprep.mubr.bf16.mxu0 0
  %260 = vmatmul.mubr.bf16.gmra.mrb[0].mxu0 %v121
  %v261 = vpop.f32.mrb[0].mxu0
  %v262 = vadd.f32 0.0, %v261
  %v263 = vpop.f32.mrb[0].mxu0
  %v264 = vpop.f32.mrb[0].mxu0
  %v265 = vadd.f32 0.0, %v264
  %v266 = vpop.f32.mrb[0].mxu0
  %267 = vmatprep.mubr.bf16.mxu0 0
  %268 = vmatmul.mubr.bf16.gmra.mrb[0].mxu0 %v122
  %v269 = vpop.f32.mrb[0].mxu0
  %v270 = vadd.f32 0.0, %v269
  %v271 = vpop.f32.mrb[0].mxu0
  %v272 = vpop.f32.mrb[0].mxu0
  %v273 = vadd.f32 0.0, %v272
  %v274 = vpop.f32.mrb[0].mxu0
  %275 = vdwg.mxu0
  %v276 = vadd.f32 %v35, %v214
  %v277 = vadd.f32 %v36, %v217
  %v278 = vadd.f32 %v37, %v222
  %v279 = vadd.f32 %v38, %v225
  %v280 = vadd.f32 %v39, %v230
  %v281 = vadd.f32 %v40, %v233
  %v282 = vadd.f32 %v41, %v238
  %v283 = vadd.f32 %v42, %v241
  %v284 = vadd.f32 %v43, %v246
  %v285 = vadd.f32 %v44, %v249
  %v286 = vadd.f32 %v45, %v254
  %v287 = vadd.f32 %v46, %v257
  %v288 = vadd.f32 %v47, %v262
  %v289 = vadd.f32 %v48, %v265
  %v290 = vadd.f32 %v49, %v270
  %v291 = vadd.f32 %v50, %v273
  %292 = vst [vmem:[#allocation2] sm:$0xff] %v276
  %293 = vst [vmem:[#allocation2 + $0x8] sm:$0xff] %v277
  %294 = vst [vmem:[#allocation2 + $0x10] sm:$0xff] %v278
  %295 = vst [vmem:[#allocation2 + $0x18] sm:$0xff] %v279
  %296 = vst [vmem:[#allocation2 + $0x20] sm:$0xff] %v280
  %297 = vst [vmem:[#allocation2 + $0x28] sm:$0xff] %v281
  %298 = vst [vmem:[#allocation2 + $0x30] sm:$0xff] %v282
  %299 = vst [vmem:[#allocation2 + $0x38] sm:$0xff] %v283
  %300 = vst [vmem:[#allocation2 + $0x40] sm:$0xff] %v284
  %301 = vst [vmem:[#allocation2 + $0x48] sm:$0xff] %v285
  %302 = vst [vmem:[#allocation2 + $0x50] sm:$0xff] %v286
  %303 = vst [vmem:[#allocation2 + $0x58] sm:$0xff] %v287
  %304 = vst [vmem:[#allocation2 + $0x60] sm:$0xff] %v288
  %305 = vst [vmem:[#allocation2 + $0x68] sm:$0xff] %v289
  %306 = vst [vmem:[#allocation2 + $0x70] sm:$0xff] %v290
  %307 = vst [vmem:[#allocation2 + $0x78] sm:$0xff] %v291
  // Predicated region
  $region18: #{forward.45} parent=0 // pred_check
    %p308 = pneg %p15
  $region19: #{forward.45} parent=0 // pred_check_branch
    %310 = sbr.rel (%p308) target = $region21
  $region20: #{forward.45} parent=0 // pred_region
    %v311 = vld [vmem:[#allocation2] sm:$0xff]
    %v312 = vld [vmem:[#allocation2 + $0x8] sm:$0xff]
    %v313 = vld [vmem:[#allocation2 + $0x10] sm:$0xff]
    %v314 = vld [vmem:[#allocation2 + $0x18] sm:$0xff]
    %v315 = vld [vmem:[#allocation2 + $0x20] sm:$0xff]
    %v316 = vld [vmem:[#allocation2 + $0x28] sm:$0xff]
    %v317 = vld [vmem:[#allocation2 + $0x30] sm:$0xff]
    %v318 = vld [vmem:[#allocation2 + $0x38] sm:$0xff]
    %v319 = vld [vmem:[#allocation2 + $0x40] sm:$0xff]
    %v320 = vld [vmem:[#allocation2 + $0x48] sm:$0xff]
    %v321 = vld [vmem:[#allocation2 + $0x50] sm:$0xff]
    %v322 = vld [vmem:[#allocation2 + $0x58] sm:$0xff]
    %v323 = vld [vmem:[#allocation2 + $0x60] sm:$0xff]
    %v324 = vld [vmem:[#allocation2 + $0x68] sm:$0xff]
    %v325 = vld [vmem:[#allocation2 + $0x70] sm:$0xff]
    %v326 = vld [vmem:[#allocation2 + $0x78] sm:$0xff]
    %v327 = vld [vmem:[%s2] sm:$0x1]
    %v329 = vlaneseq
    %v330 = vshrl.u32 %v329, 7
    %v331 = vsub.s32 0, %v330
    %v332 = vrot.slane %v327, %v331
    %v334 = vadd.f32 %v311, %v332
    %v335 = vadd.f32 %v312, %v332
    %v336 = vadd.f32 %v313, %v332
    %v337 = vadd.f32 %v314, %v332
    %v338 = vadd.f32 %v315, %v332
    %v339 = vadd.f32 %v316, %v332
    %v340 = vadd.f32 %v317, %v332
    %v341 = vadd.f32 %v318, %v332
    %v342 = vadd.f32 %v319, %v332
    %v343 = vadd.f32 %v320, %v332
    %v344 = vadd.f32 %v321, %v332
    %v345 = vadd.f32 %v322, %v332
    %v346 = vadd.f32 %v323, %v332
    %v347 = vadd.f32 %v324, %v332
    %v348 = vadd.f32 %v325, %v332
    %v349 = vadd.f32 %v326, %v332
    %v350 = vmax.f32 %v334, 0.0
    %v351 = vmax.f32 %v335, 0.0
    %v352 = vmax.f32 %v336, 0.0
    %v353 = vmax.f32 %v337, 0.0
    %v354 = vmax.f32 %v338, 0.0
    %v355 = vmax.f32 %v339, 0.0
    %v356 = vmax.f32 %v340, 0.0
    %v357 = vmax.f32 %v341, 0.0
    %v358 = vmax.f32 %v342, 0.0
    %v359 = vmax.f32 %v343, 0.0
    %v360 = vmax.f32 %v344, 0.0
    %v361 = vmax.f32 %v345, 0.0
    %v362 = vmax.f32 %v346, 0.0
    %v363 = vmax.f32 %v347, 0.0
    %v364 = vmax.f32 %v348, 0.0
    %v365 = vmax.f32 %v349, 0.0
    %v366 = vpack.c.bf16 %v351, %v350
    %v367 = vpack.c.bf16 %v353, %v352
    %v368 = vpack.c.bf16 %v355, %v354
    %v369 = vpack.c.bf16 %v357, %v356
    %v370 = vpack.c.bf16 %v359, %v358
    %v371 = vpack.c.bf16 %v361, %v360
    %v372 = vpack.c.bf16 %v363, %v362
    %v373 = vpack.c.bf16 %v365, %v364
    %v382 = vunpack.c.l.b16 %v366
    %v383 = vunpack.c.h.b16 %v366
    %v384 = vunpack.c.l.b16 %v367
    %v385 = vunpack.c.h.b16 %v367
    %v386 = vunpack.c.l.b16 %v368
    %v387 = vunpack.c.h.b16 %v368
    %v388 = vunpack.c.l.b16 %v369
    %v389 = vunpack.c.h.b16 %v369
    %v390 = vunpack.c.l.b16 %v370
    %v391 = vunpack.c.h.b16 %v370
    %v392 = vunpack.c.l.b16 %v371
    %v393 = vunpack.c.h.b16 %v371
    %v394 = vunpack.c.l.b16 %v372
    %v395 = vunpack.c.h.b16 %v372
    %v396 = vunpack.c.l.b16 %v373
    %v397 = vunpack.c.h.b16 %v373
    %v398 = vpack.c.b16 %v382, %v382
    %v399 = vpack.c.b16 %v383, %v383
    %v400 = vpack.c.b16 %v384, %v384
    %v401 = vpack.c.b16 %v385, %v385
    %v402 = vpack.c.b16 %v386, %v386
    %v403 = vpack.c.b16 %v387, %v387
    %v404 = vpack.c.b16 %v388, %v388
    %v405 = vpack.c.b16 %v389, %v389
    %v406 = vpack.c.b16 %v390, %v390
    %v407 = vpack.c.b16 %v391, %v391
    %v408 = vpack.c.b16 %v392, %v392
    %v409 = vpack.c.b16 %v393, %v393
    %v410 = vpack.c.b16 %v394, %v394
    %v411 = vpack.c.b16 %v395, %v395
    %v412 = vpack.c.b16 %v396, %v396
    %v413 = vpack.c.b16 %v397, %v397
    %430 = vst [vmem:[%s3] sm:$0xf] %v398
    %431 = vst [vmem:[%s3 + $0x4] sm:$0xf] %v399
    %432 = vst [vmem:[%s3 + $0x8] sm:$0xf] %v400
    %433 = vst [vmem:[%s3 + $0xc] sm:$0xf] %v401
    %434 = vst [vmem:[%s3 + $0x10] sm:$0xf] %v402
    %435 = vst [vmem:[%s3 + $0x14] sm:$0xf] %v403
    %436 = vst [vmem:[%s3 + $0x18] sm:$0xf] %v404
    %437 = vst [vmem:[%s3 + $0x1c] sm:$0xf] %v405
    %438 = vst [vmem:[%s3 + $0x20] sm:$0xf] %v406
    %439 = vst [vmem:[%s3 + $0x24] sm:$0xf] %v407
    %440 = vst [vmem:[%s3 + $0x28] sm:$0xf] %v408
    %441 = vst [vmem:[%s3 + $0x2c] sm:$0xf] %v409
    %442 = vst [vmem:[%s3 + $0x30] sm:$0xf] %v410
    %443 = vst [vmem:[%s3 + $0x34] sm:$0xf] %v411
    %444 = vst [vmem:[%s3 + $0x38] sm:$0xf] %v412
    %445 = vst [vmem:[%s3 + $0x3c] sm:$0xf] %v413
  $region21: #{forward.45} parent=0 // pred_fallthru
    _
  // Predicated region
  $region22: #{forward.45} parent=0 // pred_check
    _
  $region23: #{forward.45} parent=0 // pred_check_branch
    %447 = sbr.rel (0) target = $region25
  $region24: #{forward.45} parent=0 // pred_region
    _
  $region25: #{forward.45} parent=0 // pred_fallthru
    _
  // Predicated region
  $region26: #{forward.45} parent=0 // pred_check
    _
  $region27: #{forward.45} parent=0 // pred_check_branch
    %449 = sbr.rel (0) target = $region29
  $region28: #{forward.45} parent=0 // pred_region
    _
  $region29: #{forward.45} parent=0 // pred_fallthru
    _

// kernel: forward.43
$region0: #{forward.43}
  #allocation0 [shape = 'u32[]', space=smem, size = 0x4, offset = 0x4, fixed_abs, tag = 'smem constant byte address 0x4 - core index']
  #allocation1 [shape = 'u32[144,128]{1,0:T(1,128)}', space=vmem, size = 0x12000, scoped, tag = 'internal scratch']
  #allocation2 [shape = 'f32[256,128]{1,0:T(8,128)}', space=vmem, size = 0x20000, scoped, tag = 'scratch operand']
  %s0 = inlined_call_operand.vmem [shape: bf16[512,256], index: 0, kind: input, shape index: {}]
  %s1 = inlined_call_operand.vmem [shape: bf16[256,128], index: 1, kind: input, shape index: {}]
  %s2 = inlined_call_operand.vmem [shape: f32[1,128], index: 2, kind: input, shape index: {}]
  %s3 = inlined_call_operand.vmem [shape: bf16[512,128], index: 3, kind: output, shape index: {}]
  %s4 = sld [smem:[#allocation0]]
  $region53: #{forward.43} parent=0
    _
  %s6 = ssub.s32 1, %s4
  %s7 = scalar_select 0, %s6, %s4
  loop: start=0, step=1, limit=4
  $region2: #{forward.43} parent=0 // loop_pre_header
    _
  $region3: #{forward.43} parent=0 // loop_header
    %s9 = sphi 0, %s13
    %p10 = scmp.ge.s32.totalorder %s9, 4
    %s16 = sphi 0, %s35
    %s17 = sphi 0, %s31
    %s18 = sphi 0, %s27
    %s19 = sphi 0, %s16
    %s20 = sphi 0, %s17
    %s21 = sphi 0, %s18
    %s22 = sphi 0, %s19
    %s23 = sphi 0, %s20
    %s24 = sphi 0, %s21
    %s40 = sphi 0, %s42
    %s43 = sphi 0, %s40
    %s44 = sphi 0, %s43
    %s60 = sphi 0, %s44
    %s68 = sphi 0, %s70
    %s71 = sphi 0, %s68
    %s72 = sphi 0, %s71
    %s88 = sphi 0, %s72
    %s94 = sphi 0, %s96
    %s97 = sphi 0, %s94
    %s98 = sphi 0, %s97
    %s114 = sphi 0, %s98
    %s122 = sphi 0, %s124
    %s125 = sphi 0, %s122
    %s126 = sphi 0, %s125
    %s142 = sphi 0, %s126
  $region4: #{forward.43} parent=0 // loop_header_branch
    %12 = sbr.rel (%p10) target = $region8
  $region5: #{forward.43} parent=0 // loop_body
    %s14 = ssub.s32 %s9, 1
    %s15 = ssub.s32 %s9, 2
    %s25 = sadd.s32 1, %s18
    %p26 = scmp.ge.s32.totalorder %s25, 1
    %s27 = scalar_select %p26, 0, %s25
    %s28 = sadd.s32 1, %s17
    %s29 = scalar_select %p26, %s28, %s17
    %p30 = scmp.ge.s32.totalorder %s29, 1
    %s31 = scalar_select %p30, 0, %s29
    %s32 = sadd.s32 1, %s16
    %s33 = scalar_select %p30, %s32, %s16
    %p34 = scmp.ge.s32.totalorder %s33, 2
    %s35 = scalar_select %p34, 0, %s33
    %s36 = ssub.s32 %s16, %s35
    %s37 = ssub.s32 %s18, %s27
    %s38 = sor.u32 %s36, %s37
    %p39 = scmp.eq.s32.totalorder %s38, 0
    %s41 = sadd.s32 %s40, 1
    %s42 = scalar_select %p39, %s40, %s41
    %p45 = pneg %p39
    %p46 = scmp.eq.s32.totalorder %s9, 1
    %p47 = por %p45, %p46
    %p48 = scmp.ne.s32.totalorder %s40, %s43
    %p49 = scmp.eq.s32.totalorder %s9, 0
    %p50 = por %p48, %p49
    %p51 = scmp.ne.s32.totalorder %s40, %s43
    %p52 = scmp.eq.s32.totalorder %s14, 1
    %p53 = por %p51, %p52
    %p54 = scmp.ne.s32.totalorder %s43, %s44
    %p55 = scmp.eq.s32.totalorder %s14, 0
    %p56 = por %p54, %p55
    %p57 = scmp.ne.s32.totalorder %s43, %s44
    %p58 = scmp.eq.s32.totalorder %s15, 1
    %p59 = por %p57, %p58
    %p61 = scmp.ne.s32.totalorder %s44, %s60
    %p62 = scmp.eq.s32.totalorder %s15, 0
    %p63 = por %p61, %p62
    %s64 = ssub.s32 %s18, %s27
    %s65 = ssub.s32 %s17, %s31
    %s66 = sor.u32 %s64, %s65
    %p67 = scmp.eq.s32.totalorder %s66, 0
    %s69 = sadd.s32 %s68, 1
    %s70 = scalar_select %p67, %s68, %s69
    %p73 = pneg %p67
    %p74 = scmp.eq.s32.totalorder %s9, 1
    %p75 = por %p73, %p74
    %p76 = scmp.ne.s32.totalorder %s68, %s71
    %p77 = scmp.eq.s32.totalorder %s9, 0
    %p78 = por %p76, %p77
    %p79 = scmp.ne.s32.totalorder %s68, %s71
    %p80 = scmp.eq.s32.totalorder %s14, 1
    %p81 = por %p79, %p80
    %p82 = scmp.ne.s32.totalorder %s71, %s72
    %p83 = scmp.eq.s32.totalorder %s14, 0
    %p84 = por %p82, %p83
    %p85 = scmp.ne.s32.totalorder %s71, %s72
    %p86 = scmp.eq.s32.totalorder %s15, 1
    %p87 = por %p85, %p86
    %p89 = scmp.ne.s32.totalorder %s72, %s88
    %p90 = scmp.eq.s32.totalorder %s15, 0
    %p91 = por %p89, %p90
    %s92 = ssub.s32 %s17, %s31
    %p93 = scmp.eq.s32.totalorder %s92, 0
    %s95 = sadd.s32 %s94, 1
    %s96 = scalar_select %p93, %s94, %s95
    %p99 = pneg %p93
    %p100 = scmp.eq.s32.totalorder %s9, 1
    %p101 = por %p99, %p100
    %p102 = scmp.ne.s32.totalorder %s94, %s97
    %p103 = scmp.eq.s32.totalorder %s9, 0
    %p104 = por %p102, %p103
    %p105 = scmp.ne.s32.totalorder %s94, %s97
    %p106 = scmp.eq.s32.totalorder %s14, 1
    %p107 = por %p105, %p106
    %p108 = scmp.ne.s32.totalorder %s97, %s98
    %p109 = scmp.eq.s32.totalorder %s14, 0
    %p110 = por %p108, %p109
    %p111 = scmp.ne.s32.totalorder %s97, %s98
    %p112 = scmp.eq.s32.totalorder %s15, 1
    %p113 = por %p111, %p112
    %p115 = scmp.ne.s32.totalorder %s98, %s114
    %p116 = scmp.eq.s32.totalorder %s15, 0
    %p117 = por %p115, %p116
    %s118 = ssub.s32 %s16, %s35
    %s119 = ssub.s32 %s17, %s31
    %s120 = sor.u32 %s118, %s119
    %p121 = scmp.eq.s32.totalorder %s120, 0
    %s123 = sadd.s32 %s122, 1
    %s124 = scalar_select %p121, %s122, %s123
    %p127 = pneg %p121
    %p128 = scmp.eq.s32.totalorder %s9, 1
    %p129 = por %p127, %p128
    %p130 = scmp.ne.s32.totalorder %s122, %s125
    %p131 = scmp.eq.s32.totalorder %s9, 0
    %p132 = por %p130, %p131
    %p133 = scmp.ne.s32.totalorder %s122, %s125
    %p134 = scmp.eq.s32.totalorder %s14, 1
    %p135 = por %p133, %p134
    %p136 = scmp.ne.s32.totalorder %s125, %s126
    %p137 = scmp.eq.s32.totalorder %s14, 0
    %p138 = por %p136, %p137
    %p139 = scmp.ne.s32.totalorder %s125, %s126
    %p140 = scmp.eq.s32.totalorder %s15, 1
    %p141 = por %p139, %p140
    %p143 = scmp.ne.s32.totalorder %s126, %s142
    %p144 = scmp.eq.s32.totalorder %s15, 0
    %p145 = por %p143, %p144
    %p146 = scmp.le.s32.totalorder 1, %s9
    %p147 = scmp.lt.s32.totalorder %s9, 3
    %p148 = pnand %p146, %p147
    %p149 = pneg %p148
    // Predicated region
    $region9: #{forward.43} parent=5 // pred_check
      _
    $region10: #{forward.43} parent=5 // pred_check_branch
      %151 = sbr.rel (%p148) target = $region12
    $region11: #{forward.43} parent=5 // pred_region
      %s152 = ssub.s32 %s9, 1
      // Predicated region
      $region13: #{forward.43} parent=11 // pred_check
        %p153 = pneg %p84
      $region14: #{forward.43} parent=11 // pred_check_branch
        %155 = sbr.rel (%p153) target = $region16
      $region15: #{forward.43} parent=11 // pred_region
        %s156 = smul.u32 32, %s21
        %p157 = scmp.lt.s32.totalorder %s156, 31
        %s158 = scalar_select %p157, %s156, 31
        %p159 = scmp.lt.s32.totalorder %s20, 0
        %s160 = scalar_select %p159, %s20, 0
        %s161 = sadd.s32 %s160, %s158
        %s162 = smul.addr %s161, 4
        %s163 = scalar_lea.vmem %s1, %s162
        %s164 = smul.u32 32, %s21
      $region16: #{forward.43} parent=11 // pred_fallthru
        _
      // Predicated region
      $region17: #{forward.43} parent=11 // pred_check
        %p165 = pneg %p110
      $region18: #{forward.43} parent=11 // pred_check_branch
        %167 = sbr.rel (%p165) target = $region20
      $region19: #{forward.43} parent=11 // pred_region
        %p168 = scmp.lt.s32.totalorder %s20, 0
        %s169 = scalar_select %p168, %s20, 0
        %s170 = scalar_lea.vmem %s2, %s169
      $region20: #{forward.43} parent=11 // pred_fallthru
        _
    $region12: #{forward.43} parent=5 // pred_fallthru
      _
    %p171 = scmp.lt.s32.totalorder %s9, 2
    // Predicated region
    $region21: #{forward.43} parent=5 // pred_check
      %p172 = pneg %p171
    $region22: #{forward.43} parent=5 // pred_check_branch
      %174 = sbr.rel (%p172) target = $region24
    $region23: #{forward.43} parent=5 // pred_region
      // Predicated region
      $region25: #{forward.43} parent=23 // pred_check
        %p175 = pneg %p50
      $region26: #{forward.43} parent=23 // pred_check_branch
        %177 = sbr.rel (%p175) target = $region28
      $region27: #{forward.43} parent=23 // pred_region
        %s178 = smul.u32 32, %s16
        %s179 = smul.u32 2, %s18
        %p180 = scmp.lt.s32.totalorder %s178, 63
        %s181 = scalar_select %p180, %s178, 63
        %p182 = scmp.lt.s32.totalorder %s179, 1
        %s183 = scalar_select %p182, %s179, 1
        %s184 = smul.addr %s181, 2
        %s185 = sadd.s32 %s183, %s184
        %s186 = smul.addr %s185, 4
        %s187 = scalar_lea.vmem %s0, %s186
        %s188 = smul.u32 32, %s16
        %s189 = smul.u32 2, %s18
      $region28: #{forward.43} parent=23 // pred_fallthru
        _
    $region24: #{forward.43} parent=5 // pred_fallthru
      _
    %p190 = scmp.le.s32.totalorder 1, %s9
    %p191 = scmp.lt.s32.totalorder %s9, 3
    %p192 = pnand %p190, %p191
    %p193 = pneg %p192
    // Predicated region
    $region29: #{forward.43} parent=5 // pred_check
      _
    $region30: #{forward.43} parent=5 // pred_check_branch
      %195 = sbr.rel (%p192) target = $region32
    $region31: #{forward.43} parent=5 // pred_region
      %s196 = ssub.s32 %s9, 1
      %s197 = smul.u32 32, %s19
      %s198 = smul.u32 2, %s21
      %p199 = scmp.lt.s32.totalorder %s197, 63
      %s200 = scalar_select %p199, %s197, 63
      %p201 = scmp.lt.s32.totalorder %s198, 1
      %s202 = scalar_select %p201, %s198, 1
      %s203 = smul.addr %s200, 2
      %s204 = sadd.s32 %s202, %s203
      %s205 = smul.addr %s204, 4
      %s206 = scalar_lea.vmem %s0, %s205
      %p207 = pneg %p56
      %p208 = pneg %p53
      %s209 = smul.u32 32, %s21
      %p210 = scmp.lt.s32.totalorder %s209, 31
      %s211 = scalar_select %p210, %s209, 31
      %p212 = scmp.lt.s32.totalorder %s20, 0
      %s213 = scalar_select %p212, %s20, 0
      %s214 = sadd.s32 %s213, %s211
      %s215 = smul.addr %s214, 4
      %s216 = scalar_lea.vmem %s1, %s215
      %p217 = pneg %p84
      %p218 = pneg %p81
      %p219 = scmp.lt.s32.totalorder %s20, 0
      %s220 = scalar_select %p219, %s20, 0
      %s221 = scalar_lea.vmem %s2, %s220
      %p222 = pneg %p110
      %p223 = pneg %p107
      %p224 = pneg %p138
      %p225 = pneg %p135
      %s226 = smul.u32 32, %s19
      %p227 = scmp.lt.s32.totalorder %s226, 63
      %s228 = scalar_select %p227, %s226, 63
      %p229 = scmp.lt.s32.totalorder %s20, 0
      %s230 = scalar_select %p229, %s20, 0
      %s231 = sadd.s32 %s230, %s228
      %s232 = smul.addr %s231, 4
      %s233 = scalar_lea.vmem %s3, %s232
      %s234 = smul.u32 32, %s19
      %s235 = smul.u32 2, %s21
      %p236 = scmp.lt.s32.totalorder %s234, 63
      %s237 = scalar_select %p236, %s234, 63
      %p238 = scmp.lt.s32.totalorder %s235, 1
      %s239 = scalar_select %p238, %s235, 1
      %s240 = smul.addr %s237, 2
      %s241 = sadd.s32 %s239, %s240
      %s242 = smul.addr %s241, 4
      %s243 = scalar_lea.vmem %s0, %s242
      %s244 = smul.u32 32, %s19
      %s245 = smul.u32 2, %s21
      %s246 = smul.u32 32, %s21
      %p247 = scmp.lt.s32.totalorder %s246, 31
      %s248 = scalar_select %p247, %s246, 31
      %p249 = scmp.lt.s32.totalorder %s20, 0
      %s250 = scalar_select %p249, %s20, 0
      %s251 = sadd.s32 %s250, %s248
      %s252 = smul.addr %s251, 4
      %s253 = scalar_lea.vmem %s1, %s252
      %s254 = smul.u32 32, %s21
      %p255 = scmp.lt.s32.totalorder %s20, 0
      %s256 = scalar_select %p255, %s20, 0
      %s257 = scalar_lea.vmem %s2, %s256
      %s258 = smul.u32 32, %s19
      %p259 = scmp.lt.s32.totalorder %s258, 63
      %s260 = scalar_select %p259, %s258, 63
      %p261 = scmp.lt.s32.totalorder %s20, 0
      %s262 = scalar_select %p261, %s20, 0
      %s263 = sadd.s32 %s262, %s260
      %s264 = smul.addr %s263, 4
      %s265 = scalar_lea.vmem %s3, %s264
      %s266 = smul.u32 32, %s19
      %p268 = scmp.eq.s32.totalorder %s21, 0
      // Predicated region
      $region33: #{forward.43} parent=31 // pred_check
        %p269 = pneg %p268
      $region34: #{forward.43} parent=31 // pred_check_branch
        %271 = sbr.rel (%p269) target = $region36
      $region35: #{forward.43} parent=31 // pred_region
        %272 = vst [vmem:[#allocation2] sm:$0xff] 0.0
        %273 = vst [vmem:[#allocation2 + $0x8] sm:$0xff] 0.0
        %274 = vst [vmem:[#allocation2 + $0x10] sm:$0xff] 0.0
        %275 = vst [vmem:[#allocation2 + $0x18] sm:$0xff] 0.0
        %276 = vst [vmem:[#allocation2 + $0x20] sm:$0xff] 0.0
        %277 = vst [vmem:[#allocation2 + $0x28] sm:$0xff] 0.0
        %278 = vst [vmem:[#allocation2 + $0x30] sm:$0xff] 0.0
        %279 = vst [vmem:[#allocation2 + $0x38] sm:$0xff] 0.0
        %280 = vst [vmem:[#allocation2 + $0x40] sm:$0xff] 0.0
        %281 = vst [vmem:[#allocation2 + $0x48] sm:$0xff] 0.0
        %282 = vst [vmem:[#allocation2 + $0x50] sm:$0xff] 0.0
        %283 = vst [vmem:[#allocation2 + $0x58] sm:$0xff] 0.0
        %284 = vst [vmem:[#allocation2 + $0x60] sm:$0xff] 0.0
        %285 = vst [vmem:[#allocation2 + $0x68] sm:$0xff] 0.0
        %286 = vst [vmem:[#allocation2 + $0x70] sm:$0xff] 0.0
        %287 = vst [vmem:[#allocation2 + $0x78] sm:$0xff] 0.0
        %288 = vst [vmem:[#allocation2 + $0x80] sm:$0xff] 0.0
        %289 = vst [vmem:[#allocation2 + $0x88] sm:$0xff] 0.0
        %290 = vst [vmem:[#allocation2 + $0x90] sm:$0xff] 0.0
        %291 = vst [vmem:[#allocation2 + $0x98] sm:$0xff] 0.0
        %292 = vst [vmem:[#allocation2 + $0xa0] sm:$0xff] 0.0
        %293 = vst [vmem:[#allocation2 + $0xa8] sm:$0xff] 0.0
        %294 = vst [vmem:[#allocation2 + $0xb0] sm:$0xff] 0.0
        %295 = vst [vmem:[#allocation2 + $0xb8] sm:$0xff] 0.0
        %296 = vst [vmem:[#allocation2 + $0xc0] sm:$0xff] 0.0
        %297 = vst [vmem:[#allocation2 + $0xc8] sm:$0xff] 0.0
        %298 = vst [vmem:[#allocation2 + $0xd0] sm:$0xff] 0.0
        %299 = vst [vmem:[#allocation2 + $0xd8] sm:$0xff] 0.0
        %300 = vst [vmem:[#allocation2 + $0xe0] sm:$0xff] 0.0
        %301 = vst [vmem:[#allocation2 + $0xe8] sm:$0xff] 0.0
        %302 = vst [vmem:[#allocation2 + $0xf0] sm:$0xff] 0.0
        %303 = vst [vmem:[#allocation2 + $0xf8] sm:$0xff] 0.0
      $region36: #{forward.43} parent=31 // pred_fallthru
        _
      %v304 = vld [vmem:[#allocation2] sm:$0xff]
      %v305 = vld [vmem:[#allocation2 + $0x8] sm:$0xff]
      %v306 = vld [vmem:[#allocation2 + $0x10] sm:$0xff]
      %v307 = vld [vmem:[#allocation2 + $0x18] sm:$0xff]
      %v308 = vld [vmem:[#allocation2 + $0x20] sm:$0xff]
      %v309 = vld [vmem:[#allocation2 + $0x28] sm:$0xff]
      %v310 = vld [vmem:[#allocation2 + $0x30] sm:$0xff]
      %v311 = vld [vmem:[#allocation2 + $0x38] sm:$0xff]
      %v312 = vld [vmem:[#allocation2 + $0x40] sm:$0xff]
      %v313 = vld [vmem:[#allocation2 + $0x48] sm:$0xff]
      %v314 = vld [vmem:[#allocation2 + $0x50] sm:$0xff]
      %v315 = vld [vmem:[#allocation2 + $0x58] sm:$0xff]
      %v316 = vld [vmem:[#allocation2 + $0x60] sm:$0xff]
      %v317 = vld [vmem:[#allocation2 + $0x68] sm:$0xff]
      %v318 = vld [vmem:[#allocation2 + $0x70] sm:$0xff]
      %v319 = vld [vmem:[#allocation2 + $0x78] sm:$0xff]
      %v320 = vld [vmem:[#allocation2 + $0x80] sm:$0xff]
      %v321 = vld [vmem:[#allocation2 + $0x88] sm:$0xff]
      %v322 = vld [vmem:[#allocation2 + $0x90] sm:$0xff]
      %v323 = vld [vmem:[#allocation2 + $0x98] sm:$0xff]
      %v324 = vld [vmem:[#allocation2 + $0xa0] sm:$0xff]
      %v325 = vld [vmem:[#allocation2 + $0xa8] sm:$0xff]
      %v326 = vld [vmem:[#allocation2 + $0xb0] sm:$0xff]
      %v327 = vld [vmem:[#allocation2 + $0xb8] sm:$0xff]
      %v328 = vld [vmem:[#allocation2 + $0xc0] sm:$0xff]
      %v329 = vld [vmem:[#allocation2 + $0xc8] sm:$0xff]
      %v330 = vld [vmem:[#allocation2 + $0xd0] sm:$0xff]
      %v331 = vld [vmem:[#allocation2 + $0xd8] sm:$0xff]
      %v332 = vld [vmem:[#allocation2 + $0xe0] sm:$0xff]
      %v333 = vld [vmem:[#allocation2 + $0xe8] sm:$0xff]
      %v334 = vld [vmem:[#allocation2 + $0xf0] sm:$0xff]
      %v335 = vld [vmem:[#allocation2 + $0xf8] sm:$0xff]
      %v336 = vld [vmem:[%s243] sm:$0xff]
      %v337 = vld [vmem:[%s243 + $0x8] sm:$0xff]
      %v338 = vld [vmem:[%s243 + $0x10] sm:$0xff]
      %v339 = vld [vmem:[%s243 + $0x18] sm:$0xff]
      %v340 = vld [vmem:[%s243 + $0x20] sm:$0xff]
      %v341 = vld [vmem:[%s243 + $0x28] sm:$0xff]
      %v342 = vld [vmem:[%s243 + $0x30] sm:$0xff]
      %v343 = vld [vmem:[%s243 + $0x38] sm:$0xff]
      %v344 = vld [vmem:[%s243 + $0x40] sm:$0xff]
      %v345 = vld [vmem:[%s243 + $0x48] sm:$0xff]
      %v346 = vld [vmem:[%s243 + $0x50] sm:$0xff]
      %v347 = vld [vmem:[%s243 + $0x58] sm:$0xff]
      %v348 = vld [vmem:[%s243 + $0x60] sm:$0xff]
      %v349 = vld [vmem:[%s243 + $0x68] sm:$0xff]
      %v350 = vld [vmem:[%s243 + $0x70] sm:$0xff]
      %v351 = vld [vmem:[%s243 + $0x78] sm:$0xff]
      %v352 = vld [vmem:[%s243 + $0x80] sm:$0xff]
      %v353 = vld [vmem:[%s243 + $0x88] sm:$0xff]
      %v354 = vld [vmem:[%s243 + $0x90] sm:$0xff]
      %v355 = vld [vmem:[%s243 + $0x98] sm:$0xff]
      %v356 = vld [vmem:[%s243 + $0xa0] sm:$0xff]
      %v357 = vld [vmem:[%s243 + $0xa8] sm:$0xff]
      %v358 = vld [vmem:[%s243 + $0xb0] sm:$0xff]
      %v359 = vld [vmem:[%s243 + $0xb8] sm:$0xff]
      %v360 = vld [vmem:[%s243 + $0xc0] sm:$0xff]
      %v361 = vld [vmem:[%s243 + $0xc8] sm:$0xff]
      %v362 = vld [vmem:[%s243 + $0xd0] sm:$0xff]
      %v363 = vld [vmem:[%s243 + $0xd8] sm:$0xff]
      %v364 = vld [vmem:[%s243 + $0xe0] sm:$0xff]
      %v365 = vld [vmem:[%s243 + $0xe8] sm:$0xff]
      %v366 = vld [vmem:[%s243 + $0xf0] sm:$0xff]
      %v367 = vld [vmem:[%s243 + $0xf8] sm:$0xff]
      %v368 = vld [vmem:[%s253] sm:$0xf]
      %v369 = vld [vmem:[%s253 + $0x4] sm:$0xf]
      %v370 = vld [vmem:[%s253 + $0x8] sm:$0xf]
      %v371 = vld [vmem:[%s253 + $0xc] sm:$0xf]
      %v372 = vld [vmem:[%s253 + $0x10] sm:$0xf]
      %v373 = vld [vmem:[%s253 + $0x14] sm:$0xf]
      %v374 = vld [vmem:[%s253 + $0x18] sm:$0xf]
      %v375 = vld [vmem:[%s253 + $0x1c] sm:$0xf]
      %v376 = vld [vmem:[%s253 + $0x20] sm:$0xf]
      %v377 = vld [vmem:[%s253 + $0x24] sm:$0xf]
      %v378 = vld [vmem:[%s253 + $0x28] sm:$0xf]
      %v379 = vld [vmem:[%s253 + $0x2c] sm:$0xf]
      %v380 = vld [vmem:[%s253 + $0x30] sm:$0xf]
      %v381 = vld [vmem:[%s253 + $0x34] sm:$0xf]
      %v382 = vld [vmem:[%s253 + $0x38] sm:$0xf]
      %v383 = vld [vmem:[%s253 + $0x3c] sm:$0xf]
      %v384 = vld [vmem:[%s253 + $0x40] sm:$0xf]
      %v385 = vld [vmem:[%s253 + $0x44] sm:$0xf]
      %v386 = vld [vmem:[%s253 + $0x48] sm:$0xf]
      %v387 = vld [vmem:[%s253 + $0x4c] sm:$0xf]
      %v388 = vld [vmem:[%s253 + $0x50] sm:$0xf]
      %v389 = vld [vmem:[%s253 + $0x54] sm:$0xf]
      %v390 = vld [vmem:[%s253 + $0x58] sm:$0xf]
      %v391 = vld [vmem:[%s253 + $0x5c] sm:$0xf]
      %v392 = vld [vmem:[%s253 + $0x60] sm:$0xf]
      %v393 = vld [vmem:[%s253 + $0x64] sm:$0xf]
      %v394 = vld [vmem:[%s253 + $0x68] sm:$0xf]
      %v395 = vld [vmem:[%s253 + $0x6c] sm:$0xf]
      %v396 = vld [vmem:[%s253 + $0x70] sm:$0xf]
      %v397 = vld [vmem:[%s253 + $0x74] sm:$0xf]
      %v398 = vld [vmem:[%s253 + $0x78] sm:$0xf]
      %v399 = vld [vmem:[%s253 + $0x7c] sm:$0xf]
      %v432 = vunpack.c.l.b16 %v336
      %v433 = vunpack.c.h.b16 %v336
      %v434 = vunpack.c.l.b16 %v337
      %v435 = vunpack.c.h.b16 %v337
      %v436 = vunpack.c.l.b16 %v338
      %v437 = vunpack.c.h.b16 %v338
      %v438 = vunpack.c.l.b16 %v339
      %v439 = vunpack.c.h.b16 %v339
      %v440 = vunpack.c.l.b16 %v340
      %v441 = vunpack.c.h.b16 %v340
      %v442 = vunpack.c.l.b16 %v341
      %v443 = vunpack.c.h.b16 %v341
      %v444 = vunpack.c.l.b16 %v342
      %v445 = vunpack.c.h.b16 %v342
      %v446 = vunpack.c.l.b16 %v343
      %v447 = vunpack.c.h.b16 %v343
      %v448 = vunpack.c.l.b16 %v344
      %v449 = vunpack.c.h.b16 %v344
      %v450 = vunpack.c.l.b16 %v345
      %v451 = vunpack.c.h.b16 %v345
      %v452 = vunpack.c.l.b16 %v346
      %v453 = vunpack.c.h.b16 %v346
      %v454 = vunpack.c.l.b16 %v347
      %v455 = vunpack.c.h.b16 %v347
      %v456 = vunpack.c.l.b16 %v348
      %v457 = vunpack.c.h.b16 %v348
      %v458 = vunpack.c.l.b16 %v349
      %v459 = vunpack.c.h.b16 %v349
      %v460 = vunpack.c.l.b16 %v350
      %v461 = vunpack.c.h.b16 %v350
      %v462 = vunpack.c.l.b16 %v351
      %v463 = vunpack.c.h.b16 %v351
      %v464 = vunpack.c.l.b16 %v352
      %v465 = vunpack.c.h.b16 %v352
      %v466 = vunpack.c.l.b16 %v353
      %v467 = vunpack.c.h.b16 %v353
      %v468 = vunpack.c.l.b16 %v354
      %v469 = vunpack.c.h.b16 %v354
      %v470 = vunpack.c.l.b16 %v355
      %v471 = vunpack.c.h.b16 %v355
      %v472 = vunpack.c.l.b16 %v356
      %v473 = vunpack.c.h.b16 %v356
      %v474 = vunpack.c.l.b16 %v357
      %v475 = vunpack.c.h.b16 %v357
      %v476 = vunpack.c.l.b16 %v358
      %v477 = vunpack.c.h.b16 %v358
      %v478 = vunpack.c.l.b16 %v359
      %v479 = vunpack.c.h.b16 %v359
      %v480 = vunpack.c.l.b16 %v360
      %v481 = vunpack.c.h.b16 %v360
      %v482 = vunpack.c.l.b16 %v361
      %v483 = vunpack.c.h.b16 %v361
      %v484 = vunpack.c.l.b16 %v362
      %v485 = vunpack.c.h.b16 %v362
      %v486 = vunpack.c.l.b16 %v363
      %v487 = vunpack.c.h.b16 %v363
      %v488 = vunpack.c.l.b16 %v364
      %v489 = vunpack.c.h.b16 %v364
      %v490 = vunpack.c.l.b16 %v365
      %v491 = vunpack.c.h.b16 %v365
      %v492 = vunpack.c.l.b16 %v366
      %v493 = vunpack.c.h.b16 %v366
      %v494 = vunpack.c.l.b16 %v367
      %v495 = vunpack.c.h.b16 %v367
      %v496 = vpack.c.b16 %v434, %v432
      %v497 = vpack.c.b16 %v435, %v433
      %v498 = vpack.c.b16 %v438, %v436
      %v499 = vpack.c.b16 %v439, %v437
      %v500 = vpack.c.b16 %v442, %v440
      %v501 = vpack.c.b16 %v443, %v441
      %v502 = vpack.c.b16 %v446, %v444
      %v503 = vpack.c.b16 %v447, %v445
      %v504 = vpack.c.b16 %v450, %v448
      %v505 = vpack.c.b16 %v451, %v449
      %v506 = vpack.c.b16 %v454, %v452
      %v507 = vpack.c.b16 %v455, %v453
      %v508 = vpack.c.b16 %v458, %v456
      %v509 = vpack.c.b16 %v459, %v457
      %v510 = vpack.c.b16 %v462, %v460
      %v511 = vpack.c.b16 %v463, %v461
      %v512 = vpack.c.b16 %v466, %v464
      %v513 = vpack.c.b16 %v467, %v465
      %v514 = vpack.c.b16 %v470, %v468
      %v515 = vpack.c.b16 %v471, %v469
      %v516 = vpack.c.b16 %v474, %v472
      %v517 = vpack.c.b16 %v475, %v473
      %v518 = vpack.c.b16 %v478, %v476
      %v519 = vpack.c.b16 %v479, %v477
      %v520 = vpack.c.b16 %v482, %v480
      %v521 = vpack.c.b16 %v483, %v481
      %v522 = vpack.c.b16 %v486, %v484
      %v523 = vpack.c.b16 %v487, %v485
      %v524 = vpack.c.b16 %v490, %v488
      %v525 = vpack.c.b16 %v491, %v489
      %v526 = vpack.c.b16 %v494, %v492
      %v527 = vpack.c.b16 %v495, %v493
      %v592 = vunpack.c.l.b16 %v368
      %v593 = vunpack.c.l.b16 %v369
      %v594 = vunpack.c.l.b16 %v370
      %v595 = vunpack.c.l.b16 %v371
      %v596 = vunpack.c.l.b16 %v372
      %v597 = vunpack.c.l.b16 %v373
      %v598 = vunpack.c.l.b16 %v374
      %v599 = vunpack.c.l.b16 %v375
      %v600 = vunpack.c.l.b16 %v376
      %v601 = vunpack.c.l.b16 %v377
      %v602 = vunpack.c.l.b16 %v378
      %v603 = vunpack.c.l.b16 %v379
      %v604 = vunpack.c.l.b16 %v380
      %v605 = vunpack.c.l.b16 %v381
      %v606 = vunpack.c.l.b16 %v382
      %v607 = vunpack.c.l.b16 %v383
      %v608 = vunpack.c.l.b16 %v384
      %v609 = vunpack.c.l.b16 %v385
      %v610 = vunpack.c.l.b16 %v386
      %v611 = vunpack.c.l.b16 %v387
      %v612 = vunpack.c.l.b16 %v388
      %v613 = vunpack.c.l.b16 %v389
      %v614 = vunpack.c.l.b16 %v390
      %v615 = vunpack.c.l.b16 %v391
      %v616 = vunpack.c.l.b16 %v392
      %v617 = vunpack.c.l.b16 %v393
      %v618 = vunpack.c.l.b16 %v394
      %v619 = vunpack.c.l.b16 %v395
      %v620 = vunpack.c.l.b16 %v396
      %v621 = vunpack.c.l.b16 %v397
      %v622 = vunpack.c.l.b16 %v398
      %v623 = vunpack.c.l.b16 %v399
      %v624 = vpack.c.b16 %v593, %v592
      %v625 = vpack.c.b16 %v595, %v594
      %v626 = vpack.c.b16 %v597, %v596
      %v627 = vpack.c.b16 %v599, %v598
      %v628 = vpack.c.b16 %v601, %v600
      %v629 = vpack.c.b16 %v603, %v602
      %v630 = vpack.c.b16 %v605, %v604
      %v631 = vpack.c.b16 %v607, %v606
      %v632 = vpack.c.b16 %v609, %v608
      %v633 = vpack.c.b16 %v611, %v610
      %v634 = vpack.c.b16 %v613, %v612
      %v635 = vpack.c.b16 %v615, %v614
      %v636 = vpack.c.b16 %v617, %v616
      %v637 = vpack.c.b16 %v619, %v618
      %v638 = vpack.c.b16 %v621, %v620
      %v639 = vpack.c.b16 %v623, %v622
      %656 = vmatprep.subr.bf16.mxu0 0
      %657 = vmatpush1.bf16.msra.mxu0 %v624
      %658 = vmatprep.subr.bf16.mxu0 0
      %659 = vmatpush1.bf16.msra.mxu0 %v625
      %660 = vmatprep.subr.bf16.mxu0 0
      %661 = vmatpush1.bf16.msra.mxu0 %v626
      %662 = vmatprep.subr.bf16.mxu0 0
      %663 = vmatpush1.bf16.msra.mxu0 %v627
      %664 = vmatprep.subr.bf16.mxu0 0
      %665 = vmatpush1.bf16.msra.mxu0 %v628
      %666 = vmatprep.subr.bf16.mxu0 0
      %667 = vmatpush1.bf16.msra.mxu0 %v629
      %668 = vmatprep.subr.bf16.mxu0 0
      %669 = vmatpush1.bf16.msra.mxu0 %v630
      %670 = vmatprep.subr.bf16.mxu0 0
      %671 = vmatpush1.bf16.msra.mxu0 %v631
      %672 = vmatprep.subr.bf16.mxu0 0
      %673 = vmatpush1.bf16.msra.mxu0 %v632
      %674 = vmatprep.subr.bf16.mxu0 0
      %675 = vmatpush1.bf16.msra.mxu0 %v633
      %676 = vmatprep.subr.bf16.mxu0 0
      %677 = vmatpush1.bf16.msra.mxu0 %v634
      %678 = vmatprep.subr.bf16.mxu0 0
      %679 = vmatpush1.bf16.msra.mxu0 %v635
      %680 = vmatprep.subr.bf16.mxu0 0
      %681 = vmatpush1.bf16.msra.mxu0 %v636
      %682 = vmatprep.subr.bf16.mxu0 0
      %683 = vmatpush1.bf16.msra.mxu0 %v637
      %684 = vmatprep.subr.bf16.mxu0 0
      %685 = vmatpush1.bf16.msra.mxu0 %v638
      %686 = vmatprep.subr.bf16.mxu0 0
      %687 = vmatpush1.bf16.msra.mxu0 %v639
      %688 = vmatprep.mubr.bf16.mxu0 %v497
      %689 = vmatmul.mubr.bf16.gmra.mrb[0].mxu0 %v496
      %v690 = vpop.f32.mrb[0].mxu0
      %v691 = vadd.f32 0.0, %v690
      %v692 = vpop.f32.mrb[0].mxu0
      %v693 = vpop.f32.mrb[0].mxu0
      %v694 = vadd.f32 0.0, %v693
      %v695 = vpop.f32.mrb[0].mxu0
      %696 = vmatprep.mubr.bf16.mxu0 %v499
      %697 = vmatmul.mubr.bf16.gmra.mrb[0].mxu0 %v498
      %v698 = vpop.f32.mrb[0].mxu0
      %v699 = vadd.f32 0.0, %v698
      %v700 = vpop.f32.mrb[0].mxu0
      %v701 = vpop.f32.mrb[0].mxu0
      %v702 = vadd.f32 0.0, %v701
      %v703 = vpop.f32.mrb[0].mxu0
      %704 = vmatprep.mubr.bf16.mxu0 %v501
      %705 = vmatmul.mubr.bf16.gmra.mrb[0].mxu0 %v500
      %v706 = vpop.f32.mrb[0].mxu0
      %v707 = vadd.f32 0.0, %v706
      %v708 = vpop.f32.mrb[0].mxu0
      %v709 = vpop.f32.mrb[0].mxu0
      %v710 = vadd.f32 0.0, %v709
      %v711 = vpop.f32.mrb[0].mxu0
      %712 = vmatprep.mubr.bf16.mxu0 %v503
      %713 = vmatmul.mubr.bf16.gmra.mrb[0].mxu0 %v502
      %v714 = vpop.f32.mrb[0].mxu0
      %v715 = vadd.f32 0.0, %v714
      %v716 = vpop.f32.mrb[0].mxu0
      %v717 = vpop.f32.mrb[0].mxu0
      %v718 = vadd.f32 0.0, %v717
      %v719 = vpop.f32.mrb[0].mxu0
      %720 = vmatprep.mubr.bf16.mxu0 %v505
      %721 = vmatmul.mubr.bf16.gmra.mrb[0].mxu0 %v504
      %v722 = vpop.f32.mrb[0].mxu0
      %v723 = vadd.f32 0.0, %v722
      %v724 = vpop.f32.mrb[0].mxu0
      %v725 = vpop.f32.mrb[0].mxu0
      %v726 = vadd.f32 0.0, %v725
      %v727 = vpop.f32.mrb[0].mxu0
      %728 = vmatprep.mubr.bf16.mxu0 %v507
      %729 = vmatmul.mubr.bf16.gmra.mrb[0].mxu0 %v506
      %v730 = vpop.f32.mrb[0].mxu0
      %v731 = vadd.f32 0.0, %v730
      %v732 = vpop.f32.mrb[0].mxu0
      %v733 = vpop.f32.mrb[0].mxu0
      %v734 = vadd.f32 0.0, %v733
      %v735 = vpop.f32.mrb[0].mxu0
      %736 = vmatprep.mubr.bf16.mxu0 %v509
      %737 = vmatmul.mubr.bf16.gmra.mrb[0].mxu0 %v508
      %v738 = vpop.f32.mrb[0].mxu0
      %v739 = vadd.f32 0.0, %v738
      %v740 = vpop.f32.mrb[0].mxu0
      %v741 = vpop.f32.mrb[0].mxu0
      %v742 = vadd.f32 0.0, %v741
      %v743 = vpop.f32.mrb[0].mxu0
      %744 = vmatprep.mubr.bf16.mxu0 %v511
      %745 = vmatmul.mubr.bf16.gmra.mrb[0].mxu0 %v510
      %v746 = vpop.f32.mrb[0].mxu0
      %v747 = vadd.f32 0.0, %v746
      %v748 = vpop.f32.mrb[0].mxu0
      %v749 = vpop.f32.mrb[0].mxu0
      %v750 = vadd.f32 0.0, %v749
      %v751 = vpop.f32.mrb[0].mxu0
      %752 = vmatprep.mubr.bf16.mxu0 %v513
      %753 = vmatmul.mubr.bf16.gmra.mrb[0].mxu0 %v512
      %v754 = vpop.f32.mrb[0].mxu0
      %v755 = vadd.f32 0.0, %v754
      %v756 = vpop.f32.mrb[0].mxu0
      %v757 = vpop.f32.mrb[0].mxu0
      %v758 = vadd.f32 0.0, %v757
      %v759 = vpop.f32.mrb[0].mxu0
      %760 = vmatprep.mubr.bf16.mxu0 %v515
      %761 = vmatmul.mubr.bf16.gmra.mrb[0].mxu0 %v514
      %v762 = vpop.f32.mrb[0].mxu0
      %v763 = vadd.f32 0.0, %v762
      %v764 = vpop.f32.mrb[0].mxu0
      %v765 = vpop.f32.mrb[0].mxu0
      %v766 = vadd.f32 0.0, %v765
      %v767 = vpop.f32.mrb[0].mxu0
      %768 = vmatprep.mubr.bf16.mxu0 %v517
      %769 = vmatmul.mubr.bf16.gmra.mrb[0].mxu0 %v516
      %v770 = vpop.f32.mrb[0].mxu0
      %v771 = vadd.f32 0.0, %v770
      %v772 = vpop.f32.mrb[0].mxu0
      %v773 = vpop.f32.mrb[0].mxu0
      %v774 = vadd.f32 0.0, %v773
      %v775 = vpop.f32.mrb[0].mxu0
      %776 = vmatprep.mubr.bf16.mxu0 %v519
      %777 = vmatmul.mubr.bf16.gmra.mrb[0].mxu0 %v518
      %v778 = vpop.f32.mrb[0].mxu0
      %v779 = vadd.f32 0.0, %v778
      %v780 = vpop.f32.mrb[0].mxu0
      %v781 = vpop.f32.mrb[0].mxu0
      %v782 = vadd.f32 0.0, %v781
      %v783 = vpop.f32.mrb[0].mxu0
      %784 = vmatprep.mubr.bf16.mxu0 %v521
      %785 = vmatmul.mubr.bf16.gmra.mrb[0].mxu0 %v520
      %v786 = vpop.f32.mrb[0].mxu0
      %v787 = vadd.f32 0.0, %v786
      %v788 = vpop.f32.mrb[0].mxu0
      %v789 = vpop.f32.mrb[0].mxu0
      %v790 = vadd.f32 0.0, %v789
      %v791 = vpop.f32.mrb[0].mxu0
      %792 = vmatprep.mubr.bf16.mxu0 %v523
      %793 = vmatmul.mubr.bf16.gmra.mrb[0].mxu0 %v522
      %v794 = vpop.f32.mrb[0].mxu0
      %v795 = vadd.f32 0.0, %v794
      %v796 = vpop.f32.mrb[0].mxu0
      %v797 = vpop.f32.mrb[0].mxu0
      %v798 = vadd.f32 0.0, %v797
      %v799 = vpop.f32.mrb[0].mxu0
      %800 = vmatprep.mubr.bf16.mxu0 %v525
      %801 = vmatmul.mubr.bf16.gmra.mrb[0].mxu0 %v524
      %v802 = vpop.f32.mrb[0].mxu0
      %v803 = vadd.f32 0.0, %v802
      %v804 = vpop.f32.mrb[0].mxu0
      %v805 = vpop.f32.mrb[0].mxu0
      %v806 = vadd.f32 0.0, %v805
      %v807 = vpop.f32.mrb[0].mxu0
      %808 = vmatprep.mubr.bf16.mxu0 %v527
      %809 = vmatmul.mubr.bf16.gmra.mrb[0].mxu0 %v526
      %v810 = vpop.f32.mrb[0].mxu0
      %v811 = vadd.f32 0.0, %v810
      %v812 = vpop.f32.mrb[0].mxu0
      %v813 = vpop.f32.mrb[0].mxu0
      %v814 = vadd.f32 0.0, %v813
      %v815 = vpop.f32.mrb[0].mxu0
      %816 = vdwg.mxu0
      %v817 = vadd.f32 %v304, %v691
      %v818 = vadd.f32 %v305, %v694
      %v819 = vadd.f32 %v306, %v699
      %v820 = vadd.f32 %v307, %v702
      %v821 = vadd.f32 %v308, %v707
      %v822 = vadd.f32 %v309, %v710
      %v823 = vadd.f32 %v310, %v715
      %v824 = vadd.f32 %v311, %v718
      %v825 = vadd.f32 %v312, %v723
      %v826 = vadd.f32 %v313, %v726
      %v827 = vadd.f32 %v314, %v731
      %v828 = vadd.f32 %v315, %v734
      %v829 = vadd.f32 %v316, %v739
      %v830 = vadd.f32 %v317, %v742
      %v831 = vadd.f32 %v318, %v747
      %v832 = vadd.f32 %v319, %v750
      %v833 = vadd.f32 %v320, %v755
      %v834 = vadd.f32 %v321, %v758
      %v835 = vadd.f32 %v322, %v763
      %v836 = vadd.f32 %v323, %v766
      %v837 = vadd.f32 %v324, %v771
      %v838 = vadd.f32 %v325, %v774
      %v839 = vadd.f32 %v326, %v779
      %v840 = vadd.f32 %v327, %v782
      %v841 = vadd.f32 %v328, %v787
      %v842 = vadd.f32 %v329, %v790
      %v843 = vadd.f32 %v330, %v795
      %v844 = vadd.f32 %v331, %v798
      %v845 = vadd.f32 %v332, %v803
      %v846 = vadd.f32 %v333, %v806
      %v847 = vadd.f32 %v334, %v811
      %v848 = vadd.f32 %v335, %v814
      %849 = vst [vmem:[#allocation2] sm:$0xff] %v817
      %850 = vst [vmem:[#allocation2 + $0x8] sm:$0xff] %v818
      %851 = vst [vmem:[#allocation2 + $0x10] sm:$0xff] %v819
      %852 = vst [vmem:[#allocation2 + $0x18] sm:$0xff] %v820
      %853 = vst [vmem:[#allocation2 + $0x20] sm:$0xff] %v821
      %854 = vst [vmem:[#allocation2 + $0x28] sm:$0xff] %v822
      %855 = vst [vmem:[#allocation2 + $0x30] sm:$0xff] %v823
      %856 = vst [vmem:[#allocation2 + $0x38] sm:$0xff] %v824
      %857 = vst [vmem:[#allocation2 + $0x40] sm:$0xff] %v825
      %858 = vst [vmem:[#allocation2 + $0x48] sm:$0xff] %v826
      %859 = vst [vmem:[#allocation2 + $0x50] sm:$0xff] %v827
      %860 = vst [vmem:[#allocation2 + $0x58] sm:$0xff] %v828
      %861 = vst [vmem:[#allocation2 + $0x60] sm:$0xff] %v829
      %862 = vst [vmem:[#allocation2 + $0x68] sm:$0xff] %v830
      %863 = vst [vmem:[#allocation2 + $0x70] sm:$0xff] %v831
      %864 = vst [vmem:[#allocation2 + $0x78] sm:$0xff] %v832
      %865 = vst [vmem:[#allocation2 + $0x80] sm:$0xff] %v833
      %866 = vst [vmem:[#allocation2 + $0x88] sm:$0xff] %v834
      %867 = vst [vmem:[#allocation2 + $0x90] sm:$0xff] %v835
      %868 = vst [vmem:[#allocation2 + $0x98] sm:$0xff] %v836
      %869 = vst [vmem:[#allocation2 + $0xa0] sm:$0xff] %v837
      %870 = vst [vmem:[#allocation2 + $0xa8] sm:$0xff] %v838
      %871 = vst [vmem:[#allocation2 + $0xb0] sm:$0xff] %v839
      %872 = vst [vmem:[#allocation2 + $0xb8] sm:$0xff] %v840
      %873 = vst [vmem:[#allocation2 + $0xc0] sm:$0xff] %v841
      %874 = vst [vmem:[#allocation2 + $0xc8] sm:$0xff] %v842
      %875 = vst [vmem:[#allocation2 + $0xd0] sm:$0xff] %v843
      %876 = vst [vmem:[#allocation2 + $0xd8] sm:$0xff] %v844
      %877 = vst [vmem:[#allocation2 + $0xe0] sm:$0xff] %v845
      %878 = vst [vmem:[#allocation2 + $0xe8] sm:$0xff] %v846
      %879 = vst [vmem:[#allocation2 + $0xf0] sm:$0xff] %v847
      %880 = vst [vmem:[#allocation2 + $0xf8] sm:$0xff] %v848
      // Predicated region
      $region37: #{forward.43} parent=31 // pred_check
        %p881 = pneg %p268
      $region38: #{forward.43} parent=31 // pred_check_branch
        %883 = sbr.rel (%p881) target = $region40
      $region39: #{forward.43} parent=31 // pred_region
        %v884 = vld [vmem:[#allocation2] sm:$0xff]
        %v885 = vld [vmem:[#allocation2 + $0x8] sm:$0xff]
        %v886 = vld [vmem:[#allocation2 + $0x10] sm:$0xff]
        %v887 = vld [vmem:[#allocation2 + $0x18] sm:$0xff]
        %v888 = vld [vmem:[#allocation2 + $0x20] sm:$0xff]
        %v889 = vld [vmem:[#allocation2 + $0x28] sm:$0xff]
        %v890 = vld [vmem:[#allocation2 + $0x30] sm:$0xff]
        %v891 = vld [vmem:[#allocation2 + $0x38] sm:$0xff]
        %v892 = vld [vmem:[#allocation2 + $0x40] sm:$0xff]
        %v893 = vld [vmem:[#allocation2 + $0x48] sm:$0xff]
        %v894 = vld [vmem:[#allocation2 + $0x50] sm:$0xff]
        %v895 = vld [vmem:[#allocation2 + $0x58] sm:$0xff]
        %v896 = vld [vmem:[#allocation2 + $0x60] sm:$0xff]
        %v897 = vld [vmem:[#allocation2 + $0x68] sm:$0xff]
        %v898 = vld [vmem:[#allocation2 + $0x70] sm:$0xff]
        %v899 = vld [vmem:[#allocation2 + $0x78] sm:$0xff]
        %v900 = vld [vmem:[#allocation2 + $0x80] sm:$0xff]
        %v901 = vld [vmem:[#allocation2 + $0x88] sm:$0xff]
        %v902 = vld [vmem:[#allocation2 + $0x90] sm:$0xff]
        %v903 = vld [vmem:[#allocation2 + $0x98] sm:$0xff]
        %v904 = vld [vmem:[#allocation2 + $0xa0] sm:$0xff]
        %v905 = vld [vmem:[#allocation2 + $0xa8] sm:$0xff]
        %v906 = vld [vmem:[#allocation2 + $0xb0] sm:$0xff]
        %v907 = vld [vmem:[#allocation2 + $0xb8] sm:$0xff]
        %v908 = vld [vmem:[#allocation2 + $0xc0] sm:$0xff]
        %v909 = vld [vmem:[#allocation2 + $0xc8] sm:$0xff]
        %v910 = vld [vmem:[#allocation2 + $0xd0] sm:$0xff]
        %v911 = vld [vmem:[#allocation2 + $0xd8] sm:$0xff]
        %v912 = vld [vmem:[#allocation2 + $0xe0] sm:$0xff]
        %v913 = vld [vmem:[#allocation2 + $0xe8] sm:$0xff]
        %v914 = vld [vmem:[#allocation2 + $0xf0] sm:$0xff]
        %v915 = vld [vmem:[#allocation2 + $0xf8] sm:$0xff]
        %v916 = vld [vmem:[%s257] sm:$0x1]
        %v918 = vlaneseq
        %v919 = vshrl.u32 %v918, 7
        %v920 = vsub.s32 0, %v919
        %v921 = vrot.slane %v916, %v920
        %v923 = vadd.f32 %v884, %v921
        %v924 = vadd.f32 %v885, %v921
        %v925 = vadd.f32 %v886, %v921
        %v926 = vadd.f32 %v887, %v921
        %v927 = vadd.f32 %v888, %v921
        %v928 = vadd.f32 %v889, %v921
        %v929 = vadd.f32 %v890, %v921
        %v930 = vadd.f32 %v891, %v921
        %v931 = vadd.f32 %v892, %v921
        %v932 = vadd.f32 %v893, %v921
        %v933 = vadd.f32 %v894, %v921
        %v934 = vadd.f32 %v895, %v921
        %v935 = vadd.f32 %v896, %v921
        %v936 = vadd.f32 %v897, %v921
        %v937 = vadd.f32 %v898, %v921
        %v938 = vadd.f32 %v899, %v921
        %v939 = vadd.f32 %v900, %v921
        %v940 = vadd.f32 %v901, %v921
        %v941 = vadd.f32 %v902, %v921
        %v942 = vadd.f32 %v903, %v921
        %v943 = vadd.f32 %v904, %v921
        %v944 = vadd.f32 %v905, %v921
        %v945 = vadd.f32 %v906, %v921
        %v946 = vadd.f32 %v907, %v921
        %v947 = vadd.f32 %v908, %v921
        %v948 = vadd.f32 %v909, %v921
        %v949 = vadd.f32 %v910, %v921
        %v950 = vadd.f32 %v911, %v921
        %v951 = vadd.f32 %v912, %v921
        %v952 = vadd.f32 %v913, %v921
        %v953 = vadd.f32 %v914, %v921
        %v954 = vadd.f32 %v915, %v921
        %v955 = vmax.f32 %v923, 0.0
        %v956 = vmax.f32 %v924, 0.0
        %v957 = vmax.f32 %v925, 0.0
        %v958 = vmax.f32 %v926, 0.0
        %v959 = vmax.f32 %v927, 0.0
        %v960 = vmax.f32 %v928, 0.0
        %v961 = vmax.f32 %v929, 0.0
        %v962 = vmax.f32 %v930, 0.0
        %v963 = vmax.f32 %v931, 0.0
        %v964 = vmax.f32 %v932, 0.0
        %v965 = vmax.f32 %v933, 0.0
        %v966 = vmax.f32 %v934, 0.0
        %v967 = vmax.f32 %v935, 0.0
        %v968 = vmax.f32 %v936, 0.0
        %v969 = vmax.f32 %v937, 0.0
        %v970 = vmax.f32 %v938, 0.0
        %v971 = vmax.f32 %v939, 0.0
        %v972 = vmax.f32 %v940, 0.0
        %v973 = vmax.f32 %v941, 0.0
        %v974 = vmax.f32 %v942, 0.0
        %v975 = vmax.f32 %v943, 0.0
        %v976 = vmax.f32 %v944, 0.0
        %v977 = vmax.f32 %v945, 0.0
        %v978 = vmax.f32 %v946, 0.0
        %v979 = vmax.f32 %v947, 0.0
        %v980 = vmax.f32 %v948, 0.0
        %v981 = vmax.f32 %v949, 0.0
        %v982 = vmax.f32 %v950, 0.0
        %v983 = vmax.f32 %v951, 0.0
        %v984 = vmax.f32 %v952, 0.0
        %v985 = vmax.f32 %v953, 0.0
        %v986 = vmax.f32 %v954, 0.0
        %v987 = vpack.c.bf16 %v956, %v955
        %v988 = vpack.c.bf16 %v958, %v957
        %v989 = vpack.c.bf16 %v960, %v959
        %v990 = vpack.c.bf16 %v962, %v961
        %v991 = vpack.c.bf16 %v964, %v963
        %v992 = vpack.c.bf16 %v966, %v965
        %v993 = vpack.c.bf16 %v968, %v967
        %v994 = vpack.c.bf16 %v970, %v969
        %v995 = vpack.c.bf16 %v972, %v971
        %v996 = vpack.c.bf16 %v974, %v973
        %v997 = vpack.c.bf16 %v976, %v975
        %v998 = vpack.c.bf16 %v978, %v977
        %v999 = vpack.c.bf16 %v980, %v979
        %v1000 = vpack.c.bf16 %v982, %v981
        %v1001 = vpack.c.bf16 %v984, %v983
        %v1002 = vpack.c.bf16 %v986, %v985
        %v1019 = vunpack.c.l.b16 %v987
        %v1020 = vunpack.c.h.b16 %v987
        %v1021 = vunpack.c.l.b16 %v988
        %v1022 = vunpack.c.h.b16 %v988
        %v1023 = vunpack.c.l.b16 %v989
        %v1024 = vunpack.c.h.b16 %v989
        %v1025 = vunpack.c.l.b16 %v990
        %v1026 = vunpack.c.h.b16 %v990
        %v1027 = vunpack.c.l.b16 %v991
        %v1028 = vunpack.c.h.b16 %v991
        %v1029 = vunpack.c.l.b16 %v992
        %v1030 = vunpack.c.h.b16 %v992
        %v1031 = vunpack.c.l.b16 %v993
        %v1032 = vunpack.c.h.b16 %v993
        %v1033 = vunpack.c.l.b16 %v994
        %v1034 = vunpack.c.h.b16 %v994
        %v1035 = vunpack.c.l.b16 %v995
        %v1036 = vunpack.c.h.b16 %v995
        %v1037 = vunpack.c.l.b16 %v996
        %v1038 = vunpack.c.h.b16 %v996
        %v1039 = vunpack.c.l.b16 %v997
        %v1040 = vunpack.c.h.b16 %v997
        %v1041 = vunpack.c.l.b16 %v998
        %v1042 = vunpack.c.h.b16 %v998
        %v1043 = vunpack.c.l.b16 %v999
        %v1044 = vunpack.c.h.b16 %v999
        %v1045 = vunpack.c.l.b16 %v1000
        %v1046 = vunpack.c.h.b16 %v1000
        %v1047 = vunpack.c.l.b16 %v1001
        %v1048 = vunpack.c.h.b16 %v1001
        %v1049 = vunpack.c.l.b16 %v1002
        %v1050 = vunpack.c.h.b16 %v1002
        %v1051 = vpack.c.b16 %v1019, %v1019
        %v1052 = vpack.c.b16 %v1020, %v1020
        %v1053 = vpack.c.b16 %v1021, %v1021
        %v1054 = vpack.c.b16 %v1022, %v1022
        %v1055 = vpack.c.b16 %v1023, %v1023
        %v1056 = vpack.c.b16 %v1024, %v1024
        %v1057 = vpack.c.b16 %v1025, %v1025
        %v1058 = vpack.c.b16 %v1026, %v1026
        %v1059 = vpack.c.b16 %v1027, %v1027
        %v1060 = vpack.c.b16 %v1028, %v1028
        %v1061 = vpack.c.b16 %v1029, %v1029
        %v1062 = vpack.c.b16 %v1030, %v1030
        %v1063 = vpack.c.b16 %v1031, %v1031
        %v1064 = vpack.c.b16 %v1032, %v1032
        %v1065 = vpack.c.b16 %v1033, %v1033
        %v1066 = vpack.c.b16 %v1034, %v1034
        %v1067 = vpack.c.b16 %v1035, %v1035
        %v1068 = vpack.c.b16 %v1036, %v1036
        %v1069 = vpack.c.b16 %v1037, %v1037
        %v1070 = vpack.c.b16 %v1038, %v1038
        %v1071 = vpack.c.b16 %v1039, %v1039
        %v1072 = vpack.c.b16 %v1040, %v1040
        %v1073 = vpack.c.b16 %v1041, %v1041
        %v1074 = vpack.c.b16 %v1042, %v1042
        %v1075 = vpack.c.b16 %v1043, %v1043
        %v1076 = vpack.c.b16 %v1044, %v1044
        %v1077 = vpack.c.b16 %v1045, %v1045
        %v1078 = vpack.c.b16 %v1046, %v1046
        %v1079 = vpack.c.b16 %v1047, %v1047
        %v1080 = vpack.c.b16 %v1048, %v1048
        %v1081 = vpack.c.b16 %v1049, %v1049
        %v1082 = vpack.c.b16 %v1050, %v1050
        %1115 = vst [vmem:[%s265] sm:$0xf] %v1051
        %1116 = vst [vmem:[%s265 + $0x4] sm:$0xf] %v1052
        %1117 = vst [vmem:[%s265 + $0x8] sm:$0xf] %v1053
        %1118 = vst [vmem:[%s265 + $0xc] sm:$0xf] %v1054
        %1119 = vst [vmem:[%s265 + $0x10] sm:$0xf] %v1055
        %1120 = vst [vmem:[%s265 + $0x14] sm:$0xf] %v1056
        %1121 = vst [vmem:[%s265 + $0x18] sm:$0xf] %v1057
        %1122 = vst [vmem:[%s265 + $0x1c] sm:$0xf] %v1058
        %1123 = vst [vmem:[%s265 + $0x20] sm:$0xf] %v1059
        %1124 = vst [vmem:[%s265 + $0x24] sm:$0xf] %v1060
        %1125 = vst [vmem:[%s265 + $0x28] sm:$0xf] %v1061
        %1126 = vst [vmem:[%s265 + $0x2c] sm:$0xf] %v1062
        %1127 = vst [vmem:[%s265 + $0x30] sm:$0xf] %v1063
        %1128 = vst [vmem:[%s265 + $0x34] sm:$0xf] %v1064
        %1129 = vst [vmem:[%s265 + $0x38] sm:$0xf] %v1065
        %1130 = vst [vmem:[%s265 + $0x3c] sm:$0xf] %v1066
        %1131 = vst [vmem:[%s265 + $0x40] sm:$0xf] %v1067
        %1132 = vst [vmem:[%s265 + $0x44] sm:$0xf] %v1068
        %1133 = vst [vmem:[%s265 + $0x48] sm:$0xf] %v1069
        %1134 = vst [vmem:[%s265 + $0x4c] sm:$0xf] %v1070
        %1135 = vst [vmem:[%s265 + $0x50] sm:$0xf] %v1071
        %1136 = vst [vmem:[%s265 + $0x54] sm:$0xf] %v1072
        %1137 = vst [vmem:[%s265 + $0x58] sm:$0xf] %v1073
        %1138 = vst [vmem:[%s265 + $0x5c] sm:$0xf] %v1074
        %1139 = vst [vmem:[%s265 + $0x60] sm:$0xf] %v1075
        %1140 = vst [vmem:[%s265 + $0x64] sm:$0xf] %v1076
        %1141 = vst [vmem:[%s265 + $0x68] sm:$0xf] %v1077
        %1142 = vst [vmem:[%s265 + $0x6c] sm:$0xf] %v1078
        %1143 = vst [vmem:[%s265 + $0x70] sm:$0xf] %v1079
        %1144 = vst [vmem:[%s265 + $0x74] sm:$0xf] %v1080
        %1145 = vst [vmem:[%s265 + $0x78] sm:$0xf] %v1081
        %1146 = vst [vmem:[%s265 + $0x7c] sm:$0xf] %v1082
      $region40: #{forward.43} parent=31 // pred_fallthru
        _
      %s1147 = smul.u32 32, %s19
      %p1148 = scmp.lt.s32.totalorder %s1147, 63
      %s1149 = scalar_select %p1148, %s1147, 63
      %p1150 = scmp.lt.s32.totalorder %s20, 0
      %s1151 = scalar_select %p1150, %s20, 0
      %s1152 = sadd.s32 %s1151, %s1149
      %s1153 = smul.addr %s1152, 4
      %s1154 = scalar_lea.vmem %s3, %s1153
      // Predicated region
      $region41: #{forward.43} parent=31 // pred_check
        %p1155 = pneg %p135
      $region42: #{forward.43} parent=31 // pred_check_branch
        %1157 = sbr.rel (%p1155) target = $region44
      $region43: #{forward.43} parent=31 // pred_region
        %s1158 = smul.u32 32, %s19
      $region44: #{forward.43} parent=31 // pred_fallthru
        _
    $region32: #{forward.43} parent=5 // pred_fallthru
      _
    %p1159 = scmp.le.s32.totalorder 2, %s9
    // Predicated region
    $region45: #{forward.43} parent=5 // pred_check
      %p1160 = pneg %p1159
    $region46: #{forward.43} parent=5 // pred_check_branch
      %1162 = sbr.rel (%p1160) target = $region48
    $region47: #{forward.43} parent=5 // pred_region
      %s1163 = ssub.s32 %s9, 2
      // Predicated region
      $region49: #{forward.43} parent=47 // pred_check
        %p1164 = pneg %p141
      $region50: #{forward.43} parent=47 // pred_check_branch
        %1166 = sbr.rel (%p1164) target = $region52
      $region51: #{forward.43} parent=47 // pred_region
        %s1167 = smul.u32 32, %s22
        %p1168 = scmp.lt.s32.totalorder %s1167, 63
        %s1169 = scalar_select %p1168, %s1167, 63
        %p1170 = scmp.lt.s32.totalorder %s23, 0
        %s1171 = scalar_select %p1170, %s23, 0
        %s1172 = sadd.s32 %s1171, %s1169
        %s1173 = smul.addr %s1172, 4
        %s1174 = scalar_lea.vmem %s3, %s1173
      $region52: #{forward.43} parent=47 // pred_fallthru
        _
    $region48: #{forward.43} parent=5 // pred_fallthru
      _
  $region6: #{forward.43} parent=0 // loop_footer
    %s13 = sadd.s32 1, %s9
  $region7: #{forward.43} parent=0 // loop_footer_branch
    %8 = sbr.rel target = $region3
  $region8: #{forward.43} parent=0 // loop_exit
    _

// kernel: forward.54
$region0: #{forward.54}
  #allocation0 [shape = 'u32[]', space=smem, size = 0x4, offset = 0x4, fixed_abs, tag = 'smem constant byte address 0x4 - core index']
  #allocation1 [shape = 'u32[144,128]{1,0:T(1,128)}', space=vmem, size = 0x12000, scoped, tag = 'internal scratch']
  #allocation2 [shape = 'f32[32,128]{1,0:T(8,128)}', space=vmem, size = 0x4000, scoped, tag = 'scratch operand']
  %s0 = inlined_call_operand.vmem [shape: bf16[32,128], index: 0, kind: input, shape index: {}]
  %s1 = inlined_call_operand.vmem [shape: bf16[128,128], index: 1, kind: input, shape index: {}]
  %s2 = inlined_call_operand.vmem [shape: f32[1,128], index: 2, kind: input, shape index: {}]
  %s3 = inlined_call_operand.vmem [shape: bf16[32,128], index: 3, kind: output, shape index: {}]
  %s4 = sld [smem:[#allocation0]]
  $region30: #{forward.54} parent=0
    _
  %s6 = ssub.s32 1, %s4
  %s7 = scalar_select 0, %s6, %s4
  // Predicated region
  $region2: #{forward.54} parent=0 // pred_check
    _
  $region3: #{forward.54} parent=0 // pred_check_branch
    %9 = sbr.rel (0) target = $region5
  $region4: #{forward.54} parent=0 // pred_region
    _
  $region5: #{forward.54} parent=0 // pred_fallthru
    _
  // Predicated region
  $region6: #{forward.54} parent=0 // pred_check
    _
  $region7: #{forward.54} parent=0 // pred_check_branch
    %11 = sbr.rel (0) target = $region9
  $region8: #{forward.54} parent=0 // pred_region
    _
  $region9: #{forward.54} parent=0 // pred_fallthru
    _
  // Predicated region
  $region10: #{forward.54} parent=0 // pred_check
    _
  $region11: #{forward.54} parent=0 // pred_check_branch
    %13 = sbr.rel (0) target = $region13
  $region12: #{forward.54} parent=0 // pred_region
    _
  $region13: #{forward.54} parent=0 // pred_fallthru
    _
  %p15 = scmp.eq.s32.totalorder 0, 0
  // Predicated region
  $region14: #{forward.54} parent=0 // pred_check
    %p16 = pneg %p15
  $region15: #{forward.54} parent=0 // pred_check_branch
    %18 = sbr.rel (%p16) target = $region17
  $region16: #{forward.54} parent=0 // pred_region
    %19 = vst [vmem:[#allocation2] sm:$0xff] 0.0
    %20 = vst [vmem:[#allocation2 + $0x8] sm:$0xff] 0.0
    %21 = vst [vmem:[#allocation2 + $0x10] sm:$0xff] 0.0
    %22 = vst [vmem:[#allocation2 + $0x18] sm:$0xff] 0.0
  $region17: #{forward.54} parent=0 // pred_fallthru
    _
  %v23 = vld [vmem:[#allocation2] sm:$0xff]
  %v24 = vld [vmem:[#allocation2 + $0x8] sm:$0xff]
  %v25 = vld [vmem:[#allocation2 + $0x10] sm:$0xff]
  %v26 = vld [vmem:[#allocation2 + $0x18] sm:$0xff]
  %v27 = vld [vmem:[%s0] sm:$0xf]
  %v28 = vld [vmem:[%s0 + $0x4] sm:$0xf]
  %v29 = vld [vmem:[%s0 + $0x8] sm:$0xf]
  %v30 = vld [vmem:[%s0 + $0xc] sm:$0xf]
  %v31 = vld [vmem:[%s1] sm:$0xf]
  %v32 = vld [vmem:[%s1 + $0x4] sm:$0xf]
  %v33 = vld [vmem:[%s1 + $0x8] sm:$0xf]
  %v34 = vld [vmem:[%s1 + $0xc] sm:$0xf]
  %v35 = vld [vmem:[%s1 + $0x10] sm:$0xf]
  %v36 = vld [vmem:[%s1 + $0x14] sm:$0xf]
  %v37 = vld [vmem:[%s1 + $0x18] sm:$0xf]
  %v38 = vld [vmem:[%s1 + $0x1c] sm:$0xf]
  %v39 = vld [vmem:[%s1 + $0x20] sm:$0xf]
  %v40 = vld [vmem:[%s1 + $0x24] sm:$0xf]
  %v41 = vld [vmem:[%s1 + $0x28] sm:$0xf]
  %v42 = vld [vmem:[%s1 + $0x2c] sm:$0xf]
  %v43 = vld [vmem:[%s1 + $0x30] sm:$0xf]
  %v44 = vld [vmem:[%s1 + $0x34] sm:$0xf]
  %v45 = vld [vmem:[%s1 + $0x38] sm:$0xf]
  %v46 = vld [vmem:[%s1 + $0x3c] sm:$0xf]
  %v51 = vunpack.c.l.b16 %v27
  %v52 = vunpack.c.l.b16 %v28
  %v53 = vunpack.c.l.b16 %v29
  %v54 = vunpack.c.l.b16 %v30
  %v55 = vpack.c.b16 %v52, %v51
  %v56 = vpack.c.b16 %v54, %v53
  %v75 = vunpack.c.l.b16 %v31
  %v76 = vunpack.c.l.b16 %v32
  %v77 = vunpack.c.l.b16 %v33
  %v78 = vunpack.c.l.b16 %v34
  %v79 = vunpack.c.l.b16 %v35
  %v80 = vunpack.c.l.b16 %v36
  %v81 = vunpack.c.l.b16 %v37
  %v82 = vunpack.c.l.b16 %v38
  %v83 = vunpack.c.l.b16 %v39
  %v84 = vunpack.c.l.b16 %v40
  %v85 = vunpack.c.l.b16 %v41
  %v86 = vunpack.c.l.b16 %v42
  %v87 = vunpack.c.l.b16 %v43
  %v88 = vunpack.c.l.b16 %v44
  %v89 = vunpack.c.l.b16 %v45
  %v90 = vunpack.c.l.b16 %v46
  %v91 = vpack.c.b16 %v76, %v75
  %v92 = vpack.c.b16 %v78, %v77
  %v93 = vpack.c.b16 %v80, %v79
  %v94 = vpack.c.b16 %v82, %v81
  %v95 = vpack.c.b16 %v84, %v83
  %v96 = vpack.c.b16 %v86, %v85
  %v97 = vpack.c.b16 %v88, %v87
  %v98 = vpack.c.b16 %v90, %v89
  %107 = vmatprep.subr.bf16.mxu0 0
  %108 = vmatpush1.bf16.msra.mxu0 %v91
  %109 = vmatprep.subr.bf16.mxu0 0
  %110 = vmatpush1.bf16.msra.mxu0 %v92
  %111 = vmatprep.subr.bf16.mxu0 0
  %112 = vmatpush1.bf16.msra.mxu0 %v93
  %113 = vmatprep.subr.bf16.mxu0 0
  %114 = vmatpush1.bf16.msra.mxu0 %v94
  %115 = vmatprep.subr.bf16.mxu0 0
  %116 = vmatpush1.bf16.msra.mxu0 %v95
  %117 = vmatprep.subr.bf16.mxu0 0
  %118 = vmatpush1.bf16.msra.mxu0 %v96
  %119 = vmatprep.subr.bf16.mxu0 0
  %120 = vmatpush1.bf16.msra.mxu0 %v97
  %121 = vmatprep.subr.bf16.mxu0 0
  %122 = vmatpush1.bf16.msra.mxu0 %v98
  %123 = vmatprep.subr.bf16.mxu0 0
  %124 = vmatpush1.bf16.msra.mxu0 0
  %125 = vmatprep.subr.bf16.mxu0 0
  %126 = vmatpush1.bf16.msra.mxu0 0
  %127 = vmatprep.subr.bf16.mxu0 0
  %128 = vmatpush1.bf16.msra.mxu0 0
  %129 = vmatprep.subr.bf16.mxu0 0
  %130 = vmatpush1.bf16.msra.mxu0 0
  %131 = vmatprep.subr.bf16.mxu0 0
  %132 = vmatpush1.bf16.msra.mxu0 0
  %133 = vmatprep.subr.bf16.mxu0 0
  %134 = vmatpush1.bf16.msra.mxu0 0
  %135 = vmatprep.subr.bf16.mxu0 0
  %136 = vmatpush1.bf16.msra.mxu0 0
  %137 = vmatprep.subr.bf16.mxu0 0
  %138 = vmatpush1.bf16.msra.mxu0 0
  %139 = vmatprep.mubr.bf16.mxu0 0
  %140 = vmatmul.mubr.bf16.gmra.mrb[0].mxu0 %v55
  %v141 = vpop.f32.mrb[0].mxu0
  %v142 = vadd.f32 0.0, %v141
  %v143 = vpop.f32.mrb[0].mxu0
  %v144 = vpop.f32.mrb[0].mxu0
  %v145 = vadd.f32 0.0, %v144
  %v146 = vpop.f32.mrb[0].mxu0
  %147 = vmatprep.mubr.bf16.mxu0 0
  %148 = vmatmul.mubr.bf16.gmra.mrb[0].mxu0 %v56
  %v149 = vpop.f32.mrb[0].mxu0
  %v150 = vadd.f32 0.0, %v149
  %v151 = vpop.f32.mrb[0].mxu0
  %v152 = vpop.f32.mrb[0].mxu0
  %v153 = vadd.f32 0.0, %v152
  %v154 = vpop.f32.mrb[0].mxu0
  %155 = vdwg.mxu0
  %v156 = vadd.f32 %v23, %v142
  %v157 = vadd.f32 %v24, %v145
  %v158 = vadd.f32 %v25, %v150
  %v159 = vadd.f32 %v26, %v153
  %160 = vst [vmem:[#allocation2] sm:$0xff] %v156
  %161 = vst [vmem:[#allocation2 + $0x8] sm:$0xff] %v157
  %162 = vst [vmem:[#allocation2 + $0x10] sm:$0xff] %v158
  %163 = vst [vmem:[#allocation2 + $0x18] sm:$0xff] %v159
  // Predicated region
  $region18: #{forward.54} parent=0 // pred_check
    %p164 = pneg %p15
  $region19: #{forward.54} parent=0 // pred_check_branch
    %166 = sbr.rel (%p164) target = $region21
  $region20: #{forward.54} parent=0 // pred_region
    %v167 = vld [vmem:[#allocation2] sm:$0xff]
    %v168 = vld [vmem:[#allocation2 + $0x8] sm:$0xff]
    %v169 = vld [vmem:[#allocation2 + $0x10] sm:$0xff]
    %v170 = vld [vmem:[#allocation2 + $0x18] sm:$0xff]
    %v171 = vld [vmem:[%s2] sm:$0x1]
    %v173 = vlaneseq
    %v174 = vshrl.u32 %v173, 7
    %v175 = vsub.s32 0, %v174
    %v176 = vrot.slane %v171, %v175
    %v178 = vadd.f32 %v167, %v176
    %v179 = vadd.f32 %v168, %v176
    %v180 = vadd.f32 %v169, %v176
    %v181 = vadd.f32 %v170, %v176
    %v182 = vpack.c.bf16 %v179, %v178
    %v183 = vpack.c.bf16 %v181, %v180
    %v186 = vunpack.c.l.b16 %v182
    %v187 = vunpack.c.h.b16 %v182
    %v188 = vunpack.c.l.b16 %v183
    %v189 = vunpack.c.h.b16 %v183
    %v190 = vpack.c.b16 %v186, %v186
    %v191 = vpack.c.b16 %v187, %v187
    %v192 = vpack.c.b16 %v188, %v188
    %v193 = vpack.c.b16 %v189, %v189
    %198 = vst [vmem:[%s3] sm:$0xf] %v190
    %199 = vst [vmem:[%s3 + $0x4] sm:$0xf] %v191
    %200 = vst [vmem:[%s3 + $0x8] sm:$0xf] %v192
    %201 = vst [vmem:[%s3 + $0xc] sm:$0xf] %v193
  $region21: #{forward.54} parent=0 // pred_fallthru
    _
  // Predicated region
  $region22: #{forward.54} parent=0 // pred_check
    _
  $region23: #{forward.54} parent=0 // pred_check_branch
    %203 = sbr.rel (0) target = $region25
  $region24: #{forward.54} parent=0 // pred_region
    _
  $region25: #{forward.54} parent=0 // pred_fallthru
    _
  // Predicated region
  $region26: #{forward.54} parent=0 // pred_check
    _
  $region27: #{forward.54} parent=0 // pred_check_branch
    %205 = sbr.rel (0) target = $region29
  $region28: #{forward.54} parent=0 // pred_region
    _
  $region29: #{forward.54} parent=0 // pred_fallthru
    _

// kernel: forward.47
$region0: #{forward.47}
  #allocation0 [shape = 'u32[]', space=smem, size = 0x4, offset = 0x4, fixed_abs, tag = 'smem constant byte address 0x4 - core index']
  #allocation1 [shape = 'u32[144,128]{1,0:T(1,128)}', space=vmem, size = 0x12000, scoped, tag = 'internal scratch']
  #allocation2 [shape = 'f32[128,128]{1,0:T(8,128)}', space=vmem, size = 0x10000, scoped, tag = 'scratch operand']
  %s0 = inlined_call_operand.vmem [shape: bf16[128,128], index: 0, kind: input, shape index: {}]
  %s1 = inlined_call_operand.vmem [shape: bf16[128,128], index: 1, kind: input, shape index: {}]
  %s2 = inlined_call_operand.vmem [shape: f32[1,128], index: 2, kind: input, shape index: {}]
  %s3 = inlined_call_operand.vmem [shape: bf16[128,128], index: 3, kind: input, shape index: {}]
  %s4 = inlined_call_operand.vmem [shape: bf16[128,128], index: 4, kind: output, shape index: {}]
  %s5 = sld [smem:[#allocation0]]
  $region34: #{forward.47} parent=0
    _
  %s7 = ssub.s32 1, %s5
  %s8 = scalar_select 0, %s7, %s5
  // Predicated region
  $region2: #{forward.47} parent=0 // pred_check
    _
  $region3: #{forward.47} parent=0 // pred_check_branch
    %10 = sbr.rel (0) target = $region5
  $region4: #{forward.47} parent=0 // pred_region
    _
  $region5: #{forward.47} parent=0 // pred_fallthru
    _
  // Predicated region
  $region6: #{forward.47} parent=0 // pred_check
    _
  $region7: #{forward.47} parent=0 // pred_check_branch
    %12 = sbr.rel (0) target = $region9
  $region8: #{forward.47} parent=0 // pred_region
    _
  $region9: #{forward.47} parent=0 // pred_fallthru
    _
  // Predicated region
  $region10: #{forward.47} parent=0 // pred_check
    _
  $region11: #{forward.47} parent=0 // pred_check_branch
    %14 = sbr.rel (0) target = $region13
  $region12: #{forward.47} parent=0 // pred_region
    _
  $region13: #{forward.47} parent=0 // pred_fallthru
    _
  // Predicated region
  $region14: #{forward.47} parent=0 // pred_check
    _
  $region15: #{forward.47} parent=0 // pred_check_branch
    %16 = sbr.rel (0) target = $region17
  $region16: #{forward.47} parent=0 // pred_region
    _
  $region17: #{forward.47} parent=0 // pred_fallthru
    _
  %p18 = scmp.eq.s32.totalorder 0, 0
  // Predicated region
  $region18: #{forward.47} parent=0 // pred_check
    %p19 = pneg %p18
  $region19: #{forward.47} parent=0 // pred_check_branch
    %21 = sbr.rel (%p19) target = $region21
  $region20: #{forward.47} parent=0 // pred_region
    %22 = vst [vmem:[#allocation2] sm:$0xff] 0.0
    %23 = vst [vmem:[#allocation2 + $0x8] sm:$0xff] 0.0
    %24 = vst [vmem:[#allocation2 + $0x10] sm:$0xff] 0.0
    %25 = vst [vmem:[#allocation2 + $0x18] sm:$0xff] 0.0
    %26 = vst [vmem:[#allocation2 + $0x20] sm:$0xff] 0.0
    %27 = vst [vmem:[#allocation2 + $0x28] sm:$0xff] 0.0
    %28 = vst [vmem:[#allocation2 + $0x30] sm:$0xff] 0.0
    %29 = vst [vmem:[#allocation2 + $0x38] sm:$0xff] 0.0
    %30 = vst [vmem:[#allocation2 + $0x40] sm:$0xff] 0.0
    %31 = vst [vmem:[#allocation2 + $0x48] sm:$0xff] 0.0
    %32 = vst [vmem:[#allocation2 + $0x50] sm:$0xff] 0.0
    %33 = vst [vmem:[#allocation2 + $0x58] sm:$0xff] 0.0
    %34 = vst [vmem:[#allocation2 + $0x60] sm:$0xff] 0.0
    %35 = vst [vmem:[#allocation2 + $0x68] sm:$0xff] 0.0
    %36 = vst [vmem:[#allocation2 + $0x70] sm:$0xff] 0.0
    %37 = vst [vmem:[#allocation2 + $0x78] sm:$0xff] 0.0
  $region21: #{forward.47} parent=0 // pred_fallthru
    _
  %v38 = vld [vmem:[#allocation2] sm:$0xff]
  %v39 = vld [vmem:[#allocation2 + $0x8] sm:$0xff]
  %v40 = vld [vmem:[#allocation2 + $0x10] sm:$0xff]
  %v41 = vld [vmem:[#allocation2 + $0x18] sm:$0xff]
  %v42 = vld [vmem:[#allocation2 + $0x20] sm:$0xff]
  %v43 = vld [vmem:[#allocation2 + $0x28] sm:$0xff]
  %v44 = vld [vmem:[#allocation2 + $0x30] sm:$0xff]
  %v45 = vld [vmem:[#allocation2 + $0x38] sm:$0xff]
  %v46 = vld [vmem:[#allocation2 + $0x40] sm:$0xff]
  %v47 = vld [vmem:[#allocation2 + $0x48] sm:$0xff]
  %v48 = vld [vmem:[#allocation2 + $0x50] sm:$0xff]
  %v49 = vld [vmem:[#allocation2 + $0x58] sm:$0xff]
  %v50 = vld [vmem:[#allocation2 + $0x60] sm:$0xff]
  %v51 = vld [vmem:[#allocation2 + $0x68] sm:$0xff]
  %v52 = vld [vmem:[#allocation2 + $0x70] sm:$0xff]
  %v53 = vld [vmem:[#allocation2 + $0x78] sm:$0xff]
  %v54 = vld [vmem:[%s0] sm:$0xf]
  %v55 = vld [vmem:[%s0 + $0x4] sm:$0xf]
  %v56 = vld [vmem:[%s0 + $0x8] sm:$0xf]
  %v57 = vld [vmem:[%s0 + $0xc] sm:$0xf]
  %v58 = vld [vmem:[%s0 + $0x10] sm:$0xf]
  %v59 = vld [vmem:[%s0 + $0x14] sm:$0xf]
  %v60 = vld [vmem:[%s0 + $0x18] sm:$0xf]
  %v61 = vld [vmem:[%s0 + $0x1c] sm:$0xf]
  %v62 = vld [vmem:[%s0 + $0x20] sm:$0xf]
  %v63 = vld [vmem:[%s0 + $0x24] sm:$0xf]
  %v64 = vld [vmem:[%s0 + $0x28] sm:$0xf]
  %v65 = vld [vmem:[%s0 + $0x2c] sm:$0xf]
  %v66 = vld [vmem:[%s0 + $0x30] sm:$0xf]
  %v67 = vld [vmem:[%s0 + $0x34] sm:$0xf]
  %v68 = vld [vmem:[%s0 + $0x38] sm:$0xf]
  %v69 = vld [vmem:[%s0 + $0x3c] sm:$0xf]
  %v70 = vld [vmem:[%s1] sm:$0xf]
  %v71 = vld [vmem:[%s1 + $0x4] sm:$0xf]
  %v72 = vld [vmem:[%s1 + $0x8] sm:$0xf]
  %v73 = vld [vmem:[%s1 + $0xc] sm:$0xf]
  %v74 = vld [vmem:[%s1 + $0x10] sm:$0xf]
  %v75 = vld [vmem:[%s1 + $0x14] sm:$0xf]
  %v76 = vld [vmem:[%s1 + $0x18] sm:$0xf]
  %v77 = vld [vmem:[%s1 + $0x1c] sm:$0xf]
  %v78 = vld [vmem:[%s1 + $0x20] sm:$0xf]
  %v79 = vld [vmem:[%s1 + $0x24] sm:$0xf]
  %v80 = vld [vmem:[%s1 + $0x28] sm:$0xf]
  %v81 = vld [vmem:[%s1 + $0x2c] sm:$0xf]
  %v82 = vld [vmem:[%s1 + $0x30] sm:$0xf]
  %v83 = vld [vmem:[%s1 + $0x34] sm:$0xf]
  %v84 = vld [vmem:[%s1 + $0x38] sm:$0xf]
  %v85 = vld [vmem:[%s1 + $0x3c] sm:$0xf]
  %v102 = vunpack.c.l.b16 %v54
  %v103 = vunpack.c.l.b16 %v55
  %v104 = vunpack.c.l.b16 %v56
  %v105 = vunpack.c.l.b16 %v57
  %v106 = vunpack.c.l.b16 %v58
  %v107 = vunpack.c.l.b16 %v59
  %v108 = vunpack.c.l.b16 %v60
  %v109 = vunpack.c.l.b16 %v61
  %v110 = vunpack.c.l.b16 %v62
  %v111 = vunpack.c.l.b16 %v63
  %v112 = vunpack.c.l.b16 %v64
  %v113 = vunpack.c.l.b16 %v65
  %v114 = vunpack.c.l.b16 %v66
  %v115 = vunpack.c.l.b16 %v67
  %v116 = vunpack.c.l.b16 %v68
  %v117 = vunpack.c.l.b16 %v69
  %v118 = vpack.c.b16 %v103, %v102
  %v119 = vpack.c.b16 %v105, %v104
  %v120 = vpack.c.b16 %v107, %v106
  %v121 = vpack.c.b16 %v109, %v108
  %v122 = vpack.c.b16 %v111, %v110
  %v123 = vpack.c.b16 %v113, %v112
  %v124 = vpack.c.b16 %v115, %v114
  %v125 = vpack.c.b16 %v117, %v116
  %v150 = vunpack.c.l.b16 %v70
  %v151 = vunpack.c.l.b16 %v71
  %v152 = vunpack.c.l.b16 %v72
  %v153 = vunpack.c.l.b16 %v73
  %v154 = vunpack.c.l.b16 %v74
  %v155 = vunpack.c.l.b16 %v75
  %v156 = vunpack.c.l.b16 %v76
  %v157 = vunpack.c.l.b16 %v77
  %v158 = vunpack.c.l.b16 %v78
  %v159 = vunpack.c.l.b16 %v79
  %v160 = vunpack.c.l.b16 %v80
  %v161 = vunpack.c.l.b16 %v81
  %v162 = vunpack.c.l.b16 %v82
  %v163 = vunpack.c.l.b16 %v83
  %v164 = vunpack.c.l.b16 %v84
  %v165 = vunpack.c.l.b16 %v85
  %v166 = vpack.c.b16 %v151, %v150
  %v167 = vpack.c.b16 %v153, %v152
  %v168 = vpack.c.b16 %v155, %v154
  %v169 = vpack.c.b16 %v157, %v156
  %v170 = vpack.c.b16 %v159, %v158
  %v171 = vpack.c.b16 %v161, %v160
  %v172 = vpack.c.b16 %v163, %v162
  %v173 = vpack.c.b16 %v165, %v164
  %182 = vmatprep.subr.bf16.mxu0 0
  %183 = vmatpush1.bf16.msra.mxu0 %v166
  %184 = vmatprep.subr.bf16.mxu0 0
  %185 = vmatpush1.bf16.msra.mxu0 %v167
  %186 = vmatprep.subr.bf16.mxu0 0
  %187 = vmatpush1.bf16.msra.mxu0 %v168
  %188 = vmatprep.subr.bf16.mxu0 0
  %189 = vmatpush1.bf16.msra.mxu0 %v169
  %190 = vmatprep.subr.bf16.mxu0 0
  %191 = vmatpush1.bf16.msra.mxu0 %v170
  %192 = vmatprep.subr.bf16.mxu0 0
  %193 = vmatpush1.bf16.msra.mxu0 %v171
  %194 = vmatprep.subr.bf16.mxu0 0
  %195 = vmatpush1.bf16.msra.mxu0 %v172
  %196 = vmatprep.subr.bf16.mxu0 0
  %197 = vmatpush1.bf16.msra.mxu0 %v173
  %198 = vmatprep.subr.bf16.mxu0 0
  %199 = vmatpush1.bf16.msra.mxu0 0
  %200 = vmatprep.subr.bf16.mxu0 0
  %201 = vmatpush1.bf16.msra.mxu0 0
  %202 = vmatprep.subr.bf16.mxu0 0
  %203 = vmatpush1.bf16.msra.mxu0 0
  %204 = vmatprep.subr.bf16.mxu0 0
  %205 = vmatpush1.bf16.msra.mxu0 0
  %206 = vmatprep.subr.bf16.mxu0 0
  %207 = vmatpush1.bf16.msra.mxu0 0
  %208 = vmatprep.subr.bf16.mxu0 0
  %209 = vmatpush1.bf16.msra.mxu0 0
  %210 = vmatprep.subr.bf16.mxu0 0
  %211 = vmatpush1.bf16.msra.mxu0 0
  %212 = vmatprep.subr.bf16.mxu0 0
  %213 = vmatpush1.bf16.msra.mxu0 0
  %214 = vmatprep.mubr.bf16.mxu0 0
  %215 = vmatmul.mubr.bf16.gmra.mrb[0].mxu0 %v118
  %v216 = vpop.f32.mrb[0].mxu0
  %v217 = vadd.f32 0.0, %v216
  %v218 = vpop.f32.mrb[0].mxu0
  %v219 = vpop.f32.mrb[0].mxu0
  %v220 = vadd.f32 0.0, %v219
  %v221 = vpop.f32.mrb[0].mxu0
  %222 = vmatprep.mubr.bf16.mxu0 0
  %223 = vmatmul.mubr.bf16.gmra.mrb[0].mxu0 %v119
  %v224 = vpop.f32.mrb[0].mxu0
  %v225 = vadd.f32 0.0, %v224
  %v226 = vpop.f32.mrb[0].mxu0
  %v227 = vpop.f32.mrb[0].mxu0
  %v228 = vadd.f32 0.0, %v227
  %v229 = vpop.f32.mrb[0].mxu0
  %230 = vmatprep.mubr.bf16.mxu0 0
  %231 = vmatmul.mubr.bf16.gmra.mrb[0].mxu0 %v120
  %v232 = vpop.f32.mrb[0].mxu0
  %v233 = vadd.f32 0.0, %v232
  %v234 = vpop.f32.mrb[0].mxu0
  %v235 = vpop.f32.mrb[0].mxu0
  %v236 = vadd.f32 0.0, %v235
  %v237 = vpop.f32.mrb[0].mxu0
  %238 = vmatprep.mubr.bf16.mxu0 0
  %239 = vmatmul.mubr.bf16.gmra.mrb[0].mxu0 %v121
  %v240 = vpop.f32.mrb[0].mxu0
  %v241 = vadd.f32 0.0, %v240
  %v242 = vpop.f32.mrb[0].mxu0
  %v243 = vpop.f32.mrb[0].mxu0
  %v244 = vadd.f32 0.0, %v243
  %v245 = vpop.f32.mrb[0].mxu0
  %246 = vmatprep.mubr.bf16.mxu0 0
  %247 = vmatmul.mubr.bf16.gmra.mrb[0].mxu0 %v122
  %v248 = vpop.f32.mrb[0].mxu0
  %v249 = vadd.f32 0.0, %v248
  %v250 = vpop.f32.mrb[0].mxu0
  %v251 = vpop.f32.mrb[0].mxu0
  %v252 = vadd.f32 0.0, %v251
  %v253 = vpop.f32.mrb[0].mxu0
  %254 = vmatprep.mubr.bf16.mxu0 0
  %255 = vmatmul.mubr.bf16.gmra.mrb[0].mxu0 %v123
  %v256 = vpop.f32.mrb[0].mxu0
  %v257 = vadd.f32 0.0, %v256
  %v258 = vpop.f32.mrb[0].mxu0
  %v259 = vpop.f32.mrb[0].mxu0
  %v260 = vadd.f32 0.0, %v259
  %v261 = vpop.f32.mrb[0].mxu0
  %262 = vmatprep.mubr.bf16.mxu0 0
  %263 = vmatmul.mubr.bf16.gmra.mrb[0].mxu0 %v124
  %v264 = vpop.f32.mrb[0].mxu0
  %v265 = vadd.f32 0.0, %v264
  %v266 = vpop.f32.mrb[0].mxu0
  %v267 = vpop.f32.mrb[0].mxu0
  %v268 = vadd.f32 0.0, %v267
  %v269 = vpop.f32.mrb[0].mxu0
  %270 = vmatprep.mubr.bf16.mxu0 0
  %271 = vmatmul.mubr.bf16.gmra.mrb[0].mxu0 %v125
  %v272 = vpop.f32.mrb[0].mxu0
  %v273 = vadd.f32 0.0, %v272
  %v274 = vpop.f32.mrb[0].mxu0
  %v275 = vpop.f32.mrb[0].mxu0
  %v276 = vadd.f32 0.0, %v275
  %v277 = vpop.f32.mrb[0].mxu0
  %278 = vdwg.mxu0
  %v279 = vadd.f32 %v38, %v217
  %v280 = vadd.f32 %v39, %v220
  %v281 = vadd.f32 %v40, %v225
  %v282 = vadd.f32 %v41, %v228
  %v283 = vadd.f32 %v42, %v233
  %v284 = vadd.f32 %v43, %v236
  %v285 = vadd.f32 %v44, %v241
  %v286 = vadd.f32 %v45, %v244
  %v287 = vadd.f32 %v46, %v249
  %v288 = vadd.f32 %v47, %v252
  %v289 = vadd.f32 %v48, %v257
  %v290 = vadd.f32 %v49, %v260
  %v291 = vadd.f32 %v50, %v265
  %v292 = vadd.f32 %v51, %v268
  %v293 = vadd.f32 %v52, %v273
  %v294 = vadd.f32 %v53, %v276
  %295 = vst [vmem:[#allocation2] sm:$0xff] %v279
  %296 = vst [vmem:[#allocation2 + $0x8] sm:$0xff] %v280
  %297 = vst [vmem:[#allocation2 + $0x10] sm:$0xff] %v281
  %298 = vst [vmem:[#allocation2 + $0x18] sm:$0xff] %v282
  %299 = vst [vmem:[#allocation2 + $0x20] sm:$0xff] %v283
  %300 = vst [vmem:[#allocation2 + $0x28] sm:$0xff] %v284
  %301 = vst [vmem:[#allocation2 + $0x30] sm:$0xff] %v285
  %302 = vst [vmem:[#allocation2 + $0x38] sm:$0xff] %v286
  %303 = vst [vmem:[#allocation2 + $0x40] sm:$0xff] %v287
  %304 = vst [vmem:[#allocation2 + $0x48] sm:$0xff] %v288
  %305 = vst [vmem:[#allocation2 + $0x50] sm:$0xff] %v289
  %306 = vst [vmem:[#allocation2 + $0x58] sm:$0xff] %v290
  %307 = vst [vmem:[#allocation2 + $0x60] sm:$0xff] %v291
  %308 = vst [vmem:[#allocation2 + $0x68] sm:$0xff] %v292
  %309 = vst [vmem:[#allocation2 + $0x70] sm:$0xff] %v293
  %310 = vst [vmem:[#allocation2 + $0x78] sm:$0xff] %v294
  // Predicated region
  $region22: #{forward.47} parent=0 // pred_check
    %p311 = pneg %p18
  $region23: #{forward.47} parent=0 // pred_check_branch
    %313 = sbr.rel (%p311) target = $region25
  $region24: #{forward.47} parent=0 // pred_region
    %v314 = vld [vmem:[#allocation2] sm:$0xff]
    %v315 = vld [vmem:[#allocation2 + $0x8] sm:$0xff]
    %v316 = vld [vmem:[#allocation2 + $0x10] sm:$0xff]
    %v317 = vld [vmem:[#allocation2 + $0x18] sm:$0xff]
    %v318 = vld [vmem:[#allocation2 + $0x20] sm:$0xff]
    %v319 = vld [vmem:[#allocation2 + $0x28] sm:$0xff]
    %v320 = vld [vmem:[#allocation2 + $0x30] sm:$0xff]
    %v321 = vld [vmem:[#allocation2 + $0x38] sm:$0xff]
    %v322 = vld [vmem:[#allocation2 + $0x40] sm:$0xff]
    %v323 = vld [vmem:[#allocation2 + $0x48] sm:$0xff]
    %v324 = vld [vmem:[#allocation2 + $0x50] sm:$0xff]
    %v325 = vld [vmem:[#allocation2 + $0x58] sm:$0xff]
    %v326 = vld [vmem:[#allocation2 + $0x60] sm:$0xff]
    %v327 = vld [vmem:[#allocation2 + $0x68] sm:$0xff]
    %v328 = vld [vmem:[#allocation2 + $0x70] sm:$0xff]
    %v329 = vld [vmem:[#allocation2 + $0x78] sm:$0xff]
    %v330 = vld [vmem:[%s2] sm:$0x1]
    %v331 = vld [vmem:[%s3] sm:$0xf]
    %v332 = vld [vmem:[%s3 + $0x4] sm:$0xf]
    %v333 = vld [vmem:[%s3 + $0x8] sm:$0xf]
    %v334 = vld [vmem:[%s3 + $0xc] sm:$0xf]
    %v335 = vld [vmem:[%s3 + $0x10] sm:$0xf]
    %v336 = vld [vmem:[%s3 + $0x14] sm:$0xf]
    %v337 = vld [vmem:[%s3 + $0x18] sm:$0xf]
    %v338 = vld [vmem:[%s3 + $0x1c] sm:$0xf]
    %v339 = vld [vmem:[%s3 + $0x20] sm:$0xf]
    %v340 = vld [vmem:[%s3 + $0x24] sm:$0xf]
    %v341 = vld [vmem:[%s3 + $0x28] sm:$0xf]
    %v342 = vld [vmem:[%s3 + $0x2c] sm:$0xf]
    %v343 = vld [vmem:[%s3 + $0x30] sm:$0xf]
    %v344 = vld [vmem:[%s3 + $0x34] sm:$0xf]
    %v345 = vld [vmem:[%s3 + $0x38] sm:$0xf]
    %v346 = vld [vmem:[%s3 + $0x3c] sm:$0xf]
    %v348 = vlaneseq
    %v349 = vshrl.u32 %v348, 7
    %v350 = vsub.s32 0, %v349
    %v351 = vrot.slane %v330, %v350
    %v353 = vadd.f32 %v314, %v351
    %v354 = vadd.f32 %v315, %v351
    %v355 = vadd.f32 %v316, %v351
    %v356 = vadd.f32 %v317, %v351
    %v357 = vadd.f32 %v318, %v351
    %v358 = vadd.f32 %v319, %v351
    %v359 = vadd.f32 %v320, %v351
    %v360 = vadd.f32 %v321, %v351
    %v361 = vadd.f32 %v322, %v351
    %v362 = vadd.f32 %v323, %v351
    %v363 = vadd.f32 %v324, %v351
    %v364 = vadd.f32 %v325, %v351
    %v365 = vadd.f32 %v326, %v351
    %v366 = vadd.f32 %v327, %v351
    %v367 = vadd.f32 %v328, %v351
    %v368 = vadd.f32 %v329, %v351
    %v369 = vunpack.c.l.bf16 %v331
    %v370 = vunpack.c.l.bf16 %v332
    %v371 = vunpack.c.l.bf16 %v333
    %v372 = vunpack.c.l.bf16 %v334
    %v373 = vunpack.c.l.bf16 %v335
    %v374 = vunpack.c.l.bf16 %v336
    %v375 = vunpack.c.l.bf16 %v337
    %v376 = vunpack.c.l.bf16 %v338
    %v377 = vunpack.c.l.bf16 %v339
    %v378 = vunpack.c.l.bf16 %v340
    %v379 = vunpack.c.l.bf16 %v341
    %v380 = vunpack.c.l.bf16 %v342
    %v381 = vunpack.c.l.bf16 %v343
    %v382 = vunpack.c.l.bf16 %v344
    %v383 = vunpack.c.l.bf16 %v345
    %v384 = vunpack.c.l.bf16 %v346
    %v385 = vadd.f32 %v353, %v369
    %v386 = vadd.f32 %v354, %v370
    %v387 = vadd.f32 %v355, %v371
    %v388 = vadd.f32 %v356, %v372
    %v389 = vadd.f32 %v357, %v373
    %v390 = vadd.f32 %v358, %v374
    %v391 = vadd.f32 %v359, %v375
    %v392 = vadd.f32 %v360, %v376
    %v393 = vadd.f32 %v361, %v377
    %v394 = vadd.f32 %v362, %v378
    %v395 = vadd.f32 %v363, %v379
    %v396 = vadd.f32 %v364, %v380
    %v397 = vadd.f32 %v365, %v381
    %v398 = vadd.f32 %v366, %v382
    %v399 = vadd.f32 %v367, %v383
    %v400 = vadd.f32 %v368, %v384
    %v401 = vmax.f32 %v385, 0.0
    %v402 = vmax.f32 %v386, 0.0
    %v403 = vmax.f32 %v387, 0.0
    %v404 = vmax.f32 %v388, 0.0
    %v405 = vmax.f32 %v389, 0.0
    %v406 = vmax.f32 %v390, 0.0
    %v407 = vmax.f32 %v391, 0.0
    %v408 = vmax.f32 %v392, 0.0
    %v409 = vmax.f32 %v393, 0.0
    %v410 = vmax.f32 %v394, 0.0
    %v411 = vmax.f32 %v395, 0.0
    %v412 = vmax.f32 %v396, 0.0
    %v413 = vmax.f32 %v397, 0.0
    %v414 = vmax.f32 %v398, 0.0
    %v415 = vmax.f32 %v399, 0.0
    %v416 = vmax.f32 %v400, 0.0
    %v417 = vpack.c.bf16 %v402, %v401
    %v418 = vpack.c.bf16 %v404, %v403
    %v419 = vpack.c.bf16 %v406, %v405
    %v420 = vpack.c.bf16 %v408, %v407
    %v421 = vpack.c.bf16 %v410, %v409
    %v422 = vpack.c.bf16 %v412, %v411
    %v423 = vpack.c.bf16 %v414, %v413
    %v424 = vpack.c.bf16 %v416, %v415
    %v433 = vunpack.c.l.b16 %v417
    %v434 = vunpack.c.h.b16 %v417
    %v435 = vunpack.c.l.b16 %v418
    %v436 = vunpack.c.h.b16 %v418
    %v437 = vunpack.c.l.b16 %v419
    %v438 = vunpack.c.h.b16 %v419
    %v439 = vunpack.c.l.b16 %v420
    %v440 = vunpack.c.h.b16 %v420
    %v441 = vunpack.c.l.b16 %v421
    %v442 = vunpack.c.h.b16 %v421
    %v443 = vunpack.c.l.b16 %v422
    %v444 = vunpack.c.h.b16 %v422
    %v445 = vunpack.c.l.b16 %v423
    %v446 = vunpack.c.h.b16 %v423
    %v447 = vunpack.c.l.b16 %v424
    %v448 = vunpack.c.h.b16 %v424
    %v449 = vpack.c.b16 %v433, %v433
    %v450 = vpack.c.b16 %v434, %v434
    %v451 = vpack.c.b16 %v435, %v435
    %v452 = vpack.c.b16 %v436, %v436
    %v453 = vpack.c.b16 %v437, %v437
    %v454 = vpack.c.b16 %v438, %v438
    %v455 = vpack.c.b16 %v439, %v439
    %v456 = vpack.c.b16 %v440, %v440
    %v457 = vpack.c.b16 %v441, %v441
    %v458 = vpack.c.b16 %v442, %v442
    %v459 = vpack.c.b16 %v443, %v443
    %v460 = vpack.c.b16 %v444, %v444
    %v461 = vpack.c.b16 %v445, %v445
    %v462 = vpack.c.b16 %v446, %v446
    %v463 = vpack.c.b16 %v447, %v447
    %v464 = vpack.c.b16 %v448, %v448
    %481 = vst [vmem:[%s4] sm:$0xf] %v449
    %482 = vst [vmem:[%s4 + $0x4] sm:$0xf] %v450
    %483 = vst [vmem:[%s4 + $0x8] sm:$0xf] %v451
    %484 = vst [vmem:[%s4 + $0xc] sm:$0xf] %v452
    %485 = vst [vmem:[%s4 + $0x10] sm:$0xf] %v453
    %486 = vst [vmem:[%s4 + $0x14] sm:$0xf] %v454
    %487 = vst [vmem:[%s4 + $0x18] sm:$0xf] %v455
    %488 = vst [vmem:[%s4 + $0x1c] sm:$0xf] %v456
    %489 = vst [vmem:[%s4 + $0x20] sm:$0xf] %v457
    %490 = vst [vmem:[%s4 + $0x24] sm:$0xf] %v458
    %491 = vst [vmem:[%s4 + $0x28] sm:$0xf] %v459
    %492 = vst [vmem:[%s4 + $0x2c] sm:$0xf] %v460
    %493 = vst [vmem:[%s4 + $0x30] sm:$0xf] %v461
    %494 = vst [vmem:[%s4 + $0x34] sm:$0xf] %v462
    %495 = vst [vmem:[%s4 + $0x38] sm:$0xf] %v463
    %496 = vst [vmem:[%s4 + $0x3c] sm:$0xf] %v464
  $region25: #{forward.47} parent=0 // pred_fallthru
    _
  // Predicated region
  $region26: #{forward.47} parent=0 // pred_check
    _
  $region27: #{forward.47} parent=0 // pred_check_branch
    %498 = sbr.rel (0) target = $region29
  $region28: #{forward.47} parent=0 // pred_region
    _
  $region29: #{forward.47} parent=0 // pred_fallthru
    _
  // Predicated region
  $region30: #{forward.47} parent=0 // pred_check
    _
  $region31: #{forward.47} parent=0 // pred_check_branch
    %500 = sbr.rel (0) target = $region33
  $region32: #{forward.47} parent=0 // pred_region
    _
  $region33: #{forward.47} parent=0 // pred_fallthru
    _

// kernel: forward.46
$region0: #{forward.46}
  #allocation0 [shape = 'u32[]', space=smem, size = 0x4, offset = 0x4, fixed_abs, tag = 'smem constant byte address 0x4 - core index']
  #allocation1 [shape = 'u32[144,128]{1,0:T(1,128)}', space=vmem, size = 0x12000, scoped, tag = 'internal scratch']
  #allocation2 [shape = 'f32[128,128]{1,0:T(8,128)}', space=vmem, size = 0x10000, scoped, tag = 'scratch operand']
  %s0 = inlined_call_operand.vmem [shape: bf16[128,1152], index: 0, kind: input, shape index: {}]
  %s1 = inlined_call_operand.vmem [shape: bf16[1152,128], index: 1, kind: input, shape index: {}]
  %s2 = inlined_call_operand.vmem [shape: f32[1,128], index: 2, kind: input, shape index: {}]
  %s3 = inlined_call_operand.vmem [shape: bf16[128,128], index: 3, kind: output, shape index: {}]
  %s4 = sld [smem:[#allocation0]]
  $region79: #{forward.46} parent=0
    _
  %s6 = ssub.s32 1, %s4
  %s7 = scalar_select 0, %s6, %s4
  $region1: #{forward.46} parent=0
    #allocation3 [shape = 'u8[196608]{0}', space=vmem, size = 0x30000, scoped, tag = 'input window, operand 0']
    loop: start=0, step=1, limit=5
    $region2: #{forward.46} parent=1 // loop_pre_header
      _
    $region3: #{forward.46} parent=1 // loop_header
      %s9 = sphi 0, %s13
      %p10 = scmp.ge.s32.totalorder %s9, 5
      %s16 = sphi 0, %s35
      %s17 = sphi 0, %s31
      %s18 = sphi 0, %s27
      %s19 = sphi 0, %s16
      %s20 = sphi 0, %s17
      %s21 = sphi 0, %s18
      %s22 = sphi 0, %s19
      %s23 = sphi 0, %s20
      %s24 = sphi 0, %s21
      %s40 = sphi 0, %s42
      %s43 = sphi 0, %s40
      %s44 = sphi 0, %s43
      %s60 = sphi 0, %s44
      %s68 = sphi 0, %s70
      %s71 = sphi 0, %s68
      %s72 = sphi 0, %s71
      %s88 = sphi 0, %s72
      %s94 = sphi 0, %s96
      %s97 = sphi 0, %s94
      %s98 = sphi 0, %s97
      %s114 = sphi 0, %s98
      %s122 = sphi 0, %s124
      %s125 = sphi 0, %s122
      %s126 = sphi 0, %s125
      %s142 = sphi 0, %s126
    $region4: #{forward.46} parent=1 // loop_header_branch
      %12 = sbr.rel (%p10) target = $region8
    $region5: #{forward.46} parent=1 // loop_body
      %s14 = ssub.s32 %s9, 1
      %s15 = ssub.s32 %s9, 2
      %s25 = sadd.s32 1, %s18
      %p26 = scmp.ge.s32.totalorder %s25, 3
      %s27 = scalar_select %p26, 0, %s25
      %s28 = sadd.s32 1, %s17
      %s29 = scalar_select %p26, %s28, %s17
      %p30 = scmp.ge.s32.totalorder %s29, 1
      %s31 = scalar_select %p30, 0, %s29
      %s32 = sadd.s32 1, %s16
      %s33 = scalar_select %p30, %s32, %s16
      %p34 = scmp.ge.s32.totalorder %s33, 1
      %s35 = scalar_select %p34, 0, %s33
      %s36 = ssub.s32 %s16, %s35
      %s37 = ssub.s32 %s18, %s27
      %s38 = sor.u32 %s36, %s37
      %p39 = scmp.eq.s32.totalorder %s38, 0
      %s41 = sadd.s32 %s40, 1
      %s42 = scalar_select %p39, %s40, %s41
      %p45 = pneg %p39
      %p46 = scmp.eq.s32.totalorder %s9, 2
      %p47 = por %p45, %p46
      %p48 = scmp.ne.s32.totalorder %s40, %s43
      %p49 = scmp.eq.s32.totalorder %s9, 0
      %p50 = por %p48, %p49
      %p51 = scmp.ne.s32.totalorder %s40, %s43
      %p52 = scmp.eq.s32.totalorder %s14, 2
      %p53 = por %p51, %p52
      %p54 = scmp.ne.s32.totalorder %s43, %s44
      %p55 = scmp.eq.s32.totalorder %s14, 0
      %p56 = por %p54, %p55
      %p57 = scmp.ne.s32.totalorder %s43, %s44
      %p58 = scmp.eq.s32.totalorder %s15, 2
      %p59 = por %p57, %p58
      %p61 = scmp.ne.s32.totalorder %s44, %s60
      %p62 = scmp.eq.s32.totalorder %s15, 0
      %p63 = por %p61, %p62
      %s64 = ssub.s32 %s18, %s27
      %s65 = ssub.s32 %s17, %s31
      %s66 = sor.u32 %s64, %s65
      %p67 = scmp.eq.s32.totalorder %s66, 0
      %s69 = sadd.s32 %s68, 1
      %s70 = scalar_select %p67, %s68, %s69
      %p73 = pneg %p67
      %p74 = scmp.eq.s32.totalorder %s9, 2
      %p75 = por %p73, %p74
      %p76 = scmp.ne.s32.totalorder %s68, %s71
      %p77 = scmp.eq.s32.totalorder %s9, 0
      %p78 = por %p76, %p77
      %p79 = scmp.ne.s32.totalorder %s68, %s71
      %p80 = scmp.eq.s32.totalorder %s14, 2
      %p81 = por %p79, %p80
      %p82 = scmp.ne.s32.totalorder %s71, %s72
      %p83 = scmp.eq.s32.totalorder %s14, 0
      %p84 = por %p82, %p83
      %p85 = scmp.ne.s32.totalorder %s71, %s72
      %p86 = scmp.eq.s32.totalorder %s15, 2
      %p87 = por %p85, %p86
      %p89 = scmp.ne.s32.totalorder %s72, %s88
      %p90 = scmp.eq.s32.totalorder %s15, 0
      %p91 = por %p89, %p90
      %s92 = ssub.s32 %s17, %s31
      %p93 = scmp.eq.s32.totalorder %s92, 0
      %s95 = sadd.s32 %s94, 1
      %s96 = scalar_select %p93, %s94, %s95
      %p99 = pneg %p93
      %p100 = scmp.eq.s32.totalorder %s9, 2
      %p101 = por %p99, %p100
      %p102 = scmp.ne.s32.totalorder %s94, %s97
      %p103 = scmp.eq.s32.totalorder %s9, 0
      %p104 = por %p102, %p103
      %p105 = scmp.ne.s32.totalorder %s94, %s97
      %p106 = scmp.eq.s32.totalorder %s14, 2
      %p107 = por %p105, %p106
      %p108 = scmp.ne.s32.totalorder %s97, %s98
      %p109 = scmp.eq.s32.totalorder %s14, 0
      %p110 = por %p108, %p109
      %p111 = scmp.ne.s32.totalorder %s97, %s98
      %p112 = scmp.eq.s32.totalorder %s15, 2
      %p113 = por %p111, %p112
      %p115 = scmp.ne.s32.totalorder %s98, %s114
      %p116 = scmp.eq.s32.totalorder %s15, 0
      %p117 = por %p115, %p116
      %s118 = ssub.s32 %s16, %s35
      %s119 = ssub.s32 %s17, %s31
      %s120 = sor.u32 %s118, %s119
      %p121 = scmp.eq.s32.totalorder %s120, 0
      %s123 = sadd.s32 %s122, 1
      %s124 = scalar_select %p121, %s122, %s123
      %p127 = pneg %p121
      %p128 = scmp.eq.s32.totalorder %s9, 2
      %p129 = por %p127, %p128
      %p130 = scmp.ne.s32.totalorder %s122, %s125
      %p131 = scmp.eq.s32.totalorder %s9, 0
      %p132 = por %p130, %p131
      %p133 = scmp.ne.s32.totalorder %s122, %s125
      %p134 = scmp.eq.s32.totalorder %s14, 2
      %p135 = por %p133, %p134
      %p136 = scmp.ne.s32.totalorder %s125, %s126
      %p137 = scmp.eq.s32.totalorder %s14, 0
      %p138 = por %p136, %p137
      %p139 = scmp.ne.s32.totalorder %s125, %s126
      %p140 = scmp.eq.s32.totalorder %s15, 2
      %p141 = por %p139, %p140
      %p143 = scmp.ne.s32.totalorder %s126, %s142
      %p144 = scmp.eq.s32.totalorder %s15, 0
      %p145 = por %p143, %p144
      %p146 = scmp.le.s32.totalorder 1, %s9
      %p147 = scmp.lt.s32.totalorder %s9, 4
      %p148 = pnand %p146, %p147
      %p149 = pneg %p148
      // Predicated region
      $region9: #{forward.46} parent=5 // pred_check
        _
      $region10: #{forward.46} parent=5 // pred_check_branch
        %151 = sbr.rel (%p148) target = $region12
      $region11: #{forward.46} parent=5 // pred_region
        %s152 = ssub.s32 %s9, 1
        // Predicated region
        $region13: #{forward.46} parent=11 // pred_check
          %p153 = pneg %p110
        $region14: #{forward.46} parent=11 // pred_check_branch
          %155 = sbr.rel (%p153) target = $region16
        $region15: #{forward.46} parent=11 // pred_region
          %p156 = scmp.lt.s32.totalorder %s20, 0
          %s157 = scalar_select %p156, %s20, 0
          %s158 = scalar_lea.vmem %s2, %s157
        $region16: #{forward.46} parent=11 // pred_fallthru
          _
      $region12: #{forward.46} parent=5 // pred_fallthru
        _
      %p159 = scmp.lt.s32.totalorder %s9, 3
      // Predicated region
      $region17: #{forward.46} parent=5 // pred_check
        %p160 = pneg %p159
      $region18: #{forward.46} parent=5 // pred_check_branch
        %162 = sbr.rel (%p160) target = $region20
      $region19: #{forward.46} parent=5 // pred_region
        // Predicated region
        $region21: #{forward.46} parent=19 // pred_check
          %p163 = pneg %p50
        $region22: #{forward.46} parent=19 // pred_check_branch
          %165 = sbr.rel (%p163) target = $region24
        $region23: #{forward.46} parent=19 // pred_region
          %s166 = sand.u32 %s40, 1
          %s167 = sand.u32 %s40, 1
          %s168 = smul.addr %s167, 192
          %s169 = scalar_lea.vmem [#allocation3], %s168
          %s170 = smul.u32 16, %s16
          %s171 = smul.u32 3, %s18
          %s172 = smul.addr %s170, 9
          %s173 = sadd.s32 %s171, %s172
          %s174 = smul.addr %s173, 4
          %s175 = scalar_lea.vmem %s0, %s174
          // Predicated region
          $region25: #{forward.46} parent=23 // pred_check
            _
          $region26: #{forward.46} parent=23 // pred_check_branch
            %177 = sbr.rel (0) target = $region28
          $region27: #{forward.46} parent=23 // pred_region
            // Predicated region
            $region29: #{forward.46} parent=27 // pred_check
              _
            $region30: #{forward.46} parent=27 // pred_check_branch
              %179 = sbr.rel (0) target = $region32
            $region31: #{forward.46} parent=27 // pred_region
              %s180 = scalar_lea.vmem %s175, 8
              %s181 = scalar_lea.vmem %s169, 8 [#allocation3]
              loop: start=0, step=1, limit=1
              $region33: #{forward.46} parent=31 // loop_pre_header
                _
              $region34: #{forward.46} parent=31 // loop_header
                %s183 = sphi 0, %s187
                %p184 = scmp.ge.s32.totalorder %s183, 1
                %s188 = sphi %s175, %s175
                %s189 = sphi %s169, %s169
              $region35: #{forward.46} parent=31 // loop_header_branch
                %186 = sbr.rel (%p184) target = $region39
              $region36: #{forward.46} parent=31 // loop_body
                %v190 = vld [vmem:[%s188] sm:$0xff]
                %191 = vst [vmem:[%s189] sm:$0xff] %v190
                %v192 = vld [vmem:[%s188 + $0x24] sm:$0xff]
                %193 = vst [vmem:[%s189 + $0xc] sm:$0xff] %v192
                %v194 = vld [vmem:[%s188 + $0x48] sm:$0xff]
                %195 = vst [vmem:[%s189 + $0x18] sm:$0xff] %v194
                %v196 = vld [vmem:[%s188 + $0x6c] sm:$0xff]
                %197 = vst [vmem:[%s189 + $0x24] sm:$0xff] %v196
                %v198 = vld [vmem:[%s188 + $0x90] sm:$0xff]
                %199 = vst [vmem:[%s189 + $0x30] sm:$0xff] %v198
                %v200 = vld [vmem:[%s188 + $0xb4] sm:$0xff]
                %201 = vst [vmem:[%s189 + $0x3c] sm:$0xff] %v200
                %v202 = vld [vmem:[%s188 + $0xd8] sm:$0xff]
                %203 = vst [vmem:[%s189 + $0x48] sm:$0xff] %v202
                %v204 = vld [vmem:[%s188 + $0xfc] sm:$0xff]
                %205 = vst [vmem:[%s189 + $0x54] sm:$0xff] %v204
                %v206 = vld [vmem:[%s188 + $0x120] sm:$0xff]
                %207 = vst [vmem:[%s189 + $0x60] sm:$0xff] %v206
                %v208 = vld [vmem:[%s188 + $0x144] sm:$0xff]
                %209 = vst [vmem:[%s189 + $0x6c] sm:$0xff] %v208
                %v210 = vld [vmem:[%s188 + $0x168] sm:$0xff]
                %211 = vst [vmem:[%s189 + $0x78] sm:$0xff] %v210
                %v212 = vld [vmem:[%s188 + $0x18c] sm:$0xff]
                %213 = vst [vmem:[%s189 + $0x84] sm:$0xff] %v212
                %v214 = vld [vmem:[%s188 + $0x1b0] sm:$0xff]
                %215 = vst [vmem:[%s189 + $0x90] sm:$0xff] %v214
                %v216 = vld [vmem:[%s188 + $0x1d4] sm:$0xff]
                %217 = vst [vmem:[%s189 + $0x9c] sm:$0xff] %v216
                %v218 = vld [vmem:[%s188 + $0x1f8] sm:$0xff]
                %219 = vst [vmem:[%s189 + $0xa8] sm:$0xff] %v218
                %v220 = vld [vmem:[%s188 + $0x21c] sm:$0xff]
                %221 = vst [vmem:[%s189 + $0xb4] sm:$0xff] %v220
              $region37: #{forward.46} parent=31 // loop_footer
                %s187 = sadd.s32 1, %s183
              $region38: #{forward.46} parent=31 // loop_footer_branch
                %182 = sbr.rel target = $region34
              $region39: #{forward.46} parent=31 // loop_exit
                _
              loop: start=0, step=1, limit=1
              $region40: #{forward.46} parent=31 // loop_pre_header
                _
              $region41: #{forward.46} parent=31 // loop_header
                %s224 = sphi 0, %s228
                %p225 = scmp.ge.s32.totalorder %s224, 1
                %s229 = sphi %s180, %s180
                %s230 = sphi %s181, %s181
              $region42: #{forward.46} parent=31 // loop_header_branch
                %227 = sbr.rel (%p225) target = $region46
              $region43: #{forward.46} parent=31 // loop_body
                %v231 = vld [vmem:[%s229] sm:$0xf]
                %232 = vst [vmem:[%s230] sm:$0xf] %v231
                %v233 = vld [vmem:[%s229 + $0x24] sm:$0xf]
                %234 = vst [vmem:[%s230 + $0xc] sm:$0xf] %v233
                %v235 = vld [vmem:[%s229 + $0x48] sm:$0xf]
                %236 = vst [vmem:[%s230 + $0x18] sm:$0xf] %v235
                %v237 = vld [vmem:[%s229 + $0x6c] sm:$0xf]
                %238 = vst [vmem:[%s230 + $0x24] sm:$0xf] %v237
                %v239 = vld [vmem:[%s229 + $0x90] sm:$0xf]
                %240 = vst [vmem:[%s230 + $0x30] sm:$0xf] %v239
                %v241 = vld [vmem:[%s229 + $0xb4] sm:$0xf]
                %242 = vst [vmem:[%s230 + $0x3c] sm:$0xf] %v241
                %v243 = vld [vmem:[%s229 + $0xd8] sm:$0xf]
                %244 = vst [vmem:[%s230 + $0x48] sm:$0xf] %v243
                %v245 = vld [vmem:[%s229 + $0xfc] sm:$0xf]
                %246 = vst [vmem:[%s230 + $0x54] sm:$0xf] %v245
                %v247 = vld [vmem:[%s229 + $0x120] sm:$0xf]
                %248 = vst [vmem:[%s230 + $0x60] sm:$0xf] %v247
                %v249 = vld [vmem:[%s229 + $0x144] sm:$0xf]
                %250 = vst [vmem:[%s230 + $0x6c] sm:$0xf] %v249
                %v251 = vld [vmem:[%s229 + $0x168] sm:$0xf]
                %252 = vst [vmem:[%s230 + $0x78] sm:$0xf] %v251
                %v253 = vld [vmem:[%s229 + $0x18c] sm:$0xf]
                %254 = vst [vmem:[%s230 + $0x84] sm:$0xf] %v253
                %v255 = vld [vmem:[%s229 + $0x1b0] sm:$0xf]
                %256 = vst [vmem:[%s230 + $0x90] sm:$0xf] %v255
                %v257 = vld [vmem:[%s229 + $0x1d4] sm:$0xf]
                %258 = vst [vmem:[%s230 + $0x9c] sm:$0xf] %v257
                %v259 = vld [vmem:[%s229 + $0x1f8] sm:$0xf]
                %260 = vst [vmem:[%s230 + $0xa8] sm:$0xf] %v259
                %v261 = vld [vmem:[%s229 + $0x21c] sm:$0xf]
                %262 = vst [vmem:[%s230 + $0xb4] sm:$0xf] %v261
              $region44: #{forward.46} parent=31 // loop_footer
                %s228 = sadd.s32 1, %s224
              $region45: #{forward.46} parent=31 // loop_footer_branch
                %223 = sbr.rel target = $region41
              $region46: #{forward.46} parent=31 // loop_exit
                _
            $region32: #{forward.46} parent=27 // pred_fallthru
              _
          $region28: #{forward.46} parent=23 // pred_fallthru
            _
          %263 = vnop
        $region24: #{forward.46} parent=19 // pred_fallthru
          _
        // Predicated region
        $region47: #{forward.46} parent=19 // pred_check
          %p264 = pneg %p78
        $region48: #{forward.46} parent=19 // pred_check_branch
          %266 = sbr.rel (%p264) target = $region50
        $region49: #{forward.46} parent=19 // pred_region
          %s267 = smul.u32 48, %s18
          %p268 = scmp.lt.s32.totalorder %s267, 143
          %s269 = scalar_select %p268, %s267, 143
          %p270 = scmp.lt.s32.totalorder %s17, 0
          %s271 = scalar_select %p270, %s17, 0
          %s272 = sadd.s32 %s271, %s269
          %s273 = smul.addr %s272, 4
          %s274 = scalar_lea.vmem %s1, %s273
          %s275 = smul.u32 48, %s18
        $region50: #{forward.46} parent=19 // pred_fallthru
          _
      $region20: #{forward.46} parent=5 // pred_fallthru
        _
      %p276 = scmp.le.s32.totalorder 1, %s9
      %p277 = scmp.lt.s32.totalorder %s9, 4
      %p278 = pnand %p276, %p277
      %p279 = pneg %p278
      // Predicated region
      $region51: #{forward.46} parent=5 // pred_check
        _
      $region52: #{forward.46} parent=5 // pred_check_branch
        %281 = sbr.rel (%p278) target = $region54
      $region53: #{forward.46} parent=5 // pred_region
        %s282 = ssub.s32 %s9, 1
        %s283 = sand.u32 %s43, 1
        %s284 = sand.u32 %s43, 1
        %s285 = smul.addr %s284, 192
        %s286 = scalar_lea.vmem [#allocation3], %s285
        // Predicated region
        $region55: #{forward.46} parent=53 // pred_check
          %p287 = pneg %p56
        $region56: #{forward.46} parent=53 // pred_check_branch
          %289 = sbr.rel (%p287) target = $region58
        $region57: #{forward.46} parent=53 // pred_region
          _
        $region58: #{forward.46} parent=53 // pred_fallthru
          _
        %s290 = sand.u32 %s43, 1
        %s291 = sand.u32 %s43, 1
        %s292 = smul.addr %s291, 192
        %s293 = scalar_lea.vmem [#allocation3], %s292
        %p294 = pneg %p56
        %p295 = pneg %p53
        %s296 = smul.u32 48, %s21
        %p297 = scmp.lt.s32.totalorder %s296, 143
        %s298 = scalar_select %p297, %s296, 143
        %p299 = scmp.lt.s32.totalorder %s20, 0
        %s300 = scalar_select %p299, %s20, 0
        %s301 = sadd.s32 %s300, %s298
        %s302 = smul.addr %s301, 4
        %s303 = scalar_lea.vmem %s1, %s302
        %p304 = pneg %p84
        %p305 = pneg %p81
        %p306 = scmp.lt.s32.totalorder %s20, 0
        %s307 = scalar_select %p306, %s20, 0
        %s308 = scalar_lea.vmem %s2, %s307
        %p309 = pneg %p110
        %p310 = pneg %p107
        %p311 = pneg %p138
        %p312 = pneg %p135
        %s313 = smul.u32 16, %s19
        %p314 = scmp.lt.s32.totalorder %s313, 15
        %s315 = scalar_select %p314, %s313, 15
        %p316 = scmp.lt.s32.totalorder %s20, 0
        %s317 = scalar_select %p316, %s20, 0
        %s318 = sadd.s32 %s317, %s315
        %s319 = smul.addr %s318, 4
        %s320 = scalar_lea.vmem %s3, %s319
        %s321 = smul.u32 16, %s19
        %s322 = smul.u32 3, %s21
        %s323 = smul.u32 48, %s21
        %p324 = scmp.lt.s32.totalorder %s323, 143
        %s325 = scalar_select %p324, %s323, 143
        %p326 = scmp.lt.s32.totalorder %s20, 0
        %s327 = scalar_select %p326, %s20, 0
        %s328 = sadd.s32 %s327, %s325
        %s329 = smul.addr %s328, 4
        %s330 = scalar_lea.vmem %s1, %s329
        %s331 = smul.u32 48, %s21
        %p332 = scmp.lt.s32.totalorder %s20, 0
        %s333 = scalar_select %p332, %s20, 0
        %s334 = scalar_lea.vmem %s2, %s333
        %s335 = smul.u32 16, %s19
        %p336 = scmp.lt.s32.totalorder %s335, 15
        %s337 = scalar_select %p336, %s335, 15
        %p338 = scmp.lt.s32.totalorder %s20, 0
        %s339 = scalar_select %p338, %s20, 0
        %s340 = sadd.s32 %s339, %s337
        %s341 = smul.addr %s340, 4
        %s342 = scalar_lea.vmem %s3, %s341
        %s343 = smul.u32 16, %s19
        %p345 = scmp.eq.s32.totalorder %s21, 0
        // Predicated region
        $region59: #{forward.46} parent=53 // pred_check
          %p346 = pneg %p345
        $region60: #{forward.46} parent=53 // pred_check_branch
          %348 = sbr.rel (%p346) target = $region62
        $region61: #{forward.46} parent=53 // pred_region
          %349 = vst [vmem:[#allocation2] sm:$0xff] 0.0
          %350 = vst [vmem:[#allocation2 + $0x8] sm:$0xff] 0.0
          %351 = vst [vmem:[#allocation2 + $0x10] sm:$0xff] 0.0
          %352 = vst [vmem:[#allocation2 + $0x18] sm:$0xff] 0.0
          %353 = vst [vmem:[#allocation2 + $0x20] sm:$0xff] 0.0
          %354 = vst [vmem:[#allocation2 + $0x28] sm:$0xff] 0.0
          %355 = vst [vmem:[#allocation2 + $0x30] sm:$0xff] 0.0
          %356 = vst [vmem:[#allocation2 + $0x38] sm:$0xff] 0.0
          %357 = vst [vmem:[#allocation2 + $0x40] sm:$0xff] 0.0
          %358 = vst [vmem:[#allocation2 + $0x48] sm:$0xff] 0.0
          %359 = vst [vmem:[#allocation2 + $0x50] sm:$0xff] 0.0
          %360 = vst [vmem:[#allocation2 + $0x58] sm:$0xff] 0.0
          %361 = vst [vmem:[#allocation2 + $0x60] sm:$0xff] 0.0
          %362 = vst [vmem:[#allocation2 + $0x68] sm:$0xff] 0.0
          %363 = vst [vmem:[#allocation2 + $0x70] sm:$0xff] 0.0
          %364 = vst [vmem:[#allocation2 + $0x78] sm:$0xff] 0.0
        $region62: #{forward.46} parent=53 // pred_fallthru
          _
        %v365 = vld [vmem:[#allocation2] sm:$0xff]
        %v366 = vld [vmem:[#allocation2 + $0x8] sm:$0xff]
        %v367 = vld [vmem:[#allocation2 + $0x10] sm:$0xff]
        %v368 = vld [vmem:[#allocation2 + $0x18] sm:$0xff]
        %v369 = vld [vmem:[#allocation2 + $0x20] sm:$0xff]
        %v370 = vld [vmem:[#allocation2 + $0x28] sm:$0xff]
        %v371 = vld [vmem:[#allocation2 + $0x30] sm:$0xff]
        %v372 = vld [vmem:[#allocation2 + $0x38] sm:$0xff]
        %v373 = vld [vmem:[#allocation2 + $0x40] sm:$0xff]
        %v374 = vld [vmem:[#allocation2 + $0x48] sm:$0xff]
        %v375 = vld [vmem:[#allocation2 + $0x50] sm:$0xff]
        %v376 = vld [vmem:[#allocation2 + $0x58] sm:$0xff]
        %v377 = vld [vmem:[#allocation2 + $0x60] sm:$0xff]
        %v378 = vld [vmem:[#allocation2 + $0x68] sm:$0xff]
        %v379 = vld [vmem:[#allocation2 + $0x70] sm:$0xff]
        %v380 = vld [vmem:[#allocation2 + $0x78] sm:$0xff]
        %v381 = vld [vmem:[%s286] sm:$0xff]
        %v382 = vld [vmem:[%s286 + $0x8] sm:$0xf]
        %v383 = vld [vmem:[%s286 + $0xc] sm:$0xff]
        %v384 = vld [vmem:[%s286 + $0x14] sm:$0xf]
        %v385 = vld [vmem:[%s286 + $0x18] sm:$0xff]
        %v386 = vld [vmem:[%s286 + $0x20] sm:$0xf]
        %v387 = vld [vmem:[%s286 + $0x24] sm:$0xff]
        %v388 = vld [vmem:[%s286 + $0x2c] sm:$0xf]
        %v389 = vld [vmem:[%s286 + $0x30] sm:$0xff]
        %v390 = vld [vmem:[%s286 + $0x38] sm:$0xf]
        %v391 = vld [vmem:[%s286 + $0x3c] sm:$0xff]
        %v392 = vld [vmem:[%s286 + $0x44] sm:$0xf]
        %v393 = vld [vmem:[%s286 + $0x48] sm:$0xff]
        %v394 = vld [vmem:[%s286 + $0x50] sm:$0xf]
        %v395 = vld [vmem:[%s286 + $0x54] sm:$0xff]
        %v396 = vld [vmem:[%s286 + $0x5c] sm:$0xf]
        %v397 = vld [vmem:[%s286 + $0x60] sm:$0xff]
        %v398 = vld [vmem:[%s286 + $0x68] sm:$0xf]
        %v399 = vld [vmem:[%s286 + $0x6c] sm:$0xff]
        %v400 = vld [vmem:[%s286 + $0x74] sm:$0xf]
        %v401 = vld [vmem:[%s286 + $0x78] sm:$0xff]
        %v402 = vld [vmem:[%s286 + $0x80] sm:$0xf]
        %v403 = vld [vmem:[%s286 + $0x84] sm:$0xff]
        %v404 = vld [vmem:[%s286 + $0x8c] sm:$0xf]
        %v405 = vld [vmem:[%s286 + $0x90] sm:$0xff]
        %v406 = vld [vmem:[%s286 + $0x98] sm:$0xf]
        %v407 = vld [vmem:[%s286 + $0x9c] sm:$0xff]
        %v408 = vld [vmem:[%s286 + $0xa4] sm:$0xf]
        %v409 = vld [vmem:[%s286 + $0xa8] sm:$0xff]
        %v410 = vld [vmem:[%s286 + $0xb0] sm:$0xf]
        %v411 = vld [vmem:[%s286 + $0xb4] sm:$0xff]
        %v412 = vld [vmem:[%s286 + $0xbc] sm:$0xf]
        %v413 = vld [vmem:[%s330] sm:$0xf]
        %v414 = vld [vmem:[%s330 + $0x4] sm:$0xf]
        %v415 = vld [vmem:[%s330 + $0x8] sm:$0xf]
        %v416 = vld [vmem:[%s330 + $0xc] sm:$0xf]
        %v417 = vld [vmem:[%s330 + $0x10] sm:$0xf]
        %v418 = vld [vmem:[%s330 + $0x14] sm:$0xf]
        %v419 = vld [vmem:[%s330 + $0x18] sm:$0xf]
        %v420 = vld [vmem:[%s330 + $0x1c] sm:$0xf]
        %v421 = vld [vmem:[%s330 + $0x20] sm:$0xf]
        %v422 = vld [vmem:[%s330 + $0x24] sm:$0xf]
        %v423 = vld [vmem:[%s330 + $0x28] sm:$0xf]
        %v424 = vld [vmem:[%s330 + $0x2c] sm:$0xf]
        %v425 = vld [vmem:[%s330 + $0x30] sm:$0xf]
        %v426 = vld [vmem:[%s330 + $0x34] sm:$0xf]
        %v427 = vld [vmem:[%s330 + $0x38] sm:$0xf]
        %v428 = vld [vmem:[%s330 + $0x3c] sm:$0xf]
        %v429 = vld [vmem:[%s330 + $0x40] sm:$0xf]
        %v430 = vld [vmem:[%s330 + $0x44] sm:$0xf]
        %v431 = vld [vmem:[%s330 + $0x48] sm:$0xf]
        %v432 = vld [vmem:[%s330 + $0x4c] sm:$0xf]
        %v433 = vld [vmem:[%s330 + $0x50] sm:$0xf]
        %v434 = vld [vmem:[%s330 + $0x54] sm:$0xf]
        %v435 = vld [vmem:[%s330 + $0x58] sm:$0xf]
        %v436 = vld [vmem:[%s330 + $0x5c] sm:$0xf]
        %v437 = vld [vmem:[%s330 + $0x60] sm:$0xf]
        %v438 = vld [vmem:[%s330 + $0x64] sm:$0xf]
        %v439 = vld [vmem:[%s330 + $0x68] sm:$0xf]
        %v440 = vld [vmem:[%s330 + $0x6c] sm:$0xf]
        %v441 = vld [vmem:[%s330 + $0x70] sm:$0xf]
        %v442 = vld [vmem:[%s330 + $0x74] sm:$0xf]
        %v443 = vld [vmem:[%s330 + $0x78] sm:$0xf]
        %v444 = vld [vmem:[%s330 + $0x7c] sm:$0xf]
        %v445 = vld [vmem:[%s330 + $0x80] sm:$0xf]
        %v446 = vld [vmem:[%s330 + $0x84] sm:$0xf]
        %v447 = vld [vmem:[%s330 + $0x88] sm:$0xf]
        %v448 = vld [vmem:[%s330 + $0x8c] sm:$0xf]
        %v449 = vld [vmem:[%s330 + $0x90] sm:$0xf]
        %v450 = vld [vmem:[%s330 + $0x94] sm:$0xf]
        %v451 = vld [vmem:[%s330 + $0x98] sm:$0xf]
        %v452 = vld [vmem:[%s330 + $0x9c] sm:$0xf]
        %v453 = vld [vmem:[%s330 + $0xa0] sm:$0xf]
        %v454 = vld [vmem:[%s330 + $0xa4] sm:$0xf]
        %v455 = vld [vmem:[%s330 + $0xa8] sm:$0xf]
        %v456 = vld [vmem:[%s330 + $0xac] sm:$0xf]
        %v457 = vld [vmem:[%s330 + $0xb0] sm:$0xf]
        %v458 = vld [vmem:[%s330 + $0xb4] sm:$0xf]
        %v459 = vld [vmem:[%s330 + $0xb8] sm:$0xf]
        %v460 = vld [vmem:[%s330 + $0xbc] sm:$0xf]
        %v493 = vunpack.c.l.b16 %v381
        %v494 = vunpack.c.h.b16 %v381
        %v495 = vunpack.c.l.b16 %v382
        %v496 = vunpack.c.l.b16 %v383
        %v497 = vunpack.c.h.b16 %v383
        %v498 = vunpack.c.l.b16 %v384
        %v499 = vunpack.c.l.b16 %v385
        %v500 = vunpack.c.h.b16 %v385
        %v501 = vunpack.c.l.b16 %v386
        %v502 = vunpack.c.l.b16 %v387
        %v503 = vunpack.c.h.b16 %v387
        %v504 = vunpack.c.l.b16 %v388
        %v505 = vunpack.c.l.b16 %v389
        %v506 = vunpack.c.h.b16 %v389
        %v507 = vunpack.c.l.b16 %v390
        %v508 = vunpack.c.l.b16 %v391
        %v509 = vunpack.c.h.b16 %v391
        %v510 = vunpack.c.l.b16 %v392
        %v511 = vunpack.c.l.b16 %v393
        %v512 = vunpack.c.h.b16 %v393
        %v513 = vunpack.c.l.b16 %v394
        %v514 = vunpack.c.l.b16 %v395
        %v515 = vunpack.c.h.b16 %v395
        %v516 = vunpack.c.l.b16 %v396
        %v517 = vunpack.c.l.b16 %v397
        %v518 = vunpack.c.h.b16 %v397
        %v519 = vunpack.c.l.b16 %v398
        %v520 = vunpack.c.l.b16 %v399
        %v521 = vunpack.c.h.b16 %v399
        %v522 = vunpack.c.l.b16 %v400
        %v523 = vunpack.c.l.b16 %v401
        %v524 = vunpack.c.h.b16 %v401
        %v525 = vunpack.c.l.b16 %v402
        %v526 = vunpack.c.l.b16 %v403
        %v527 = vunpack.c.h.b16 %v403
        %v528 = vunpack.c.l.b16 %v404
        %v529 = vunpack.c.l.b16 %v405
        %v530 = vunpack.c.h.b16 %v405
        %v531 = vunpack.c.l.b16 %v406
        %v532 = vunpack.c.l.b16 %v407
        %v533 = vunpack.c.h.b16 %v407
        %v534 = vunpack.c.l.b16 %v408
        %v535 = vunpack.c.l.b16 %v409
        %v536 = vunpack.c.h.b16 %v409
        %v537 = vunpack.c.l.b16 %v410
        %v538 = vunpack.c.l.b16 %v411
        %v539 = vunpack.c.h.b16 %v411
        %v540 = vunpack.c.l.b16 %v412
        %v541 = vpack.c.b16 %v496, %v493
        %v542 = vpack.c.b16 %v497, %v494
        %v543 = vpack.c.b16 %v498, %v495
        %v544 = vpack.c.b16 %v502, %v499
        %v545 = vpack.c.b16 %v503, %v500
        %v546 = vpack.c.b16 %v504, %v501
        %v547 = vpack.c.b16 %v508, %v505
        %v548 = vpack.c.b16 %v509, %v506
        %v549 = vpack.c.b16 %v510, %v507
        %v550 = vpack.c.b16 %v514, %v511
        %v551 = vpack.c.b16 %v515, %v512
        %v552 = vpack.c.b16 %v516, %v513
        %v553 = vpack.c.b16 %v520, %v517
        %v554 = vpack.c.b16 %v521, %v518
        %v555 = vpack.c.b16 %v522, %v519
        %v556 = vpack.c.b16 %v526, %v523
        %v557 = vpack.c.b16 %v527, %v524
        %v558 = vpack.c.b16 %v528, %v525
        %v559 = vpack.c.b16 %v532, %v529
        %v560 = vpack.c.b16 %v533, %v530
        %v561 = vpack.c.b16 %v534, %v531
        %v562 = vpack.c.b16 %v538, %v535
        %v563 = vpack.c.b16 %v539, %v536
        %v564 = vpack.c.b16 %v540, %v537
        %v637 = vunpack.c.l.b16 %v413
        %v638 = vunpack.c.l.b16 %v414
        %v639 = vunpack.c.l.b16 %v415
        %v640 = vunpack.c.l.b16 %v416
        %v641 = vunpack.c.l.b16 %v417
        %v642 = vunpack.c.l.b16 %v418
        %v643 = vunpack.c.l.b16 %v419
        %v644 = vunpack.c.l.b16 %v420
        %v645 = vunpack.c.l.b16 %v421
        %v646 = vunpack.c.l.b16 %v422
        %v647 = vunpack.c.l.b16 %v423
        %v648 = vunpack.c.l.b16 %v424
        %v649 = vunpack.c.l.b16 %v425
        %v650 = vunpack.c.l.b16 %v426
        %v651 = vunpack.c.l.b16 %v427
        %v652 = vunpack.c.l.b16 %v428
        %v653 = vunpack.c.l.b16 %v429
        %v654 = vunpack.c.l.b16 %v430
        %v655 = vunpack.c.l.b16 %v431
        %v656 = vunpack.c.l.b16 %v432
        %v657 = vunpack.c.l.b16 %v433
        %v658 = vunpack.c.l.b16 %v434
        %v659 = vunpack.c.l.b16 %v435
        %v660 = vunpack.c.l.b16 %v436
        %v661 = vunpack.c.l.b16 %v437
        %v662 = vunpack.c.l.b16 %v438
        %v663 = vunpack.c.l.b16 %v439
        %v664 = vunpack.c.l.b16 %v440
        %v665 = vunpack.c.l.b16 %v441
        %v666 = vunpack.c.l.b16 %v442
        %v667 = vunpack.c.l.b16 %v443
        %v668 = vunpack.c.l.b16 %v444
        %v669 = vunpack.c.l.b16 %v445
        %v670 = vunpack.c.l.b16 %v446
        %v671 = vunpack.c.l.b16 %v447
        %v672 = vunpack.c.l.b16 %v448
        %v673 = vunpack.c.l.b16 %v449
        %v674 = vunpack.c.l.b16 %v450
        %v675 = vunpack.c.l.b16 %v451
        %v676 = vunpack.c.l.b16 %v452
        %v677 = vunpack.c.l.b16 %v453
        %v678 = vunpack.c.l.b16 %v454
        %v679 = vunpack.c.l.b16 %v455
        %v680 = vunpack.c.l.b16 %v456
        %v681 = vunpack.c.l.b16 %v457
        %v682 = vunpack.c.l.b16 %v458
        %v683 = vunpack.c.l.b16 %v459
        %v684 = vunpack.c.l.b16 %v460
        %v685 = vpack.c.b16 %v638, %v637
        %v686 = vpack.c.b16 %v640, %v639
        %v687 = vpack.c.b16 %v642, %v641
        %v688 = vpack.c.b16 %v644, %v643
        %v689 = vpack.c.b16 %v646, %v645
        %v690 = vpack.c.b16 %v648, %v647
        %v691 = vpack.c.b16 %v650, %v649
        %v692 = vpack.c.b16 %v652, %v651
        %v693 = vpack.c.b16 %v654, %v653
        %v694 = vpack.c.b16 %v656, %v655
        %v695 = vpack.c.b16 %v658, %v657
        %v696 = vpack.c.b16 %v660, %v659
        %v697 = vpack.c.b16 %v662, %v661
        %v698 = vpack.c.b16 %v664, %v663
        %v699 = vpack.c.b16 %v666, %v665
        %v700 = vpack.c.b16 %v668, %v667
        %v701 = vpack.c.b16 %v670, %v669
        %v702 = vpack.c.b16 %v672, %v671
        %v703 = vpack.c.b16 %v674, %v673
        %v704 = vpack.c.b16 %v676, %v675
        %v705 = vpack.c.b16 %v678, %v677
        %v706 = vpack.c.b16 %v680, %v679
        %v707 = vpack.c.b16 %v682, %v681
        %v708 = vpack.c.b16 %v684, %v683
        %733 = vmatprep.subr.bf16.mxu0 0
        %734 = vmatpush1.bf16.msra.mxu0 %v685
        %735 = vmatprep.subr.bf16.mxu0 0
        %736 = vmatpush1.bf16.msra.mxu0 %v686
        %737 = vmatprep.subr.bf16.mxu0 0
        %738 = vmatpush1.bf16.msra.mxu0 %v687
        %739 = vmatprep.subr.bf16.mxu0 0
        %740 = vmatpush1.bf16.msra.mxu0 %v688
        %741 = vmatprep.subr.bf16.mxu0 0
        %742 = vmatpush1.bf16.msra.mxu0 %v689
        %743 = vmatprep.subr.bf16.mxu0 0
        %744 = vmatpush1.bf16.msra.mxu0 %v690
        %745 = vmatprep.subr.bf16.mxu0 0
        %746 = vmatpush1.bf16.msra.mxu0 %v691
        %747 = vmatprep.subr.bf16.mxu0 0
        %748 = vmatpush1.bf16.msra.mxu0 %v692
        %749 = vmatprep.subr.bf16.mxu0 0
        %750 = vmatpush1.bf16.msra.mxu0 %v693
        %751 = vmatprep.subr.bf16.mxu0 0
        %752 = vmatpush1.bf16.msra.mxu0 %v694
        %753 = vmatprep.subr.bf16.mxu0 0
        %754 = vmatpush1.bf16.msra.mxu0 %v695
        %755 = vmatprep.subr.bf16.mxu0 0
        %756 = vmatpush1.bf16.msra.mxu0 %v696
        %757 = vmatprep.subr.bf16.mxu0 0
        %758 = vmatpush1.bf16.msra.mxu0 %v697
        %759 = vmatprep.subr.bf16.mxu0 0
        %760 = vmatpush1.bf16.msra.mxu0 %v698
        %761 = vmatprep.subr.bf16.mxu0 0
        %762 = vmatpush1.bf16.msra.mxu0 %v699
        %763 = vmatprep.subr.bf16.mxu0 0
        %764 = vmatpush1.bf16.msra.mxu0 %v700
        %765 = vmatprep.mubr.bf16.mxu0 %v542
        %766 = vmatmul.mubr.bf16.gmra.mrb[0].mxu0 %v541
        %v767 = vpop.f32.mrb[0].mxu0
        %v768 = vadd.f32 0.0, %v767
        %v769 = vpop.f32.mrb[0].mxu0
        %v770 = vpop.f32.mrb[0].mxu0
        %v771 = vadd.f32 0.0, %v770
        %v772 = vpop.f32.mrb[0].mxu0
        %773 = vmatprep.mubr.bf16.mxu0 %v545
        %774 = vmatmul.mubr.bf16.gmra.mrb[0].mxu0 %v544
        %v775 = vpop.f32.mrb[0].mxu0
        %v776 = vadd.f32 0.0, %v775
        %v777 = vpop.f32.mrb[0].mxu0
        %v778 = vpop.f32.mrb[0].mxu0
        %v779 = vadd.f32 0.0, %v778
        %v780 = vpop.f32.mrb[0].mxu0
        %781 = vmatprep.mubr.bf16.mxu0 %v548
        %782 = vmatmul.mubr.bf16.gmra.mrb[0].mxu0 %v547
        %v783 = vpop.f32.mrb[0].mxu0
        %v784 = vadd.f32 0.0, %v783
        %v785 = vpop.f32.mrb[0].mxu0
        %v786 = vpop.f32.mrb[0].mxu0
        %v787 = vadd.f32 0.0, %v786
        %v788 = vpop.f32.mrb[0].mxu0
        %789 = vmatprep.mubr.bf16.mxu0 %v551
        %790 = vmatmul.mubr.bf16.gmra.mrb[0].mxu0 %v550
        %v791 = vpop.f32.mrb[0].mxu0
        %v792 = vadd.f32 0.0, %v791
        %v793 = vpop.f32.mrb[0].mxu0
        %v794 = vpop.f32.mrb[0].mxu0
        %v795 = vadd.f32 0.0, %v794
        %v796 = vpop.f32.mrb[0].mxu0
        %797 = vmatprep.mubr.bf16.mxu0 %v554
        %798 = vmatmul.mubr.bf16.gmra.mrb[0].mxu0 %v553
        %v799 = vpop.f32.mrb[0].mxu0
        %v800 = vadd.f32 0.0, %v799
        %v801 = vpop.f32.mrb[0].mxu0
        %v802 = vpop.f32.mrb[0].mxu0
        %v803 = vadd.f32 0.0, %v802
        %v804 = vpop.f32.mrb[0].mxu0
        %805 = vmatprep.mubr.bf16.mxu0 %v557
        %806 = vmatmul.mubr.bf16.gmra.mrb[0].mxu0 %v556
        %v807 = vpop.f32.mrb[0].mxu0
        %v808 = vadd.f32 0.0, %v807
        %v809 = vpop.f32.mrb[0].mxu0
        %v810 = vpop.f32.mrb[0].mxu0
        %v811 = vadd.f32 0.0, %v810
        %v812 = vpop.f32.mrb[0].mxu0
        %813 = vmatprep.mubr.bf16.mxu0 %v560
        %814 = vmatmul.mubr.bf16.gmra.mrb[0].mxu0 %v559
        %v815 = vpop.f32.mrb[0].mxu0
        %v816 = vadd.f32 0.0, %v815
        %v817 = vpop.f32.mrb[0].mxu0
        %v818 = vpop.f32.mrb[0].mxu0
        %v819 = vadd.f32 0.0, %v818
        %v820 = vpop.f32.mrb[0].mxu0
        %821 = vmatprep.mubr.bf16.mxu0 %v563
        %822 = vmatmul.mubr.bf16.gmra.mrb[0].mxu0 %v562
        %v823 = vpop.f32.mrb[0].mxu0
        %v824 = vadd.f32 0.0, %v823
        %v825 = vpop.f32.mrb[0].mxu0
        %v826 = vpop.f32.mrb[0].mxu0
        %v827 = vadd.f32 0.0, %v826
        %v828 = vpop.f32.mrb[0].mxu0
        %829 = vdwg.mxu0
        %830 = vmatprep.subr.bf16.mxu0 0
        %831 = vmatpush1.bf16.msra.mxu0 %v701
        %832 = vmatprep.subr.bf16.mxu0 0
        %833 = vmatpush1.bf16.msra.mxu0 %v702
        %834 = vmatprep.subr.bf16.mxu0 0
        %835 = vmatpush1.bf16.msra.mxu0 %v703
        %836 = vmatprep.subr.bf16.mxu0 0
        %837 = vmatpush1.bf16.msra.mxu0 %v704
        %838 = vmatprep.subr.bf16.mxu0 0
        %839 = vmatpush1.bf16.msra.mxu0 %v705
        %840 = vmatprep.subr.bf16.mxu0 0
        %841 = vmatpush1.bf16.msra.mxu0 %v706
        %842 = vmatprep.subr.bf16.mxu0 0
        %843 = vmatpush1.bf16.msra.mxu0 %v707
        %844 = vmatprep.subr.bf16.mxu0 0
        %845 = vmatpush1.bf16.msra.mxu0 %v708
        %846 = vmatprep.subr.bf16.mxu0 0
        %847 = vmatpush1.bf16.msra.mxu0 0
        %848 = vmatprep.subr.bf16.mxu0 0
        %849 = vmatpush1.bf16.msra.mxu0 0
        %850 = vmatprep.subr.bf16.mxu0 0
        %851 = vmatpush1.bf16.msra.mxu0 0
        %852 = vmatprep.subr.bf16.mxu0 0
        %853 = vmatpush1.bf16.msra.mxu0 0
        %854 = vmatprep.subr.bf16.mxu0 0
        %855 = vmatpush1.bf16.msra.mxu0 0
        %856 = vmatprep.subr.bf16.mxu0 0
        %857 = vmatpush1.bf16.msra.mxu0 0
        %858 = vmatprep.subr.bf16.mxu0 0
        %859 = vmatpush1.bf16.msra.mxu0 0
        %860 = vmatprep.subr.bf16.mxu0 0
        %861 = vmatpush1.bf16.msra.mxu0 0
        %862 = vmatprep.mubr.bf16.mxu0 0
        %863 = vmatmul.mubr.bf16.gmra.mrb[0].mxu0 %v543
        %v864 = vpop.f32.mrb[0].mxu0
        %v865 = vadd.f32 %v768, %v864
        %v866 = vpop.f32.mrb[0].mxu0
        %v867 = vpop.f32.mrb[0].mxu0
        %v868 = vadd.f32 %v771, %v867
        %v869 = vpop.f32.mrb[0].mxu0
        %870 = vmatprep.mubr.bf16.mxu0 0
        %871 = vmatmul.mubr.bf16.gmra.mrb[0].mxu0 %v546
        %v872 = vpop.f32.mrb[0].mxu0
        %v873 = vadd.f32 %v776, %v872
        %v874 = vpop.f32.mrb[0].mxu0
        %v875 = vpop.f32.mrb[0].mxu0
        %v876 = vadd.f32 %v779, %v875
        %v877 = vpop.f32.mrb[0].mxu0
        %878 = vmatprep.mubr.bf16.mxu0 0
        %879 = vmatmul.mubr.bf16.gmra.mrb[0].mxu0 %v549
        %v880 = vpop.f32.mrb[0].mxu0
        %v881 = vadd.f32 %v784, %v880
        %v882 = vpop.f32.mrb[0].mxu0
        %v883 = vpop.f32.mrb[0].mxu0
        %v884 = vadd.f32 %v787, %v883
        %v885 = vpop.f32.mrb[0].mxu0
        %886 = vmatprep.mubr.bf16.mxu0 0
        %887 = vmatmul.mubr.bf16.gmra.mrb[0].mxu0 %v552
        %v888 = vpop.f32.mrb[0].mxu0
        %v889 = vadd.f32 %v792, %v888
        %v890 = vpop.f32.mrb[0].mxu0
        %v891 = vpop.f32.mrb[0].mxu0
        %v892 = vadd.f32 %v795, %v891
        %v893 = vpop.f32.mrb[0].mxu0
        %894 = vmatprep.mubr.bf16.mxu0 0
        %895 = vmatmul.mubr.bf16.gmra.mrb[0].mxu0 %v555
        %v896 = vpop.f32.mrb[0].mxu0
        %v897 = vadd.f32 %v800, %v896
        %v898 = vpop.f32.mrb[0].mxu0
        %v899 = vpop.f32.mrb[0].mxu0
        %v900 = vadd.f32 %v803, %v899
        %v901 = vpop.f32.mrb[0].mxu0
        %902 = vmatprep.mubr.bf16.mxu0 0
        %903 = vmatmul.mubr.bf16.gmra.mrb[0].mxu0 %v558
        %v904 = vpop.f32.mrb[0].mxu0
        %v905 = vadd.f32 %v808, %v904
        %v906 = vpop.f32.mrb[0].mxu0
        %v907 = vpop.f32.mrb[0].mxu0
        %v908 = vadd.f32 %v811, %v907
        %v909 = vpop.f32.mrb[0].mxu0
        %910 = vmatprep.mubr.bf16.mxu0 0
        %911 = vmatmul.mubr.bf16.gmra.mrb[0].mxu0 %v561
        %v912 = vpop.f32.mrb[0].mxu0
        %v913 = vadd.f32 %v816, %v912
        %v914 = vpop.f32.mrb[0].mxu0
        %v915 = vpop.f32.mrb[0].mxu0
        %v916 = vadd.f32 %v819, %v915
        %v917 = vpop.f32.mrb[0].mxu0
        %918 = vmatprep.mubr.bf16.mxu0 0
        %919 = vmatmul.mubr.bf16.gmra.mrb[0].mxu0 %v564
        %v920 = vpop.f32.mrb[0].mxu0
        %v921 = vadd.f32 %v824, %v920
        %v922 = vpop.f32.mrb[0].mxu0
        %v923 = vpop.f32.mrb[0].mxu0
        %v924 = vadd.f32 %v827, %v923
        %v925 = vpop.f32.mrb[0].mxu0
        %926 = vdwg.mxu0
        %v927 = vadd.f32 %v365, %v865
        %v928 = vadd.f32 %v366, %v868
        %v929 = vadd.f32 %v367, %v873
        %v930 = vadd.f32 %v368, %v876
        %v931 = vadd.f32 %v369, %v881
        %v932 = vadd.f32 %v370, %v884
        %v933 = vadd.f32 %v371, %v889
        %v934 = vadd.f32 %v372, %v892
        %v935 = vadd.f32 %v373, %v897
        %v936 = vadd.f32 %v374, %v900
        %v937 = vadd.f32 %v375, %v905
        %v938 = vadd.f32 %v376, %v908
        %v939 = vadd.f32 %v377, %v913
        %v940 = vadd.f32 %v378, %v916
        %v941 = vadd.f32 %v379, %v921
        %v942 = vadd.f32 %v380, %v924
        %943 = vst [vmem:[#allocation2] sm:$0xff] %v927
        %944 = vst [vmem:[#allocation2 + $0x8] sm:$0xff] %v928
        %945 = vst [vmem:[#allocation2 + $0x10] sm:$0xff] %v929
        %946 = vst [vmem:[#allocation2 + $0x18] sm:$0xff] %v930
        %947 = vst [vmem:[#allocation2 + $0x20] sm:$0xff] %v931
        %948 = vst [vmem:[#allocation2 + $0x28] sm:$0xff] %v932
        %949 = vst [vmem:[#allocation2 + $0x30] sm:$0xff] %v933
        %950 = vst [vmem:[#allocation2 + $0x38] sm:$0xff] %v934
        %951 = vst [vmem:[#allocation2 + $0x40] sm:$0xff] %v935
        %952 = vst [vmem:[#allocation2 + $0x48] sm:$0xff] %v936
        %953 = vst [vmem:[#allocation2 + $0x50] sm:$0xff] %v937
        %954 = vst [vmem:[#allocation2 + $0x58] sm:$0xff] %v938
        %955 = vst [vmem:[#allocation2 + $0x60] sm:$0xff] %v939
        %956 = vst [vmem:[#allocation2 + $0x68] sm:$0xff] %v940
        %957 = vst [vmem:[#allocation2 + $0x70] sm:$0xff] %v941
        %958 = vst [vmem:[#allocation2 + $0x78] sm:$0xff] %v942
        %p959 = scmp.eq.s32.totalorder %s21, 2
        // Predicated region
        $region63: #{forward.46} parent=53 // pred_check
          %p960 = pneg %p959
        $region64: #{forward.46} parent=53 // pred_check_branch
          %962 = sbr.rel (%p960) target = $region66
        $region65: #{forward.46} parent=53 // pred_region
          %v963 = vld [vmem:[#allocation2] sm:$0xff]
          %v964 = vld [vmem:[#allocation2 + $0x8] sm:$0xff]
          %v965 = vld [vmem:[#allocation2 + $0x10] sm:$0xff]
          %v966 = vld [vmem:[#allocation2 + $0x18] sm:$0xff]
          %v967 = vld [vmem:[#allocation2 + $0x20] sm:$0xff]
          %v968 = vld [vmem:[#allocation2 + $0x28] sm:$0xff]
          %v969 = vld [vmem:[#allocation2 + $0x30] sm:$0xff]
          %v970 = vld [vmem:[#allocation2 + $0x38] sm:$0xff]
          %v971 = vld [vmem:[#allocation2 + $0x40] sm:$0xff]
          %v972 = vld [vmem:[#allocation2 + $0x48] sm:$0xff]
          %v973 = vld [vmem:[#allocation2 + $0x50] sm:$0xff]
          %v974 = vld [vmem:[#allocation2 + $0x58] sm:$0xff]
          %v975 = vld [vmem:[#allocation2 + $0x60] sm:$0xff]
          %v976 = vld [vmem:[#allocation2 + $0x68] sm:$0xff]
          %v977 = vld [vmem:[#allocation2 + $0x70] sm:$0xff]
          %v978 = vld [vmem:[#allocation2 + $0x78] sm:$0xff]
          %v979 = vld [vmem:[%s334] sm:$0x1]
          %v981 = vlaneseq
          %v982 = vshrl.u32 %v981, 7
          %v983 = vsub.s32 0, %v982
          %v984 = vrot.slane %v979, %v983
          %v986 = vadd.f32 %v963, %v984
          %v987 = vadd.f32 %v964, %v984
          %v988 = vadd.f32 %v965, %v984
          %v989 = vadd.f32 %v966, %v984
          %v990 = vadd.f32 %v967, %v984
          %v991 = vadd.f32 %v968, %v984
          %v992 = vadd.f32 %v969, %v984
          %v993 = vadd.f32 %v970, %v984
          %v994 = vadd.f32 %v971, %v984
          %v995 = vadd.f32 %v972, %v984
          %v996 = vadd.f32 %v973, %v984
          %v997 = vadd.f32 %v974, %v984
          %v998 = vadd.f32 %v975, %v984
          %v999 = vadd.f32 %v976, %v984
          %v1000 = vadd.f32 %v977, %v984
          %v1001 = vadd.f32 %v978, %v984
          %v1002 = vmax.f32 %v986, 0.0
          %v1003 = vmax.f32 %v987, 0.0
          %v1004 = vmax.f32 %v988, 0.0
          %v1005 = vmax.f32 %v989, 0.0
          %v1006 = vmax.f32 %v990, 0.0
          %v1007 = vmax.f32 %v991, 0.0
          %v1008 = vmax.f32 %v992, 0.0
          %v1009 = vmax.f32 %v993, 0.0
          %v1010 = vmax.f32 %v994, 0.0
          %v1011 = vmax.f32 %v995, 0.0
          %v1012 = vmax.f32 %v996, 0.0
          %v1013 = vmax.f32 %v997, 0.0
          %v1014 = vmax.f32 %v998, 0.0
          %v1015 = vmax.f32 %v999, 0.0
          %v1016 = vmax.f32 %v1000, 0.0
          %v1017 = vmax.f32 %v1001, 0.0
          %v1018 = vpack.c.bf16 %v1003, %v1002
          %v1019 = vpack.c.bf16 %v1005, %v1004
          %v1020 = vpack.c.bf16 %v1007, %v1006
          %v1021 = vpack.c.bf16 %v1009, %v1008
          %v1022 = vpack.c.bf16 %v1011, %v1010
          %v1023 = vpack.c.bf16 %v1013, %v1012
          %v1024 = vpack.c.bf16 %v1015, %v1014
          %v1025 = vpack.c.bf16 %v1017, %v1016
          %v1034 = vunpack.c.l.b16 %v1018
          %v1035 = vunpack.c.h.b16 %v1018
          %v1036 = vunpack.c.l.b16 %v1019
          %v1037 = vunpack.c.h.b16 %v1019
          %v1038 = vunpack.c.l.b16 %v1020
          %v1039 = vunpack.c.h.b16 %v1020
          %v1040 = vunpack.c.l.b16 %v1021
          %v1041 = vunpack.c.h.b16 %v1021
          %v1042 = vunpack.c.l.b16 %v1022
          %v1043 = vunpack.c.h.b16 %v1022
          %v1044 = vunpack.c.l.b16 %v1023
          %v1045 = vunpack.c.h.b16 %v1023
          %v1046 = vunpack.c.l.b16 %v1024
          %v1047 = vunpack.c.h.b16 %v1024
          %v1048 = vunpack.c.l.b16 %v1025
          %v1049 = vunpack.c.h.b16 %v1025
          %v1050 = vpack.c.b16 %v1034, %v1034
          %v1051 = vpack.c.b16 %v1035, %v1035
          %v1052 = vpack.c.b16 %v1036, %v1036
          %v1053 = vpack.c.b16 %v1037, %v1037
          %v1054 = vpack.c.b16 %v1038, %v1038
          %v1055 = vpack.c.b16 %v1039, %v1039
          %v1056 = vpack.c.b16 %v1040, %v1040
          %v1057 = vpack.c.b16 %v1041, %v1041
          %v1058 = vpack.c.b16 %v1042, %v1042
          %v1059 = vpack.c.b16 %v1043, %v1043
          %v1060 = vpack.c.b16 %v1044, %v1044
          %v1061 = vpack.c.b16 %v1045, %v1045
          %v1062 = vpack.c.b16 %v1046, %v1046
          %v1063 = vpack.c.b16 %v1047, %v1047
          %v1064 = vpack.c.b16 %v1048, %v1048
          %v1065 = vpack.c.b16 %v1049, %v1049
          %1082 = vst [vmem:[%s342] sm:$0xf] %v1050
          %1083 = vst [vmem:[%s342 + $0x4] sm:$0xf] %v1051
          %1084 = vst [vmem:[%s342 + $0x8] sm:$0xf] %v1052
          %1085 = vst [vmem:[%s342 + $0xc] sm:$0xf] %v1053
          %1086 = vst [vmem:[%s342 + $0x10] sm:$0xf] %v1054
          %1087 = vst [vmem:[%s342 + $0x14] sm:$0xf] %v1055
          %1088 = vst [vmem:[%s342 + $0x18] sm:$0xf] %v1056
          %1089 = vst [vmem:[%s342 + $0x1c] sm:$0xf] %v1057
          %1090 = vst [vmem:[%s342 + $0x20] sm:$0xf] %v1058
          %1091 = vst [vmem:[%s342 + $0x24] sm:$0xf] %v1059
          %1092 = vst [vmem:[%s342 + $0x28] sm:$0xf] %v1060
          %1093 = vst [vmem:[%s342 + $0x2c] sm:$0xf] %v1061
          %1094 = vst [vmem:[%s342 + $0x30] sm:$0xf] %v1062
          %1095 = vst [vmem:[%s342 + $0x34] sm:$0xf] %v1063
          %1096 = vst [vmem:[%s342 + $0x38] sm:$0xf] %v1064
          %1097 = vst [vmem:[%s342 + $0x3c] sm:$0xf] %v1065
        $region66: #{forward.46} parent=53 // pred_fallthru
          _
        %s1098 = smul.u32 16, %s19
        %p1099 = scmp.lt.s32.totalorder %s1098, 15
        %s1100 = scalar_select %p1099, %s1098, 15
        %p1101 = scmp.lt.s32.totalorder %s20, 0
        %s1102 = scalar_select %p1101, %s20, 0
        %s1103 = sadd.s32 %s1102, %s1100
        %s1104 = smul.addr %s1103, 4
        %s1105 = scalar_lea.vmem %s3, %s1104
        // Predicated region
        $region67: #{forward.46} parent=53 // pred_check
          %p1106 = pneg %p135
        $region68: #{forward.46} parent=53 // pred_check_branch
          %1108 = sbr.rel (%p1106) target = $region70
        $region69: #{forward.46} parent=53 // pred_region
          %s1109 = smul.u32 16, %s19
        $region70: #{forward.46} parent=53 // pred_fallthru
          _
        // Predicated region
        $region71: #{forward.46} parent=53 // pred_check
          %p1110 = pneg %p135
        $region72: #{forward.46} parent=53 // pred_check_branch
          %1112 = sbr.rel (%p1110) target = $region74
        $region73: #{forward.46} parent=53 // pred_region
          %s1113 = smul.u32 16, %s19
          %p1114 = scmp.lt.s32.totalorder %s1113, 15
          %s1115 = scalar_select %p1114, %s1113, 15
          %p1116 = scmp.lt.s32.totalorder %s20, 0
          %s1117 = scalar_select %p1116, %s20, 0
          %s1118 = sadd.s32 %s1117, %s1115
          %s1119 = smul.addr %s1118, 4
          %s1120 = scalar_lea.vmem %s3, %s1119
        $region74: #{forward.46} parent=53 // pred_fallthru
          _
      $region54: #{forward.46} parent=5 // pred_fallthru
        _
      %p1121 = scmp.le.s32.totalorder 2, %s9
      // Predicated region
      $region75: #{forward.46} parent=5 // pred_check
        %p1122 = pneg %p1121
      $region76: #{forward.46} parent=5 // pred_check_branch
        %1124 = sbr.rel (%p1122) target = $region78
      $region77: #{forward.46} parent=5 // pred_region
        %s1125 = ssub.s32 %s9, 2
      $region78: #{forward.46} parent=5 // pred_fallthru
        _
    $region6: #{forward.46} parent=1 // loop_footer
      %s13 = sadd.s32 1, %s9
    $region7: #{forward.46} parent=1 // loop_footer_branch
      %8 = sbr.rel target = $region3
    $region8: #{forward.46} parent=1 // loop_exit
      _

// kernel: forward.58
$region0: #{forward.58}
  #allocation0 [shape = 'u32[]', space=smem, size = 0x4, offset = 0x4, fixed_abs, tag = 'smem constant byte address 0x4 - core index']
  #allocation1 [shape = 'u32[144,128]{1,0:T(1,128)}', space=vmem, size = 0x12000, scoped, tag = 'internal scratch']
  #allocation2 [shape = 'f32[32,128]{1,0:T(8,128)}', space=vmem, size = 0x4000, scoped, tag = 'scratch operand']
  %s0 = inlined_call_operand.vmem [shape: bf16[32,128], index: 0, kind: input, shape index: {}]
  %s1 = inlined_call_operand.vmem [shape: bf16[128,128], index: 1, kind: input, shape index: {}]
  %s2 = inlined_call_operand.vmem [shape: f32[1,128], index: 2, kind: input, shape index: {}]
  %s3 = inlined_call_operand.vmem [shape: bf16[32,128], index: 3, kind: output, shape index: {}]
  %s4 = sld [smem:[#allocation0]]
  $region30: #{forward.58} parent=0
    _
  %s6 = ssub.s32 1, %s4
  %s7 = scalar_select 0, %s6, %s4
  // Predicated region
  $region2: #{forward.58} parent=0 // pred_check
    _
  $region3: #{forward.58} parent=0 // pred_check_branch
    %9 = sbr.rel (0) target = $region5
  $region4: #{forward.58} parent=0 // pred_region
    _
  $region5: #{forward.58} parent=0 // pred_fallthru
    _
  // Predicated region
  $region6: #{forward.58} parent=0 // pred_check
    _
  $region7: #{forward.58} parent=0 // pred_check_branch
    %11 = sbr.rel (0) target = $region9
  $region8: #{forward.58} parent=0 // pred_region
    _
  $region9: #{forward.58} parent=0 // pred_fallthru
    _
  // Predicated region
  $region10: #{forward.58} parent=0 // pred_check
    _
  $region11: #{forward.58} parent=0 // pred_check_branch
    %13 = sbr.rel (0) target = $region13
  $region12: #{forward.58} parent=0 // pred_region
    _
  $region13: #{forward.58} parent=0 // pred_fallthru
    _
  %p15 = scmp.eq.s32.totalorder 0, 0
  // Predicated region
  $region14: #{forward.58} parent=0 // pred_check
    %p16 = pneg %p15
  $region15: #{forward.58} parent=0 // pred_check_branch
    %18 = sbr.rel (%p16) target = $region17
  $region16: #{forward.58} parent=0 // pred_region
    %19 = vst [vmem:[#allocation2] sm:$0xff] 0.0
    %20 = vst [vmem:[#allocation2 + $0x8] sm:$0xff] 0.0
    %21 = vst [vmem:[#allocation2 + $0x10] sm:$0xff] 0.0
    %22 = vst [vmem:[#allocation2 + $0x18] sm:$0xff] 0.0
  $region17: #{forward.58} parent=0 // pred_fallthru
    _
  %v23 = vld [vmem:[#allocation2] sm:$0xff]
  %v24 = vld [vmem:[#allocation2 + $0x8] sm:$0xff]
  %v25 = vld [vmem:[#allocation2 + $0x10] sm:$0xff]
  %v26 = vld [vmem:[#allocation2 + $0x18] sm:$0xff]
  %v27 = vld [vmem:[%s0] sm:$0xf]
  %v28 = vld [vmem:[%s0 + $0x4] sm:$0xf]
  %v29 = vld [vmem:[%s0 + $0x8] sm:$0xf]
  %v30 = vld [vmem:[%s0 + $0xc] sm:$0xf]
  %v31 = vld [vmem:[%s1] sm:$0xf]
  %v32 = vld [vmem:[%s1 + $0x4] sm:$0xf]
  %v33 = vld [vmem:[%s1 + $0x8] sm:$0xf]
  %v34 = vld [vmem:[%s1 + $0xc] sm:$0xf]
  %v35 = vld [vmem:[%s1 + $0x10] sm:$0xf]
  %v36 = vld [vmem:[%s1 + $0x14] sm:$0xf]
  %v37 = vld [vmem:[%s1 + $0x18] sm:$0xf]
  %v38 = vld [vmem:[%s1 + $0x1c] sm:$0xf]
  %v39 = vld [vmem:[%s1 + $0x20] sm:$0xf]
  %v40 = vld [vmem:[%s1 + $0x24] sm:$0xf]
  %v41 = vld [vmem:[%s1 + $0x28] sm:$0xf]
  %v42 = vld [vmem:[%s1 + $0x2c] sm:$0xf]
  %v43 = vld [vmem:[%s1 + $0x30] sm:$0xf]
  %v44 = vld [vmem:[%s1 + $0x34] sm:$0xf]
  %v45 = vld [vmem:[%s1 + $0x38] sm:$0xf]
  %v46 = vld [vmem:[%s1 + $0x3c] sm:$0xf]
  %v51 = vunpack.c.l.b16 %v27
  %v52 = vunpack.c.l.b16 %v28
  %v53 = vunpack.c.l.b16 %v29
  %v54 = vunpack.c.l.b16 %v30
  %v55 = vpack.c.b16 %v52, %v51
  %v56 = vpack.c.b16 %v54, %v53
  %v75 = vunpack.c.l.b16 %v31
  %v76 = vunpack.c.l.b16 %v32
  %v77 = vunpack.c.l.b16 %v33
  %v78 = vunpack.c.l.b16 %v34
  %v79 = vunpack.c.l.b16 %v35
  %v80 = vunpack.c.l.b16 %v36
  %v81 = vunpack.c.l.b16 %v37
  %v82 = vunpack.c.l.b16 %v38
  %v83 = vunpack.c.l.b16 %v39
  %v84 = vunpack.c.l.b16 %v40
  %v85 = vunpack.c.l.b16 %v41
  %v86 = vunpack.c.l.b16 %v42
  %v87 = vunpack.c.l.b16 %v43
  %v88 = vunpack.c.l.b16 %v44
  %v89 = vunpack.c.l.b16 %v45
  %v90 = vunpack.c.l.b16 %v46
  %v91 = vpack.c.b16 %v76, %v75
  %v92 = vpack.c.b16 %v78, %v77
  %v93 = vpack.c.b16 %v80, %v79
  %v94 = vpack.c.b16 %v82, %v81
  %v95 = vpack.c.b16 %v84, %v83
  %v96 = vpack.c.b16 %v86, %v85
  %v97 = vpack.c.b16 %v88, %v87
  %v98 = vpack.c.b16 %v90, %v89
  %107 = vmatprep.subr.bf16.mxu0 0
  %108 = vmatpush1.bf16.msra.mxu0 %v91
  %109 = vmatprep.subr.bf16.mxu0 0
  %110 = vmatpush1.bf16.msra.mxu0 %v92
  %111 = vmatprep.subr.bf16.mxu0 0
  %112 = vmatpush1.bf16.msra.mxu0 %v93
  %113 = vmatprep.subr.bf16.mxu0 0
  %114 = vmatpush1.bf16.msra.mxu0 %v94
  %115 = vmatprep.subr.bf16.mxu0 0
  %116 = vmatpush1.bf16.msra.mxu0 %v95
  %117 = vmatprep.subr.bf16.mxu0 0
  %118 = vmatpush1.bf16.msra.mxu0 %v96
  %119 = vmatprep.subr.bf16.mxu0 0
  %120 = vmatpush1.bf16.msra.mxu0 %v97
  %121 = vmatprep.subr.bf16.mxu0 0
  %122 = vmatpush1.bf16.msra.mxu0 %v98
  %123 = vmatprep.subr.bf16.mxu0 0
  %124 = vmatpush1.bf16.msra.mxu0 0
  %125 = vmatprep.subr.bf16.mxu0 0
  %126 = vmatpush1.bf16.msra.mxu0 0
  %127 = vmatprep.subr.bf16.mxu0 0
  %128 = vmatpush1.bf16.msra.mxu0 0
  %129 = vmatprep.subr.bf16.mxu0 0
  %130 = vmatpush1.bf16.msra.mxu0 0
  %131 = vmatprep.subr.bf16.mxu0 0
  %132 = vmatpush1.bf16.msra.mxu0 0
  %133 = vmatprep.subr.bf16.mxu0 0
  %134 = vmatpush1.bf16.msra.mxu0 0
  %135 = vmatprep.subr.bf16.mxu0 0
  %136 = vmatpush1.bf16.msra.mxu0 0
  %137 = vmatprep.subr.bf16.mxu0 0
  %138 = vmatpush1.bf16.msra.mxu0 0
  %139 = vmatprep.mubr.bf16.mxu0 0
  %140 = vmatmul.mubr.bf16.gmra.mrb[0].mxu0 %v55
  %v141 = vpop.f32.mrb[0].mxu0
  %v142 = vadd.f32 0.0, %v141
  %v143 = vpop.f32.mrb[0].mxu0
  %v144 = vpop.f32.mrb[0].mxu0
  %v145 = vadd.f32 0.0, %v144
  %v146 = vpop.f32.mrb[0].mxu0
  %147 = vmatprep.mubr.bf16.mxu0 0
  %148 = vmatmul.mubr.bf16.gmra.mrb[0].mxu0 %v56
  %v149 = vpop.f32.mrb[0].mxu0
  %v150 = vadd.f32 0.0, %v149
  %v151 = vpop.f32.mrb[0].mxu0
  %v152 = vpop.f32.mrb[0].mxu0
  %v153 = vadd.f32 0.0, %v152
  %v154 = vpop.f32.mrb[0].mxu0
  %155 = vdwg.mxu0
  %v156 = vadd.f32 %v23, %v142
  %v157 = vadd.f32 %v24, %v145
  %v158 = vadd.f32 %v25, %v150
  %v159 = vadd.f32 %v26, %v153
  %160 = vst [vmem:[#allocation2] sm:$0xff] %v156
  %161 = vst [vmem:[#allocation2 + $0x8] sm:$0xff] %v157
  %162 = vst [vmem:[#allocation2 + $0x10] sm:$0xff] %v158
  %163 = vst [vmem:[#allocation2 + $0x18] sm:$0xff] %v159
  // Predicated region
  $region18: #{forward.58} parent=0 // pred_check
    %p164 = pneg %p15
  $region19: #{forward.58} parent=0 // pred_check_branch
    %166 = sbr.rel (%p164) target = $region21
  $region20: #{forward.58} parent=0 // pred_region
    %v167 = vld [vmem:[#allocation2] sm:$0xff]
    %v168 = vld [vmem:[#allocation2 + $0x8] sm:$0xff]
    %v169 = vld [vmem:[#allocation2 + $0x10] sm:$0xff]
    %v170 = vld [vmem:[#allocation2 + $0x18] sm:$0xff]
    %v171 = vld [vmem:[%s2] sm:$0x1]
    %v173 = vlaneseq
    %v174 = vshrl.u32 %v173, 7
    %v175 = vsub.s32 0, %v174
    %v176 = vrot.slane %v171, %v175
    %v178 = vadd.f32 %v167, %v176
    %v179 = vadd.f32 %v168, %v176
    %v180 = vadd.f32 %v169, %v176
    %v181 = vadd.f32 %v170, %v176
    %v182 = vmax.f32 %v178, 0.0
    %v183 = vmax.f32 %v179, 0.0
    %v184 = vmax.f32 %v180, 0.0
    %v185 = vmax.f32 %v181, 0.0
    %v186 = vpack.c.bf16 %v183, %v182
    %v187 = vpack.c.bf16 %v185, %v184
    %v190 = vunpack.c.l.b16 %v186
    %v191 = vunpack.c.h.b16 %v186
    %v192 = vunpack.c.l.b16 %v187
    %v193 = vunpack.c.h.b16 %v187
    %v194 = vpack.c.b16 %v190, %v190
    %v195 = vpack.c.b16 %v191, %v191
    %v196 = vpack.c.b16 %v192, %v192
    %v197 = vpack.c.b16 %v193, %v193
    %202 = vst [vmem:[%s3] sm:$0xf] %v194
    %203 = vst [vmem:[%s3 + $0x4] sm:$0xf] %v195
    %204 = vst [vmem:[%s3 + $0x8] sm:$0xf] %v196
    %205 = vst [vmem:[%s3 + $0xc] sm:$0xf] %v197
  $region21: #{forward.58} parent=0 // pred_fallthru
    _
  // Predicated region
  $region22: #{forward.58} parent=0 // pred_check
    _
  $region23: #{forward.58} parent=0 // pred_check_branch
    %207 = sbr.rel (0) target = $region25
  $region24: #{forward.58} parent=0 // pred_region
    _
  $region25: #{forward.58} parent=0 // pred_fallthru
    _
  // Predicated region
  $region26: #{forward.58} parent=0 // pred_check
    _
  $region27: #{forward.58} parent=0 // pred_check_branch
    %209 = sbr.rel (0) target = $region29
  $region28: #{forward.58} parent=0 // pred_region
    _
  $region29: #{forward.58} parent=0 // pred_fallthru
    _

// kernel: forward.57
$region0: #{forward.57}
  #allocation0 [shape = 'u32[]', space=smem, size = 0x4, offset = 0x4, fixed_abs, tag = 'smem constant byte address 0x4 - core index']
  #allocation1 [shape = 'u32[144,128]{1,0:T(1,128)}', space=vmem, size = 0x12000, scoped, tag = 'internal scratch']
  #allocation2 [shape = 'f32[32,128]{1,0:T(8,128)}', space=vmem, size = 0x4000, scoped, tag = 'scratch operand']
  %s0 = inlined_call_operand.vmem [shape: bf16[32,128], index: 0, kind: input, shape index: {}]
  %s1 = inlined_call_operand.vmem [shape: bf16[128,128], index: 1, kind: input, shape index: {}]
  %s2 = inlined_call_operand.vmem [shape: f32[1,128], index: 2, kind: input, shape index: {}]
  %s3 = inlined_call_operand.vmem [shape: bf16[32,128], index: 3, kind: input, shape index: {}]
  %s4 = inlined_call_operand.vmem [shape: bf16[32,128], index: 4, kind: output, shape index: {}]
  %s5 = sld [smem:[#allocation0]]
  $region34: #{forward.57} parent=0
    _
  %s7 = ssub.s32 1, %s5
  %s8 = scalar_select 0, %s7, %s5
  // Predicated region
  $region2: #{forward.57} parent=0 // pred_check
    _
  $region3: #{forward.57} parent=0 // pred_check_branch
    %10 = sbr.rel (0) target = $region5
  $region4: #{forward.57} parent=0 // pred_region
    _
  $region5: #{forward.57} parent=0 // pred_fallthru
    _
  // Predicated region
  $region6: #{forward.57} parent=0 // pred_check
    _
  $region7: #{forward.57} parent=0 // pred_check_branch
    %12 = sbr.rel (0) target = $region9
  $region8: #{forward.57} parent=0 // pred_region
    _
  $region9: #{forward.57} parent=0 // pred_fallthru
    _
  // Predicated region
  $region10: #{forward.57} parent=0 // pred_check
    _
  $region11: #{forward.57} parent=0 // pred_check_branch
    %14 = sbr.rel (0) target = $region13
  $region12: #{forward.57} parent=0 // pred_region
    _
  $region13: #{forward.57} parent=0 // pred_fallthru
    _
  // Predicated region
  $region14: #{forward.57} parent=0 // pred_check
    _
  $region15: #{forward.57} parent=0 // pred_check_branch
    %16 = sbr.rel (0) target = $region17
  $region16: #{forward.57} parent=0 // pred_region
    _
  $region17: #{forward.57} parent=0 // pred_fallthru
    _
  %p18 = scmp.eq.s32.totalorder 0, 0
  // Predicated region
  $region18: #{forward.57} parent=0 // pred_check
    %p19 = pneg %p18
  $region19: #{forward.57} parent=0 // pred_check_branch
    %21 = sbr.rel (%p19) target = $region21
  $region20: #{forward.57} parent=0 // pred_region
    %22 = vst [vmem:[#allocation2] sm:$0xff] 0.0
    %23 = vst [vmem:[#allocation2 + $0x8] sm:$0xff] 0.0
    %24 = vst [vmem:[#allocation2 + $0x10] sm:$0xff] 0.0
    %25 = vst [vmem:[#allocation2 + $0x18] sm:$0xff] 0.0
  $region21: #{forward.57} parent=0 // pred_fallthru
    _
  %v26 = vld [vmem:[#allocation2] sm:$0xff]
  %v27 = vld [vmem:[#allocation2 + $0x8] sm:$0xff]
  %v28 = vld [vmem:[#allocation2 + $0x10] sm:$0xff]
  %v29 = vld [vmem:[#allocation2 + $0x18] sm:$0xff]
  %v30 = vld [vmem:[%s0] sm:$0xf]
  %v31 = vld [vmem:[%s0 + $0x4] sm:$0xf]
  %v32 = vld [vmem:[%s0 + $0x8] sm:$0xf]
  %v33 = vld [vmem:[%s0 + $0xc] sm:$0xf]
  %v34 = vld [vmem:[%s1] sm:$0xf]
  %v35 = vld [vmem:[%s1 + $0x4] sm:$0xf]
  %v36 = vld [vmem:[%s1 + $0x8] sm:$0xf]
  %v37 = vld [vmem:[%s1 + $0xc] sm:$0xf]
  %v38 = vld [vmem:[%s1 + $0x10] sm:$0xf]
  %v39 = vld [vmem:[%s1 + $0x14] sm:$0xf]
  %v40 = vld [vmem:[%s1 + $0x18] sm:$0xf]
  %v41 = vld [vmem:[%s1 + $0x1c] sm:$0xf]
  %v42 = vld [vmem:[%s1 + $0x20] sm:$0xf]
  %v43 = vld [vmem:[%s1 + $0x24] sm:$0xf]
  %v44 = vld [vmem:[%s1 + $0x28] sm:$0xf]
  %v45 = vld [vmem:[%s1 + $0x2c] sm:$0xf]
  %v46 = vld [vmem:[%s1 + $0x30] sm:$0xf]
  %v47 = vld [vmem:[%s1 + $0x34] sm:$0xf]
  %v48 = vld [vmem:[%s1 + $0x38] sm:$0xf]
  %v49 = vld [vmem:[%s1 + $0x3c] sm:$0xf]
  %v54 = vunpack.c.l.b16 %v30
  %v55 = vunpack.c.l.b16 %v31
  %v56 = vunpack.c.l.b16 %v32
  %v57 = vunpack.c.l.b16 %v33
  %v58 = vpack.c.b16 %v55, %v54
  %v59 = vpack.c.b16 %v57, %v56
  %v78 = vunpack.c.l.b16 %v34
  %v79 = vunpack.c.l.b16 %v35
  %v80 = vunpack.c.l.b16 %v36
  %v81 = vunpack.c.l.b16 %v37
  %v82 = vunpack.c.l.b16 %v38
  %v83 = vunpack.c.l.b16 %v39
  %v84 = vunpack.c.l.b16 %v40
  %v85 = vunpack.c.l.b16 %v41
  %v86 = vunpack.c.l.b16 %v42
  %v87 = vunpack.c.l.b16 %v43
  %v88 = vunpack.c.l.b16 %v44
  %v89 = vunpack.c.l.b16 %v45
  %v90 = vunpack.c.l.b16 %v46
  %v91 = vunpack.c.l.b16 %v47
  %v92 = vunpack.c.l.b16 %v48
  %v93 = vunpack.c.l.b16 %v49
  %v94 = vpack.c.b16 %v79, %v78
  %v95 = vpack.c.b16 %v81, %v80
  %v96 = vpack.c.b16 %v83, %v82
  %v97 = vpack.c.b16 %v85, %v84
  %v98 = vpack.c.b16 %v87, %v86
  %v99 = vpack.c.b16 %v89, %v88
  %v100 = vpack.c.b16 %v91, %v90
  %v101 = vpack.c.b16 %v93, %v92
  %110 = vmatprep.subr.bf16.mxu0 0
  %111 = vmatpush1.bf16.msra.mxu0 %v94
  %112 = vmatprep.subr.bf16.mxu0 0
  %113 = vmatpush1.bf16.msra.mxu0 %v95
  %114 = vmatprep.subr.bf16.mxu0 0
  %115 = vmatpush1.bf16.msra.mxu0 %v96
  %116 = vmatprep.subr.bf16.mxu0 0
  %117 = vmatpush1.bf16.msra.mxu0 %v97
  %118 = vmatprep.subr.bf16.mxu0 0
  %119 = vmatpush1.bf16.msra.mxu0 %v98
  %120 = vmatprep.subr.bf16.mxu0 0
  %121 = vmatpush1.bf16.msra.mxu0 %v99
  %122 = vmatprep.subr.bf16.mxu0 0
  %123 = vmatpush1.bf16.msra.mxu0 %v100
  %124 = vmatprep.subr.bf16.mxu0 0
  %125 = vmatpush1.bf16.msra.mxu0 %v101
  %126 = vmatprep.subr.bf16.mxu0 0
  %127 = vmatpush1.bf16.msra.mxu0 0
  %128 = vmatprep.subr.bf16.mxu0 0
  %129 = vmatpush1.bf16.msra.mxu0 0
  %130 = vmatprep.subr.bf16.mxu0 0
  %131 = vmatpush1.bf16.msra.mxu0 0
  %132 = vmatprep.subr.bf16.mxu0 0
  %133 = vmatpush1.bf16.msra.mxu0 0
  %134 = vmatprep.subr.bf16.mxu0 0
  %135 = vmatpush1.bf16.msra.mxu0 0
  %136 = vmatprep.subr.bf16.mxu0 0
  %137 = vmatpush1.bf16.msra.mxu0 0
  %138 = vmatprep.subr.bf16.mxu0 0
  %139 = vmatpush1.bf16.msra.mxu0 0
  %140 = vmatprep.subr.bf16.mxu0 0
  %141 = vmatpush1.bf16.msra.mxu0 0
  %142 = vmatprep.mubr.bf16.mxu0 0
  %143 = vmatmul.mubr.bf16.gmra.mrb[0].mxu0 %v58
  %v144 = vpop.f32.mrb[0].mxu0
  %v145 = vadd.f32 0.0, %v144
  %v146 = vpop.f32.mrb[0].mxu0
  %v147 = vpop.f32.mrb[0].mxu0
  %v148 = vadd.f32 0.0, %v147
  %v149 = vpop.f32.mrb[0].mxu0
  %150 = vmatprep.mubr.bf16.mxu0 0
  %151 = vmatmul.mubr.bf16.gmra.mrb[0].mxu0 %v59
  %v152 = vpop.f32.mrb[0].mxu0
  %v153 = vadd.f32 0.0, %v152
  %v154 = vpop.f32.mrb[0].mxu0
  %v155 = vpop.f32.mrb[0].mxu0
  %v156 = vadd.f32 0.0, %v155
  %v157 = vpop.f32.mrb[0].mxu0
  %158 = vdwg.mxu0
  %v159 = vadd.f32 %v26, %v145
  %v160 = vadd.f32 %v27, %v148
  %v161 = vadd.f32 %v28, %v153
  %v162 = vadd.f32 %v29, %v156
  %163 = vst [vmem:[#allocation2] sm:$0xff] %v159
  %164 = vst [vmem:[#allocation2 + $0x8] sm:$0xff] %v160
  %165 = vst [vmem:[#allocation2 + $0x10] sm:$0xff] %v161
  %166 = vst [vmem:[#allocation2 + $0x18] sm:$0xff] %v162
  // Predicated region
  $region22: #{forward.57} parent=0 // pred_check
    %p167 = pneg %p18
  $region23: #{forward.57} parent=0 // pred_check_branch
    %169 = sbr.rel (%p167) target = $region25
  $region24: #{forward.57} parent=0 // pred_region
    %v170 = vld [vmem:[#allocation2] sm:$0xff]
    %v171 = vld [vmem:[#allocation2 + $0x8] sm:$0xff]
    %v172 = vld [vmem:[#allocation2 + $0x10] sm:$0xff]
    %v173 = vld [vmem:[#allocation2 + $0x18] sm:$0xff]
    %v174 = vld [vmem:[%s2] sm:$0x1]
    %v175 = vld [vmem:[%s3] sm:$0xf]
    %v176 = vld [vmem:[%s3 + $0x4] sm:$0xf]
    %v177 = vld [vmem:[%s3 + $0x8] sm:$0xf]
    %v178 = vld [vmem:[%s3 + $0xc] sm:$0xf]
    %v180 = vlaneseq
    %v181 = vshrl.u32 %v180, 7
    %v182 = vsub.s32 0, %v181
    %v183 = vrot.slane %v174, %v182
    %v185 = vadd.f32 %v170, %v183
    %v186 = vadd.f32 %v171, %v183
    %v187 = vadd.f32 %v172, %v183
    %v188 = vadd.f32 %v173, %v183
    %v189 = vunpack.c.l.bf16 %v175
    %v190 = vunpack.c.l.bf16 %v176
    %v191 = vunpack.c.l.bf16 %v177
    %v192 = vunpack.c.l.bf16 %v178
    %v193 = vadd.f32 %v185, %v189
    %v194 = vadd.f32 %v186, %v190
    %v195 = vadd.f32 %v187, %v191
    %v196 = vadd.f32 %v188, %v192
    %v197 = vmax.f32 %v193, 0.0
    %v198 = vmax.f32 %v194, 0.0
    %v199 = vmax.f32 %v195, 0.0
    %v200 = vmax.f32 %v196, 0.0
    %v201 = vpack.c.bf16 %v198, %v197
    %v202 = vpack.c.bf16 %v200, %v199
    %v205 = vunpack.c.l.b16 %v201
    %v206 = vunpack.c.h.b16 %v201
    %v207 = vunpack.c.l.b16 %v202
    %v208 = vunpack.c.h.b16 %v202
    %v209 = vpack.c.b16 %v205, %v205
    %v210 = vpack.c.b16 %v206, %v206
    %v211 = vpack.c.b16 %v207, %v207
    %v212 = vpack.c.b16 %v208, %v208
    %217 = vst [vmem:[%s4] sm:$0xf] %v209
    %218 = vst [vmem:[%s4 + $0x4] sm:$0xf] %v210
    %219 = vst [vmem:[%s4 + $0x8] sm:$0xf] %v211
    %220 = vst [vmem:[%s4 + $0xc] sm:$0xf] %v212
  $region25: #{forward.57} parent=0 // pred_fallthru
    _
  // Predicated region
  $region26: #{forward.57} parent=0 // pred_check
    _
  $region27: #{forward.57} parent=0 // pred_check_branch
    %222 = sbr.rel (0) target = $region29
  $region28: #{forward.57} parent=0 // pred_region
    _
  $region29: #{forward.57} parent=0 // pred_fallthru
    _
  // Predicated region
  $region30: #{forward.57} parent=0 // pred_check
    _
  $region31: #{forward.57} parent=0 // pred_check_branch
    %224 = sbr.rel (0) target = $region33
  $region32: #{forward.57} parent=0 // pred_region
    _
  $region33: #{forward.57} parent=0 // pred_fallthru
    _

// kernel: forward.56
$region0: #{forward.56}
  #allocation0 [shape = 'u32[]', space=smem, size = 0x4, offset = 0x4, fixed_abs, tag = 'smem constant byte address 0x4 - core index']
  #allocation1 [shape = 'u32[144,128]{1,0:T(1,128)}', space=vmem, size = 0x12000, scoped, tag = 'internal scratch']
  #allocation2 [shape = 'f32[32,128]{1,0:T(8,128)}', space=vmem, size = 0x4000, scoped, tag = 'scratch operand']
  %s0 = inlined_call_operand.vmem [shape: bf16[32,1152], index: 0, kind: input, shape index: {}]
  %s1 = inlined_call_operand.vmem [shape: bf16[1152,128], index: 1, kind: input, shape index: {}]
  %s2 = inlined_call_operand.vmem [shape: f32[1,128], index: 2, kind: input, shape index: {}]
  %s3 = inlined_call_operand.vmem [shape: bf16[32,128], index: 3, kind: output, shape index: {}]
  %s4 = sld [smem:[#allocation0]]
  $region79: #{forward.56} parent=0
    _
  %s6 = ssub.s32 1, %s4
  %s7 = scalar_select 0, %s6, %s4
  $region1: #{forward.56} parent=0
    #allocation3 [shape = 'u8[49152]{0}', space=vmem, size = 0xc000, scoped, tag = 'input window, operand 0']
    loop: start=0, step=1, limit=5
    $region2: #{forward.56} parent=1 // loop_pre_header
      _
    $region3: #{forward.56} parent=1 // loop_header
      %s9 = sphi 0, %s13
      %p10 = scmp.ge.s32.totalorder %s9, 5
      %s16 = sphi 0, %s35
      %s17 = sphi 0, %s31
      %s18 = sphi 0, %s27
      %s19 = sphi 0, %s16
      %s20 = sphi 0, %s17
      %s21 = sphi 0, %s18
      %s22 = sphi 0, %s19
      %s23 = sphi 0, %s20
      %s24 = sphi 0, %s21
      %s40 = sphi 0, %s42
      %s43 = sphi 0, %s40
      %s44 = sphi 0, %s43
      %s60 = sphi 0, %s44
      %s68 = sphi 0, %s70
      %s71 = sphi 0, %s68
      %s72 = sphi 0, %s71
      %s88 = sphi 0, %s72
      %s94 = sphi 0, %s96
      %s97 = sphi 0, %s94
      %s98 = sphi 0, %s97
      %s114 = sphi 0, %s98
      %s122 = sphi 0, %s124
      %s125 = sphi 0, %s122
      %s126 = sphi 0, %s125
      %s142 = sphi 0, %s126
    $region4: #{forward.56} parent=1 // loop_header_branch
      %12 = sbr.rel (%p10) target = $region8
    $region5: #{forward.56} parent=1 // loop_body
      %s14 = ssub.s32 %s9, 1
      %s15 = ssub.s32 %s9, 2
      %s25 = sadd.s32 1, %s18
      %p26 = scmp.ge.s32.totalorder %s25, 3
      %s27 = scalar_select %p26, 0, %s25
      %s28 = sadd.s32 1, %s17
      %s29 = scalar_select %p26, %s28, %s17
      %p30 = scmp.ge.s32.totalorder %s29, 1
      %s31 = scalar_select %p30, 0, %s29
      %s32 = sadd.s32 1, %s16
      %s33 = scalar_select %p30, %s32, %s16
      %p34 = scmp.ge.s32.totalorder %s33, 1
      %s35 = scalar_select %p34, 0, %s33
      %s36 = ssub.s32 %s16, %s35
      %s37 = ssub.s32 %s18, %s27
      %s38 = sor.u32 %s36, %s37
      %p39 = scmp.eq.s32.totalorder %s38, 0
      %s41 = sadd.s32 %s40, 1
      %s42 = scalar_select %p39, %s40, %s41
      %p45 = pneg %p39
      %p46 = scmp.eq.s32.totalorder %s9, 2
      %p47 = por %p45, %p46
      %p48 = scmp.ne.s32.totalorder %s40, %s43
      %p49 = scmp.eq.s32.totalorder %s9, 0
      %p50 = por %p48, %p49
      %p51 = scmp.ne.s32.totalorder %s40, %s43
      %p52 = scmp.eq.s32.totalorder %s14, 2
      %p53 = por %p51, %p52
      %p54 = scmp.ne.s32.totalorder %s43, %s44
      %p55 = scmp.eq.s32.totalorder %s14, 0
      %p56 = por %p54, %p55
      %p57 = scmp.ne.s32.totalorder %s43, %s44
      %p58 = scmp.eq.s32.totalorder %s15, 2
      %p59 = por %p57, %p58
      %p61 = scmp.ne.s32.totalorder %s44, %s60
      %p62 = scmp.eq.s32.totalorder %s15, 0
      %p63 = por %p61, %p62
      %s64 = ssub.s32 %s18, %s27
      %s65 = ssub.s32 %s17, %s31
      %s66 = sor.u32 %s64, %s65
      %p67 = scmp.eq.s32.totalorder %s66, 0
      %s69 = sadd.s32 %s68, 1
      %s70 = scalar_select %p67, %s68, %s69
      %p73 = pneg %p67
      %p74 = scmp.eq.s32.totalorder %s9, 2
      %p75 = por %p73, %p74
      %p76 = scmp.ne.s32.totalorder %s68, %s71
      %p77 = scmp.eq.s32.totalorder %s9, 0
      %p78 = por %p76, %p77
      %p79 = scmp.ne.s32.totalorder %s68, %s71
      %p80 = scmp.eq.s32.totalorder %s14, 2
      %p81 = por %p79, %p80
      %p82 = scmp.ne.s32.totalorder %s71, %s72
      %p83 = scmp.eq.s32.totalorder %s14, 0
      %p84 = por %p82, %p83
      %p85 = scmp.ne.s32.totalorder %s71, %s72
      %p86 = scmp.eq.s32.totalorder %s15, 2
      %p87 = por %p85, %p86
      %p89 = scmp.ne.s32.totalorder %s72, %s88
      %p90 = scmp.eq.s32.totalorder %s15, 0
      %p91 = por %p89, %p90
      %s92 = ssub.s32 %s17, %s31
      %p93 = scmp.eq.s32.totalorder %s92, 0
      %s95 = sadd.s32 %s94, 1
      %s96 = scalar_select %p93, %s94, %s95
      %p99 = pneg %p93
      %p100 = scmp.eq.s32.totalorder %s9, 2
      %p101 = por %p99, %p100
      %p102 = scmp.ne.s32.totalorder %s94, %s97
      %p103 = scmp.eq.s32.totalorder %s9, 0
      %p104 = por %p102, %p103
      %p105 = scmp.ne.s32.totalorder %s94, %s97
      %p106 = scmp.eq.s32.totalorder %s14, 2
      %p107 = por %p105, %p106
      %p108 = scmp.ne.s32.totalorder %s97, %s98
      %p109 = scmp.eq.s32.totalorder %s14, 0
      %p110 = por %p108, %p109
      %p111 = scmp.ne.s32.totalorder %s97, %s98
      %p112 = scmp.eq.s32.totalorder %s15, 2
      %p113 = por %p111, %p112
      %p115 = scmp.ne.s32.totalorder %s98, %s114
      %p116 = scmp.eq.s32.totalorder %s15, 0
      %p117 = por %p115, %p116
      %s118 = ssub.s32 %s16, %s35
      %s119 = ssub.s32 %s17, %s31
      %s120 = sor.u32 %s118, %s119
      %p121 = scmp.eq.s32.totalorder %s120, 0
      %s123 = sadd.s32 %s122, 1
      %s124 = scalar_select %p121, %s122, %s123
      %p127 = pneg %p121
      %p128 = scmp.eq.s32.totalorder %s9, 2
      %p129 = por %p127, %p128
      %p130 = scmp.ne.s32.totalorder %s122, %s125
      %p131 = scmp.eq.s32.totalorder %s9, 0
      %p132 = por %p130, %p131
      %p133 = scmp.ne.s32.totalorder %s122, %s125
      %p134 = scmp.eq.s32.totalorder %s14, 2
      %p135 = por %p133, %p134
      %p136 = scmp.ne.s32.totalorder %s125, %s126
      %p137 = scmp.eq.s32.totalorder %s14, 0
      %p138 = por %p136, %p137
      %p139 = scmp.ne.s32.totalorder %s125, %s126
      %p140 = scmp.eq.s32.totalorder %s15, 2
      %p141 = por %p139, %p140
      %p143 = scmp.ne.s32.totalorder %s126, %s142
      %p144 = scmp.eq.s32.totalorder %s15, 0
      %p145 = por %p143, %p144
      %p146 = scmp.le.s32.totalorder 1, %s9
      %p147 = scmp.lt.s32.totalorder %s9, 4
      %p148 = pnand %p146, %p147
      %p149 = pneg %p148
      // Predicated region
      $region9: #{forward.56} parent=5 // pred_check
        _
      $region10: #{forward.56} parent=5 // pred_check_branch
        %151 = sbr.rel (%p148) target = $region12
      $region11: #{forward.56} parent=5 // pred_region
        %s152 = ssub.s32 %s9, 1
        // Predicated region
        $region13: #{forward.56} parent=11 // pred_check
          %p153 = pneg %p110
        $region14: #{forward.56} parent=11 // pred_check_branch
          %155 = sbr.rel (%p153) target = $region16
        $region15: #{forward.56} parent=11 // pred_region
          %p156 = scmp.lt.s32.totalorder %s20, 0
          %s157 = scalar_select %p156, %s20, 0
          %s158 = scalar_lea.vmem %s2, %s157
        $region16: #{forward.56} parent=11 // pred_fallthru
          _
      $region12: #{forward.56} parent=5 // pred_fallthru
        _
      %p159 = scmp.lt.s32.totalorder %s9, 3
      // Predicated region
      $region17: #{forward.56} parent=5 // pred_check
        %p160 = pneg %p159
      $region18: #{forward.56} parent=5 // pred_check_branch
        %162 = sbr.rel (%p160) target = $region20
      $region19: #{forward.56} parent=5 // pred_region
        // Predicated region
        $region21: #{forward.56} parent=19 // pred_check
          %p163 = pneg %p50
        $region22: #{forward.56} parent=19 // pred_check_branch
          %165 = sbr.rel (%p163) target = $region24
        $region23: #{forward.56} parent=19 // pred_region
          %s166 = sand.u32 %s40, 1
          %s167 = sand.u32 %s40, 1
          %s168 = smul.addr %s167, 48
          %s169 = scalar_lea.vmem [#allocation3], %s168
          %s170 = smul.u32 4, %s16
          %s171 = smul.u32 3, %s18
          %s172 = smul.addr %s170, 9
          %s173 = sadd.s32 %s171, %s172
          %s174 = smul.addr %s173, 4
          %s175 = scalar_lea.vmem %s0, %s174
          // Predicated region
          $region25: #{forward.56} parent=23 // pred_check
            _
          $region26: #{forward.56} parent=23 // pred_check_branch
            %177 = sbr.rel (0) target = $region28
          $region27: #{forward.56} parent=23 // pred_region
            // Predicated region
            $region29: #{forward.56} parent=27 // pred_check
              _
            $region30: #{forward.56} parent=27 // pred_check_branch
              %179 = sbr.rel (0) target = $region32
            $region31: #{forward.56} parent=27 // pred_region
              %s180 = scalar_lea.vmem %s175, 8
              %s181 = scalar_lea.vmem %s169, 8 [#allocation3]
              loop: start=0, step=1, limit=1
              $region33: #{forward.56} parent=31 // loop_pre_header
                _
              $region34: #{forward.56} parent=31 // loop_header
                %s183 = sphi 0, %s187
                %p184 = scmp.ge.s32.totalorder %s183, 1
                %s188 = sphi %s175, %s175
                %s189 = sphi %s169, %s169
              $region35: #{forward.56} parent=31 // loop_header_branch
                %186 = sbr.rel (%p184) target = $region39
              $region36: #{forward.56} parent=31 // loop_body
                %v190 = vld [vmem:[%s188] sm:$0xff]
                %191 = vst [vmem:[%s189] sm:$0xff] %v190
                %v192 = vld [vmem:[%s188 + $0x24] sm:$0xff]
                %193 = vst [vmem:[%s189 + $0xc] sm:$0xff] %v192
                %v194 = vld [vmem:[%s188 + $0x48] sm:$0xff]
                %195 = vst [vmem:[%s189 + $0x18] sm:$0xff] %v194
                %v196 = vld [vmem:[%s188 + $0x6c] sm:$0xff]
                %197 = vst [vmem:[%s189 + $0x24] sm:$0xff] %v196
              $region37: #{forward.56} parent=31 // loop_footer
                %s187 = sadd.s32 1, %s183
              $region38: #{forward.56} parent=31 // loop_footer_branch
                %182 = sbr.rel target = $region34
              $region39: #{forward.56} parent=31 // loop_exit
                _
              loop: start=0, step=1, limit=1
              $region40: #{forward.56} parent=31 // loop_pre_header
                _
              $region41: #{forward.56} parent=31 // loop_header
                %s200 = sphi 0, %s204
                %p201 = scmp.ge.s32.totalorder %s200, 1
                %s205 = sphi %s180, %s180
                %s206 = sphi %s181, %s181
              $region42: #{forward.56} parent=31 // loop_header_branch
                %203 = sbr.rel (%p201) target = $region46
              $region43: #{forward.56} parent=31 // loop_body
                %v207 = vld [vmem:[%s205] sm:$0xf]
                %208 = vst [vmem:[%s206] sm:$0xf] %v207
                %v209 = vld [vmem:[%s205 + $0x24] sm:$0xf]
                %210 = vst [vmem:[%s206 + $0xc] sm:$0xf] %v209
                %v211 = vld [vmem:[%s205 + $0x48] sm:$0xf]
                %212 = vst [vmem:[%s206 + $0x18] sm:$0xf] %v211
                %v213 = vld [vmem:[%s205 + $0x6c] sm:$0xf]
                %214 = vst [vmem:[%s206 + $0x24] sm:$0xf] %v213
              $region44: #{forward.56} parent=31 // loop_footer
                %s204 = sadd.s32 1, %s200
              $region45: #{forward.56} parent=31 // loop_footer_branch
                %199 = sbr.rel target = $region41
              $region46: #{forward.56} parent=31 // loop_exit
                _
            $region32: #{forward.56} parent=27 // pred_fallthru
              _
          $region28: #{forward.56} parent=23 // pred_fallthru
            _
          %215 = vnop
        $region24: #{forward.56} parent=19 // pred_fallthru
          _
        // Predicated region
        $region47: #{forward.56} parent=19 // pred_check
          %p216 = pneg %p78
        $region48: #{forward.56} parent=19 // pred_check_branch
          %218 = sbr.rel (%p216) target = $region50
        $region49: #{forward.56} parent=19 // pred_region
          %s219 = smul.u32 48, %s18
          %p220 = scmp.lt.s32.totalorder %s219, 143
          %s221 = scalar_select %p220, %s219, 143
          %p222 = scmp.lt.s32.totalorder %s17, 0
          %s223 = scalar_select %p222, %s17, 0
          %s224 = sadd.s32 %s223, %s221
          %s225 = smul.addr %s224, 4
          %s226 = scalar_lea.vmem %s1, %s225
          %s227 = smul.u32 48, %s18
        $region50: #{forward.56} parent=19 // pred_fallthru
          _
      $region20: #{forward.56} parent=5 // pred_fallthru
        _
      %p228 = scmp.le.s32.totalorder 1, %s9
      %p229 = scmp.lt.s32.totalorder %s9, 4
      %p230 = pnand %p228, %p229
      %p231 = pneg %p230
      // Predicated region
      $region51: #{forward.56} parent=5 // pred_check
        _
      $region52: #{forward.56} parent=5 // pred_check_branch
        %233 = sbr.rel (%p230) target = $region54
      $region53: #{forward.56} parent=5 // pred_region
        %s234 = ssub.s32 %s9, 1
        %s235 = sand.u32 %s43, 1
        %s236 = sand.u32 %s43, 1
        %s237 = smul.addr %s236, 48
        %s238 = scalar_lea.vmem [#allocation3], %s237
        // Predicated region
        $region55: #{forward.56} parent=53 // pred_check
          %p239 = pneg %p56
        $region56: #{forward.56} parent=53 // pred_check_branch
          %241 = sbr.rel (%p239) target = $region58
        $region57: #{forward.56} parent=53 // pred_region
          _
        $region58: #{forward.56} parent=53 // pred_fallthru
          _
        %s242 = sand.u32 %s43, 1
        %s243 = sand.u32 %s43, 1
        %s244 = smul.addr %s243, 48
        %s245 = scalar_lea.vmem [#allocation3], %s244
        %p246 = pneg %p56
        %p247 = pneg %p53
        %s248 = smul.u32 48, %s21
        %p249 = scmp.lt.s32.totalorder %s248, 143
        %s250 = scalar_select %p249, %s248, 143
        %p251 = scmp.lt.s32.totalorder %s20, 0
        %s252 = scalar_select %p251, %s20, 0
        %s253 = sadd.s32 %s252, %s250
        %s254 = smul.addr %s253, 4
        %s255 = scalar_lea.vmem %s1, %s254
        %p256 = pneg %p84
        %p257 = pneg %p81
        %p258 = scmp.lt.s32.totalorder %s20, 0
        %s259 = scalar_select %p258, %s20, 0
        %s260 = scalar_lea.vmem %s2, %s259
        %p261 = pneg %p110
        %p262 = pneg %p107
        %p263 = pneg %p138
        %p264 = pneg %p135
        %s265 = smul.u32 4, %s19
        %p266 = scmp.lt.s32.totalorder %s265, 3
        %s267 = scalar_select %p266, %s265, 3
        %p268 = scmp.lt.s32.totalorder %s20, 0
        %s269 = scalar_select %p268, %s20, 0
        %s270 = sadd.s32 %s269, %s267
        %s271 = smul.addr %s270, 4
        %s272 = scalar_lea.vmem %s3, %s271
        %s273 = smul.u32 4, %s19
        %s274 = smul.u32 3, %s21
        %s275 = smul.u32 48, %s21
        %p276 = scmp.lt.s32.totalorder %s275, 143
        %s277 = scalar_select %p276, %s275, 143
        %p278 = scmp.lt.s32.totalorder %s20, 0
        %s279 = scalar_select %p278, %s20, 0
        %s280 = sadd.s32 %s279, %s277
        %s281 = smul.addr %s280, 4
        %s282 = scalar_lea.vmem %s1, %s281
        %s283 = smul.u32 48, %s21
        %p284 = scmp.lt.s32.totalorder %s20, 0
        %s285 = scalar_select %p284, %s20, 0
        %s286 = scalar_lea.vmem %s2, %s285
        %s287 = smul.u32 4, %s19
        %p288 = scmp.lt.s32.totalorder %s287, 3
        %s289 = scalar_select %p288, %s287, 3
        %p290 = scmp.lt.s32.totalorder %s20, 0
        %s291 = scalar_select %p290, %s20, 0
        %s292 = sadd.s32 %s291, %s289
        %s293 = smul.addr %s292, 4
        %s294 = scalar_lea.vmem %s3, %s293
        %s295 = smul.u32 4, %s19
        %p297 = scmp.eq.s32.totalorder %s21, 0
        // Predicated region
        $region59: #{forward.56} parent=53 // pred_check
          %p298 = pneg %p297
        $region60: #{forward.56} parent=53 // pred_check_branch
          %300 = sbr.rel (%p298) target = $region62
        $region61: #{forward.56} parent=53 // pred_region
          %301 = vst [vmem:[#allocation2] sm:$0xff] 0.0
          %302 = vst [vmem:[#allocation2 + $0x8] sm:$0xff] 0.0
          %303 = vst [vmem:[#allocation2 + $0x10] sm:$0xff] 0.0
          %304 = vst [vmem:[#allocation2 + $0x18] sm:$0xff] 0.0
        $region62: #{forward.56} parent=53 // pred_fallthru
          _
        %v305 = vld [vmem:[#allocation2] sm:$0xff]
        %v306 = vld [vmem:[#allocation2 + $0x8] sm:$0xff]
        %v307 = vld [vmem:[#allocation2 + $0x10] sm:$0xff]
        %v308 = vld [vmem:[#allocation2 + $0x18] sm:$0xff]
        %v309 = vld [vmem:[%s238] sm:$0xff]
        %v310 = vld [vmem:[%s238 + $0x8] sm:$0xf]
        %v311 = vld [vmem:[%s238 + $0xc] sm:$0xff]
        %v312 = vld [vmem:[%s238 + $0x14] sm:$0xf]
        %v313 = vld [vmem:[%s238 + $0x18] sm:$0xff]
        %v314 = vld [vmem:[%s238 + $0x20] sm:$0xf]
        %v315 = vld [vmem:[%s238 + $0x24] sm:$0xff]
        %v316 = vld [vmem:[%s238 + $0x2c] sm:$0xf]
        %v317 = vld [vmem:[%s282] sm:$0xf]
        %v318 = vld [vmem:[%s282 + $0x4] sm:$0xf]
        %v319 = vld [vmem:[%s282 + $0x8] sm:$0xf]
        %v320 = vld [vmem:[%s282 + $0xc] sm:$0xf]
        %v321 = vld [vmem:[%s282 + $0x10] sm:$0xf]
        %v322 = vld [vmem:[%s282 + $0x14] sm:$0xf]
        %v323 = vld [vmem:[%s282 + $0x18] sm:$0xf]
        %v324 = vld [vmem:[%s282 + $0x1c] sm:$0xf]
        %v325 = vld [vmem:[%s282 + $0x20] sm:$0xf]
        %v326 = vld [vmem:[%s282 + $0x24] sm:$0xf]
        %v327 = vld [vmem:[%s282 + $0x28] sm:$0xf]
        %v328 = vld [vmem:[%s282 + $0x2c] sm:$0xf]
        %v329 = vld [vmem:[%s282 + $0x30] sm:$0xf]
        %v330 = vld [vmem:[%s282 + $0x34] sm:$0xf]
        %v331 = vld [vmem:[%s282 + $0x38] sm:$0xf]
        %v332 = vld [vmem:[%s282 + $0x3c] sm:$0xf]
        %v333 = vld [vmem:[%s282 + $0x40] sm:$0xf]
        %v334 = vld [vmem:[%s282 + $0x44] sm:$0xf]
        %v335 = vld [vmem:[%s282 + $0x48] sm:$0xf]
        %v336 = vld [vmem:[%s282 + $0x4c] sm:$0xf]
        %v337 = vld [vmem:[%s282 + $0x50] sm:$0xf]
        %v338 = vld [vmem:[%s282 + $0x54] sm:$0xf]
        %v339 = vld [vmem:[%s282 + $0x58] sm:$0xf]
        %v340 = vld [vmem:[%s282 + $0x5c] sm:$0xf]
        %v341 = vld [vmem:[%s282 + $0x60] sm:$0xf]
        %v342 = vld [vmem:[%s282 + $0x64] sm:$0xf]
        %v343 = vld [vmem:[%s282 + $0x68] sm:$0xf]
        %v344 = vld [vmem:[%s282 + $0x6c] sm:$0xf]
        %v345 = vld [vmem:[%s282 + $0x70] sm:$0xf]
        %v346 = vld [vmem:[%s282 + $0x74] sm:$0xf]
        %v347 = vld [vmem:[%s282 + $0x78] sm:$0xf]
        %v348 = vld [vmem:[%s282 + $0x7c] sm:$0xf]
        %v349 = vld [vmem:[%s282 + $0x80] sm:$0xf]
        %v350 = vld [vmem:[%s282 + $0x84] sm:$0xf]
        %v351 = vld [vmem:[%s282 + $0x88] sm:$0xf]
        %v352 = vld [vmem:[%s282 + $0x8c] sm:$0xf]
        %v353 = vld [vmem:[%s282 + $0x90] sm:$0xf]
        %v354 = vld [vmem:[%s282 + $0x94] sm:$0xf]
        %v355 = vld [vmem:[%s282 + $0x98] sm:$0xf]
        %v356 = vld [vmem:[%s282 + $0x9c] sm:$0xf]
        %v357 = vld [vmem:[%s282 + $0xa0] sm:$0xf]
        %v358 = vld [vmem:[%s282 + $0xa4] sm:$0xf]
        %v359 = vld [vmem:[%s282 + $0xa8] sm:$0xf]
        %v360 = vld [vmem:[%s282 + $0xac] sm:$0xf]
        %v361 = vld [vmem:[%s282 + $0xb0] sm:$0xf]
        %v362 = vld [vmem:[%s282 + $0xb4] sm:$0xf]
        %v363 = vld [vmem:[%s282 + $0xb8] sm:$0xf]
        %v364 = vld [vmem:[%s282 + $0xbc] sm:$0xf]
        %v373 = vunpack.c.l.b16 %v309
        %v374 = vunpack.c.h.b16 %v309
        %v375 = vunpack.c.l.b16 %v310
        %v376 = vunpack.c.l.b16 %v311
        %v377 = vunpack.c.h.b16 %v311
        %v378 = vunpack.c.l.b16 %v312
        %v379 = vunpack.c.l.b16 %v313
        %v380 = vunpack.c.h.b16 %v313
        %v381 = vunpack.c.l.b16 %v314
        %v382 = vunpack.c.l.b16 %v315
        %v383 = vunpack.c.h.b16 %v315
        %v384 = vunpack.c.l.b16 %v316
        %v385 = vpack.c.b16 %v376, %v373
        %v386 = vpack.c.b16 %v377, %v374
        %v387 = vpack.c.b16 %v378, %v375
        %v388 = vpack.c.b16 %v382, %v379
        %v389 = vpack.c.b16 %v383, %v380
        %v390 = vpack.c.b16 %v384, %v381
        %v445 = vunpack.c.l.b16 %v317
        %v446 = vunpack.c.l.b16 %v318
        %v447 = vunpack.c.l.b16 %v319
        %v448 = vunpack.c.l.b16 %v320
        %v449 = vunpack.c.l.b16 %v321
        %v450 = vunpack.c.l.b16 %v322
        %v451 = vunpack.c.l.b16 %v323
        %v452 = vunpack.c.l.b16 %v324
        %v453 = vunpack.c.l.b16 %v325
        %v454 = vunpack.c.l.b16 %v326
        %v455 = vunpack.c.l.b16 %v327
        %v456 = vunpack.c.l.b16 %v328
        %v457 = vunpack.c.l.b16 %v329
        %v458 = vunpack.c.l.b16 %v330
        %v459 = vunpack.c.l.b16 %v331
        %v460 = vunpack.c.l.b16 %v332
        %v461 = vunpack.c.l.b16 %v333
        %v462 = vunpack.c.l.b16 %v334
        %v463 = vunpack.c.l.b16 %v335
        %v464 = vunpack.c.l.b16 %v336
        %v465 = vunpack.c.l.b16 %v337
        %v466 = vunpack.c.l.b16 %v338
        %v467 = vunpack.c.l.b16 %v339
        %v468 = vunpack.c.l.b16 %v340
        %v469 = vunpack.c.l.b16 %v341
        %v470 = vunpack.c.l.b16 %v342
        %v471 = vunpack.c.l.b16 %v343
        %v472 = vunpack.c.l.b16 %v344
        %v473 = vunpack.c.l.b16 %v345
        %v474 = vunpack.c.l.b16 %v346
        %v475 = vunpack.c.l.b16 %v347
        %v476 = vunpack.c.l.b16 %v348
        %v477 = vunpack.c.l.b16 %v349
        %v478 = vunpack.c.l.b16 %v350
        %v479 = vunpack.c.l.b16 %v351
        %v480 = vunpack.c.l.b16 %v352
        %v481 = vunpack.c.l.b16 %v353
        %v482 = vunpack.c.l.b16 %v354
        %v483 = vunpack.c.l.b16 %v355
        %v484 = vunpack.c.l.b16 %v356
        %v485 = vunpack.c.l.b16 %v357
        %v486 = vunpack.c.l.b16 %v358
        %v487 = vunpack.c.l.b16 %v359
        %v488 = vunpack.c.l.b16 %v360
        %v489 = vunpack.c.l.b16 %v361
        %v490 = vunpack.c.l.b16 %v362
        %v491 = vunpack.c.l.b16 %v363
        %v492 = vunpack.c.l.b16 %v364
        %v493 = vpack.c.b16 %v446, %v445
        %v494 = vpack.c.b16 %v448, %v447
        %v495 = vpack.c.b16 %v450, %v449
        %v496 = vpack.c.b16 %v452, %v451
        %v497 = vpack.c.b16 %v454, %v453
        %v498 = vpack.c.b16 %v456, %v455
        %v499 = vpack.c.b16 %v458, %v457
        %v500 = vpack.c.b16 %v460, %v459
        %v501 = vpack.c.b16 %v462, %v461
        %v502 = vpack.c.b16 %v464, %v463
        %v503 = vpack.c.b16 %v466, %v465
        %v504 = vpack.c.b16 %v468, %v467
        %v505 = vpack.c.b16 %v470, %v469
        %v506 = vpack.c.b16 %v472, %v471
        %v507 = vpack.c.b16 %v474, %v473
        %v508 = vpack.c.b16 %v476, %v475
        %v509 = vpack.c.b16 %v478, %v477
        %v510 = vpack.c.b16 %v480, %v479
        %v511 = vpack.c.b16 %v482, %v481
        %v512 = vpack.c.b16 %v484, %v483
        %v513 = vpack.c.b16 %v486, %v485
        %v514 = vpack.c.b16 %v488, %v487
        %v515 = vpack.c.b16 %v490, %v489
        %v516 = vpack.c.b16 %v492, %v491
        %541 = vmatprep.subr.bf16.mxu0 0
        %542 = vmatpush1.bf16.msra.mxu0 %v493
        %543 = vmatprep.subr.bf16.mxu0 0
        %544 = vmatpush1.bf16.msra.mxu0 %v494
        %545 = vmatprep.subr.bf16.mxu0 0
        %546 = vmatpush1.bf16.msra.mxu0 %v495
        %547 = vmatprep.subr.bf16.mxu0 0
        %548 = vmatpush1.bf16.msra.mxu0 %v496
        %549 = vmatprep.subr.bf16.mxu0 0
        %550 = vmatpush1.bf16.msra.mxu0 %v497
        %551 = vmatprep.subr.bf16.mxu0 0
        %552 = vmatpush1.bf16.msra.mxu0 %v498
        %553 = vmatprep.subr.bf16.mxu0 0
        %554 = vmatpush1.bf16.msra.mxu0 %v499
        %555 = vmatprep.subr.bf16.mxu0 0
        %556 = vmatpush1.bf16.msra.mxu0 %v500
        %557 = vmatprep.subr.bf16.mxu0 0
        %558 = vmatpush1.bf16.msra.mxu0 %v501
        %559 = vmatprep.subr.bf16.mxu0 0
        %560 = vmatpush1.bf16.msra.mxu0 %v502
        %561 = vmatprep.subr.bf16.mxu0 0
        %562 = vmatpush1.bf16.msra.mxu0 %v503
        %563 = vmatprep.subr.bf16.mxu0 0
        %564 = vmatpush1.bf16.msra.mxu0 %v504
        %565 = vmatprep.subr.bf16.mxu0 0
        %566 = vmatpush1.bf16.msra.mxu0 %v505
        %567 = vmatprep.subr.bf16.mxu0 0
        %568 = vmatpush1.bf16.msra.mxu0 %v506
        %569 = vmatprep.subr.bf16.mxu0 0
        %570 = vmatpush1.bf16.msra.mxu0 %v507
        %571 = vmatprep.subr.bf16.mxu0 0
        %572 = vmatpush1.bf16.msra.mxu0 %v508
        %573 = vmatprep.mubr.bf16.mxu0 %v386
        %574 = vmatmul.mubr.bf16.gmra.mrb[0].mxu0 %v385
        %v575 = vpop.f32.mrb[0].mxu0
        %v576 = vadd.f32 0.0, %v575
        %v577 = vpop.f32.mrb[0].mxu0
        %v578 = vpop.f32.mrb[0].mxu0
        %v579 = vadd.f32 0.0, %v578
        %v580 = vpop.f32.mrb[0].mxu0
        %581 = vmatprep.mubr.bf16.mxu0 %v389
        %582 = vmatmul.mubr.bf16.gmra.mrb[0].mxu0 %v388
        %v583 = vpop.f32.mrb[0].mxu0
        %v584 = vadd.f32 0.0, %v583
        %v585 = vpop.f32.mrb[0].mxu0
        %v586 = vpop.f32.mrb[0].mxu0
        %v587 = vadd.f32 0.0, %v586
        %v588 = vpop.f32.mrb[0].mxu0
        %589 = vdwg.mxu0
        %590 = vmatprep.subr.bf16.mxu0 0
        %591 = vmatpush1.bf16.msra.mxu0 %v509
        %592 = vmatprep.subr.bf16.mxu0 0
        %593 = vmatpush1.bf16.msra.mxu0 %v510
        %594 = vmatprep.subr.bf16.mxu0 0
        %595 = vmatpush1.bf16.msra.mxu0 %v511
        %596 = vmatprep.subr.bf16.mxu0 0
        %597 = vmatpush1.bf16.msra.mxu0 %v512
        %598 = vmatprep.subr.bf16.mxu0 0
        %599 = vmatpush1.bf16.msra.mxu0 %v513
        %600 = vmatprep.subr.bf16.mxu0 0
        %601 = vmatpush1.bf16.msra.mxu0 %v514
        %602 = vmatprep.subr.bf16.mxu0 0
        %603 = vmatpush1.bf16.msra.mxu0 %v515
        %604 = vmatprep.subr.bf16.mxu0 0
        %605 = vmatpush1.bf16.msra.mxu0 %v516
        %606 = vmatprep.subr.bf16.mxu0 0
        %607 = vmatpush1.bf16.msra.mxu0 0
        %608 = vmatprep.subr.bf16.mxu0 0
        %609 = vmatpush1.bf16.msra.mxu0 0
        %610 = vmatprep.subr.bf16.mxu0 0
        %611 = vmatpush1.bf16.msra.mxu0 0
        %612 = vmatprep.subr.bf16.mxu0 0
        %613 = vmatpush1.bf16.msra.mxu0 0
        %614 = vmatprep.subr.bf16.mxu0 0
        %615 = vmatpush1.bf16.msra.mxu0 0
        %616 = vmatprep.subr.bf16.mxu0 0
        %617 = vmatpush1.bf16.msra.mxu0 0
        %618 = vmatprep.subr.bf16.mxu0 0
        %619 = vmatpush1.bf16.msra.mxu0 0
        %620 = vmatprep.subr.bf16.mxu0 0
        %621 = vmatpush1.bf16.msra.mxu0 0
        %622 = vmatprep.mubr.bf16.mxu0 0
        %623 = vmatmul.mubr.bf16.gmra.mrb[0].mxu0 %v387
        %v624 = vpop.f32.mrb[0].mxu0
        %v625 = vadd.f32 %v576, %v624
        %v626 = vpop.f32.mrb[0].mxu0
        %v627 = vpop.f32.mrb[0].mxu0
        %v628 = vadd.f32 %v579, %v627
        %v629 = vpop.f32.mrb[0].mxu0
        %630 = vmatprep.mubr.bf16.mxu0 0
        %631 = vmatmul.mubr.bf16.gmra.mrb[0].mxu0 %v390
        %v632 = vpop.f32.mrb[0].mxu0
        %v633 = vadd.f32 %v584, %v632
        %v634 = vpop.f32.mrb[0].mxu0
        %v635 = vpop.f32.mrb[0].mxu0
        %v636 = vadd.f32 %v587, %v635
        %v637 = vpop.f32.mrb[0].mxu0
        %638 = vdwg.mxu0
        %v639 = vadd.f32 %v305, %v625
        %v640 = vadd.f32 %v306, %v628
        %v641 = vadd.f32 %v307, %v633
        %v642 = vadd.f32 %v308, %v636
        %643 = vst [vmem:[#allocation2] sm:$0xff] %v639
        %644 = vst [vmem:[#allocation2 + $0x8] sm:$0xff] %v640
        %645 = vst [vmem:[#allocation2 + $0x10] sm:$0xff] %v641
        %646 = vst [vmem:[#allocation2 + $0x18] sm:$0xff] %v642
        %p647 = scmp.eq.s32.totalorder %s21, 2
        // Predicated region
        $region63: #{forward.56} parent=53 // pred_check
          %p648 = pneg %p647
        $region64: #{forward.56} parent=53 // pred_check_branch
          %650 = sbr.rel (%p648) target = $region66
        $region65: #{forward.56} parent=53 // pred_region
          %v651 = vld [vmem:[#allocation2] sm:$0xff]
          %v652 = vld [vmem:[#allocation2 + $0x8] sm:$0xff]
          %v653 = vld [vmem:[#allocation2 + $0x10] sm:$0xff]
          %v654 = vld [vmem:[#allocation2 + $0x18] sm:$0xff]
          %v655 = vld [vmem:[%s286] sm:$0x1]
          %v657 = vlaneseq
          %v658 = vshrl.u32 %v657, 7
          %v659 = vsub.s32 0, %v658
          %v660 = vrot.slane %v655, %v659
          %v662 = vadd.f32 %v651, %v660
          %v663 = vadd.f32 %v652, %v660
          %v664 = vadd.f32 %v653, %v660
          %v665 = vadd.f32 %v654, %v660
          %v666 = vmax.f32 %v662, 0.0
          %v667 = vmax.f32 %v663, 0.0
          %v668 = vmax.f32 %v664, 0.0
          %v669 = vmax.f32 %v665, 0.0
          %v670 = vpack.c.bf16 %v667, %v666
          %v671 = vpack.c.bf16 %v669, %v668
          %v674 = vunpack.c.l.b16 %v670
          %v675 = vunpack.c.h.b16 %v670
          %v676 = vunpack.c.l.b16 %v671
          %v677 = vunpack.c.h.b16 %v671
          %v678 = vpack.c.b16 %v674, %v674
          %v679 = vpack.c.b16 %v675, %v675
          %v680 = vpack.c.b16 %v676, %v676
          %v681 = vpack.c.b16 %v677, %v677
          %686 = vst [vmem:[%s294] sm:$0xf] %v678
          %687 = vst [vmem:[%s294 + $0x4] sm:$0xf] %v679
          %688 = vst [vmem:[%s294 + $0x8] sm:$0xf] %v680
          %689 = vst [vmem:[%s294 + $0xc] sm:$0xf] %v681
        $region66: #{forward.56} parent=53 // pred_fallthru
          _
        %s690 = smul.u32 4, %s19
        %p691 = scmp.lt.s32.totalorder %s690, 3
        %s692 = scalar_select %p691, %s690, 3
        %p693 = scmp.lt.s32.totalorder %s20, 0
        %s694 = scalar_select %p693, %s20, 0
        %s695 = sadd.s32 %s694, %s692
        %s696 = smul.addr %s695, 4
        %s697 = scalar_lea.vmem %s3, %s696
        // Predicated region
        $region67: #{forward.56} parent=53 // pred_check
          %p698 = pneg %p135
        $region68: #{forward.56} parent=53 // pred_check_branch
          %700 = sbr.rel (%p698) target = $region70
        $region69: #{forward.56} parent=53 // pred_region
          %s701 = smul.u32 4, %s19
        $region70: #{forward.56} parent=53 // pred_fallthru
          _
        // Predicated region
        $region71: #{forward.56} parent=53 // pred_check
          %p702 = pneg %p135
        $region72: #{forward.56} parent=53 // pred_check_branch
          %704 = sbr.rel (%p702) target = $region74
        $region73: #{forward.56} parent=53 // pred_region
          %s705 = smul.u32 4, %s19
          %p706 = scmp.lt.s32.totalorder %s705, 3
          %s707 = scalar_select %p706, %s705, 3
          %p708 = scmp.lt.s32.totalorder %s20, 0
          %s709 = scalar_select %p708, %s20, 0
          %s710 = sadd.s32 %s709, %s707
          %s711 = smul.addr %s710, 4
          %s712 = scalar_lea.vmem %s3, %s711
        $region74: #{forward.56} parent=53 // pred_fallthru
          _
      $region54: #{forward.56} parent=5 // pred_fallthru
        _
      %p713 = scmp.le.s32.totalorder 2, %s9
      // Predicated region
      $region75: #{forward.56} parent=5 // pred_check
        %p714 = pneg %p713
      $region76: #{forward.56} parent=5 // pred_check_branch
        %716 = sbr.rel (%p714) target = $region78
      $region77: #{forward.56} parent=5 // pred_region
        %s717 = ssub.s32 %s9, 2
      $region78: #{forward.56} parent=5 // pred_fallthru
        _
    $region6: #{forward.56} parent=1 // loop_footer
      %s13 = sadd.s32 1, %s9
    $region7: #{forward.56} parent=1 // loop_footer_branch
      %8 = sbr.rel target = $region3
    $region8: #{forward.56} parent=1 // loop_exit
      _

// kernel: forward.67
$region0: #{forward.67}
  #allocation0 [shape = 'u32[]', space=smem, size = 0x4, offset = 0x4, fixed_abs, tag = 'smem constant byte address 0x4 - core index']
  #allocation1 [shape = 'u32[144,128]{1,0:T(1,128)}', space=vmem, size = 0x12000, scoped, tag = 'internal scratch']
  #allocation2 [shape = 'f32[8,128]{1,0:T(8,128)}', space=vmem, size = 0x1000, scoped, tag = 'scratch operand']
  %s0 = inlined_call_operand.vmem [shape: bf16[8,128], index: 0, kind: input, shape index: {}]
  %s1 = inlined_call_operand.vmem [shape: bf16[128,128], index: 1, kind: input, shape index: {}]
  %s2 = inlined_call_operand.vmem [shape: f32[1,128], index: 2, kind: input, shape index: {}]
  %s3 = inlined_call_operand.vmem [shape: bf16[8,128], index: 3, kind: output, shape index: {}]
  %s4 = sld [smem:[#allocation0]]
  $region30: #{forward.67} parent=0
    _
  %s6 = ssub.s32 1, %s4
  %s7 = scalar_select 0, %s6, %s4
  // Predicated region
  $region2: #{forward.67} parent=0 // pred_check
    _
  $region3: #{forward.67} parent=0 // pred_check_branch
    %9 = sbr.rel (0) target = $region5
  $region4: #{forward.67} parent=0 // pred_region
    _
  $region5: #{forward.67} parent=0 // pred_fallthru
    _
  // Predicated region
  $region6: #{forward.67} parent=0 // pred_check
    _
  $region7: #{forward.67} parent=0 // pred_check_branch
    %11 = sbr.rel (0) target = $region9
  $region8: #{forward.67} parent=0 // pred_region
    _
  $region9: #{forward.67} parent=0 // pred_fallthru
    _
  // Predicated region
  $region10: #{forward.67} parent=0 // pred_check
    _
  $region11: #{forward.67} parent=0 // pred_check_branch
    %13 = sbr.rel (0) target = $region13
  $region12: #{forward.67} parent=0 // pred_region
    _
  $region13: #{forward.67} parent=0 // pred_fallthru
    _
  %p15 = scmp.eq.s32.totalorder 0, 0
  // Predicated region
  $region14: #{forward.67} parent=0 // pred_check
    %p16 = pneg %p15
  $region15: #{forward.67} parent=0 // pred_check_branch
    %18 = sbr.rel (%p16) target = $region17
  $region16: #{forward.67} parent=0 // pred_region
    %19 = vst [vmem:[#allocation2] sm:$0xff] 0.0
  $region17: #{forward.67} parent=0 // pred_fallthru
    _
  %v20 = vld [vmem:[#allocation2] sm:$0xff]
  %v21 = vld [vmem:[%s0] sm:$0xf]
  %v22 = vld [vmem:[%s1] sm:$0xf]
  %v23 = vld [vmem:[%s1 + $0x4] sm:$0xf]
  %v24 = vld [vmem:[%s1 + $0x8] sm:$0xf]
  %v25 = vld [vmem:[%s1 + $0xc] sm:$0xf]
  %v26 = vld [vmem:[%s1 + $0x10] sm:$0xf]
  %v27 = vld [vmem:[%s1 + $0x14] sm:$0xf]
  %v28 = vld [vmem:[%s1 + $0x18] sm:$0xf]
  %v29 = vld [vmem:[%s1 + $0x1c] sm:$0xf]
  %v30 = vld [vmem:[%s1 + $0x20] sm:$0xf]
  %v31 = vld [vmem:[%s1 + $0x24] sm:$0xf]
  %v32 = vld [vmem:[%s1 + $0x28] sm:$0xf]
  %v33 = vld [vmem:[%s1 + $0x2c] sm:$0xf]
  %v34 = vld [vmem:[%s1 + $0x30] sm:$0xf]
  %v35 = vld [vmem:[%s1 + $0x34] sm:$0xf]
  %v36 = vld [vmem:[%s1 + $0x38] sm:$0xf]
  %v37 = vld [vmem:[%s1 + $0x3c] sm:$0xf]
  %v54 = vunpack.c.l.b16 %v22
  %v55 = vunpack.c.l.b16 %v23
  %v56 = vunpack.c.l.b16 %v24
  %v57 = vunpack.c.l.b16 %v25
  %v58 = vunpack.c.l.b16 %v26
  %v59 = vunpack.c.l.b16 %v27
  %v60 = vunpack.c.l.b16 %v28
  %v61 = vunpack.c.l.b16 %v29
  %v62 = vunpack.c.l.b16 %v30
  %v63 = vunpack.c.l.b16 %v31
  %v64 = vunpack.c.l.b16 %v32
  %v65 = vunpack.c.l.b16 %v33
  %v66 = vunpack.c.l.b16 %v34
  %v67 = vunpack.c.l.b16 %v35
  %v68 = vunpack.c.l.b16 %v36
  %v69 = vunpack.c.l.b16 %v37
  %v70 = vpack.c.b16 %v55, %v54
  %v71 = vpack.c.b16 %v57, %v56
  %v72 = vpack.c.b16 %v59, %v58
  %v73 = vpack.c.b16 %v61, %v60
  %v74 = vpack.c.b16 %v63, %v62
  %v75 = vpack.c.b16 %v65, %v64
  %v76 = vpack.c.b16 %v67, %v66
  %v77 = vpack.c.b16 %v69, %v68
  %86 = vmatprep.subr.bf16.mxu0 0
  %87 = vmatpush1.bf16.msra.mxu0 %v70
  %88 = vmatprep.subr.bf16.mxu0 0
  %89 = vmatpush1.bf16.msra.mxu0 %v71
  %90 = vmatprep.subr.bf16.mxu0 0
  %91 = vmatpush1.bf16.msra.mxu0 %v72
  %92 = vmatprep.subr.bf16.mxu0 0
  %93 = vmatpush1.bf16.msra.mxu0 %v73
  %94 = vmatprep.subr.bf16.mxu0 0
  %95 = vmatpush1.bf16.msra.mxu0 %v74
  %96 = vmatprep.subr.bf16.mxu0 0
  %97 = vmatpush1.bf16.msra.mxu0 %v75
  %98 = vmatprep.subr.bf16.mxu0 0
  %99 = vmatpush1.bf16.msra.mxu0 %v76
  %100 = vmatprep.subr.bf16.mxu0 0
  %101 = vmatpush1.bf16.msra.mxu0 %v77
  %102 = vmatprep.subr.bf16.mxu0 0
  %103 = vmatpush1.bf16.msra.mxu0 0
  %104 = vmatprep.subr.bf16.mxu0 0
  %105 = vmatpush1.bf16.msra.mxu0 0
  %106 = vmatprep.subr.bf16.mxu0 0
  %107 = vmatpush1.bf16.msra.mxu0 0
  %108 = vmatprep.subr.bf16.mxu0 0
  %109 = vmatpush1.bf16.msra.mxu0 0
  %110 = vmatprep.subr.bf16.mxu0 0
  %111 = vmatpush1.bf16.msra.mxu0 0
  %112 = vmatprep.subr.bf16.mxu0 0
  %113 = vmatpush1.bf16.msra.mxu0 0
  %114 = vmatprep.subr.bf16.mxu0 0
  %115 = vmatpush1.bf16.msra.mxu0 0
  %116 = vmatprep.subr.bf16.mxu0 0
  %117 = vmatpush1.bf16.msra.mxu0 0
  %118 = vmatprep.mubr.bf16.mxu0 0
  %119 = vmatmul.mubr.bf16.gmra.mrb[0].mxu0 %v21
  %v120 = vpop.f32.mrb[0].mxu0
  %v121 = vadd.f32 0.0, %v120
  %v122 = vpop.f32.mrb[0].mxu0
  %v123 = vpop.f32.mrb[0].mxu0
  %v124 = vpop.f32.mrb[0].mxu0
  %125 = vdwg.mxu0
  %v126 = vadd.f32 %v20, %v121
  %127 = vst [vmem:[#allocation2] sm:$0xff] %v126
  // Predicated region
  $region18: #{forward.67} parent=0 // pred_check
    %p128 = pneg %p15
  $region19: #{forward.67} parent=0 // pred_check_branch
    %130 = sbr.rel (%p128) target = $region21
  $region20: #{forward.67} parent=0 // pred_region
    %v131 = vld [vmem:[#allocation2] sm:$0xff]
    %v132 = vld [vmem:[%s2] sm:$0x1]
    %v134 = vlaneseq
    %v135 = vshrl.u32 %v134, 7
    %v136 = vsub.s32 0, %v135
    %v137 = vrot.slane %v132, %v136
    %v139 = vadd.f32 %v131, %v137
    %v140 = vpack.c.bf16 %v139, %v139
    %141 = vst [vmem:[%s3] sm:$0xf] %v140
  $region21: #{forward.67} parent=0 // pred_fallthru
    _
  // Predicated region
  $region22: #{forward.67} parent=0 // pred_check
    _
  $region23: #{forward.67} parent=0 // pred_check_branch
    %143 = sbr.rel (0) target = $region25
  $region24: #{forward.67} parent=0 // pred_region
    _
  $region25: #{forward.67} parent=0 // pred_fallthru
    _
  // Predicated region
  $region26: #{forward.67} parent=0 // pred_check
    _
  $region27: #{forward.67} parent=0 // pred_check_branch
    %145 = sbr.rel (0) target = $region29
  $region28: #{forward.67} parent=0 // pred_region
    _
  $region29: #{forward.67} parent=0 // pred_fallthru
    _

// kernel: forward.70
$region0: #{forward.70}
  #allocation0 [shape = 'u32[]', space=smem, size = 0x4, offset = 0x4, fixed_abs, tag = 'smem constant byte address 0x4 - core index']
  #allocation1 [shape = 'u32[144,128]{1,0:T(1,128)}', space=vmem, size = 0x12000, scoped, tag = 'internal scratch']
  #allocation2 [shape = 'f32[8,128]{1,0:T(8,128)}', space=vmem, size = 0x1000, scoped, tag = 'scratch operand']
  %s0 = inlined_call_operand.vmem [shape: bf16[8,128], index: 0, kind: input, shape index: {}]
  %s1 = inlined_call_operand.vmem [shape: bf16[128,128], index: 1, kind: input, shape index: {}]
  %s2 = inlined_call_operand.vmem [shape: f32[1,128], index: 2, kind: input, shape index: {}]
  %s3 = inlined_call_operand.vmem [shape: bf16[8,128], index: 3, kind: input, shape index: {}]
  %s4 = inlined_call_operand.vmem [shape: bf16[8,128], index: 4, kind: output, shape index: {}]
  %s5 = sld [smem:[#allocation0]]
  $region34: #{forward.70} parent=0
    _
  %s7 = ssub.s32 1, %s5
  %s8 = scalar_select 0, %s7, %s5
  // Predicated region
  $region2: #{forward.70} parent=0 // pred_check
    _
  $region3: #{forward.70} parent=0 // pred_check_branch
    %10 = sbr.rel (0) target = $region5
  $region4: #{forward.70} parent=0 // pred_region
    _
  $region5: #{forward.70} parent=0 // pred_fallthru
    _
  // Predicated region
  $region6: #{forward.70} parent=0 // pred_check
    _
  $region7: #{forward.70} parent=0 // pred_check_branch
    %12 = sbr.rel (0) target = $region9
  $region8: #{forward.70} parent=0 // pred_region
    _
  $region9: #{forward.70} parent=0 // pred_fallthru
    _
  // Predicated region
  $region10: #{forward.70} parent=0 // pred_check
    _
  $region11: #{forward.70} parent=0 // pred_check_branch
    %14 = sbr.rel (0) target = $region13
  $region12: #{forward.70} parent=0 // pred_region
    _
  $region13: #{forward.70} parent=0 // pred_fallthru
    _
  // Predicated region
  $region14: #{forward.70} parent=0 // pred_check
    _
  $region15: #{forward.70} parent=0 // pred_check_branch
    %16 = sbr.rel (0) target = $region17
  $region16: #{forward.70} parent=0 // pred_region
    _
  $region17: #{forward.70} parent=0 // pred_fallthru
    _
  %p18 = scmp.eq.s32.totalorder 0, 0
  // Predicated region
  $region18: #{forward.70} parent=0 // pred_check
    %p19 = pneg %p18
  $region19: #{forward.70} parent=0 // pred_check_branch
    %21 = sbr.rel (%p19) target = $region21
  $region20: #{forward.70} parent=0 // pred_region
    %22 = vst [vmem:[#allocation2] sm:$0xff] 0.0
  $region21: #{forward.70} parent=0 // pred_fallthru
    _
  %v23 = vld [vmem:[#allocation2] sm:$0xff]
  %v24 = vld [vmem:[%s0] sm:$0xf]
  %v25 = vld [vmem:[%s1] sm:$0xf]
  %v26 = vld [vmem:[%s1 + $0x4] sm:$0xf]
  %v27 = vld [vmem:[%s1 + $0x8] sm:$0xf]
  %v28 = vld [vmem:[%s1 + $0xc] sm:$0xf]
  %v29 = vld [vmem:[%s1 + $0x10] sm:$0xf]
  %v30 = vld [vmem:[%s1 + $0x14] sm:$0xf]
  %v31 = vld [vmem:[%s1 + $0x18] sm:$0xf]
  %v32 = vld [vmem:[%s1 + $0x1c] sm:$0xf]
  %v33 = vld [vmem:[%s1 + $0x20] sm:$0xf]
  %v34 = vld [vmem:[%s1 + $0x24] sm:$0xf]
  %v35 = vld [vmem:[%s1 + $0x28] sm:$0xf]
  %v36 = vld [vmem:[%s1 + $0x2c] sm:$0xf]
  %v37 = vld [vmem:[%s1 + $0x30] sm:$0xf]
  %v38 = vld [vmem:[%s1 + $0x34] sm:$0xf]
  %v39 = vld [vmem:[%s1 + $0x38] sm:$0xf]
  %v40 = vld [vmem:[%s1 + $0x3c] sm:$0xf]
  %v57 = vunpack.c.l.b16 %v25
  %v58 = vunpack.c.l.b16 %v26
  %v59 = vunpack.c.l.b16 %v27
  %v60 = vunpack.c.l.b16 %v28
  %v61 = vunpack.c.l.b16 %v29
  %v62 = vunpack.c.l.b16 %v30
  %v63 = vunpack.c.l.b16 %v31
  %v64 = vunpack.c.l.b16 %v32
  %v65 = vunpack.c.l.b16 %v33
  %v66 = vunpack.c.l.b16 %v34
  %v67 = vunpack.c.l.b16 %v35
  %v68 = vunpack.c.l.b16 %v36
  %v69 = vunpack.c.l.b16 %v37
  %v70 = vunpack.c.l.b16 %v38
  %v71 = vunpack.c.l.b16 %v39
  %v72 = vunpack.c.l.b16 %v40
  %v73 = vpack.c.b16 %v58, %v57
  %v74 = vpack.c.b16 %v60, %v59
  %v75 = vpack.c.b16 %v62, %v61
  %v76 = vpack.c.b16 %v64, %v63
  %v77 = vpack.c.b16 %v66, %v65
  %v78 = vpack.c.b16 %v68, %v67
  %v79 = vpack.c.b16 %v70, %v69
  %v80 = vpack.c.b16 %v72, %v71
  %89 = vmatprep.subr.bf16.mxu0 0
  %90 = vmatpush1.bf16.msra.mxu0 %v73
  %91 = vmatprep.subr.bf16.mxu0 0
  %92 = vmatpush1.bf16.msra.mxu0 %v74
  %93 = vmatprep.subr.bf16.mxu0 0
  %94 = vmatpush1.bf16.msra.mxu0 %v75
  %95 = vmatprep.subr.bf16.mxu0 0
  %96 = vmatpush1.bf16.msra.mxu0 %v76
  %97 = vmatprep.subr.bf16.mxu0 0
  %98 = vmatpush1.bf16.msra.mxu0 %v77
  %99 = vmatprep.subr.bf16.mxu0 0
  %100 = vmatpush1.bf16.msra.mxu0 %v78
  %101 = vmatprep.subr.bf16.mxu0 0
  %102 = vmatpush1.bf16.msra.mxu0 %v79
  %103 = vmatprep.subr.bf16.mxu0 0
  %104 = vmatpush1.bf16.msra.mxu0 %v80
  %105 = vmatprep.subr.bf16.mxu0 0
  %106 = vmatpush1.bf16.msra.mxu0 0
  %107 = vmatprep.subr.bf16.mxu0 0
  %108 = vmatpush1.bf16.msra.mxu0 0
  %109 = vmatprep.subr.bf16.mxu0 0
  %110 = vmatpush1.bf16.msra.mxu0 0
  %111 = vmatprep.subr.bf16.mxu0 0
  %112 = vmatpush1.bf16.msra.mxu0 0
  %113 = vmatprep.subr.bf16.mxu0 0
  %114 = vmatpush1.bf16.msra.mxu0 0
  %115 = vmatprep.subr.bf16.mxu0 0
  %116 = vmatpush1.bf16.msra.mxu0 0
  %117 = vmatprep.subr.bf16.mxu0 0
  %118 = vmatpush1.bf16.msra.mxu0 0
  %119 = vmatprep.subr.bf16.mxu0 0
  %120 = vmatpush1.bf16.msra.mxu0 0
  %121 = vmatprep.mubr.bf16.mxu0 0
  %122 = vmatmul.mubr.bf16.gmra.mrb[0].mxu0 %v24
  %v123 = vpop.f32.mrb[0].mxu0
  %v124 = vadd.f32 0.0, %v123
  %v125 = vpop.f32.mrb[0].mxu0
  %v126 = vpop.f32.mrb[0].mxu0
  %v127 = vpop.f32.mrb[0].mxu0
  %128 = vdwg.mxu0
  %v129 = vadd.f32 %v23, %v124
  %130 = vst [vmem:[#allocation2] sm:$0xff] %v129
  // Predicated region
  $region22: #{forward.70} parent=0 // pred_check
    %p131 = pneg %p18
  $region23: #{forward.70} parent=0 // pred_check_branch
    %133 = sbr.rel (%p131) target = $region25
  $region24: #{forward.70} parent=0 // pred_region
    %v134 = vld [vmem:[#allocation2] sm:$0xff]
    %v135 = vld [vmem:[%s2] sm:$0x1]
    %v136 = vld [vmem:[%s3] sm:$0xf]
    %v138 = vlaneseq
    %v139 = vshrl.u32 %v138, 7
    %v140 = vsub.s32 0, %v139
    %v141 = vrot.slane %v135, %v140
    %v143 = vadd.f32 %v134, %v141
    %v144 = vunpack.c.l.bf16 %v136
    %v145 = vadd.f32 %v143, %v144
    %v146 = vmax.f32 %v145, 0.0
    %v147 = vpack.c.bf16 %v146, %v146
    %148 = vst [vmem:[%s4] sm:$0xf] %v147
  $region25: #{forward.70} parent=0 // pred_fallthru
    _
  // Predicated region
  $region26: #{forward.70} parent=0 // pred_check
    _
  $region27: #{forward.70} parent=0 // pred_check_branch
    %150 = sbr.rel (0) target = $region29
  $region28: #{forward.70} parent=0 // pred_region
    _
  $region29: #{forward.70} parent=0 // pred_fallthru
    _
  // Predicated region
  $region30: #{forward.70} parent=0 // pred_check
    _
  $region31: #{forward.70} parent=0 // pred_check_branch
    %152 = sbr.rel (0) target = $region33
  $region32: #{forward.70} parent=0 // pred_region
    _
  $region33: #{forward.70} parent=0 // pred_fallthru
    _

// kernel: forward.71
$region0: #{forward.71}
  #allocation0 [shape = 'u32[]', space=smem, size = 0x4, offset = 0x4, fixed_abs, tag = 'smem constant byte address 0x4 - core index']
  #allocation1 [shape = 'u32[144,128]{1,0:T(1,128)}', space=vmem, size = 0x12000, scoped, tag = 'internal scratch']
  #allocation2 [shape = 'f32[8,128]{1,0:T(8,128)}', space=vmem, size = 0x1000, scoped, tag = 'scratch operand']
  %s0 = inlined_call_operand.vmem [shape: bf16[8,128], index: 0, kind: input, shape index: {}]
  %s1 = inlined_call_operand.vmem [shape: bf16[128,128], index: 1, kind: input, shape index: {}]
  %s2 = inlined_call_operand.vmem [shape: f32[1,128], index: 2, kind: input, shape index: {}]
  %s3 = inlined_call_operand.vmem [shape: bf16[8,128], index: 3, kind: output, shape index: {}]
  %s4 = sld [smem:[#allocation0]]
  $region30: #{forward.71} parent=0
    _
  %s6 = ssub.s32 1, %s4
  %s7 = scalar_select 0, %s6, %s4
  // Predicated region
  $region2: #{forward.71} parent=0 // pred_check
    _
  $region3: #{forward.71} parent=0 // pred_check_branch
    %9 = sbr.rel (0) target = $region5
  $region4: #{forward.71} parent=0 // pred_region
    _
  $region5: #{forward.71} parent=0 // pred_fallthru
    _
  // Predicated region
  $region6: #{forward.71} parent=0 // pred_check
    _
  $region7: #{forward.71} parent=0 // pred_check_branch
    %11 = sbr.rel (0) target = $region9
  $region8: #{forward.71} parent=0 // pred_region
    _
  $region9: #{forward.71} parent=0 // pred_fallthru
    _
  // Predicated region
  $region10: #{forward.71} parent=0 // pred_check
    _
  $region11: #{forward.71} parent=0 // pred_check_branch
    %13 = sbr.rel (0) target = $region13
  $region12: #{forward.71} parent=0 // pred_region
    _
  $region13: #{forward.71} parent=0 // pred_fallthru
    _
  %p15 = scmp.eq.s32.totalorder 0, 0
  // Predicated region
  $region14: #{forward.71} parent=0 // pred_check
    %p16 = pneg %p15
  $region15: #{forward.71} parent=0 // pred_check_branch
    %18 = sbr.rel (%p16) target = $region17
  $region16: #{forward.71} parent=0 // pred_region
    %19 = vst [vmem:[#allocation2] sm:$0xff] 0.0
  $region17: #{forward.71} parent=0 // pred_fallthru
    _
  %v20 = vld [vmem:[#allocation2] sm:$0xff]
  %v21 = vld [vmem:[%s0] sm:$0xf]
  %v22 = vld [vmem:[%s1] sm:$0xf]
  %v23 = vld [vmem:[%s1 + $0x4] sm:$0xf]
  %v24 = vld [vmem:[%s1 + $0x8] sm:$0xf]
  %v25 = vld [vmem:[%s1 + $0xc] sm:$0xf]
  %v26 = vld [vmem:[%s1 + $0x10] sm:$0xf]
  %v27 = vld [vmem:[%s1 + $0x14] sm:$0xf]
  %v28 = vld [vmem:[%s1 + $0x18] sm:$0xf]
  %v29 = vld [vmem:[%s1 + $0x1c] sm:$0xf]
  %v30 = vld [vmem:[%s1 + $0x20] sm:$0xf]
  %v31 = vld [vmem:[%s1 + $0x24] sm:$0xf]
  %v32 = vld [vmem:[%s1 + $0x28] sm:$0xf]
  %v33 = vld [vmem:[%s1 + $0x2c] sm:$0xf]
  %v34 = vld [vmem:[%s1 + $0x30] sm:$0xf]
  %v35 = vld [vmem:[%s1 + $0x34] sm:$0xf]
  %v36 = vld [vmem:[%s1 + $0x38] sm:$0xf]
  %v37 = vld [vmem:[%s1 + $0x3c] sm:$0xf]
  %v54 = vunpack.c.l.b16 %v22
  %v55 = vunpack.c.l.b16 %v23
  %v56 = vunpack.c.l.b16 %v24
  %v57 = vunpack.c.l.b16 %v25
  %v58 = vunpack.c.l.b16 %v26
  %v59 = vunpack.c.l.b16 %v27
  %v60 = vunpack.c.l.b16 %v28
  %v61 = vunpack.c.l.b16 %v29
  %v62 = vunpack.c.l.b16 %v30
  %v63 = vunpack.c.l.b16 %v31
  %v64 = vunpack.c.l.b16 %v32
  %v65 = vunpack.c.l.b16 %v33
  %v66 = vunpack.c.l.b16 %v34
  %v67 = vunpack.c.l.b16 %v35
  %v68 = vunpack.c.l.b16 %v36
  %v69 = vunpack.c.l.b16 %v37
  %v70 = vpack.c.b16 %v55, %v54
  %v71 = vpack.c.b16 %v57, %v56
  %v72 = vpack.c.b16 %v59, %v58
  %v73 = vpack.c.b16 %v61, %v60
  %v74 = vpack.c.b16 %v63, %v62
  %v75 = vpack.c.b16 %v65, %v64
  %v76 = vpack.c.b16 %v67, %v66
  %v77 = vpack.c.b16 %v69, %v68
  %86 = vmatprep.subr.bf16.mxu0 0
  %87 = vmatpush1.bf16.msra.mxu0 %v70
  %88 = vmatprep.subr.bf16.mxu0 0
  %89 = vmatpush1.bf16.msra.mxu0 %v71
  %90 = vmatprep.subr.bf16.mxu0 0
  %91 = vmatpush1.bf16.msra.mxu0 %v72
  %92 = vmatprep.subr.bf16.mxu0 0
  %93 = vmatpush1.bf16.msra.mxu0 %v73
  %94 = vmatprep.subr.bf16.mxu0 0
  %95 = vmatpush1.bf16.msra.mxu0 %v74
  %96 = vmatprep.subr.bf16.mxu0 0
  %97 = vmatpush1.bf16.msra.mxu0 %v75
  %98 = vmatprep.subr.bf16.mxu0 0
  %99 = vmatpush1.bf16.msra.mxu0 %v76
  %100 = vmatprep.subr.bf16.mxu0 0
  %101 = vmatpush1.bf16.msra.mxu0 %v77
  %102 = vmatprep.subr.bf16.mxu0 0
  %103 = vmatpush1.bf16.msra.mxu0 0
  %104 = vmatprep.subr.bf16.mxu0 0
  %105 = vmatpush1.bf16.msra.mxu0 0
  %106 = vmatprep.subr.bf16.mxu0 0
  %107 = vmatpush1.bf16.msra.mxu0 0
  %108 = vmatprep.subr.bf16.mxu0 0
  %109 = vmatpush1.bf16.msra.mxu0 0
  %110 = vmatprep.subr.bf16.mxu0 0
  %111 = vmatpush1.bf16.msra.mxu0 0
  %112 = vmatprep.subr.bf16.mxu0 0
  %113 = vmatpush1.bf16.msra.mxu0 0
  %114 = vmatprep.subr.bf16.mxu0 0
  %115 = vmatpush1.bf16.msra.mxu0 0
  %116 = vmatprep.subr.bf16.mxu0 0
  %117 = vmatpush1.bf16.msra.mxu0 0
  %118 = vmatprep.mubr.bf16.mxu0 0
  %119 = vmatmul.mubr.bf16.gmra.mrb[0].mxu0 %v21
  %v120 = vpop.f32.mrb[0].mxu0
  %v121 = vadd.f32 0.0, %v120
  %v122 = vpop.f32.mrb[0].mxu0
  %v123 = vpop.f32.mrb[0].mxu0
  %v124 = vpop.f32.mrb[0].mxu0
  %125 = vdwg.mxu0
  %v126 = vadd.f32 %v20, %v121
  %127 = vst [vmem:[#allocation2] sm:$0xff] %v126
  // Predicated region
  $region18: #{forward.71} parent=0 // pred_check
    %p128 = pneg %p15
  $region19: #{forward.71} parent=0 // pred_check_branch
    %130 = sbr.rel (%p128) target = $region21
  $region20: #{forward.71} parent=0 // pred_region
    %v131 = vld [vmem:[#allocation2] sm:$0xff]
    %v132 = vld [vmem:[%s2] sm:$0x1]
    %v134 = vlaneseq
    %v135 = vshrl.u32 %v134, 7
    %v136 = vsub.s32 0, %v135
    %v137 = vrot.slane %v132, %v136
    %v139 = vadd.f32 %v131, %v137
    %v140 = vmax.f32 %v139, 0.0
    %v141 = vpack.c.bf16 %v140, %v140
    %142 = vst [vmem:[%s3] sm:$0xf] %v141
  $region21: #{forward.71} parent=0 // pred_fallthru
    _
  // Predicated region
  $region22: #{forward.71} parent=0 // pred_check
    _
  $region23: #{forward.71} parent=0 // pred_check_branch
    %144 = sbr.rel (0) target = $region25
  $region24: #{forward.71} parent=0 // pred_region
    _
  $region25: #{forward.71} parent=0 // pred_fallthru
    _
  // Predicated region
  $region26: #{forward.71} parent=0 // pred_check
    _
  $region27: #{forward.71} parent=0 // pred_check_branch
    %146 = sbr.rel (0) target = $region29
  $region28: #{forward.71} parent=0 // pred_region
    _
  $region29: #{forward.71} parent=0 // pred_fallthru
    _

// kernel: forward.69
$region0: #{forward.69}
  #allocation0 [shape = 'u32[]', space=smem, size = 0x4, offset = 0x4, fixed_abs, tag = 'smem constant byte address 0x4 - core index']
  #allocation1 [shape = 'u32[144,128]{1,0:T(1,128)}', space=vmem, size = 0x12000, scoped, tag = 'internal scratch']
  #allocation2 [shape = 'f32[8,128]{1,0:T(8,128)}', space=vmem, size = 0x1000, scoped, tag = 'scratch operand']
  %s0 = inlined_call_operand.vmem [shape: bf16[8,1152], index: 0, kind: input, shape index: {}]
  %s1 = inlined_call_operand.vmem [shape: bf16[1152,128], index: 1, kind: input, shape index: {}]
  %s2 = inlined_call_operand.vmem [shape: f32[1,128], index: 2, kind: input, shape index: {}]
  %s3 = inlined_call_operand.vmem [shape: bf16[8,128], index: 3, kind: output, shape index: {}]
  %s4 = sld [smem:[#allocation0]]
  $region53: #{forward.69} parent=0
    _
  %s6 = ssub.s32 1, %s4
  %s7 = scalar_select 0, %s6, %s4
  loop: start=0, step=1, limit=5
  $region2: #{forward.69} parent=0 // loop_pre_header
    _
  $region3: #{forward.69} parent=0 // loop_header
    %s9 = sphi 0, %s13
    %p10 = scmp.ge.s32.totalorder %s9, 5
    %s16 = sphi 0, %s35
    %s17 = sphi 0, %s31
    %s18 = sphi 0, %s27
    %s19 = sphi 0, %s16
    %s20 = sphi 0, %s17
    %s21 = sphi 0, %s18
    %s22 = sphi 0, %s19
    %s23 = sphi 0, %s20
    %s24 = sphi 0, %s21
    %s40 = sphi 0, %s42
    %s43 = sphi 0, %s40
    %s44 = sphi 0, %s43
    %s60 = sphi 0, %s44
    %s68 = sphi 0, %s70
    %s71 = sphi 0, %s68
    %s72 = sphi 0, %s71
    %s88 = sphi 0, %s72
    %s94 = sphi 0, %s96
    %s97 = sphi 0, %s94
    %s98 = sphi 0, %s97
    %s114 = sphi 0, %s98
    %s122 = sphi 0, %s124
    %s125 = sphi 0, %s122
    %s126 = sphi 0, %s125
    %s142 = sphi 0, %s126
  $region4: #{forward.69} parent=0 // loop_header_branch
    %12 = sbr.rel (%p10) target = $region8
  $region5: #{forward.69} parent=0 // loop_body
    %s14 = ssub.s32 %s9, 1
    %s15 = ssub.s32 %s9, 2
    %s25 = sadd.s32 1, %s18
    %p26 = scmp.ge.s32.totalorder %s25, 3
    %s27 = scalar_select %p26, 0, %s25
    %s28 = sadd.s32 1, %s17
    %s29 = scalar_select %p26, %s28, %s17
    %p30 = scmp.ge.s32.totalorder %s29, 1
    %s31 = scalar_select %p30, 0, %s29
    %s32 = sadd.s32 1, %s16
    %s33 = scalar_select %p30, %s32, %s16
    %p34 = scmp.ge.s32.totalorder %s33, 1
    %s35 = scalar_select %p34, 0, %s33
    %s36 = ssub.s32 %s16, %s35
    %s37 = ssub.s32 %s18, %s27
    %s38 = sor.u32 %s36, %s37
    %p39 = scmp.eq.s32.totalorder %s38, 0
    %s41 = sadd.s32 %s40, 1
    %s42 = scalar_select %p39, %s40, %s41
    %p45 = pneg %p39
    %p46 = scmp.eq.s32.totalorder %s9, 2
    %p47 = por %p45, %p46
    %p48 = scmp.ne.s32.totalorder %s40, %s43
    %p49 = scmp.eq.s32.totalorder %s9, 0
    %p50 = por %p48, %p49
    %p51 = scmp.ne.s32.totalorder %s40, %s43
    %p52 = scmp.eq.s32.totalorder %s14, 2
    %p53 = por %p51, %p52
    %p54 = scmp.ne.s32.totalorder %s43, %s44
    %p55 = scmp.eq.s32.totalorder %s14, 0
    %p56 = por %p54, %p55
    %p57 = scmp.ne.s32.totalorder %s43, %s44
    %p58 = scmp.eq.s32.totalorder %s15, 2
    %p59 = por %p57, %p58
    %p61 = scmp.ne.s32.totalorder %s44, %s60
    %p62 = scmp.eq.s32.totalorder %s15, 0
    %p63 = por %p61, %p62
    %s64 = ssub.s32 %s18, %s27
    %s65 = ssub.s32 %s17, %s31
    %s66 = sor.u32 %s64, %s65
    %p67 = scmp.eq.s32.totalorder %s66, 0
    %s69 = sadd.s32 %s68, 1
    %s70 = scalar_select %p67, %s68, %s69
    %p73 = pneg %p67
    %p74 = scmp.eq.s32.totalorder %s9, 2
    %p75 = por %p73, %p74
    %p76 = scmp.ne.s32.totalorder %s68, %s71
    %p77 = scmp.eq.s32.totalorder %s9, 0
    %p78 = por %p76, %p77
    %p79 = scmp.ne.s32.totalorder %s68, %s71
    %p80 = scmp.eq.s32.totalorder %s14, 2
    %p81 = por %p79, %p80
    %p82 = scmp.ne.s32.totalorder %s71, %s72
    %p83 = scmp.eq.s32.totalorder %s14, 0
    %p84 = por %p82, %p83
    %p85 = scmp.ne.s32.totalorder %s71, %s72
    %p86 = scmp.eq.s32.totalorder %s15, 2
    %p87 = por %p85, %p86
    %p89 = scmp.ne.s32.totalorder %s72, %s88
    %p90 = scmp.eq.s32.totalorder %s15, 0
    %p91 = por %p89, %p90
    %s92 = ssub.s32 %s17, %s31
    %p93 = scmp.eq.s32.totalorder %s92, 0
    %s95 = sadd.s32 %s94, 1
    %s96 = scalar_select %p93, %s94, %s95
    %p99 = pneg %p93
    %p100 = scmp.eq.s32.totalorder %s9, 2
    %p101 = por %p99, %p100
    %p102 = scmp.ne.s32.totalorder %s94, %s97
    %p103 = scmp.eq.s32.totalorder %s9, 0
    %p104 = por %p102, %p103
    %p105 = scmp.ne.s32.totalorder %s94, %s97
    %p106 = scmp.eq.s32.totalorder %s14, 2
    %p107 = por %p105, %p106
    %p108 = scmp.ne.s32.totalorder %s97, %s98
    %p109 = scmp.eq.s32.totalorder %s14, 0
    %p110 = por %p108, %p109
    %p111 = scmp.ne.s32.totalorder %s97, %s98
    %p112 = scmp.eq.s32.totalorder %s15, 2
    %p113 = por %p111, %p112
    %p115 = scmp.ne.s32.totalorder %s98, %s114
    %p116 = scmp.eq.s32.totalorder %s15, 0
    %p117 = por %p115, %p116
    %s118 = ssub.s32 %s16, %s35
    %s119 = ssub.s32 %s17, %s31
    %s120 = sor.u32 %s118, %s119
    %p121 = scmp.eq.s32.totalorder %s120, 0
    %s123 = sadd.s32 %s122, 1
    %s124 = scalar_select %p121, %s122, %s123
    %p127 = pneg %p121
    %p128 = scmp.eq.s32.totalorder %s9, 2
    %p129 = por %p127, %p128
    %p130 = scmp.ne.s32.totalorder %s122, %s125
    %p131 = scmp.eq.s32.totalorder %s9, 0
    %p132 = por %p130, %p131
    %p133 = scmp.ne.s32.totalorder %s122, %s125
    %p134 = scmp.eq.s32.totalorder %s14, 2
    %p135 = por %p133, %p134
    %p136 = scmp.ne.s32.totalorder %s125, %s126
    %p137 = scmp.eq.s32.totalorder %s14, 0
    %p138 = por %p136, %p137
    %p139 = scmp.ne.s32.totalorder %s125, %s126
    %p140 = scmp.eq.s32.totalorder %s15, 2
    %p141 = por %p139, %p140
    %p143 = scmp.ne.s32.totalorder %s126, %s142
    %p144 = scmp.eq.s32.totalorder %s15, 0
    %p145 = por %p143, %p144
    %p146 = scmp.le.s32.totalorder 1, %s9
    %p147 = scmp.lt.s32.totalorder %s9, 4
    %p148 = pnand %p146, %p147
    %p149 = pneg %p148
    // Predicated region
    $region9: #{forward.69} parent=5 // pred_check
      _
    $region10: #{forward.69} parent=5 // pred_check_branch
      %151 = sbr.rel (%p148) target = $region12
    $region11: #{forward.69} parent=5 // pred_region
      %s152 = ssub.s32 %s9, 1
      // Predicated region
      $region13: #{forward.69} parent=11 // pred_check
        %p153 = pneg %p110
      $region14: #{forward.69} parent=11 // pred_check_branch
        %155 = sbr.rel (%p153) target = $region16
      $region15: #{forward.69} parent=11 // pred_region
        %p156 = scmp.lt.s32.totalorder %s20, 0
        %s157 = scalar_select %p156, %s20, 0
        %s158 = scalar_lea.vmem %s2, %s157
      $region16: #{forward.69} parent=11 // pred_fallthru
        _
    $region12: #{forward.69} parent=5 // pred_fallthru
      _
    %p159 = scmp.lt.s32.totalorder %s9, 3
    // Predicated region
    $region17: #{forward.69} parent=5 // pred_check
      %p160 = pneg %p159
    $region18: #{forward.69} parent=5 // pred_check_branch
      %162 = sbr.rel (%p160) target = $region20
    $region19: #{forward.69} parent=5 // pred_region
      // Predicated region
      $region21: #{forward.69} parent=19 // pred_check
        %p163 = pneg %p50
      $region22: #{forward.69} parent=19 // pred_check_branch
        %165 = sbr.rel (%p163) target = $region24
      $region23: #{forward.69} parent=19 // pred_region
        %s166 = smul.u32 3, %s18
        %p167 = scmp.lt.s32.totalorder %s16, 0
        %s168 = scalar_select %p167, %s16, 0
        %p169 = scmp.lt.s32.totalorder %s166, 8
        %s170 = scalar_select %p169, %s166, 8
        %s171 = smul.addr %s168, 9
        %s172 = sadd.s32 %s170, %s171
        %s173 = smul.addr %s172, 4
        %s174 = scalar_lea.vmem %s0, %s173
        %s175 = smul.u32 3, %s18
      $region24: #{forward.69} parent=19 // pred_fallthru
        _
      // Predicated region
      $region25: #{forward.69} parent=19 // pred_check
        %p176 = pneg %p78
      $region26: #{forward.69} parent=19 // pred_check_branch
        %178 = sbr.rel (%p176) target = $region28
      $region27: #{forward.69} parent=19 // pred_region
        %s179 = smul.u32 48, %s18
        %p180 = scmp.lt.s32.totalorder %s179, 143
        %s181 = scalar_select %p180, %s179, 143
        %p182 = scmp.lt.s32.totalorder %s17, 0
        %s183 = scalar_select %p182, %s17, 0
        %s184 = sadd.s32 %s183, %s181
        %s185 = smul.addr %s184, 4
        %s186 = scalar_lea.vmem %s1, %s185
        %s187 = smul.u32 48, %s18
      $region28: #{forward.69} parent=19 // pred_fallthru
        _
    $region20: #{forward.69} parent=5 // pred_fallthru
      _
    %p188 = scmp.le.s32.totalorder 1, %s9
    %p189 = scmp.lt.s32.totalorder %s9, 4
    %p190 = pnand %p188, %p189
    %p191 = pneg %p190
    // Predicated region
    $region29: #{forward.69} parent=5 // pred_check
      _
    $region30: #{forward.69} parent=5 // pred_check_branch
      %193 = sbr.rel (%p190) target = $region32
    $region31: #{forward.69} parent=5 // pred_region
      %s194 = ssub.s32 %s9, 1
      %s195 = smul.u32 3, %s21
      %p196 = scmp.lt.s32.totalorder %s19, 0
      %s197 = scalar_select %p196, %s19, 0
      %p198 = scmp.lt.s32.totalorder %s195, 8
      %s199 = scalar_select %p198, %s195, 8
      %s200 = smul.addr %s197, 9
      %s201 = sadd.s32 %s199, %s200
      %s202 = smul.addr %s201, 4
      %s203 = scalar_lea.vmem %s0, %s202
      %p204 = pneg %p56
      %p205 = pneg %p53
      %s206 = smul.u32 48, %s21
      %p207 = scmp.lt.s32.totalorder %s206, 143
      %s208 = scalar_select %p207, %s206, 143
      %p209 = scmp.lt.s32.totalorder %s20, 0
      %s210 = scalar_select %p209, %s20, 0
      %s211 = sadd.s32 %s210, %s208
      %s212 = smul.addr %s211, 4
      %s213 = scalar_lea.vmem %s1, %s212
      %p214 = pneg %p84
      %p215 = pneg %p81
      %p216 = scmp.lt.s32.totalorder %s20, 0
      %s217 = scalar_select %p216, %s20, 0
      %s218 = scalar_lea.vmem %s2, %s217
      %p219 = pneg %p110
      %p220 = pneg %p107
      %p221 = pneg %p138
      %p222 = pneg %p135
      %p223 = scmp.lt.s32.totalorder %s19, 0
      %s224 = scalar_select %p223, %s19, 0
      %p225 = scmp.lt.s32.totalorder %s20, 0
      %s226 = scalar_select %p225, %s20, 0
      %s227 = sadd.s32 %s226, %s224
      %s228 = smul.addr %s227, 4
      %s229 = scalar_lea.vmem %s3, %s228
      %s230 = smul.u32 3, %s21
      %p231 = scmp.lt.s32.totalorder %s19, 0
      %s232 = scalar_select %p231, %s19, 0
      %p233 = scmp.lt.s32.totalorder %s230, 8
      %s234 = scalar_select %p233, %s230, 8
      %s235 = smul.addr %s232, 9
      %s236 = sadd.s32 %s234, %s235
      %s237 = smul.addr %s236, 4
      %s238 = scalar_lea.vmem %s0, %s237
      %s239 = smul.u32 3, %s21
      %s240 = smul.u32 48, %s21
      %p241 = scmp.lt.s32.totalorder %s240, 143
      %s242 = scalar_select %p241, %s240, 143
      %p243 = scmp.lt.s32.totalorder %s20, 0
      %s244 = scalar_select %p243, %s20, 0
      %s245 = sadd.s32 %s244, %s242
      %s246 = smul.addr %s245, 4
      %s247 = scalar_lea.vmem %s1, %s246
      %s248 = smul.u32 48, %s21
      %p249 = scmp.lt.s32.totalorder %s20, 0
      %s250 = scalar_select %p249, %s20, 0
      %s251 = scalar_lea.vmem %s2, %s250
      %p252 = scmp.lt.s32.totalorder %s19, 0
      %s253 = scalar_select %p252, %s19, 0
      %p254 = scmp.lt.s32.totalorder %s20, 0
      %s255 = scalar_select %p254, %s20, 0
      %s256 = sadd.s32 %s255, %s253
      %s257 = smul.addr %s256, 4
      %s258 = scalar_lea.vmem %s3, %s257
      %p260 = scmp.eq.s32.totalorder %s21, 0
      // Predicated region
      $region33: #{forward.69} parent=31 // pred_check
        %p261 = pneg %p260
      $region34: #{forward.69} parent=31 // pred_check_branch
        %263 = sbr.rel (%p261) target = $region36
      $region35: #{forward.69} parent=31 // pred_region
        %264 = vst [vmem:[#allocation2] sm:$0xff] 0.0
      $region36: #{forward.69} parent=31 // pred_fallthru
        _
      %v265 = vld [vmem:[#allocation2] sm:$0xff]
      %v266 = vld [vmem:[%s238] sm:$0xff]
      %v267 = vld [vmem:[%s238 + $0x8] sm:$0xf]
      %v268 = vld [vmem:[%s247] sm:$0xf]
      %v269 = vld [vmem:[%s247 + $0x4] sm:$0xf]
      %v270 = vld [vmem:[%s247 + $0x8] sm:$0xf]
      %v271 = vld [vmem:[%s247 + $0xc] sm:$0xf]
      %v272 = vld [vmem:[%s247 + $0x10] sm:$0xf]
      %v273 = vld [vmem:[%s247 + $0x14] sm:$0xf]
      %v274 = vld [vmem:[%s247 + $0x18] sm:$0xf]
      %v275 = vld [vmem:[%s247 + $0x1c] sm:$0xf]
      %v276 = vld [vmem:[%s247 + $0x20] sm:$0xf]
      %v277 = vld [vmem:[%s247 + $0x24] sm:$0xf]
      %v278 = vld [vmem:[%s247 + $0x28] sm:$0xf]
      %v279 = vld [vmem:[%s247 + $0x2c] sm:$0xf]
      %v280 = vld [vmem:[%s247 + $0x30] sm:$0xf]
      %v281 = vld [vmem:[%s247 + $0x34] sm:$0xf]
      %v282 = vld [vmem:[%s247 + $0x38] sm:$0xf]
      %v283 = vld [vmem:[%s247 + $0x3c] sm:$0xf]
      %v284 = vld [vmem:[%s247 + $0x40] sm:$0xf]
      %v285 = vld [vmem:[%s247 + $0x44] sm:$0xf]
      %v286 = vld [vmem:[%s247 + $0x48] sm:$0xf]
      %v287 = vld [vmem:[%s247 + $0x4c] sm:$0xf]
      %v288 = vld [vmem:[%s247 + $0x50] sm:$0xf]
      %v289 = vld [vmem:[%s247 + $0x54] sm:$0xf]
      %v290 = vld [vmem:[%s247 + $0x58] sm:$0xf]
      %v291 = vld [vmem:[%s247 + $0x5c] sm:$0xf]
      %v292 = vld [vmem:[%s247 + $0x60] sm:$0xf]
      %v293 = vld [vmem:[%s247 + $0x64] sm:$0xf]
      %v294 = vld [vmem:[%s247 + $0x68] sm:$0xf]
      %v295 = vld [vmem:[%s247 + $0x6c] sm:$0xf]
      %v296 = vld [vmem:[%s247 + $0x70] sm:$0xf]
      %v297 = vld [vmem:[%s247 + $0x74] sm:$0xf]
      %v298 = vld [vmem:[%s247 + $0x78] sm:$0xf]
      %v299 = vld [vmem:[%s247 + $0x7c] sm:$0xf]
      %v300 = vld [vmem:[%s247 + $0x80] sm:$0xf]
      %v301 = vld [vmem:[%s247 + $0x84] sm:$0xf]
      %v302 = vld [vmem:[%s247 + $0x88] sm:$0xf]
      %v303 = vld [vmem:[%s247 + $0x8c] sm:$0xf]
      %v304 = vld [vmem:[%s247 + $0x90] sm:$0xf]
      %v305 = vld [vmem:[%s247 + $0x94] sm:$0xf]
      %v306 = vld [vmem:[%s247 + $0x98] sm:$0xf]
      %v307 = vld [vmem:[%s247 + $0x9c] sm:$0xf]
      %v308 = vld [vmem:[%s247 + $0xa0] sm:$0xf]
      %v309 = vld [vmem:[%s247 + $0xa4] sm:$0xf]
      %v310 = vld [vmem:[%s247 + $0xa8] sm:$0xf]
      %v311 = vld [vmem:[%s247 + $0xac] sm:$0xf]
      %v312 = vld [vmem:[%s247 + $0xb0] sm:$0xf]
      %v313 = vld [vmem:[%s247 + $0xb4] sm:$0xf]
      %v314 = vld [vmem:[%s247 + $0xb8] sm:$0xf]
      %v315 = vld [vmem:[%s247 + $0xbc] sm:$0xf]
      %v318 = vunpack.c.l.b16 %v266
      %v319 = vunpack.c.h.b16 %v266
      %v320 = vunpack.c.l.b16 %v267
      %v321 = vpack.c.b16 %v318, %v318
      %v322 = vpack.c.b16 %v319, %v319
      %v323 = vpack.c.b16 %v320, %v320
      %v375 = vunpack.c.l.b16 %v268
      %v376 = vunpack.c.l.b16 %v269
      %v377 = vunpack.c.l.b16 %v270
      %v378 = vunpack.c.l.b16 %v271
      %v379 = vunpack.c.l.b16 %v272
      %v380 = vunpack.c.l.b16 %v273
      %v381 = vunpack.c.l.b16 %v274
      %v382 = vunpack.c.l.b16 %v275
      %v383 = vunpack.c.l.b16 %v276
      %v384 = vunpack.c.l.b16 %v277
      %v385 = vunpack.c.l.b16 %v278
      %v386 = vunpack.c.l.b16 %v279
      %v387 = vunpack.c.l.b16 %v280
      %v388 = vunpack.c.l.b16 %v281
      %v389 = vunpack.c.l.b16 %v282
      %v390 = vunpack.c.l.b16 %v283
      %v391 = vunpack.c.l.b16 %v284
      %v392 = vunpack.c.l.b16 %v285
      %v393 = vunpack.c.l.b16 %v286
      %v394 = vunpack.c.l.b16 %v287
      %v395 = vunpack.c.l.b16 %v288
      %v396 = vunpack.c.l.b16 %v289
      %v397 = vunpack.c.l.b16 %v290
      %v398 = vunpack.c.l.b16 %v291
      %v399 = vunpack.c.l.b16 %v292
      %v400 = vunpack.c.l.b16 %v293
      %v401 = vunpack.c.l.b16 %v294
      %v402 = vunpack.c.l.b16 %v295
      %v403 = vunpack.c.l.b16 %v296
      %v404 = vunpack.c.l.b16 %v297
      %v405 = vunpack.c.l.b16 %v298
      %v406 = vunpack.c.l.b16 %v299
      %v407 = vunpack.c.l.b16 %v300
      %v408 = vunpack.c.l.b16 %v301
      %v409 = vunpack.c.l.b16 %v302
      %v410 = vunpack.c.l.b16 %v303
      %v411 = vunpack.c.l.b16 %v304
      %v412 = vunpack.c.l.b16 %v305
      %v413 = vunpack.c.l.b16 %v306
      %v414 = vunpack.c.l.b16 %v307
      %v415 = vunpack.c.l.b16 %v308
      %v416 = vunpack.c.l.b16 %v309
      %v417 = vunpack.c.l.b16 %v310
      %v418 = vunpack.c.l.b16 %v311
      %v419 = vunpack.c.l.b16 %v312
      %v420 = vunpack.c.l.b16 %v313
      %v421 = vunpack.c.l.b16 %v314
      %v422 = vunpack.c.l.b16 %v315
      %v423 = vpack.c.b16 %v376, %v375
      %v424 = vpack.c.b16 %v378, %v377
      %v425 = vpack.c.b16 %v380, %v379
      %v426 = vpack.c.b16 %v382, %v381
      %v427 = vpack.c.b16 %v384, %v383
      %v428 = vpack.c.b16 %v386, %v385
      %v429 = vpack.c.b16 %v388, %v387
      %v430 = vpack.c.b16 %v390, %v389
      %v431 = vpack.c.b16 %v392, %v391
      %v432 = vpack.c.b16 %v394, %v393
      %v433 = vpack.c.b16 %v396, %v395
      %v434 = vpack.c.b16 %v398, %v397
      %v435 = vpack.c.b16 %v400, %v399
      %v436 = vpack.c.b16 %v402, %v401
      %v437 = vpack.c.b16 %v404, %v403
      %v438 = vpack.c.b16 %v406, %v405
      %v439 = vpack.c.b16 %v408, %v407
      %v440 = vpack.c.b16 %v410, %v409
      %v441 = vpack.c.b16 %v412, %v411
      %v442 = vpack.c.b16 %v414, %v413
      %v443 = vpack.c.b16 %v416, %v415
      %v444 = vpack.c.b16 %v418, %v417
      %v445 = vpack.c.b16 %v420, %v419
      %v446 = vpack.c.b16 %v422, %v421
      %471 = vmatprep.subr.bf16.mxu0 0
      %472 = vmatpush1.bf16.msra.mxu0 %v423
      %473 = vmatprep.subr.bf16.mxu0 0
      %474 = vmatpush1.bf16.msra.mxu0 %v424
      %475 = vmatprep.subr.bf16.mxu0 0
      %476 = vmatpush1.bf16.msra.mxu0 %v425
      %477 = vmatprep.subr.bf16.mxu0 0
      %478 = vmatpush1.bf16.msra.mxu0 %v426
      %479 = vmatprep.subr.bf16.mxu0 0
      %480 = vmatpush1.bf16.msra.mxu0 %v427
      %481 = vmatprep.subr.bf16.mxu0 0
      %482 = vmatpush1.bf16.msra.mxu0 %v428
      %483 = vmatprep.subr.bf16.mxu0 0
      %484 = vmatpush1.bf16.msra.mxu0 %v429
      %485 = vmatprep.subr.bf16.mxu0 0
      %486 = vmatpush1.bf16.msra.mxu0 %v430
      %487 = vmatprep.subr.bf16.mxu0 0
      %488 = vmatpush1.bf16.msra.mxu0 %v431
      %489 = vmatprep.subr.bf16.mxu0 0
      %490 = vmatpush1.bf16.msra.mxu0 %v432
      %491 = vmatprep.subr.bf16.mxu0 0
      %492 = vmatpush1.bf16.msra.mxu0 %v433
      %493 = vmatprep.subr.bf16.mxu0 0
      %494 = vmatpush1.bf16.msra.mxu0 %v434
      %495 = vmatprep.subr.bf16.mxu0 0
      %496 = vmatpush1.bf16.msra.mxu0 %v435
      %497 = vmatprep.subr.bf16.mxu0 0
      %498 = vmatpush1.bf16.msra.mxu0 %v436
      %499 = vmatprep.subr.bf16.mxu0 0
      %500 = vmatpush1.bf16.msra.mxu0 %v437
      %501 = vmatprep.subr.bf16.mxu0 0
      %502 = vmatpush1.bf16.msra.mxu0 %v438
      %503 = vmatprep.mubr.bf16.mxu0 %v322
      %504 = vmatmul.mubr.bf16.gmra.mrb[0].mxu0 %v321
      %v505 = vpop.f32.mrb[0].mxu0
      %v506 = vadd.f32 0.0, %v505
      %v507 = vpop.f32.mrb[0].mxu0
      %v508 = vpop.f32.mrb[0].mxu0
      %v509 = vpop.f32.mrb[0].mxu0
      %510 = vdwg.mxu0
      %511 = vmatprep.subr.bf16.mxu0 0
      %512 = vmatpush1.bf16.msra.mxu0 %v439
      %513 = vmatprep.subr.bf16.mxu0 0
      %514 = vmatpush1.bf16.msra.mxu0 %v440
      %515 = vmatprep.subr.bf16.mxu0 0
      %516 = vmatpush1.bf16.msra.mxu0 %v441
      %517 = vmatprep.subr.bf16.mxu0 0
      %518 = vmatpush1.bf16.msra.mxu0 %v442
      %519 = vmatprep.subr.bf16.mxu0 0
      %520 = vmatpush1.bf16.msra.mxu0 %v443
      %521 = vmatprep.subr.bf16.mxu0 0
      %522 = vmatpush1.bf16.msra.mxu0 %v444
      %523 = vmatprep.subr.bf16.mxu0 0
      %524 = vmatpush1.bf16.msra.mxu0 %v445
      %525 = vmatprep.subr.bf16.mxu0 0
      %526 = vmatpush1.bf16.msra.mxu0 %v446
      %527 = vmatprep.subr.bf16.mxu0 0
      %528 = vmatpush1.bf16.msra.mxu0 0
      %529 = vmatprep.subr.bf16.mxu0 0
      %530 = vmatpush1.bf16.msra.mxu0 0
      %531 = vmatprep.subr.bf16.mxu0 0
      %532 = vmatpush1.bf16.msra.mxu0 0
      %533 = vmatprep.subr.bf16.mxu0 0
      %534 = vmatpush1.bf16.msra.mxu0 0
      %535 = vmatprep.subr.bf16.mxu0 0
      %536 = vmatpush1.bf16.msra.mxu0 0
      %537 = vmatprep.subr.bf16.mxu0 0
      %538 = vmatpush1.bf16.msra.mxu0 0
      %539 = vmatprep.subr.bf16.mxu0 0
      %540 = vmatpush1.bf16.msra.mxu0 0
      %541 = vmatprep.subr.bf16.mxu0 0
      %542 = vmatpush1.bf16.msra.mxu0 0
      %543 = vmatprep.mubr.bf16.mxu0 0
      %544 = vmatmul.mubr.bf16.gmra.mrb[0].mxu0 %v323
      %v545 = vpop.f32.mrb[0].mxu0
      %v546 = vadd.f32 %v506, %v545
      %v547 = vpop.f32.mrb[0].mxu0
      %v548 = vpop.f32.mrb[0].mxu0
      %v549 = vpop.f32.mrb[0].mxu0
      %550 = vdwg.mxu0
      %v551 = vadd.f32 %v265, %v546
      %552 = vst [vmem:[#allocation2] sm:$0xff] %v551
      %p553 = scmp.eq.s32.totalorder %s21, 2
      // Predicated region
      $region37: #{forward.69} parent=31 // pred_check
        %p554 = pneg %p553
      $region38: #{forward.69} parent=31 // pred_check_branch
        %556 = sbr.rel (%p554) target = $region40
      $region39: #{forward.69} parent=31 // pred_region
        %v557 = vld [vmem:[#allocation2] sm:$0xff]
        %v558 = vld [vmem:[%s251] sm:$0x1]
        %v560 = vlaneseq
        %v561 = vshrl.u32 %v560, 7
        %v562 = vsub.s32 0, %v561
        %v563 = vrot.slane %v558, %v562
        %v565 = vadd.f32 %v557, %v563
        %v566 = vmax.f32 %v565, 0.0
        %v567 = vpack.c.bf16 %v566, %v566
        %568 = vst [vmem:[%s258] sm:$0xf] %v567
      $region40: #{forward.69} parent=31 // pred_fallthru
        _
      %p569 = scmp.lt.s32.totalorder %s19, 0
      %s570 = scalar_select %p569, %s19, 0
      %p571 = scmp.lt.s32.totalorder %s20, 0
      %s572 = scalar_select %p571, %s20, 0
      %s573 = sadd.s32 %s572, %s570
      %s574 = smul.addr %s573, 4
      %s575 = scalar_lea.vmem %s3, %s574
      // Predicated region
      $region41: #{forward.69} parent=31 // pred_check
        %p576 = pneg %p135
      $region42: #{forward.69} parent=31 // pred_check_branch
        %578 = sbr.rel (%p576) target = $region44
      $region43: #{forward.69} parent=31 // pred_region
        _
      $region44: #{forward.69} parent=31 // pred_fallthru
        _
      // Predicated region
      $region45: #{forward.69} parent=31 // pred_check
        %p579 = pneg %p135
      $region46: #{forward.69} parent=31 // pred_check_branch
        %581 = sbr.rel (%p579) target = $region48
      $region47: #{forward.69} parent=31 // pred_region
        %p582 = scmp.lt.s32.totalorder %s19, 0
        %s583 = scalar_select %p582, %s19, 0
        %p584 = scmp.lt.s32.totalorder %s20, 0
        %s585 = scalar_select %p584, %s20, 0
        %s586 = sadd.s32 %s585, %s583
        %s587 = smul.addr %s586, 4
        %s588 = scalar_lea.vmem %s3, %s587
      $region48: #{forward.69} parent=31 // pred_fallthru
        _
    $region32: #{forward.69} parent=5 // pred_fallthru
      _
    %p589 = scmp.le.s32.totalorder 2, %s9
    // Predicated region
    $region49: #{forward.69} parent=5 // pred_check
      %p590 = pneg %p589
    $region50: #{forward.69} parent=5 // pred_check_branch
      %592 = sbr.rel (%p590) target = $region52
    $region51: #{forward.69} parent=5 // pred_region
      %s593 = ssub.s32 %s9, 2
    $region52: #{forward.69} parent=5 // pred_fallthru
      _
  $region6: #{forward.69} parent=0 // loop_footer
    %s13 = sadd.s32 1, %s9
  $region7: #{forward.69} parent=0 // loop_footer_branch
    %8 = sbr.rel target = $region3
  $region8: #{forward.69} parent=0 // loop_exit
    _

</llo_original>
